<compile_context>
chip_gen: v6e
topology: v6e:2x2x1
jax: 0.10.0
libtpu: 0.0.40
codegen_flags: <defaults>
</compile_context>

<pallas_src>
import functools
import math

import jax
import jax.numpy as jnp
from jax import lax
from jax.experimental import pallas as pl
from jax.experimental.pallas import tpu as pltpu


# ----------------------------- in-kernel helpers -----------------------------

def _layernorm(z, g, b, eps=1e-5):
    mu = jnp.mean(z, axis=-1, keepdims=True)
    var = jnp.mean(jnp.square(z - mu), axis=-1, keepdims=True)   # biased, like torch
    return (z - mu) * lax.rsqrt(var + eps) * g + b


def _proj_heads(x, w_h, b_h, n_heads):
    """Per-head linear projection as one head-batched matmul.

    x:[L,H] f32, w_h:[nH,H,D] bf16, b_h:[nH,1,D] f32  ->  [nH,L,D] f32.
    """
    L, H = x.shape
    xb = jnp.broadcast_to(x.astype(jnp.bfloat16)[None], (n_heads, L, H))
    r = lax.dot_general(xb, w_h, (((2,), (1,)), ((0,), (0,))),
                        preferred_element_type=jnp.float32)
    return r + b_h


def _mha(q3, k3, v3, wo_h, bo, mask, scale):
    """Head-batched attention; heads merged via the (batched) output projection.

    q3:[nH,Lq,hd]  k3,v3:[nH,Lk,hd] f32   wo_h:[nH,hd,H] bf16   bo:[1,H] f32
    mask:[Lq,Lk] bool  ->  [Lq,H] f32
    """
    s = lax.dot_general(q3.astype(jnp.bfloat16), k3.astype(jnp.bfloat16),
                        (((2,), (2,)), ((0,), (0,))),
                        preferred_element_type=jnp.float32) * scale   # [nH,Lq,Lk]
    s = jnp.where(mask[None], s, -1e10)            # masked_fill(mask==0, -1e10)
    s = s - jnp.max(s, axis=-1, keepdims=True)     # f32 softmax
    p = jnp.exp(s)
    p = p / jnp.sum(p, axis=-1, keepdims=True)
    z3 = lax.dot_general(p.astype(jnp.bfloat16), v3.astype(jnp.bfloat16),
                         (((2,), (1,)), ((0,), (0,))),
                         preferred_element_type=jnp.float32)          # [nH,Lq,hd]
    zo = lax.dot_general(z3.astype(jnp.bfloat16), wo_h,
                         (((2,), (1,)), ((0,), (0,))),
                         preferred_element_type=jnp.float32)          # [nH,Lq,H]
    return jnp.sum(zo, axis=0) + bo                # head merge + single bias add


def _ffn(x, w1, b1, w2, b2):
    h = jnp.dot(x.astype(jnp.bfloat16), w1, preferred_element_type=jnp.float32) + b1
    h = jnp.maximum(h, 0.0)
    return jnp.dot(h.astype(jnp.bfloat16), w2, preferred_element_type=jnp.float32) + b2


# --------------------------- fused seq2seq kernel -----------------------------

def _seq2seq_kernel(elen_ref, dlen_ref,
                    xe_ref, xd_ref,
                    e_hw, e_hb, e_wo, e_w1, e_w2, e_vec,
                    d_hw, d_hb, d_swo, d_cwo, d_w1, d_w2, d_vec,
                    ow, ob,
                    o_ref, *, n_layers, n_heads, hd, batch_per_group):
    g = pl.program_id(0)
    Le, H = xe_ref.shape[1], xe_ref.shape[2]
    Ld = xd_ref.shape[1]
    F = e_w1.shape[2]
    scale = 1.0 / math.sqrt(hd)

    def vrow(vref, l, r, width):       # one packed bias/gamma/beta row -> [1, width]
        return vref[l, r:r + 1, :width]

    for bi in range(batch_per_group):  # static unroll; batch_per_group is tiny
        b = g * batch_per_group + bi
        elen = elen_ref[b]
        dlen = dlen_ref[b]

        # masks built in-kernel from length scalars (no HBM mask traffic)
        ecol = lax.broadcasted_iota(jnp.int32, (Le, Le), 1)
        enc_mask = ecol < elen
        drow = lax.broadcasted_iota(jnp.int32, (Ld, Ld), 0)
        dcol = lax.broadcasted_iota(jnp.int32, (Ld, Ld), 1)
        dec_mask = (dcol < dlen) & (dcol <= drow)              # padding & causal
        xcol = lax.broadcasted_iota(jnp.int32, (Ld, Le), 1)
        cross_mask = xcol < elen

        # ------------------------ encoder stack ------------------------------
        x = xe_ref[bi]                                         # [Le, H] f32
        for l in range(n_layers):                              # TODO(synk): fori_loop for deep stacks
            qkv = _proj_heads(x, e_hw[l], e_hb[l], n_heads)    # [nH, Le, 3hd]
            att = _mha(qkv[..., :hd], qkv[..., hd:2 * hd], qkv[..., 2 * hd:],
                       e_wo[l], vrow(e_vec, l, 0, H), enc_mask, scale)
            x = _layernorm(x + att, vrow(e_vec, l, 1, H), vrow(e_vec, l, 2, H))
            f = _ffn(x, e_w1[l], vrow(e_vec, l, 3, F), e_w2[l], vrow(e_vec, l, 4, H))
            x = _layernorm(x + f, vrow(e_vec, l, 5, H), vrow(e_vec, l, 6, H))

        # ------------------------ decoder stack ------------------------------
        # (encoder state `x` never leaves the kernel: no HBM round-trip)
        y = xd_ref[bi]                                         # [Ld, H] f32
        for l in range(n_layers):
            # masked self-attention (fused per-head QKV, head-batched)
            qkv = _proj_heads(y, d_hw[l, :, :, :3 * hd],
                              d_hb[l, :, :, :3 * hd], n_heads)
            att = _mha(qkv[..., :hd], qkv[..., hd:2 * hd], qkv[..., 2 * hd:],
                       d_swo[l], vrow(d_vec, l, 0, H), dec_mask, scale)
            y = _layernorm(y + att, vrow(d_vec, l, 1, H), vrow(d_vec, l, 2, H))
            # cross-attention over the in-register encoder state
            q3 = _proj_heads(y, d_hw[l, :, :, 3 * hd:4 * hd],
                             d_hb[l, :, :, 3 * hd:4 * hd], n_heads)
            kv3 = _proj_heads(x, d_hw[l, :, :, 4 * hd:],
                              d_hb[l, :, :, 4 * hd:], n_heads)
            att = _mha(q3, kv3[..., :hd], kv3[..., hd:],
                       d_cwo[l], vrow(d_vec, l, 3, H), cross_mask, scale)
            y = _layernorm(y + att, vrow(d_vec, l, 4, H), vrow(d_vec, l, 5, H))
            # position-wise FFN
            f = _ffn(y, d_w1[l], vrow(d_vec, l, 6, F), d_w2[l], vrow(d_vec, l, 7, H))
            y = _layernorm(y + f, vrow(d_vec, l, 8, H), vrow(d_vec, l, 9, H))

        # output projection to the lane-padded vocab (128-wide, unmasked stores)
        o_ref[bi] = jnp.dot(y.astype(jnp.bfloat16), ow[...],
                            preferred_element_type=jnp.float32) + ob[...]


# --------------------------------- wrappers ----------------------------------

def _pos_encode(tokens, emb, pe, scale):
    L = tokens.shape[1]
    return emb[tokens] * scale + pe[None, :L, :]


def seq2seq_forward(params, cfg, enc_x, enc_len, dec_x, dec_len):
    # token embedding gather + positional encoding in XLA (tiny); everything
    # else runs inside the single fused Pallas kernel.
    enc_emb = _pos_encode(enc_x, params["enc_emb"], params["pe"], cfg["scale"])
    dec_emb = _pos_encode(dec_x, params["dec_emb"], params["pe"], cfg["scale"])

    B, Le, H = enc_emb.shape
    Ld = dec_emb.shape[1]
    nL, nH = cfg["n_layers"], cfg["n_heads"]
    hd = H // nH
    Vp = params["out_w"].shape[-1]

    # 2 batch groups -> both v7x TensorCores busy; on v5e/v6e the extra group
    # costs one grid step.  TODO(synk): n_groups=1 (full batch fold) on 1-TC chips.
    n_groups = 2 if (B >= 2 and B % 2 == 0) else 1
    bg = B // n_groups

    kern = functools.partial(_seq2seq_kernel, n_layers=nL, n_heads=nH, hd=hd,
                             batch_per_group=bg)

    grp3 = lambda g, *_: (g, 0, 0)

    def rep(rank):
        return lambda g, *_: (0,) * rank

    weights = [
        params["e_hw"], params["e_hb"], params["e_wo"], params["e_w1"],
        params["e_w2"], params["e_vec"],
        params["d_hw"], params["d_hb"], params["d_swo"], params["d_cwo"],
        params["d_w1"], params["d_w2"], params["d_vec"],
        params["out_w"], params["out_b"],
    ]
    w_specs = [pl.BlockSpec(w.shape, rep(w.ndim)) for w in weights]

    logits = pl.pallas_call(
        kern,
        out_shape=jax.ShapeDtypeStruct((B, Ld, Vp), jnp.float32),
        grid_spec=pltpu.PrefetchScalarGridSpec(
            num_scalar_prefetch=2,
            grid=(n_groups,),
            in_specs=[pl.BlockSpec((bg, Le, H), grp3),
                      pl.BlockSpec((bg, Ld, H), grp3)] + w_specs,
            out_specs=pl.BlockSpec((bg, Ld, Vp), grp3),
        ),
        compiler_params=pltpu.CompilerParams(dimension_semantics=("parallel",)),
    )(enc_len, dec_len, enc_emb, dec_emb, *weights)

    return logits[:, :, :cfg["dec_vocab"]]


# ------------------------------ parameter init --------------------------------

def _init_linear(key, din, dout):
    k1, k2 = jax.random.split(key)
    bound = 1.0 / math.sqrt(din)
    w = jax.random.uniform(k1, (din, dout), jnp.float32, -bound, bound)
    b = jax.random.uniform(k2, (dout,), jnp.float32, -bound, bound)
    return w, b


def _init_mha(key, H):
    ks = jax.random.split(key, 4)
    return (_init_linear(ks[0], H, H), _init_linear(ks[1], H, H),
            _init_linear(ks[2], H, H), _init_linear(ks[3], H, H))


def _make_pe(n_position, H):
    i = jnp.arange(n_position, dtype=jnp.float32)[:, None]
    j = jnp.arange(0, H, 2, dtype=jnp.float32)
    angle = i / (10000.0 ** (j / H))
    pe = jnp.zeros((n_position, H), jnp.float32)
    pe = pe.at[:, 0::2].set(jnp.sin(angle))
    pe = pe.at[:, 1::2].set(jnp.cos(angle))
    return pe


def init_params(key, enc_vocab, dec_vocab, n_layers, n_heads, H, F, n_position):
    assert H % n_heads == 0 and F >= H
    nH, hd = n_heads, H // n_heads

    keys = jax.random.split(key, 3 + 2 * n_layers)
    k_enc_emb, k_dec_emb, k_out = keys[0], keys[1], keys[2]
    enc_keys = keys[3:3 + n_layers]
    dec_keys = keys[3 + n_layers:]

    ones_h = jnp.ones((H,), jnp.float32)
    zeros_h = jnp.zeros((H,), jnp.float32)

    def heads_cols(w):      # [H,H] -> [nH,H,hd]   (head h = output cols h*hd:(h+1)*hd)
        return jnp.transpose(w.reshape(H, nH, hd), (1, 0, 2))

    def heads_bias(b):      # [H] -> [nH,1,hd]
        return b.reshape(nH, 1, hd)

    def pad_row(v):         # [<=F] -> [1,F]
        return jnp.pad(v, (0, F - v.shape[0]))[None, :]

    e = {k: [] for k in ["hw", "hb", "wo", "w1", "w2", "vec"]}
    for l in range(n_layers):
        ka, kf = jax.random.split(enc_keys[l], 2)
        (wq, bq), (wk, bk), (wv, bv), (wo, bo) = _init_mha(ka, H)
        e["hw"].append(jnp.concatenate(
            [heads_cols(wq), heads_cols(wk), heads_cols(wv)], axis=2))
        e["hb"].append(jnp.concatenate(
            [heads_bias(bq), heads_bias(bk), heads_bias(bv)], axis=2))
        e["wo"].append(wo.reshape(nH, hd, H))
        k1, k2 = jax.random.split(kf, 2)
        w1, b1 = _init_linear(k1, H, F)
        w2, b2 = _init_linear(k2, F, H)
        e["w1"].append(w1); e["w2"].append(w2)
        e["vec"].append(jnp.concatenate(
            [pad_row(bo), pad_row(ones_h), pad_row(zeros_h),
             pad_row(b1), pad_row(b2), pad_row(ones_h), pad_row(zeros_h)], axis=0))

    d = {k: [] for k in ["hw", "hb", "swo", "cwo", "w1", "w2", "vec"]}
    for l in range(n_layers):
        ka, kc, kf = jax.random.split(dec_keys[l], 3)
        (wq, bq), (wk, bk), (wv, bv), (swo, sbo) = _init_mha(ka, H)
        (cwq, cbq), (cwk, cbk), (cwv, cbv), (cwo, cbo) = _init_mha(kc, H)
        d["hw"].append(jnp.concatenate(
            [heads_cols(wq), heads_cols(wk), heads_cols(wv),
             heads_cols(cwq), heads_cols(cwk), heads_cols(cwv)], axis=2))
        d["hb"].append(jnp.concatenate(
            [heads_bias(bq), heads_bias(bk), heads_bias(bv),
             heads_bias(cbq), heads_bias(cbk), heads_bias(cbv)], axis=2))
        d["swo"].append(swo.reshape(nH, hd, H))
        d["cwo"].append(cwo.reshape(nH, hd, H))
        k1, k2 = jax.random.split(kf, 2)
        w1, b1 = _init_linear(k1, H, F)
        w2, b2 = _init_linear(k2, F, H)
        d["w1"].append(w1); d["w2"].append(w2)
        d["vec"].append(jnp.concatenate(
            [pad_row(sbo), pad_row(ones_h), pad_row(zeros_h),
             pad_row(cbo), pad_row(ones_h), pad_row(zeros_h),
             pad_row(b1), pad_row(b2), pad_row(ones_h), pad_row(zeros_h)], axis=0))

    bf = jnp.bfloat16
    params = {
        # bf16 MXU operands (pre-cast in the wrapper; f32 accumulation in-kernel)
        "e_hw": jnp.stack(e["hw"]).astype(bf),
        "e_wo": jnp.stack(e["wo"]).astype(bf),
        "e_w1": jnp.stack(e["w1"]).astype(bf),
        "e_w2": jnp.stack(e["w2"]).astype(bf),
        "d_hw": jnp.stack(d["hw"]).astype(bf),
        "d_swo": jnp.stack(d["swo"]).astype(bf),
        "d_cwo": jnp.stack(d["cwo"]).astype(bf),
        "d_w1": jnp.stack(d["w1"]).astype(bf),
        "d_w2": jnp.stack(d["w2"]).astype(bf),
        # packed f32 bias / LayerNorm vectors (few DMAs instead of ~20)
        "e_hb": jnp.stack(e["hb"]),
        "e_vec": jnp.stack(e["vec"]),
        "d_hb": jnp.stack(d["hb"]),
        "d_vec": jnp.stack(d["vec"]),
    }

    out_w, out_b = _init_linear(k_out, H, dec_vocab)
    Vp = ((dec_vocab + 127) // 128) * 128
    params["out_w"] = jnp.pad(out_w, ((0, 0), (0, Vp - dec_vocab))).astype(bf)
    params["out_b"] = jnp.pad(out_b, (0, Vp - dec_vocab))[None, :]

    params["enc_emb"] = jax.random.normal(k_enc_emb, (enc_vocab, H), jnp.float32)
    params["dec_emb"] = jax.random.normal(k_dec_emb, (dec_vocab, H), jnp.float32)
    params["pe"] = _make_pe(n_position, H)

    cfg = dict(n_layers=n_layers, n_heads=n_heads, scale=math.sqrt(H),
               dec_vocab=dec_vocab)
    return params, cfg


# ------------------------------------ main ------------------------------------

if __name__ == "__main__":
    enc_vocab, dec_vocab = 50, 60
    n_layers, n_heads, n_hiddens, ff_hiddens, n_position = 2, 4, 32, 64, 100
    B, Le, Ld = 2, 8, 8

    key = jax.random.PRNGKey(0)
    kp, k1, k2 = jax.random.split(key, 3)
    params, cfg = init_params(kp, enc_vocab, dec_vocab, n_layers, n_heads,
                              n_hiddens, ff_hiddens, n_position)

    enc_x = jax.random.randint(k1, (B, Le), 0, enc_vocab, dtype=jnp.int32)
    dec_x = jax.random.randint(k2, (B, Ld), 0, dec_vocab, dtype=jnp.int32)
    enc_len = jnp.array([Le, Le - 3], dtype=jnp.int32)
    dec_len = jnp.array([Ld, Ld - 2], dtype=jnp.int32)

    fwd = jax.jit(lambda p, ex, el, dx, dl: seq2seq_forward(p, cfg, ex, el, dx, dl))
    outs = fwd(params, enc_x, enc_len, dec_x, dec_len)
    jax.block_until_ready(outs)
    assert outs.shape == (B, Ld, dec_vocab), outs.shape
    assert bool(jnp.all(jnp.isfinite(outs)))
    print("KERNEL_OK")
</pallas_src>

<mosaic_0001>
module attributes {stable_mosaic.version = 11 : i64} {
  func.func @_seq2seq_kernel(%arg0: i32, %arg1: memref<2xi32, #tpu.memory_space<smem>>, %arg2: memref<2xi32, #tpu.memory_space<smem>>, %arg3: memref<1x8x32xf32, #tpu.memory_space<vmem>>, %arg4: memref<1x8x32xf32, #tpu.memory_space<vmem>>, %arg5: memref<2x4x32x24xbf16, #tpu.memory_space<vmem>>, %arg6: memref<2x4x1x24xf32, #tpu.memory_space<vmem>>, %arg7: memref<2x4x8x32xbf16, #tpu.memory_space<vmem>>, %arg8: memref<2x32x64xbf16, #tpu.memory_space<vmem>>, %arg9: memref<2x64x32xbf16, #tpu.memory_space<vmem>>, %arg10: memref<2x7x64xf32, #tpu.memory_space<vmem>>, %arg11: memref<2x4x32x48xbf16, #tpu.memory_space<vmem>>, %arg12: memref<2x4x1x48xf32, #tpu.memory_space<vmem>>, %arg13: memref<2x4x8x32xbf16, #tpu.memory_space<vmem>>, %arg14: memref<2x4x8x32xbf16, #tpu.memory_space<vmem>>, %arg15: memref<2x32x64xbf16, #tpu.memory_space<vmem>>, %arg16: memref<2x64x32xbf16, #tpu.memory_space<vmem>>, %arg17: memref<2x10x64xf32, #tpu.memory_space<vmem>>, %arg18: memref<32x128xbf16, #tpu.memory_space<vmem>>, %arg19: memref<1x128xf32, #tpu.memory_space<vmem>>, %arg20: memref<1x8x128xf32, #tpu.memory_space<vmem>>) attributes {dimension_semantics = [#tpu.dimension_semantics<parallel>], iteration_bounds = array<i64: 2>, scalar_prefetch = 2 : i64, scratch_operands = 0 : i64, tpu.core_type = #tpu.core_type<tc>, window_params = [{transform_indices = @transform_0, window_bounds = array<i64: 1, 8, 32>}, {transform_indices = @transform_1, window_bounds = array<i64: 1, 8, 32>}, {pipeline_mode = #tpu.pipeline_mode<synchronous>, transform_indices = @transform_2, window_bounds = array<i64: 2, 4, 32, 24>}, {pipeline_mode = #tpu.pipeline_mode<synchronous>, transform_indices = @transform_3, window_bounds = array<i64: 2, 4, 1, 24>}, {pipeline_mode = #tpu.pipeline_mode<synchronous>, transform_indices = @transform_4, window_bounds = array<i64: 2, 4, 8, 32>}, {pipeline_mode = #tpu.pipeline_mode<synchronous>, transform_indices = @transform_5, window_bounds = array<i64: 2, 32, 64>}, {pipeline_mode = #tpu.pipeline_mode<synchronous>, transform_indices = @transform_6, window_bounds = array<i64: 2, 64, 32>}, {pipeline_mode = #tpu.pipeline_mode<synchronous>, transform_indices = @transform_7, window_bounds = array<i64: 2, 7, 64>}, {pipeline_mode = #tpu.pipeline_mode<synchronous>, transform_indices = @transform_8, window_bounds = array<i64: 2, 4, 32, 48>}, {pipeline_mode = #tpu.pipeline_mode<synchronous>, transform_indices = @transform_9, window_bounds = array<i64: 2, 4, 1, 48>}, {pipeline_mode = #tpu.pipeline_mode<synchronous>, transform_indices = @transform_10, window_bounds = array<i64: 2, 4, 8, 32>}, {pipeline_mode = #tpu.pipeline_mode<synchronous>, transform_indices = @transform_11, window_bounds = array<i64: 2, 4, 8, 32>}, {pipeline_mode = #tpu.pipeline_mode<synchronous>, transform_indices = @transform_12, window_bounds = array<i64: 2, 32, 64>}, {pipeline_mode = #tpu.pipeline_mode<synchronous>, transform_indices = @transform_13, window_bounds = array<i64: 2, 64, 32>}, {pipeline_mode = #tpu.pipeline_mode<synchronous>, transform_indices = @transform_14, window_bounds = array<i64: 2, 10, 64>}, {pipeline_mode = #tpu.pipeline_mode<synchronous>, transform_indices = @transform_15, window_bounds = array<i64: 32, 128>}, {pipeline_mode = #tpu.pipeline_mode<synchronous>, transform_indices = @transform_16, window_bounds = array<i64: 1, 128>}, {transform_indices = @transform_17, window_bounds = array<i64: 1, 8, 128>}]} {
    %c1_i32 = arith.constant 1 : i32
    %0 = arith.muli %arg0, %c1_i32 : i32
    %c0_i32 = arith.constant 0 : i32
    %1 = arith.addi %0, %c0_i32 : i32
    %2 = arith.index_cast %1 : i32 to index
    %3 = memref.load %arg1[%2] : memref<2xi32, #tpu.memory_space<smem>>
    %4 = arith.index_cast %1 : i32 to index
    %5 = memref.load %arg2[%4] : memref<2xi32, #tpu.memory_space<smem>>
    %6 = tpu.iota {dimensions = array<i32: 1>} : vector<8x8xi32>
    %7 = vector.broadcast %3 : i32 to vector<8x8xi32>
    %8 = arith.cmpi slt, %6, %7 : vector<8x8xi32>
    %9 = tpu.iota {dimensions = array<i32: 0>} : vector<8x8xi32>
    %10 = tpu.iota {dimensions = array<i32: 1>} : vector<8x8xi32>
    %11 = vector.broadcast %5 : i32 to vector<8x8xi32>
    %12 = arith.cmpi slt, %10, %11 : vector<8x8xi32>
    %13 = arith.cmpi sle, %10, %9 : vector<8x8xi32>
    %14 = arith.andi %12, %13 : vector<8x8xi1>
    %15 = tpu.iota {dimensions = array<i32: 1>} : vector<8x8xi32>
    %16 = vector.broadcast %3 : i32 to vector<8x8xi32>
    %17 = arith.cmpi slt, %15, %16 : vector<8x8xi32>
    %c0 = arith.constant 0 : index
    %c0_0 = arith.constant 0 : index
    %c0_1 = arith.constant 0 : index
    %18 = vector.load %arg3[%c0, %c0_0, %c0_1] : memref<1x8x32xf32, #tpu.memory_space<vmem>>, vector<1x8x32xf32>
    %19 = vector.shape_cast %18 : vector<1x8x32xf32> to vector<8x32xf32>
    %c0_2 = arith.constant 0 : index
    %c0_3 = arith.constant 0 : index
    %c0_4 = arith.constant 0 : index
    %c0_5 = arith.constant 0 : index
    %20 = vector.load %arg5[%c0_2, %c0_3, %c0_4, %c0_5] : memref<2x4x32x24xbf16, #tpu.memory_space<vmem>>, vector<1x4x32x24xbf16>
    %21 = vector.shape_cast %20 : vector<1x4x32x24xbf16> to vector<4x32x24xbf16>
    %c0_6 = arith.constant 0 : index
    %c0_7 = arith.constant 0 : index
    %c0_8 = arith.constant 0 : index
    %c0_9 = arith.constant 0 : index
    %22 = vector.load %arg6[%c0_6, %c0_7, %c0_8, %c0_9] : memref<2x4x1x24xf32, #tpu.memory_space<vmem>>, vector<1x4x1x24xf32>
    %23 = vector.shape_cast %22 : vector<1x4x1x24xf32> to vector<4x1x24xf32>
    %24 = arith.truncf %19 : vector<8x32xf32> to vector<8x32xbf16>
    %25 = vector.shape_cast %24 : vector<8x32xbf16> to vector<1x8x32xbf16>
    %26 = vector.shape_cast %25 : vector<1x8x32xbf16> to vector<1x8x32xbf16>
    %27 = vector.broadcast %26 : vector<1x8x32xbf16> to vector<4x8x32xbf16>
    %cst = arith.constant dense<0.000000e+00> : vector<4x8x24xf32>
    %28 = tpu.matmul %27, %21, %cst {dimension_numbers = #tpu.dot_dimension_numbers<[2], [1], [1], [2], [0, 0, 0, 1, 1, 2], [0], [0]>} : vector<4x8x32xbf16>, vector<4x32x24xbf16>, vector<4x8x24xf32> -> vector<4x8x24xf32>
    %29 = vector.broadcast %23 : vector<4x1x24xf32> to vector<4x8x24xf32>
    %30 = arith.addf %28, %29 : vector<4x8x24xf32>
    %31 = vector.extract_strided_slice %30 {offsets = [0, 0, 0], sizes = [4, 8, 8], strides = [1, 1, 1]} : vector<4x8x24xf32> to vector<4x8x8xf32>
    %32 = vector.extract_strided_slice %30 {offsets = [0, 0, 8], sizes = [4, 8, 8], strides = [1, 1, 1]} : vector<4x8x24xf32> to vector<4x8x8xf32>
    %33 = vector.extract_strided_slice %30 {offsets = [0, 0, 16], sizes = [4, 8, 8], strides = [1, 1, 1]} : vector<4x8x24xf32> to vector<4x8x8xf32>
    %c0_10 = arith.constant 0 : index
    %c0_11 = arith.constant 0 : index
    %c0_12 = arith.constant 0 : index
    %c0_13 = arith.constant 0 : index
    %34 = vector.load %arg7[%c0_10, %c0_11, %c0_12, %c0_13] : memref<2x4x8x32xbf16, #tpu.memory_space<vmem>>, vector<1x4x8x32xbf16>
    %35 = vector.shape_cast %34 : vector<1x4x8x32xbf16> to vector<4x8x32xbf16>
    %c0_14 = arith.constant 0 : index
    %c0_15 = arith.constant 0 : index
    %c0_16 = arith.constant 0 : index
    %36 = vector.load %arg10[%c0_14, %c0_15, %c0_16] : memref<2x7x64xf32, #tpu.memory_space<vmem>>, vector<1x1x32xf32>
    %37 = vector.shape_cast %36 : vector<1x1x32xf32> to vector<1x32xf32>
    %38 = arith.truncf %31 : vector<4x8x8xf32> to vector<4x8x8xbf16>
    %39 = arith.truncf %32 : vector<4x8x8xf32> to vector<4x8x8xbf16>
    %cst_17 = arith.constant dense<0.000000e+00> : vector<4x8x8xf32>
    %40 = tpu.matmul %38, %39, %cst_17 {dimension_numbers = #tpu.dot_dimension_numbers<[2], [2], [1], [1], [0, 0, 0, 1, 1, 1], [0], [0]>} : vector<4x8x8xbf16>, vector<4x8x8xbf16>, vector<4x8x8xf32> -> vector<4x8x8xf32>
    %cst_18 = arith.constant 0.353553385 : f32
    %41 = vector.broadcast %cst_18 : f32 to vector<4x8x8xf32>
    %42 = arith.mulf %40, %41 : vector<4x8x8xf32>
    %43 = vector.shape_cast %8 : vector<8x8xi1> to vector<1x8x8xi1>
    %cst_19 = arith.constant -1.000000e+10 : f32
    %44 = vector.shape_cast %43 : vector<1x8x8xi1> to vector<1x8x8xi1>
    %45 = vector.broadcast %44 : vector<1x8x8xi1> to vector<4x8x8xi1>
    %46 = vector.broadcast %cst_19 : f32 to vector<4x8x8xf32>
    %47 = arith.select %45, %42, %46 : vector<4x8x8xi1>, vector<4x8x8xf32>
    %cst_20 = arith.constant dense<0xFF800000> : vector<4x8xf32>
    %48 = vector.multi_reduction <maximumf>, %47, %cst_20 [2] : vector<4x8x8xf32> to vector<4x8xf32>
    %49 = vector.shape_cast %48 : vector<4x8xf32> to vector<4x8x1xf32>
    %50 = vector.broadcast %49 : vector<4x8x1xf32> to vector<4x8x8xf32>
    %51 = arith.subf %47, %50 : vector<4x8x8xf32>
    %52 = math.exp %51 : vector<4x8x8xf32>
    %cst_21 = arith.constant dense<0.000000e+00> : vector<4x8xf32>
    %53 = vector.multi_reduction <add>, %52, %cst_21 [2] : vector<4x8x8xf32> to vector<4x8xf32>
    %54 = vector.shape_cast %53 : vector<4x8xf32> to vector<4x8x1xf32>
    %55 = vector.broadcast %54 : vector<4x8x1xf32> to vector<4x8x8xf32>
    %56 = arith.divf %52, %55 : vector<4x8x8xf32>
    %57 = arith.truncf %56 : vector<4x8x8xf32> to vector<4x8x8xbf16>
    %58 = arith.truncf %33 : vector<4x8x8xf32> to vector<4x8x8xbf16>
    %cst_22 = arith.constant dense<0.000000e+00> : vector<4x8x8xf32>
    %59 = tpu.matmul %57, %58, %cst_22 {dimension_numbers = #tpu.dot_dimension_numbers<[2], [1], [1], [2], [0, 0, 0, 1, 1, 2], [0], [0]>} : vector<4x8x8xbf16>, vector<4x8x8xbf16>, vector<4x8x8xf32> -> vector<4x8x8xf32>
    %60 = arith.truncf %59 : vector<4x8x8xf32> to vector<4x8x8xbf16>
    %cst_23 = arith.constant dense<0.000000e+00> : vector<4x8x32xf32>
    %61 = tpu.matmul %60, %35, %cst_23 {dimension_numbers = #tpu.dot_dimension_numbers<[2], [1], [1], [2], [0, 0, 0, 1, 1, 2], [0], [0]>} : vector<4x8x8xbf16>, vector<4x8x32xbf16>, vector<4x8x32xf32> -> vector<4x8x32xf32>
    %cst_24 = arith.constant dense<0.000000e+00> : vector<8x32xf32>
    %62 = vector.multi_reduction <add>, %61, %cst_24 [0] : vector<4x8x32xf32> to vector<8x32xf32>
    %63 = vector.broadcast %37 : vector<1x32xf32> to vector<8x32xf32>
    %64 = arith.addf %62, %63 : vector<8x32xf32>
    %65 = arith.addf %19, %64 : vector<8x32xf32>
    %c0_25 = arith.constant 0 : index
    %c1 = arith.constant 1 : index
    %c0_26 = arith.constant 0 : index
    %66 = vector.load %arg10[%c0_25, %c1, %c0_26] : memref<2x7x64xf32, #tpu.memory_space<vmem>>, vector<1x1x32xf32>
    %67 = vector.shape_cast %66 : vector<1x1x32xf32> to vector<1x32xf32>
    %c0_27 = arith.constant 0 : index
    %c2 = arith.constant 2 : index
    %c0_28 = arith.constant 0 : index
    %68 = vector.load %arg10[%c0_27, %c2, %c0_28] : memref<2x7x64xf32, #tpu.memory_space<vmem>>, vector<1x1x32xf32>
    %69 = vector.shape_cast %68 : vector<1x1x32xf32> to vector<1x32xf32>
    %cst_29 = arith.constant dense<0.000000e+00> : vector<8xf32>
    %70 = vector.multi_reduction <add>, %65, %cst_29 [1] : vector<8x32xf32> to vector<8xf32>
    %71 = vector.shape_cast %70 : vector<8xf32> to vector<8x1xf32>
    %cst_30 = arith.constant 3.200000e+01 : f32
    %72 = vector.broadcast %cst_30 : f32 to vector<8x1xf32>
    %73 = arith.divf %71, %72 : vector<8x1xf32>
    %74 = vector.broadcast %73 : vector<8x1xf32> to vector<8x32xf32>
    %75 = arith.subf %65, %74 : vector<8x32xf32>
    %76 = arith.mulf %75, %75 : vector<8x32xf32>
    %cst_31 = arith.constant dense<0.000000e+00> : vector<8xf32>
    %77 = vector.multi_reduction <add>, %76, %cst_31 [1] : vector<8x32xf32> to vector<8xf32>
    %78 = vector.shape_cast %77 : vector<8xf32> to vector<8x1xf32>
    %cst_32 = arith.constant 3.200000e+01 : f32
    %79 = vector.broadcast %cst_32 : f32 to vector<8x1xf32>
    %80 = arith.divf %78, %79 : vector<8x1xf32>
    %81 = vector.broadcast %73 : vector<8x1xf32> to vector<8x32xf32>
    %82 = arith.subf %65, %81 : vector<8x32xf32>
    %cst_33 = arith.constant 9.99999974E-6 : f32
    %83 = vector.broadcast %cst_33 : f32 to vector<8x1xf32>
    %84 = arith.addf %80, %83 : vector<8x1xf32>
    %85 = math.rsqrt %84 : vector<8x1xf32>
    %86 = vector.broadcast %85 : vector<8x1xf32> to vector<8x32xf32>
    %87 = arith.mulf %82, %86 : vector<8x32xf32>
    %88 = vector.broadcast %67 : vector<1x32xf32> to vector<8x32xf32>
    %89 = arith.mulf %87, %88 : vector<8x32xf32>
    %90 = vector.broadcast %69 : vector<1x32xf32> to vector<8x32xf32>
    %91 = arith.addf %89, %90 : vector<8x32xf32>
    %c0_34 = arith.constant 0 : index
    %c0_35 = arith.constant 0 : index
    %c0_36 = arith.constant 0 : index
    %92 = vector.load %arg8[%c0_34, %c0_35, %c0_36] : memref<2x32x64xbf16, #tpu.memory_space<vmem>>, vector<1x32x64xbf16>
    %93 = vector.shape_cast %92 : vector<1x32x64xbf16> to vector<32x64xbf16>
    %c0_37 = arith.constant 0 : index
    %c3 = arith.constant 3 : index
    %c0_38 = arith.constant 0 : index
    %94 = vector.load %arg10[%c0_37, %c3, %c0_38] : memref<2x7x64xf32, #tpu.memory_space<vmem>>, vector<1x1x64xf32>
    %95 = vector.shape_cast %94 : vector<1x1x64xf32> to vector<1x64xf32>
    %c0_39 = arith.constant 0 : index
    %c0_40 = arith.constant 0 : index
    %c0_41 = arith.constant 0 : index
    %96 = vector.load %arg9[%c0_39, %c0_40, %c0_41] : memref<2x64x32xbf16, #tpu.memory_space<vmem>>, vector<1x64x32xbf16>
    %97 = vector.shape_cast %96 : vector<1x64x32xbf16> to vector<64x32xbf16>
    %c0_42 = arith.constant 0 : index
    %c4 = arith.constant 4 : index
    %c0_43 = arith.constant 0 : index
    %98 = vector.load %arg10[%c0_42, %c4, %c0_43] : memref<2x7x64xf32, #tpu.memory_space<vmem>>, vector<1x1x32xf32>
    %99 = vector.shape_cast %98 : vector<1x1x32xf32> to vector<1x32xf32>
    %100 = arith.truncf %91 : vector<8x32xf32> to vector<8x32xbf16>
    %cst_44 = arith.constant dense<0.000000e+00> : vector<8x64xf32>
    %101 = tpu.matmul %100, %93, %cst_44 {dimension_numbers = #tpu.dot_dimension_numbers<[1], [0], [0], [1], [0, 0, 1, 1], [], []>} : vector<8x32xbf16>, vector<32x64xbf16>, vector<8x64xf32> -> vector<8x64xf32>
    %102 = vector.broadcast %95 : vector<1x64xf32> to vector<8x64xf32>
    %103 = arith.addf %101, %102 : vector<8x64xf32>
    %cst_45 = arith.constant 0.000000e+00 : f32
    %104 = vector.broadcast %cst_45 : f32 to vector<8x64xf32>
    %105 = arith.maximumf %103, %104 : vector<8x64xf32>
    %106 = arith.truncf %105 : vector<8x64xf32> to vector<8x64xbf16>
    %cst_46 = arith.constant dense<0.000000e+00> : vector<8x32xf32>
    %107 = tpu.matmul %106, %97, %cst_46 {dimension_numbers = #tpu.dot_dimension_numbers<[1], [0], [0], [1], [0, 0, 1, 1], [], []>} : vector<8x64xbf16>, vector<64x32xbf16>, vector<8x32xf32> -> vector<8x32xf32>
    %108 = vector.broadcast %99 : vector<1x32xf32> to vector<8x32xf32>
    %109 = arith.addf %107, %108 : vector<8x32xf32>
    %110 = arith.addf %91, %109 : vector<8x32xf32>
    %c0_47 = arith.constant 0 : index
    %c5 = arith.constant 5 : index
    %c0_48 = arith.constant 0 : index
    %111 = vector.load %arg10[%c0_47, %c5, %c0_48] : memref<2x7x64xf32, #tpu.memory_space<vmem>>, vector<1x1x32xf32>
    %112 = vector.shape_cast %111 : vector<1x1x32xf32> to vector<1x32xf32>
    %c0_49 = arith.constant 0 : index
    %c6 = arith.constant 6 : index
    %c0_50 = arith.constant 0 : index
    %113 = vector.load %arg10[%c0_49, %c6, %c0_50] : memref<2x7x64xf32, #tpu.memory_space<vmem>>, vector<1x1x32xf32>
    %114 = vector.shape_cast %113 : vector<1x1x32xf32> to vector<1x32xf32>
    %cst_51 = arith.constant dense<0.000000e+00> : vector<8xf32>
    %115 = vector.multi_reduction <add>, %110, %cst_51 [1] : vector<8x32xf32> to vector<8xf32>
    %116 = vector.shape_cast %115 : vector<8xf32> to vector<8x1xf32>
    %cst_52 = arith.constant 3.200000e+01 : f32
    %117 = vector.broadcast %cst_52 : f32 to vector<8x1xf32>
    %118 = arith.divf %116, %117 : vector<8x1xf32>
    %119 = vector.broadcast %118 : vector<8x1xf32> to vector<8x32xf32>
    %120 = arith.subf %110, %119 : vector<8x32xf32>
    %121 = arith.mulf %120, %120 : vector<8x32xf32>
    %cst_53 = arith.constant dense<0.000000e+00> : vector<8xf32>
    %122 = vector.multi_reduction <add>, %121, %cst_53 [1] : vector<8x32xf32> to vector<8xf32>
    %123 = vector.shape_cast %122 : vector<8xf32> to vector<8x1xf32>
    %cst_54 = arith.constant 3.200000e+01 : f32
    %124 = vector.broadcast %cst_54 : f32 to vector<8x1xf32>
    %125 = arith.divf %123, %124 : vector<8x1xf32>
    %126 = vector.broadcast %118 : vector<8x1xf32> to vector<8x32xf32>
    %127 = arith.subf %110, %126 : vector<8x32xf32>
    %cst_55 = arith.constant 9.99999974E-6 : f32
    %128 = vector.broadcast %cst_55 : f32 to vector<8x1xf32>
    %129 = arith.addf %125, %128 : vector<8x1xf32>
    %130 = math.rsqrt %129 : vector<8x1xf32>
    %131 = vector.broadcast %130 : vector<8x1xf32> to vector<8x32xf32>
    %132 = arith.mulf %127, %131 : vector<8x32xf32>
    %133 = vector.broadcast %112 : vector<1x32xf32> to vector<8x32xf32>
    %134 = arith.mulf %132, %133 : vector<8x32xf32>
    %135 = vector.broadcast %114 : vector<1x32xf32> to vector<8x32xf32>
    %136 = arith.addf %134, %135 : vector<8x32xf32>
    %c1_56 = arith.constant 1 : index
    %c0_57 = arith.constant 0 : index
    %c0_58 = arith.constant 0 : index
    %c0_59 = arith.constant 0 : index
    %137 = vector.load %arg5[%c1_56, %c0_57, %c0_58, %c0_59] : memref<2x4x32x24xbf16, #tpu.memory_space<vmem>>, vector<1x4x32x24xbf16>
    %138 = vector.shape_cast %137 : vector<1x4x32x24xbf16> to vector<4x32x24xbf16>
    %c1_60 = arith.constant 1 : index
    %c0_61 = arith.constant 0 : index
    %c0_62 = arith.constant 0 : index
    %c0_63 = arith.constant 0 : index
    %139 = vector.load %arg6[%c1_60, %c0_61, %c0_62, %c0_63] : memref<2x4x1x24xf32, #tpu.memory_space<vmem>>, vector<1x4x1x24xf32>
    %140 = vector.shape_cast %139 : vector<1x4x1x24xf32> to vector<4x1x24xf32>
    %141 = arith.truncf %136 : vector<8x32xf32> to vector<8x32xbf16>
    %142 = vector.shape_cast %141 : vector<8x32xbf16> to vector<1x8x32xbf16>
    %143 = vector.shape_cast %142 : vector<1x8x32xbf16> to vector<1x8x32xbf16>
    %144 = vector.broadcast %143 : vector<1x8x32xbf16> to vector<4x8x32xbf16>
    %cst_64 = arith.constant dense<0.000000e+00> : vector<4x8x24xf32>
    %145 = tpu.matmul %144, %138, %cst_64 {dimension_numbers = #tpu.dot_dimension_numbers<[2], [1], [1], [2], [0, 0, 0, 1, 1, 2], [0], [0]>} : vector<4x8x32xbf16>, vector<4x32x24xbf16>, vector<4x8x24xf32> -> vector<4x8x24xf32>
    %146 = vector.broadcast %140 : vector<4x1x24xf32> to vector<4x8x24xf32>
    %147 = arith.addf %145, %146 : vector<4x8x24xf32>
    %148 = vector.extract_strided_slice %147 {offsets = [0, 0, 0], sizes = [4, 8, 8], strides = [1, 1, 1]} : vector<4x8x24xf32> to vector<4x8x8xf32>
    %149 = vector.extract_strided_slice %147 {offsets = [0, 0, 8], sizes = [4, 8, 8], strides = [1, 1, 1]} : vector<4x8x24xf32> to vector<4x8x8xf32>
    %150 = vector.extract_strided_slice %147 {offsets = [0, 0, 16], sizes = [4, 8, 8], strides = [1, 1, 1]} : vector<4x8x24xf32> to vector<4x8x8xf32>
    %c1_65 = arith.constant 1 : index
    %c0_66 = arith.constant 0 : index
    %c0_67 = arith.constant 0 : index
    %c0_68 = arith.constant 0 : index
    %151 = vector.load %arg7[%c1_65, %c0_66, %c0_67, %c0_68] : memref<2x4x8x32xbf16, #tpu.memory_space<vmem>>, vector<1x4x8x32xbf16>
    %152 = vector.shape_cast %151 : vector<1x4x8x32xbf16> to vector<4x8x32xbf16>
    %c1_69 = arith.constant 1 : index
    %c0_70 = arith.constant 0 : index
    %c0_71 = arith.constant 0 : index
    %153 = vector.load %arg10[%c1_69, %c0_70, %c0_71] : memref<2x7x64xf32, #tpu.memory_space<vmem>>, vector<1x1x32xf32>
    %154 = vector.shape_cast %153 : vector<1x1x32xf32> to vector<1x32xf32>
    %155 = arith.truncf %148 : vector<4x8x8xf32> to vector<4x8x8xbf16>
    %156 = arith.truncf %149 : vector<4x8x8xf32> to vector<4x8x8xbf16>
    %cst_72 = arith.constant dense<0.000000e+00> : vector<4x8x8xf32>
    %157 = tpu.matmul %155, %156, %cst_72 {dimension_numbers = #tpu.dot_dimension_numbers<[2], [2], [1], [1], [0, 0, 0, 1, 1, 1], [0], [0]>} : vector<4x8x8xbf16>, vector<4x8x8xbf16>, vector<4x8x8xf32> -> vector<4x8x8xf32>
    %cst_73 = arith.constant 0.353553385 : f32
    %158 = vector.broadcast %cst_73 : f32 to vector<4x8x8xf32>
    %159 = arith.mulf %157, %158 : vector<4x8x8xf32>
    %160 = vector.shape_cast %8 : vector<8x8xi1> to vector<1x8x8xi1>
    %cst_74 = arith.constant -1.000000e+10 : f32
    %161 = vector.shape_cast %160 : vector<1x8x8xi1> to vector<1x8x8xi1>
    %162 = vector.broadcast %161 : vector<1x8x8xi1> to vector<4x8x8xi1>
    %163 = vector.broadcast %cst_74 : f32 to vector<4x8x8xf32>
    %164 = arith.select %162, %159, %163 : vector<4x8x8xi1>, vector<4x8x8xf32>
    %cst_75 = arith.constant dense<0xFF800000> : vector<4x8xf32>
    %165 = vector.multi_reduction <maximumf>, %164, %cst_75 [2] : vector<4x8x8xf32> to vector<4x8xf32>
    %166 = vector.shape_cast %165 : vector<4x8xf32> to vector<4x8x1xf32>
    %167 = vector.broadcast %166 : vector<4x8x1xf32> to vector<4x8x8xf32>
    %168 = arith.subf %164, %167 : vector<4x8x8xf32>
    %169 = math.exp %168 : vector<4x8x8xf32>
    %cst_76 = arith.constant dense<0.000000e+00> : vector<4x8xf32>
    %170 = vector.multi_reduction <add>, %169, %cst_76 [2] : vector<4x8x8xf32> to vector<4x8xf32>
    %171 = vector.shape_cast %170 : vector<4x8xf32> to vector<4x8x1xf32>
    %172 = vector.broadcast %171 : vector<4x8x1xf32> to vector<4x8x8xf32>
    %173 = arith.divf %169, %172 : vector<4x8x8xf32>
    %174 = arith.truncf %173 : vector<4x8x8xf32> to vector<4x8x8xbf16>
    %175 = arith.truncf %150 : vector<4x8x8xf32> to vector<4x8x8xbf16>
    %cst_77 = arith.constant dense<0.000000e+00> : vector<4x8x8xf32>
    %176 = tpu.matmul %174, %175, %cst_77 {dimension_numbers = #tpu.dot_dimension_numbers<[2], [1], [1], [2], [0, 0, 0, 1, 1, 2], [0], [0]>} : vector<4x8x8xbf16>, vector<4x8x8xbf16>, vector<4x8x8xf32> -> vector<4x8x8xf32>
    %177 = arith.truncf %176 : vector<4x8x8xf32> to vector<4x8x8xbf16>
    %cst_78 = arith.constant dense<0.000000e+00> : vector<4x8x32xf32>
    %178 = tpu.matmul %177, %152, %cst_78 {dimension_numbers = #tpu.dot_dimension_numbers<[2], [1], [1], [2], [0, 0, 0, 1, 1, 2], [0], [0]>} : vector<4x8x8xbf16>, vector<4x8x32xbf16>, vector<4x8x32xf32> -> vector<4x8x32xf32>
    %cst_79 = arith.constant dense<0.000000e+00> : vector<8x32xf32>
    %179 = vector.multi_reduction <add>, %178, %cst_79 [0] : vector<4x8x32xf32> to vector<8x32xf32>
    %180 = vector.broadcast %154 : vector<1x32xf32> to vector<8x32xf32>
    %181 = arith.addf %179, %180 : vector<8x32xf32>
    %182 = arith.addf %136, %181 : vector<8x32xf32>
    %c1_80 = arith.constant 1 : index
    %c1_81 = arith.constant 1 : index
    %c0_82 = arith.constant 0 : index
    %183 = vector.load %arg10[%c1_80, %c1_81, %c0_82] : memref<2x7x64xf32, #tpu.memory_space<vmem>>, vector<1x1x32xf32>
    %184 = vector.shape_cast %183 : vector<1x1x32xf32> to vector<1x32xf32>
    %c1_83 = arith.constant 1 : index
    %c2_84 = arith.constant 2 : index
    %c0_85 = arith.constant 0 : index
    %185 = vector.load %arg10[%c1_83, %c2_84, %c0_85] : memref<2x7x64xf32, #tpu.memory_space<vmem>>, vector<1x1x32xf32>
    %186 = vector.shape_cast %185 : vector<1x1x32xf32> to vector<1x32xf32>
    %cst_86 = arith.constant dense<0.000000e+00> : vector<8xf32>
    %187 = vector.multi_reduction <add>, %182, %cst_86 [1] : vector<8x32xf32> to vector<8xf32>
    %188 = vector.shape_cast %187 : vector<8xf32> to vector<8x1xf32>
    %cst_87 = arith.constant 3.200000e+01 : f32
    %189 = vector.broadcast %cst_87 : f32 to vector<8x1xf32>
    %190 = arith.divf %188, %189 : vector<8x1xf32>
    %191 = vector.broadcast %190 : vector<8x1xf32> to vector<8x32xf32>
    %192 = arith.subf %182, %191 : vector<8x32xf32>
    %193 = arith.mulf %192, %192 : vector<8x32xf32>
    %cst_88 = arith.constant dense<0.000000e+00> : vector<8xf32>
    %194 = vector.multi_reduction <add>, %193, %cst_88 [1] : vector<8x32xf32> to vector<8xf32>
    %195 = vector.shape_cast %194 : vector<8xf32> to vector<8x1xf32>
    %cst_89 = arith.constant 3.200000e+01 : f32
    %196 = vector.broadcast %cst_89 : f32 to vector<8x1xf32>
    %197 = arith.divf %195, %196 : vector<8x1xf32>
    %198 = vector.broadcast %190 : vector<8x1xf32> to vector<8x32xf32>
    %199 = arith.subf %182, %198 : vector<8x32xf32>
    %cst_90 = arith.constant 9.99999974E-6 : f32
    %200 = vector.broadcast %cst_90 : f32 to vector<8x1xf32>
    %201 = arith.addf %197, %200 : vector<8x1xf32>
    %202 = math.rsqrt %201 : vector<8x1xf32>
    %203 = vector.broadcast %202 : vector<8x1xf32> to vector<8x32xf32>
    %204 = arith.mulf %199, %203 : vector<8x32xf32>
    %205 = vector.broadcast %184 : vector<1x32xf32> to vector<8x32xf32>
    %206 = arith.mulf %204, %205 : vector<8x32xf32>
    %207 = vector.broadcast %186 : vector<1x32xf32> to vector<8x32xf32>
    %208 = arith.addf %206, %207 : vector<8x32xf32>
    %c1_91 = arith.constant 1 : index
    %c0_92 = arith.constant 0 : index
    %c0_93 = arith.constant 0 : index
    %209 = vector.load %arg8[%c1_91, %c0_92, %c0_93] : memref<2x32x64xbf16, #tpu.memory_space<vmem>>, vector<1x32x64xbf16>
    %210 = vector.shape_cast %209 : vector<1x32x64xbf16> to vector<32x64xbf16>
    %c1_94 = arith.constant 1 : index
    %c3_95 = arith.constant 3 : index
    %c0_96 = arith.constant 0 : index
    %211 = vector.load %arg10[%c1_94, %c3_95, %c0_96] : memref<2x7x64xf32, #tpu.memory_space<vmem>>, vector<1x1x64xf32>
    %212 = vector.shape_cast %211 : vector<1x1x64xf32> to vector<1x64xf32>
    %c1_97 = arith.constant 1 : index
    %c0_98 = arith.constant 0 : index
    %c0_99 = arith.constant 0 : index
    %213 = vector.load %arg9[%c1_97, %c0_98, %c0_99] : memref<2x64x32xbf16, #tpu.memory_space<vmem>>, vector<1x64x32xbf16>
    %214 = vector.shape_cast %213 : vector<1x64x32xbf16> to vector<64x32xbf16>
    %c1_100 = arith.constant 1 : index
    %c4_101 = arith.constant 4 : index
    %c0_102 = arith.constant 0 : index
    %215 = vector.load %arg10[%c1_100, %c4_101, %c0_102] : memref<2x7x64xf32, #tpu.memory_space<vmem>>, vector<1x1x32xf32>
    %216 = vector.shape_cast %215 : vector<1x1x32xf32> to vector<1x32xf32>
    %217 = arith.truncf %208 : vector<8x32xf32> to vector<8x32xbf16>
    %cst_103 = arith.constant dense<0.000000e+00> : vector<8x64xf32>
    %218 = tpu.matmul %217, %210, %cst_103 {dimension_numbers = #tpu.dot_dimension_numbers<[1], [0], [0], [1], [0, 0, 1, 1], [], []>} : vector<8x32xbf16>, vector<32x64xbf16>, vector<8x64xf32> -> vector<8x64xf32>
    %219 = vector.broadcast %212 : vector<1x64xf32> to vector<8x64xf32>
    %220 = arith.addf %218, %219 : vector<8x64xf32>
    %cst_104 = arith.constant 0.000000e+00 : f32
    %221 = vector.broadcast %cst_104 : f32 to vector<8x64xf32>
    %222 = arith.maximumf %220, %221 : vector<8x64xf32>
    %223 = arith.truncf %222 : vector<8x64xf32> to vector<8x64xbf16>
    %cst_105 = arith.constant dense<0.000000e+00> : vector<8x32xf32>
    %224 = tpu.matmul %223, %214, %cst_105 {dimension_numbers = #tpu.dot_dimension_numbers<[1], [0], [0], [1], [0, 0, 1, 1], [], []>} : vector<8x64xbf16>, vector<64x32xbf16>, vector<8x32xf32> -> vector<8x32xf32>
    %225 = vector.broadcast %216 : vector<1x32xf32> to vector<8x32xf32>
    %226 = arith.addf %224, %225 : vector<8x32xf32>
    %227 = arith.addf %208, %226 : vector<8x32xf32>
    %c1_106 = arith.constant 1 : index
    %c5_107 = arith.constant 5 : index
    %c0_108 = arith.constant 0 : index
    %228 = vector.load %arg10[%c1_106, %c5_107, %c0_108] : memref<2x7x64xf32, #tpu.memory_space<vmem>>, vector<1x1x32xf32>
    %229 = vector.shape_cast %228 : vector<1x1x32xf32> to vector<1x32xf32>
    %c1_109 = arith.constant 1 : index
    %c6_110 = arith.constant 6 : index
    %c0_111 = arith.constant 0 : index
    %230 = vector.load %arg10[%c1_109, %c6_110, %c0_111] : memref<2x7x64xf32, #tpu.memory_space<vmem>>, vector<1x1x32xf32>
    %231 = vector.shape_cast %230 : vector<1x1x32xf32> to vector<1x32xf32>
    %cst_112 = arith.constant dense<0.000000e+00> : vector<8xf32>
    %232 = vector.multi_reduction <add>, %227, %cst_112 [1] : vector<8x32xf32> to vector<8xf32>
    %233 = vector.shape_cast %232 : vector<8xf32> to vector<8x1xf32>
    %cst_113 = arith.constant 3.200000e+01 : f32
    %234 = vector.broadcast %cst_113 : f32 to vector<8x1xf32>
    %235 = arith.divf %233, %234 : vector<8x1xf32>
    %236 = vector.broadcast %235 : vector<8x1xf32> to vector<8x32xf32>
    %237 = arith.subf %227, %236 : vector<8x32xf32>
    %238 = arith.mulf %237, %237 : vector<8x32xf32>
    %cst_114 = arith.constant dense<0.000000e+00> : vector<8xf32>
    %239 = vector.multi_reduction <add>, %238, %cst_114 [1] : vector<8x32xf32> to vector<8xf32>
    %240 = vector.shape_cast %239 : vector<8xf32> to vector<8x1xf32>
    %cst_115 = arith.constant 3.200000e+01 : f32
    %241 = vector.broadcast %cst_115 : f32 to vector<8x1xf32>
    %242 = arith.divf %240, %241 : vector<8x1xf32>
    %243 = vector.broadcast %235 : vector<8x1xf32> to vector<8x32xf32>
    %244 = arith.subf %227, %243 : vector<8x32xf32>
    %cst_116 = arith.constant 9.99999974E-6 : f32
    %245 = vector.broadcast %cst_116 : f32 to vector<8x1xf32>
    %246 = arith.addf %242, %245 : vector<8x1xf32>
    %247 = math.rsqrt %246 : vector<8x1xf32>
    %248 = vector.broadcast %247 : vector<8x1xf32> to vector<8x32xf32>
    %249 = arith.mulf %244, %248 : vector<8x32xf32>
    %250 = vector.broadcast %229 : vector<1x32xf32> to vector<8x32xf32>
    %251 = arith.mulf %249, %250 : vector<8x32xf32>
    %252 = vector.broadcast %231 : vector<1x32xf32> to vector<8x32xf32>
    %253 = arith.addf %251, %252 : vector<8x32xf32>
    %c0_117 = arith.constant 0 : index
    %c0_118 = arith.constant 0 : index
    %c0_119 = arith.constant 0 : index
    %254 = vector.load %arg4[%c0_117, %c0_118, %c0_119] : memref<1x8x32xf32, #tpu.memory_space<vmem>>, vector<1x8x32xf32>
    %255 = vector.shape_cast %254 : vector<1x8x32xf32> to vector<8x32xf32>
    %c0_120 = arith.constant 0 : index
    %c0_121 = arith.constant 0 : index
    %c0_122 = arith.constant 0 : index
    %c0_123 = arith.constant 0 : index
    %256 = vector.load %arg11[%c0_120, %c0_121, %c0_122, %c0_123] : memref<2x4x32x48xbf16, #tpu.memory_space<vmem>>, vector<1x4x32x24xbf16>
    %257 = vector.shape_cast %256 : vector<1x4x32x24xbf16> to vector<4x32x24xbf16>
    %c0_124 = arith.constant 0 : index
    %c0_125 = arith.constant 0 : index
    %c0_126 = arith.constant 0 : index
    %c0_127 = arith.constant 0 : index
    %258 = vector.load %arg12[%c0_124, %c0_125, %c0_126, %c0_127] : memref<2x4x1x48xf32, #tpu.memory_space<vmem>>, vector<1x4x1x24xf32>
    %259 = vector.shape_cast %258 : vector<1x4x1x24xf32> to vector<4x1x24xf32>
    %260 = arith.truncf %255 : vector<8x32xf32> to vector<8x32xbf16>
    %261 = vector.shape_cast %260 : vector<8x32xbf16> to vector<1x8x32xbf16>
    %262 = vector.shape_cast %261 : vector<1x8x32xbf16> to vector<1x8x32xbf16>
    %263 = vector.broadcast %262 : vector<1x8x32xbf16> to vector<4x8x32xbf16>
    %cst_128 = arith.constant dense<0.000000e+00> : vector<4x8x24xf32>
    %264 = tpu.matmul %263, %257, %cst_128 {dimension_numbers = #tpu.dot_dimension_numbers<[2], [1], [1], [2], [0, 0, 0, 1, 1, 2], [0], [0]>} : vector<4x8x32xbf16>, vector<4x32x24xbf16>, vector<4x8x24xf32> -> vector<4x8x24xf32>
    %265 = vector.broadcast %259 : vector<4x1x24xf32> to vector<4x8x24xf32>
    %266 = arith.addf %264, %265 : vector<4x8x24xf32>
    %267 = vector.extract_strided_slice %266 {offsets = [0, 0, 0], sizes = [4, 8, 8], strides = [1, 1, 1]} : vector<4x8x24xf32> to vector<4x8x8xf32>
    %268 = vector.extract_strided_slice %266 {offsets = [0, 0, 8], sizes = [4, 8, 8], strides = [1, 1, 1]} : vector<4x8x24xf32> to vector<4x8x8xf32>
    %269 = vector.extract_strided_slice %266 {offsets = [0, 0, 16], sizes = [4, 8, 8], strides = [1, 1, 1]} : vector<4x8x24xf32> to vector<4x8x8xf32>
    %c0_129 = arith.constant 0 : index
    %c0_130 = arith.constant 0 : index
    %c0_131 = arith.constant 0 : index
    %c0_132 = arith.constant 0 : index
    %270 = vector.load %arg13[%c0_129, %c0_130, %c0_131, %c0_132] : memref<2x4x8x32xbf16, #tpu.memory_space<vmem>>, vector<1x4x8x32xbf16>
    %271 = vector.shape_cast %270 : vector<1x4x8x32xbf16> to vector<4x8x32xbf16>
    %c0_133 = arith.constant 0 : index
    %c0_134 = arith.constant 0 : index
    %c0_135 = arith.constant 0 : index
    %272 = vector.load %arg17[%c0_133, %c0_134, %c0_135] : memref<2x10x64xf32, #tpu.memory_space<vmem>>, vector<1x1x32xf32>
    %273 = vector.shape_cast %272 : vector<1x1x32xf32> to vector<1x32xf32>
    %274 = arith.truncf %267 : vector<4x8x8xf32> to vector<4x8x8xbf16>
    %275 = arith.truncf %268 : vector<4x8x8xf32> to vector<4x8x8xbf16>
    %cst_136 = arith.constant dense<0.000000e+00> : vector<4x8x8xf32>
    %276 = tpu.matmul %274, %275, %cst_136 {dimension_numbers = #tpu.dot_dimension_numbers<[2], [2], [1], [1], [0, 0, 0, 1, 1, 1], [0], [0]>} : vector<4x8x8xbf16>, vector<4x8x8xbf16>, vector<4x8x8xf32> -> vector<4x8x8xf32>
    %cst_137 = arith.constant 0.353553385 : f32
    %277 = vector.broadcast %cst_137 : f32 to vector<4x8x8xf32>
    %278 = arith.mulf %276, %277 : vector<4x8x8xf32>
    %279 = vector.shape_cast %14 : vector<8x8xi1> to vector<1x8x8xi1>
    %cst_138 = arith.constant -1.000000e+10 : f32
    %280 = vector.shape_cast %279 : vector<1x8x8xi1> to vector<1x8x8xi1>
    %281 = vector.broadcast %280 : vector<1x8x8xi1> to vector<4x8x8xi1>
    %282 = vector.broadcast %cst_138 : f32 to vector<4x8x8xf32>
    %283 = arith.select %281, %278, %282 : vector<4x8x8xi1>, vector<4x8x8xf32>
    %cst_139 = arith.constant dense<0xFF800000> : vector<4x8xf32>
    %284 = vector.multi_reduction <maximumf>, %283, %cst_139 [2] : vector<4x8x8xf32> to vector<4x8xf32>
    %285 = vector.shape_cast %284 : vector<4x8xf32> to vector<4x8x1xf32>
    %286 = vector.broadcast %285 : vector<4x8x1xf32> to vector<4x8x8xf32>
    %287 = arith.subf %283, %286 : vector<4x8x8xf32>
    %288 = math.exp %287 : vector<4x8x8xf32>
    %cst_140 = arith.constant dense<0.000000e+00> : vector<4x8xf32>
    %289 = vector.multi_reduction <add>, %288, %cst_140 [2] : vector<4x8x8xf32> to vector<4x8xf32>
    %290 = vector.shape_cast %289 : vector<4x8xf32> to vector<4x8x1xf32>
    %291 = vector.broadcast %290 : vector<4x8x1xf32> to vector<4x8x8xf32>
    %292 = arith.divf %288, %291 : vector<4x8x8xf32>
    %293 = arith.truncf %292 : vector<4x8x8xf32> to vector<4x8x8xbf16>
    %294 = arith.truncf %269 : vector<4x8x8xf32> to vector<4x8x8xbf16>
    %cst_141 = arith.constant dense<0.000000e+00> : vector<4x8x8xf32>
    %295 = tpu.matmul %293, %294, %cst_141 {dimension_numbers = #tpu.dot_dimension_numbers<[2], [1], [1], [2], [0, 0, 0, 1, 1, 2], [0], [0]>} : vector<4x8x8xbf16>, vector<4x8x8xbf16>, vector<4x8x8xf32> -> vector<4x8x8xf32>
    %296 = arith.truncf %295 : vector<4x8x8xf32> to vector<4x8x8xbf16>
    %cst_142 = arith.constant dense<0.000000e+00> : vector<4x8x32xf32>
    %297 = tpu.matmul %296, %271, %cst_142 {dimension_numbers = #tpu.dot_dimension_numbers<[2], [1], [1], [2], [0, 0, 0, 1, 1, 2], [0], [0]>} : vector<4x8x8xbf16>, vector<4x8x32xbf16>, vector<4x8x32xf32> -> vector<4x8x32xf32>
    %cst_143 = arith.constant dense<0.000000e+00> : vector<8x32xf32>
    %298 = vector.multi_reduction <add>, %297, %cst_143 [0] : vector<4x8x32xf32> to vector<8x32xf32>
    %299 = vector.broadcast %273 : vector<1x32xf32> to vector<8x32xf32>
    %300 = arith.addf %298, %299 : vector<8x32xf32>
    %301 = arith.addf %255, %300 : vector<8x32xf32>
    %c0_144 = arith.constant 0 : index
    %c1_145 = arith.constant 1 : index
    %c0_146 = arith.constant 0 : index
    %302 = vector.load %arg17[%c0_144, %c1_145, %c0_146] : memref<2x10x64xf32, #tpu.memory_space<vmem>>, vector<1x1x32xf32>
    %303 = vector.shape_cast %302 : vector<1x1x32xf32> to vector<1x32xf32>
    %c0_147 = arith.constant 0 : index
    %c2_148 = arith.constant 2 : index
    %c0_149 = arith.constant 0 : index
    %304 = vector.load %arg17[%c0_147, %c2_148, %c0_149] : memref<2x10x64xf32, #tpu.memory_space<vmem>>, vector<1x1x32xf32>
    %305 = vector.shape_cast %304 : vector<1x1x32xf32> to vector<1x32xf32>
    %cst_150 = arith.constant dense<0.000000e+00> : vector<8xf32>
    %306 = vector.multi_reduction <add>, %301, %cst_150 [1] : vector<8x32xf32> to vector<8xf32>
    %307 = vector.shape_cast %306 : vector<8xf32> to vector<8x1xf32>
    %cst_151 = arith.constant 3.200000e+01 : f32
    %308 = vector.broadcast %cst_151 : f32 to vector<8x1xf32>
    %309 = arith.divf %307, %308 : vector<8x1xf32>
    %310 = vector.broadcast %309 : vector<8x1xf32> to vector<8x32xf32>
    %311 = arith.subf %301, %310 : vector<8x32xf32>
    %312 = arith.mulf %311, %311 : vector<8x32xf32>
    %cst_152 = arith.constant dense<0.000000e+00> : vector<8xf32>
    %313 = vector.multi_reduction <add>, %312, %cst_152 [1] : vector<8x32xf32> to vector<8xf32>
    %314 = vector.shape_cast %313 : vector<8xf32> to vector<8x1xf32>
    %cst_153 = arith.constant 3.200000e+01 : f32
    %315 = vector.broadcast %cst_153 : f32 to vector<8x1xf32>
    %316 = arith.divf %314, %315 : vector<8x1xf32>
    %317 = vector.broadcast %309 : vector<8x1xf32> to vector<8x32xf32>
    %318 = arith.subf %301, %317 : vector<8x32xf32>
    %cst_154 = arith.constant 9.99999974E-6 : f32
    %319 = vector.broadcast %cst_154 : f32 to vector<8x1xf32>
    %320 = arith.addf %316, %319 : vector<8x1xf32>
    %321 = math.rsqrt %320 : vector<8x1xf32>
    %322 = vector.broadcast %321 : vector<8x1xf32> to vector<8x32xf32>
    %323 = arith.mulf %318, %322 : vector<8x32xf32>
    %324 = vector.broadcast %303 : vector<1x32xf32> to vector<8x32xf32>
    %325 = arith.mulf %323, %324 : vector<8x32xf32>
    %326 = vector.broadcast %305 : vector<1x32xf32> to vector<8x32xf32>
    %327 = arith.addf %325, %326 : vector<8x32xf32>
    %c0_155 = arith.constant 0 : index
    %c0_156 = arith.constant 0 : index
    %c0_157 = arith.constant 0 : index
    %c24 = arith.constant 24 : index
    %328 = vector.load %arg11[%c0_155, %c0_156, %c0_157, %c24] : memref<2x4x32x48xbf16, #tpu.memory_space<vmem>>, vector<1x4x32x8xbf16>
    %329 = vector.shape_cast %328 : vector<1x4x32x8xbf16> to vector<4x32x8xbf16>
    %c0_158 = arith.constant 0 : index
    %c0_159 = arith.constant 0 : index
    %c0_160 = arith.constant 0 : index
    %c24_161 = arith.constant 24 : index
    %330 = vector.load %arg12[%c0_158, %c0_159, %c0_160, %c24_161] : memref<2x4x1x48xf32, #tpu.memory_space<vmem>>, vector<1x4x1x8xf32>
    %331 = vector.shape_cast %330 : vector<1x4x1x8xf32> to vector<4x1x8xf32>
    %332 = arith.truncf %327 : vector<8x32xf32> to vector<8x32xbf16>
    %333 = vector.shape_cast %332 : vector<8x32xbf16> to vector<1x8x32xbf16>
    %334 = vector.shape_cast %333 : vector<1x8x32xbf16> to vector<1x8x32xbf16>
    %335 = vector.broadcast %334 : vector<1x8x32xbf16> to vector<4x8x32xbf16>
    %cst_162 = arith.constant dense<0.000000e+00> : vector<4x8x8xf32>
    %336 = tpu.matmul %335, %329, %cst_162 {dimension_numbers = #tpu.dot_dimension_numbers<[2], [1], [1], [2], [0, 0, 0, 1, 1, 2], [0], [0]>} : vector<4x8x32xbf16>, vector<4x32x8xbf16>, vector<4x8x8xf32> -> vector<4x8x8xf32>
    %337 = vector.broadcast %331 : vector<4x1x8xf32> to vector<4x8x8xf32>
    %338 = arith.addf %336, %337 : vector<4x8x8xf32>
    %c0_163 = arith.constant 0 : index
    %c0_164 = arith.constant 0 : index
    %c0_165 = arith.constant 0 : index
    %c32 = arith.constant 32 : index
    %339 = vector.load %arg11[%c0_163, %c0_164, %c0_165, %c32] : memref<2x4x32x48xbf16, #tpu.memory_space<vmem>>, vector<1x4x32x16xbf16>
    %340 = vector.shape_cast %339 : vector<1x4x32x16xbf16> to vector<4x32x16xbf16>
    %c0_166 = arith.constant 0 : index
    %c0_167 = arith.constant 0 : index
    %c0_168 = arith.constant 0 : index
    %c32_169 = arith.constant 32 : index
    %341 = vector.load %arg12[%c0_166, %c0_167, %c0_168, %c32_169] : memref<2x4x1x48xf32, #tpu.memory_space<vmem>>, vector<1x4x1x16xf32>
    %342 = vector.shape_cast %341 : vector<1x4x1x16xf32> to vector<4x1x16xf32>
    %343 = arith.truncf %253 : vector<8x32xf32> to vector<8x32xbf16>
    %344 = vector.shape_cast %343 : vector<8x32xbf16> to vector<1x8x32xbf16>
    %345 = vector.shape_cast %344 : vector<1x8x32xbf16> to vector<1x8x32xbf16>
    %346 = vector.broadcast %345 : vector<1x8x32xbf16> to vector<4x8x32xbf16>
    %cst_170 = arith.constant dense<0.000000e+00> : vector<4x8x16xf32>
    %347 = tpu.matmul %346, %340, %cst_170 {dimension_numbers = #tpu.dot_dimension_numbers<[2], [1], [1], [2], [0, 0, 0, 1, 1, 2], [0], [0]>} : vector<4x8x32xbf16>, vector<4x32x16xbf16>, vector<4x8x16xf32> -> vector<4x8x16xf32>
    %348 = vector.broadcast %342 : vector<4x1x16xf32> to vector<4x8x16xf32>
    %349 = arith.addf %347, %348 : vector<4x8x16xf32>
    %350 = vector.extract_strided_slice %349 {offsets = [0, 0, 0], sizes = [4, 8, 8], strides = [1, 1, 1]} : vector<4x8x16xf32> to vector<4x8x8xf32>
    %351 = vector.extract_strided_slice %349 {offsets = [0, 0, 8], sizes = [4, 8, 8], strides = [1, 1, 1]} : vector<4x8x16xf32> to vector<4x8x8xf32>
    %c0_171 = arith.constant 0 : index
    %c0_172 = arith.constant 0 : index
    %c0_173 = arith.constant 0 : index
    %c0_174 = arith.constant 0 : index
    %352 = vector.load %arg14[%c0_171, %c0_172, %c0_173, %c0_174] : memref<2x4x8x32xbf16, #tpu.memory_space<vmem>>, vector<1x4x8x32xbf16>
    %353 = vector.shape_cast %352 : vector<1x4x8x32xbf16> to vector<4x8x32xbf16>
    %c0_175 = arith.constant 0 : index
    %c3_176 = arith.constant 3 : index
    %c0_177 = arith.constant 0 : index
    %354 = vector.load %arg17[%c0_175, %c3_176, %c0_177] : memref<2x10x64xf32, #tpu.memory_space<vmem>>, vector<1x1x32xf32>
    %355 = vector.shape_cast %354 : vector<1x1x32xf32> to vector<1x32xf32>
    %356 = arith.truncf %338 : vector<4x8x8xf32> to vector<4x8x8xbf16>
    %357 = arith.truncf %350 : vector<4x8x8xf32> to vector<4x8x8xbf16>
    %cst_178 = arith.constant dense<0.000000e+00> : vector<4x8x8xf32>
    %358 = tpu.matmul %356, %357, %cst_178 {dimension_numbers = #tpu.dot_dimension_numbers<[2], [2], [1], [1], [0, 0, 0, 1, 1, 1], [0], [0]>} : vector<4x8x8xbf16>, vector<4x8x8xbf16>, vector<4x8x8xf32> -> vector<4x8x8xf32>
    %cst_179 = arith.constant 0.353553385 : f32
    %359 = vector.broadcast %cst_179 : f32 to vector<4x8x8xf32>
    %360 = arith.mulf %358, %359 : vector<4x8x8xf32>
    %361 = vector.shape_cast %17 : vector<8x8xi1> to vector<1x8x8xi1>
    %cst_180 = arith.constant -1.000000e+10 : f32
    %362 = vector.shape_cast %361 : vector<1x8x8xi1> to vector<1x8x8xi1>
    %363 = vector.broadcast %362 : vector<1x8x8xi1> to vector<4x8x8xi1>
    %364 = vector.broadcast %cst_180 : f32 to vector<4x8x8xf32>
    %365 = arith.select %363, %360, %364 : vector<4x8x8xi1>, vector<4x8x8xf32>
    %cst_181 = arith.constant dense<0xFF800000> : vector<4x8xf32>
    %366 = vector.multi_reduction <maximumf>, %365, %cst_181 [2] : vector<4x8x8xf32> to vector<4x8xf32>
    %367 = vector.shape_cast %366 : vector<4x8xf32> to vector<4x8x1xf32>
    %368 = vector.broadcast %367 : vector<4x8x1xf32> to vector<4x8x8xf32>
    %369 = arith.subf %365, %368 : vector<4x8x8xf32>
    %370 = math.exp %369 : vector<4x8x8xf32>
    %cst_182 = arith.constant dense<0.000000e+00> : vector<4x8xf32>
    %371 = vector.multi_reduction <add>, %370, %cst_182 [2] : vector<4x8x8xf32> to vector<4x8xf32>
    %372 = vector.shape_cast %371 : vector<4x8xf32> to vector<4x8x1xf32>
    %373 = vector.broadcast %372 : vector<4x8x1xf32> to vector<4x8x8xf32>
    %374 = arith.divf %370, %373 : vector<4x8x8xf32>
    %375 = arith.truncf %374 : vector<4x8x8xf32> to vector<4x8x8xbf16>
    %376 = arith.truncf %351 : vector<4x8x8xf32> to vector<4x8x8xbf16>
    %cst_183 = arith.constant dense<0.000000e+00> : vector<4x8x8xf32>
    %377 = tpu.matmul %375, %376, %cst_183 {dimension_numbers = #tpu.dot_dimension_numbers<[2], [1], [1], [2], [0, 0, 0, 1, 1, 2], [0], [0]>} : vector<4x8x8xbf16>, vector<4x8x8xbf16>, vector<4x8x8xf32> -> vector<4x8x8xf32>
    %378 = arith.truncf %377 : vector<4x8x8xf32> to vector<4x8x8xbf16>
    %cst_184 = arith.constant dense<0.000000e+00> : vector<4x8x32xf32>
    %379 = tpu.matmul %378, %353, %cst_184 {dimension_numbers = #tpu.dot_dimension_numbers<[2], [1], [1], [2], [0, 0, 0, 1, 1, 2], [0], [0]>} : vector<4x8x8xbf16>, vector<4x8x32xbf16>, vector<4x8x32xf32> -> vector<4x8x32xf32>
    %cst_185 = arith.constant dense<0.000000e+00> : vector<8x32xf32>
    %380 = vector.multi_reduction <add>, %379, %cst_185 [0] : vector<4x8x32xf32> to vector<8x32xf32>
    %381 = vector.broadcast %355 : vector<1x32xf32> to vector<8x32xf32>
    %382 = arith.addf %380, %381 : vector<8x32xf32>
    %383 = arith.addf %327, %382 : vector<8x32xf32>
    %c0_186 = arith.constant 0 : index
    %c4_187 = arith.constant 4 : index
    %c0_188 = arith.constant 0 : index
    %384 = vector.load %arg17[%c0_186, %c4_187, %c0_188] : memref<2x10x64xf32, #tpu.memory_space<vmem>>, vector<1x1x32xf32>
    %385 = vector.shape_cast %384 : vector<1x1x32xf32> to vector<1x32xf32>
    %c0_189 = arith.constant 0 : index
    %c5_190 = arith.constant 5 : index
    %c0_191 = arith.constant 0 : index
    %386 = vector.load %arg17[%c0_189, %c5_190, %c0_191] : memref<2x10x64xf32, #tpu.memory_space<vmem>>, vector<1x1x32xf32>
    %387 = vector.shape_cast %386 : vector<1x1x32xf32> to vector<1x32xf32>
    %cst_192 = arith.constant dense<0.000000e+00> : vector<8xf32>
    %388 = vector.multi_reduction <add>, %383, %cst_192 [1] : vector<8x32xf32> to vector<8xf32>
    %389 = vector.shape_cast %388 : vector<8xf32> to vector<8x1xf32>
    %cst_193 = arith.constant 3.200000e+01 : f32
    %390 = vector.broadcast %cst_193 : f32 to vector<8x1xf32>
    %391 = arith.divf %389, %390 : vector<8x1xf32>
    %392 = vector.broadcast %391 : vector<8x1xf32> to vector<8x32xf32>
    %393 = arith.subf %383, %392 : vector<8x32xf32>
    %394 = arith.mulf %393, %393 : vector<8x32xf32>
    %cst_194 = arith.constant dense<0.000000e+00> : vector<8xf32>
    %395 = vector.multi_reduction <add>, %394, %cst_194 [1] : vector<8x32xf32> to vector<8xf32>
    %396 = vector.shape_cast %395 : vector<8xf32> to vector<8x1xf32>
    %cst_195 = arith.constant 3.200000e+01 : f32
    %397 = vector.broadcast %cst_195 : f32 to vector<8x1xf32>
    %398 = arith.divf %396, %397 : vector<8x1xf32>
    %399 = vector.broadcast %391 : vector<8x1xf32> to vector<8x32xf32>
    %400 = arith.subf %383, %399 : vector<8x32xf32>
    %cst_196 = arith.constant 9.99999974E-6 : f32
    %401 = vector.broadcast %cst_196 : f32 to vector<8x1xf32>
    %402 = arith.addf %398, %401 : vector<8x1xf32>
    %403 = math.rsqrt %402 : vector<8x1xf32>
    %404 = vector.broadcast %403 : vector<8x1xf32> to vector<8x32xf32>
    %405 = arith.mulf %400, %404 : vector<8x32xf32>
    %406 = vector.broadcast %385 : vector<1x32xf32> to vector<8x32xf32>
    %407 = arith.mulf %405, %406 : vector<8x32xf32>
    %408 = vector.broadcast %387 : vector<1x32xf32> to vector<8x32xf32>
    %409 = arith.addf %407, %408 : vector<8x32xf32>
    %c0_197 = arith.constant 0 : index
    %c0_198 = arith.constant 0 : index
    %c0_199 = arith.constant 0 : index
    %410 = vector.load %arg15[%c0_197, %c0_198, %c0_199] : memref<2x32x64xbf16, #tpu.memory_space<vmem>>, vector<1x32x64xbf16>
    %411 = vector.shape_cast %410 : vector<1x32x64xbf16> to vector<32x64xbf16>
    %c0_200 = arith.constant 0 : index
    %c6_201 = arith.constant 6 : index
    %c0_202 = arith.constant 0 : index
    %412 = vector.load %arg17[%c0_200, %c6_201, %c0_202] : memref<2x10x64xf32, #tpu.memory_space<vmem>>, vector<1x1x64xf32>
    %413 = vector.shape_cast %412 : vector<1x1x64xf32> to vector<1x64xf32>
    %c0_203 = arith.constant 0 : index
    %c0_204 = arith.constant 0 : index
    %c0_205 = arith.constant 0 : index
    %414 = vector.load %arg16[%c0_203, %c0_204, %c0_205] : memref<2x64x32xbf16, #tpu.memory_space<vmem>>, vector<1x64x32xbf16>
    %415 = vector.shape_cast %414 : vector<1x64x32xbf16> to vector<64x32xbf16>
    %c0_206 = arith.constant 0 : index
    %c7 = arith.constant 7 : index
    %c0_207 = arith.constant 0 : index
    %416 = vector.load %arg17[%c0_206, %c7, %c0_207] : memref<2x10x64xf32, #tpu.memory_space<vmem>>, vector<1x1x32xf32>
    %417 = vector.shape_cast %416 : vector<1x1x32xf32> to vector<1x32xf32>
    %418 = arith.truncf %409 : vector<8x32xf32> to vector<8x32xbf16>
    %cst_208 = arith.constant dense<0.000000e+00> : vector<8x64xf32>
    %419 = tpu.matmul %418, %411, %cst_208 {dimension_numbers = #tpu.dot_dimension_numbers<[1], [0], [0], [1], [0, 0, 1, 1], [], []>} : vector<8x32xbf16>, vector<32x64xbf16>, vector<8x64xf32> -> vector<8x64xf32>
    %420 = vector.broadcast %413 : vector<1x64xf32> to vector<8x64xf32>
    %421 = arith.addf %419, %420 : vector<8x64xf32>
    %cst_209 = arith.constant 0.000000e+00 : f32
    %422 = vector.broadcast %cst_209 : f32 to vector<8x64xf32>
    %423 = arith.maximumf %421, %422 : vector<8x64xf32>
    %424 = arith.truncf %423 : vector<8x64xf32> to vector<8x64xbf16>
    %cst_210 = arith.constant dense<0.000000e+00> : vector<8x32xf32>
    %425 = tpu.matmul %424, %415, %cst_210 {dimension_numbers = #tpu.dot_dimension_numbers<[1], [0], [0], [1], [0, 0, 1, 1], [], []>} : vector<8x64xbf16>, vector<64x32xbf16>, vector<8x32xf32> -> vector<8x32xf32>
    %426 = vector.broadcast %417 : vector<1x32xf32> to vector<8x32xf32>
    %427 = arith.addf %425, %426 : vector<8x32xf32>
    %428 = arith.addf %409, %427 : vector<8x32xf32>
    %c0_211 = arith.constant 0 : index
    %c8 = arith.constant 8 : index
    %c0_212 = arith.constant 0 : index
    %429 = vector.load %arg17[%c0_211, %c8, %c0_212] : memref<2x10x64xf32, #tpu.memory_space<vmem>>, vector<1x1x32xf32>
    %430 = vector.shape_cast %429 : vector<1x1x32xf32> to vector<1x32xf32>
    %c0_213 = arith.constant 0 : index
    %c9 = arith.constant 9 : index
    %c0_214 = arith.constant 0 : index
    %431 = vector.load %arg17[%c0_213, %c9, %c0_214] : memref<2x10x64xf32, #tpu.memory_space<vmem>>, vector<1x1x32xf32>
    %432 = vector.shape_cast %431 : vector<1x1x32xf32> to vector<1x32xf32>
    %cst_215 = arith.constant dense<0.000000e+00> : vector<8xf32>
    %433 = vector.multi_reduction <add>, %428, %cst_215 [1] : vector<8x32xf32> to vector<8xf32>
    %434 = vector.shape_cast %433 : vector<8xf32> to vector<8x1xf32>
    %cst_216 = arith.constant 3.200000e+01 : f32
    %435 = vector.broadcast %cst_216 : f32 to vector<8x1xf32>
    %436 = arith.divf %434, %435 : vector<8x1xf32>
    %437 = vector.broadcast %436 : vector<8x1xf32> to vector<8x32xf32>
    %438 = arith.subf %428, %437 : vector<8x32xf32>
    %439 = arith.mulf %438, %438 : vector<8x32xf32>
    %cst_217 = arith.constant dense<0.000000e+00> : vector<8xf32>
    %440 = vector.multi_reduction <add>, %439, %cst_217 [1] : vector<8x32xf32> to vector<8xf32>
    %441 = vector.shape_cast %440 : vector<8xf32> to vector<8x1xf32>
    %cst_218 = arith.constant 3.200000e+01 : f32
    %442 = vector.broadcast %cst_218 : f32 to vector<8x1xf32>
    %443 = arith.divf %441, %442 : vector<8x1xf32>
    %444 = vector.broadcast %436 : vector<8x1xf32> to vector<8x32xf32>
    %445 = arith.subf %428, %444 : vector<8x32xf32>
    %cst_219 = arith.constant 9.99999974E-6 : f32
    %446 = vector.broadcast %cst_219 : f32 to vector<8x1xf32>
    %447 = arith.addf %443, %446 : vector<8x1xf32>
    %448 = math.rsqrt %447 : vector<8x1xf32>
    %449 = vector.broadcast %448 : vector<8x1xf32> to vector<8x32xf32>
    %450 = arith.mulf %445, %449 : vector<8x32xf32>
    %451 = vector.broadcast %430 : vector<1x32xf32> to vector<8x32xf32>
    %452 = arith.mulf %450, %451 : vector<8x32xf32>
    %453 = vector.broadcast %432 : vector<1x32xf32> to vector<8x32xf32>
    %454 = arith.addf %452, %453 : vector<8x32xf32>
    %c1_220 = arith.constant 1 : index
    %c0_221 = arith.constant 0 : index
    %c0_222 = arith.constant 0 : index
    %c0_223 = arith.constant 0 : index
    %455 = vector.load %arg11[%c1_220, %c0_221, %c0_222, %c0_223] : memref<2x4x32x48xbf16, #tpu.memory_space<vmem>>, vector<1x4x32x24xbf16>
    %456 = vector.shape_cast %455 : vector<1x4x32x24xbf16> to vector<4x32x24xbf16>
    %c1_224 = arith.constant 1 : index
    %c0_225 = arith.constant 0 : index
    %c0_226 = arith.constant 0 : index
    %c0_227 = arith.constant 0 : index
    %457 = vector.load %arg12[%c1_224, %c0_225, %c0_226, %c0_227] : memref<2x4x1x48xf32, #tpu.memory_space<vmem>>, vector<1x4x1x24xf32>
    %458 = vector.shape_cast %457 : vector<1x4x1x24xf32> to vector<4x1x24xf32>
    %459 = arith.truncf %454 : vector<8x32xf32> to vector<8x32xbf16>
    %460 = vector.shape_cast %459 : vector<8x32xbf16> to vector<1x8x32xbf16>
    %461 = vector.shape_cast %460 : vector<1x8x32xbf16> to vector<1x8x32xbf16>
    %462 = vector.broadcast %461 : vector<1x8x32xbf16> to vector<4x8x32xbf16>
    %cst_228 = arith.constant dense<0.000000e+00> : vector<4x8x24xf32>
    %463 = tpu.matmul %462, %456, %cst_228 {dimension_numbers = #tpu.dot_dimension_numbers<[2], [1], [1], [2], [0, 0, 0, 1, 1, 2], [0], [0]>} : vector<4x8x32xbf16>, vector<4x32x24xbf16>, vector<4x8x24xf32> -> vector<4x8x24xf32>
    %464 = vector.broadcast %458 : vector<4x1x24xf32> to vector<4x8x24xf32>
    %465 = arith.addf %463, %464 : vector<4x8x24xf32>
    %466 = vector.extract_strided_slice %465 {offsets = [0, 0, 0], sizes = [4, 8, 8], strides = [1, 1, 1]} : vector<4x8x24xf32> to vector<4x8x8xf32>
    %467 = vector.extract_strided_slice %465 {offsets = [0, 0, 8], sizes = [4, 8, 8], strides = [1, 1, 1]} : vector<4x8x24xf32> to vector<4x8x8xf32>
    %468 = vector.extract_strided_slice %465 {offsets = [0, 0, 16], sizes = [4, 8, 8], strides = [1, 1, 1]} : vector<4x8x24xf32> to vector<4x8x8xf32>
    %c1_229 = arith.constant 1 : index
    %c0_230 = arith.constant 0 : index
    %c0_231 = arith.constant 0 : index
    %c0_232 = arith.constant 0 : index
    %469 = vector.load %arg13[%c1_229, %c0_230, %c0_231, %c0_232] : memref<2x4x8x32xbf16, #tpu.memory_space<vmem>>, vector<1x4x8x32xbf16>
    %470 = vector.shape_cast %469 : vector<1x4x8x32xbf16> to vector<4x8x32xbf16>
    %c1_233 = arith.constant 1 : index
    %c0_234 = arith.constant 0 : index
    %c0_235 = arith.constant 0 : index
    %471 = vector.load %arg17[%c1_233, %c0_234, %c0_235] : memref<2x10x64xf32, #tpu.memory_space<vmem>>, vector<1x1x32xf32>
    %472 = vector.shape_cast %471 : vector<1x1x32xf32> to vector<1x32xf32>
    %473 = arith.truncf %466 : vector<4x8x8xf32> to vector<4x8x8xbf16>
    %474 = arith.truncf %467 : vector<4x8x8xf32> to vector<4x8x8xbf16>
    %cst_236 = arith.constant dense<0.000000e+00> : vector<4x8x8xf32>
    %475 = tpu.matmul %473, %474, %cst_236 {dimension_numbers = #tpu.dot_dimension_numbers<[2], [2], [1], [1], [0, 0, 0, 1, 1, 1], [0], [0]>} : vector<4x8x8xbf16>, vector<4x8x8xbf16>, vector<4x8x8xf32> -> vector<4x8x8xf32>
    %cst_237 = arith.constant 0.353553385 : f32
    %476 = vector.broadcast %cst_237 : f32 to vector<4x8x8xf32>
    %477 = arith.mulf %475, %476 : vector<4x8x8xf32>
    %478 = vector.shape_cast %14 : vector<8x8xi1> to vector<1x8x8xi1>
    %cst_238 = arith.constant -1.000000e+10 : f32
    %479 = vector.shape_cast %478 : vector<1x8x8xi1> to vector<1x8x8xi1>
    %480 = vector.broadcast %479 : vector<1x8x8xi1> to vector<4x8x8xi1>
    %481 = vector.broadcast %cst_238 : f32 to vector<4x8x8xf32>
    %482 = arith.select %480, %477, %481 : vector<4x8x8xi1>, vector<4x8x8xf32>
    %cst_239 = arith.constant dense<0xFF800000> : vector<4x8xf32>
    %483 = vector.multi_reduction <maximumf>, %482, %cst_239 [2] : vector<4x8x8xf32> to vector<4x8xf32>
    %484 = vector.shape_cast %483 : vector<4x8xf32> to vector<4x8x1xf32>
    %485 = vector.broadcast %484 : vector<4x8x1xf32> to vector<4x8x8xf32>
    %486 = arith.subf %482, %485 : vector<4x8x8xf32>
    %487 = math.exp %486 : vector<4x8x8xf32>
    %cst_240 = arith.constant dense<0.000000e+00> : vector<4x8xf32>
    %488 = vector.multi_reduction <add>, %487, %cst_240 [2] : vector<4x8x8xf32> to vector<4x8xf32>
    %489 = vector.shape_cast %488 : vector<4x8xf32> to vector<4x8x1xf32>
    %490 = vector.broadcast %489 : vector<4x8x1xf32> to vector<4x8x8xf32>
    %491 = arith.divf %487, %490 : vector<4x8x8xf32>
    %492 = arith.truncf %491 : vector<4x8x8xf32> to vector<4x8x8xbf16>
    %493 = arith.truncf %468 : vector<4x8x8xf32> to vector<4x8x8xbf16>
    %cst_241 = arith.constant dense<0.000000e+00> : vector<4x8x8xf32>
    %494 = tpu.matmul %492, %493, %cst_241 {dimension_numbers = #tpu.dot_dimension_numbers<[2], [1], [1], [2], [0, 0, 0, 1, 1, 2], [0], [0]>} : vector<4x8x8xbf16>, vector<4x8x8xbf16>, vector<4x8x8xf32> -> vector<4x8x8xf32>
    %495 = arith.truncf %494 : vector<4x8x8xf32> to vector<4x8x8xbf16>
    %cst_242 = arith.constant dense<0.000000e+00> : vector<4x8x32xf32>
    %496 = tpu.matmul %495, %470, %cst_242 {dimension_numbers = #tpu.dot_dimension_numbers<[2], [1], [1], [2], [0, 0, 0, 1, 1, 2], [0], [0]>} : vector<4x8x8xbf16>, vector<4x8x32xbf16>, vector<4x8x32xf32> -> vector<4x8x32xf32>
    %cst_243 = arith.constant dense<0.000000e+00> : vector<8x32xf32>
    %497 = vector.multi_reduction <add>, %496, %cst_243 [0] : vector<4x8x32xf32> to vector<8x32xf32>
    %498 = vector.broadcast %472 : vector<1x32xf32> to vector<8x32xf32>
    %499 = arith.addf %497, %498 : vector<8x32xf32>
    %500 = arith.addf %454, %499 : vector<8x32xf32>
    %c1_244 = arith.constant 1 : index
    %c1_245 = arith.constant 1 : index
    %c0_246 = arith.constant 0 : index
    %501 = vector.load %arg17[%c1_244, %c1_245, %c0_246] : memref<2x10x64xf32, #tpu.memory_space<vmem>>, vector<1x1x32xf32>
    %502 = vector.shape_cast %501 : vector<1x1x32xf32> to vector<1x32xf32>
    %c1_247 = arith.constant 1 : index
    %c2_248 = arith.constant 2 : index
    %c0_249 = arith.constant 0 : index
    %503 = vector.load %arg17[%c1_247, %c2_248, %c0_249] : memref<2x10x64xf32, #tpu.memory_space<vmem>>, vector<1x1x32xf32>
    %504 = vector.shape_cast %503 : vector<1x1x32xf32> to vector<1x32xf32>
    %cst_250 = arith.constant dense<0.000000e+00> : vector<8xf32>
    %505 = vector.multi_reduction <add>, %500, %cst_250 [1] : vector<8x32xf32> to vector<8xf32>
    %506 = vector.shape_cast %505 : vector<8xf32> to vector<8x1xf32>
    %cst_251 = arith.constant 3.200000e+01 : f32
    %507 = vector.broadcast %cst_251 : f32 to vector<8x1xf32>
    %508 = arith.divf %506, %507 : vector<8x1xf32>
    %509 = vector.broadcast %508 : vector<8x1xf32> to vector<8x32xf32>
    %510 = arith.subf %500, %509 : vector<8x32xf32>
    %511 = arith.mulf %510, %510 : vector<8x32xf32>
    %cst_252 = arith.constant dense<0.000000e+00> : vector<8xf32>
    %512 = vector.multi_reduction <add>, %511, %cst_252 [1] : vector<8x32xf32> to vector<8xf32>
    %513 = vector.shape_cast %512 : vector<8xf32> to vector<8x1xf32>
    %cst_253 = arith.constant 3.200000e+01 : f32
    %514 = vector.broadcast %cst_253 : f32 to vector<8x1xf32>
    %515 = arith.divf %513, %514 : vector<8x1xf32>
    %516 = vector.broadcast %508 : vector<8x1xf32> to vector<8x32xf32>
    %517 = arith.subf %500, %516 : vector<8x32xf32>
    %cst_254 = arith.constant 9.99999974E-6 : f32
    %518 = vector.broadcast %cst_254 : f32 to vector<8x1xf32>
    %519 = arith.addf %515, %518 : vector<8x1xf32>
    %520 = math.rsqrt %519 : vector<8x1xf32>
    %521 = vector.broadcast %520 : vector<8x1xf32> to vector<8x32xf32>
    %522 = arith.mulf %517, %521 : vector<8x32xf32>
    %523 = vector.broadcast %502 : vector<1x32xf32> to vector<8x32xf32>
    %524 = arith.mulf %522, %523 : vector<8x32xf32>
    %525 = vector.broadcast %504 : vector<1x32xf32> to vector<8x32xf32>
    %526 = arith.addf %524, %525 : vector<8x32xf32>
    %c1_255 = arith.constant 1 : index
    %c0_256 = arith.constant 0 : index
    %c0_257 = arith.constant 0 : index
    %c24_258 = arith.constant 24 : index
    %527 = vector.load %arg11[%c1_255, %c0_256, %c0_257, %c24_258] : memref<2x4x32x48xbf16, #tpu.memory_space<vmem>>, vector<1x4x32x8xbf16>
    %528 = vector.shape_cast %527 : vector<1x4x32x8xbf16> to vector<4x32x8xbf16>
    %c1_259 = arith.constant 1 : index
    %c0_260 = arith.constant 0 : index
    %c0_261 = arith.constant 0 : index
    %c24_262 = arith.constant 24 : index
    %529 = vector.load %arg12[%c1_259, %c0_260, %c0_261, %c24_262] : memref<2x4x1x48xf32, #tpu.memory_space<vmem>>, vector<1x4x1x8xf32>
    %530 = vector.shape_cast %529 : vector<1x4x1x8xf32> to vector<4x1x8xf32>
    %531 = arith.truncf %526 : vector<8x32xf32> to vector<8x32xbf16>
    %532 = vector.shape_cast %531 : vector<8x32xbf16> to vector<1x8x32xbf16>
    %533 = vector.shape_cast %532 : vector<1x8x32xbf16> to vector<1x8x32xbf16>
    %534 = vector.broadcast %533 : vector<1x8x32xbf16> to vector<4x8x32xbf16>
    %cst_263 = arith.constant dense<0.000000e+00> : vector<4x8x8xf32>
    %535 = tpu.matmul %534, %528, %cst_263 {dimension_numbers = #tpu.dot_dimension_numbers<[2], [1], [1], [2], [0, 0, 0, 1, 1, 2], [0], [0]>} : vector<4x8x32xbf16>, vector<4x32x8xbf16>, vector<4x8x8xf32> -> vector<4x8x8xf32>
    %536 = vector.broadcast %530 : vector<4x1x8xf32> to vector<4x8x8xf32>
    %537 = arith.addf %535, %536 : vector<4x8x8xf32>
    %c1_264 = arith.constant 1 : index
    %c0_265 = arith.constant 0 : index
    %c0_266 = arith.constant 0 : index
    %c32_267 = arith.constant 32 : index
    %538 = vector.load %arg11[%c1_264, %c0_265, %c0_266, %c32_267] : memref<2x4x32x48xbf16, #tpu.memory_space<vmem>>, vector<1x4x32x16xbf16>
    %539 = vector.shape_cast %538 : vector<1x4x32x16xbf16> to vector<4x32x16xbf16>
    %c1_268 = arith.constant 1 : index
    %c0_269 = arith.constant 0 : index
    %c0_270 = arith.constant 0 : index
    %c32_271 = arith.constant 32 : index
    %540 = vector.load %arg12[%c1_268, %c0_269, %c0_270, %c32_271] : memref<2x4x1x48xf32, #tpu.memory_space<vmem>>, vector<1x4x1x16xf32>
    %541 = vector.shape_cast %540 : vector<1x4x1x16xf32> to vector<4x1x16xf32>
    %542 = arith.truncf %253 : vector<8x32xf32> to vector<8x32xbf16>
    %543 = vector.shape_cast %542 : vector<8x32xbf16> to vector<1x8x32xbf16>
    %544 = vector.shape_cast %543 : vector<1x8x32xbf16> to vector<1x8x32xbf16>
    %545 = vector.broadcast %544 : vector<1x8x32xbf16> to vector<4x8x32xbf16>
    %cst_272 = arith.constant dense<0.000000e+00> : vector<4x8x16xf32>
    %546 = tpu.matmul %545, %539, %cst_272 {dimension_numbers = #tpu.dot_dimension_numbers<[2], [1], [1], [2], [0, 0, 0, 1, 1, 2], [0], [0]>} : vector<4x8x32xbf16>, vector<4x32x16xbf16>, vector<4x8x16xf32> -> vector<4x8x16xf32>
    %547 = vector.broadcast %541 : vector<4x1x16xf32> to vector<4x8x16xf32>
    %548 = arith.addf %546, %547 : vector<4x8x16xf32>
    %549 = vector.extract_strided_slice %548 {offsets = [0, 0, 0], sizes = [4, 8, 8], strides = [1, 1, 1]} : vector<4x8x16xf32> to vector<4x8x8xf32>
    %550 = vector.extract_strided_slice %548 {offsets = [0, 0, 8], sizes = [4, 8, 8], strides = [1, 1, 1]} : vector<4x8x16xf32> to vector<4x8x8xf32>
    %c1_273 = arith.constant 1 : index
    %c0_274 = arith.constant 0 : index
    %c0_275 = arith.constant 0 : index
    %c0_276 = arith.constant 0 : index
    %551 = vector.load %arg14[%c1_273, %c0_274, %c0_275, %c0_276] : memref<2x4x8x32xbf16, #tpu.memory_space<vmem>>, vector<1x4x8x32xbf16>
    %552 = vector.shape_cast %551 : vector<1x4x8x32xbf16> to vector<4x8x32xbf16>
    %c1_277 = arith.constant 1 : index
    %c3_278 = arith.constant 3 : index
    %c0_279 = arith.constant 0 : index
    %553 = vector.load %arg17[%c1_277, %c3_278, %c0_279] : memref<2x10x64xf32, #tpu.memory_space<vmem>>, vector<1x1x32xf32>
    %554 = vector.shape_cast %553 : vector<1x1x32xf32> to vector<1x32xf32>
    %555 = arith.truncf %537 : vector<4x8x8xf32> to vector<4x8x8xbf16>
    %556 = arith.truncf %549 : vector<4x8x8xf32> to vector<4x8x8xbf16>
    %cst_280 = arith.constant dense<0.000000e+00> : vector<4x8x8xf32>
    %557 = tpu.matmul %555, %556, %cst_280 {dimension_numbers = #tpu.dot_dimension_numbers<[2], [2], [1], [1], [0, 0, 0, 1, 1, 1], [0], [0]>} : vector<4x8x8xbf16>, vector<4x8x8xbf16>, vector<4x8x8xf32> -> vector<4x8x8xf32>
    %cst_281 = arith.constant 0.353553385 : f32
    %558 = vector.broadcast %cst_281 : f32 to vector<4x8x8xf32>
    %559 = arith.mulf %557, %558 : vector<4x8x8xf32>
    %560 = vector.shape_cast %17 : vector<8x8xi1> to vector<1x8x8xi1>
    %cst_282 = arith.constant -1.000000e+10 : f32
    %561 = vector.shape_cast %560 : vector<1x8x8xi1> to vector<1x8x8xi1>
    %562 = vector.broadcast %561 : vector<1x8x8xi1> to vector<4x8x8xi1>
    %563 = vector.broadcast %cst_282 : f32 to vector<4x8x8xf32>
    %564 = arith.select %562, %559, %563 : vector<4x8x8xi1>, vector<4x8x8xf32>
    %cst_283 = arith.constant dense<0xFF800000> : vector<4x8xf32>
    %565 = vector.multi_reduction <maximumf>, %564, %cst_283 [2] : vector<4x8x8xf32> to vector<4x8xf32>
    %566 = vector.shape_cast %565 : vector<4x8xf32> to vector<4x8x1xf32>
    %567 = vector.broadcast %566 : vector<4x8x1xf32> to vector<4x8x8xf32>
    %568 = arith.subf %564, %567 : vector<4x8x8xf32>
    %569 = math.exp %568 : vector<4x8x8xf32>
    %cst_284 = arith.constant dense<0.000000e+00> : vector<4x8xf32>
    %570 = vector.multi_reduction <add>, %569, %cst_284 [2] : vector<4x8x8xf32> to vector<4x8xf32>
    %571 = vector.shape_cast %570 : vector<4x8xf32> to vector<4x8x1xf32>
    %572 = vector.broadcast %571 : vector<4x8x1xf32> to vector<4x8x8xf32>
    %573 = arith.divf %569, %572 : vector<4x8x8xf32>
    %574 = arith.truncf %573 : vector<4x8x8xf32> to vector<4x8x8xbf16>
    %575 = arith.truncf %550 : vector<4x8x8xf32> to vector<4x8x8xbf16>
    %cst_285 = arith.constant dense<0.000000e+00> : vector<4x8x8xf32>
    %576 = tpu.matmul %574, %575, %cst_285 {dimension_numbers = #tpu.dot_dimension_numbers<[2], [1], [1], [2], [0, 0, 0, 1, 1, 2], [0], [0]>} : vector<4x8x8xbf16>, vector<4x8x8xbf16>, vector<4x8x8xf32> -> vector<4x8x8xf32>
    %577 = arith.truncf %576 : vector<4x8x8xf32> to vector<4x8x8xbf16>
    %cst_286 = arith.constant dense<0.000000e+00> : vector<4x8x32xf32>
    %578 = tpu.matmul %577, %552, %cst_286 {dimension_numbers = #tpu.dot_dimension_numbers<[2], [1], [1], [2], [0, 0, 0, 1, 1, 2], [0], [0]>} : vector<4x8x8xbf16>, vector<4x8x32xbf16>, vector<4x8x32xf32> -> vector<4x8x32xf32>
    %cst_287 = arith.constant dense<0.000000e+00> : vector<8x32xf32>
    %579 = vector.multi_reduction <add>, %578, %cst_287 [0] : vector<4x8x32xf32> to vector<8x32xf32>
    %580 = vector.broadcast %554 : vector<1x32xf32> to vector<8x32xf32>
    %581 = arith.addf %579, %580 : vector<8x32xf32>
    %582 = arith.addf %526, %581 : vector<8x32xf32>
    %c1_288 = arith.constant 1 : index
    %c4_289 = arith.constant 4 : index
    %c0_290 = arith.constant 0 : index
    %583 = vector.load %arg17[%c1_288, %c4_289, %c0_290] : memref<2x10x64xf32, #tpu.memory_space<vmem>>, vector<1x1x32xf32>
    %584 = vector.shape_cast %583 : vector<1x1x32xf32> to vector<1x32xf32>
    %c1_291 = arith.constant 1 : index
    %c5_292 = arith.constant 5 : index
    %c0_293 = arith.constant 0 : index
    %585 = vector.load %arg17[%c1_291, %c5_292, %c0_293] : memref<2x10x64xf32, #tpu.memory_space<vmem>>, vector<1x1x32xf32>
    %586 = vector.shape_cast %585 : vector<1x1x32xf32> to vector<1x32xf32>
    %cst_294 = arith.constant dense<0.000000e+00> : vector<8xf32>
    %587 = vector.multi_reduction <add>, %582, %cst_294 [1] : vector<8x32xf32> to vector<8xf32>
    %588 = vector.shape_cast %587 : vector<8xf32> to vector<8x1xf32>
    %cst_295 = arith.constant 3.200000e+01 : f32
    %589 = vector.broadcast %cst_295 : f32 to vector<8x1xf32>
    %590 = arith.divf %588, %589 : vector<8x1xf32>
    %591 = vector.broadcast %590 : vector<8x1xf32> to vector<8x32xf32>
    %592 = arith.subf %582, %591 : vector<8x32xf32>
    %593 = arith.mulf %592, %592 : vector<8x32xf32>
    %cst_296 = arith.constant dense<0.000000e+00> : vector<8xf32>
    %594 = vector.multi_reduction <add>, %593, %cst_296 [1] : vector<8x32xf32> to vector<8xf32>
    %595 = vector.shape_cast %594 : vector<8xf32> to vector<8x1xf32>
    %cst_297 = arith.constant 3.200000e+01 : f32
    %596 = vector.broadcast %cst_297 : f32 to vector<8x1xf32>
    %597 = arith.divf %595, %596 : vector<8x1xf32>
    %598 = vector.broadcast %590 : vector<8x1xf32> to vector<8x32xf32>
    %599 = arith.subf %582, %598 : vector<8x32xf32>
    %cst_298 = arith.constant 9.99999974E-6 : f32
    %600 = vector.broadcast %cst_298 : f32 to vector<8x1xf32>
    %601 = arith.addf %597, %600 : vector<8x1xf32>
    %602 = math.rsqrt %601 : vector<8x1xf32>
    %603 = vector.broadcast %602 : vector<8x1xf32> to vector<8x32xf32>
    %604 = arith.mulf %599, %603 : vector<8x32xf32>
    %605 = vector.broadcast %584 : vector<1x32xf32> to vector<8x32xf32>
    %606 = arith.mulf %604, %605 : vector<8x32xf32>
    %607 = vector.broadcast %586 : vector<1x32xf32> to vector<8x32xf32>
    %608 = arith.addf %606, %607 : vector<8x32xf32>
    %c1_299 = arith.constant 1 : index
    %c0_300 = arith.constant 0 : index
    %c0_301 = arith.constant 0 : index
    %609 = vector.load %arg15[%c1_299, %c0_300, %c0_301] : memref<2x32x64xbf16, #tpu.memory_space<vmem>>, vector<1x32x64xbf16>
    %610 = vector.shape_cast %609 : vector<1x32x64xbf16> to vector<32x64xbf16>
    %c1_302 = arith.constant 1 : index
    %c6_303 = arith.constant 6 : index
    %c0_304 = arith.constant 0 : index
    %611 = vector.load %arg17[%c1_302, %c6_303, %c0_304] : memref<2x10x64xf32, #tpu.memory_space<vmem>>, vector<1x1x64xf32>
    %612 = vector.shape_cast %611 : vector<1x1x64xf32> to vector<1x64xf32>
    %c1_305 = arith.constant 1 : index
    %c0_306 = arith.constant 0 : index
    %c0_307 = arith.constant 0 : index
    %613 = vector.load %arg16[%c1_305, %c0_306, %c0_307] : memref<2x64x32xbf16, #tpu.memory_space<vmem>>, vector<1x64x32xbf16>
    %614 = vector.shape_cast %613 : vector<1x64x32xbf16> to vector<64x32xbf16>
    %c1_308 = arith.constant 1 : index
    %c7_309 = arith.constant 7 : index
    %c0_310 = arith.constant 0 : index
    %615 = vector.load %arg17[%c1_308, %c7_309, %c0_310] : memref<2x10x64xf32, #tpu.memory_space<vmem>>, vector<1x1x32xf32>
    %616 = vector.shape_cast %615 : vector<1x1x32xf32> to vector<1x32xf32>
    %617 = arith.truncf %608 : vector<8x32xf32> to vector<8x32xbf16>
    %cst_311 = arith.constant dense<0.000000e+00> : vector<8x64xf32>
    %618 = tpu.matmul %617, %610, %cst_311 {dimension_numbers = #tpu.dot_dimension_numbers<[1], [0], [0], [1], [0, 0, 1, 1], [], []>} : vector<8x32xbf16>, vector<32x64xbf16>, vector<8x64xf32> -> vector<8x64xf32>
    %619 = vector.broadcast %612 : vector<1x64xf32> to vector<8x64xf32>
    %620 = arith.addf %618, %619 : vector<8x64xf32>
    %cst_312 = arith.constant 0.000000e+00 : f32
    %621 = vector.broadcast %cst_312 : f32 to vector<8x64xf32>
    %622 = arith.maximumf %620, %621 : vector<8x64xf32>
    %623 = arith.truncf %622 : vector<8x64xf32> to vector<8x64xbf16>
    %cst_313 = arith.constant dense<0.000000e+00> : vector<8x32xf32>
    %624 = tpu.matmul %623, %614, %cst_313 {dimension_numbers = #tpu.dot_dimension_numbers<[1], [0], [0], [1], [0, 0, 1, 1], [], []>} : vector<8x64xbf16>, vector<64x32xbf16>, vector<8x32xf32> -> vector<8x32xf32>
    %625 = vector.broadcast %616 : vector<1x32xf32> to vector<8x32xf32>
    %626 = arith.addf %624, %625 : vector<8x32xf32>
    %627 = arith.addf %608, %626 : vector<8x32xf32>
    %c1_314 = arith.constant 1 : index
    %c8_315 = arith.constant 8 : index
    %c0_316 = arith.constant 0 : index
    %628 = vector.load %arg17[%c1_314, %c8_315, %c0_316] : memref<2x10x64xf32, #tpu.memory_space<vmem>>, vector<1x1x32xf32>
    %629 = vector.shape_cast %628 : vector<1x1x32xf32> to vector<1x32xf32>
    %c1_317 = arith.constant 1 : index
    %c9_318 = arith.constant 9 : index
    %c0_319 = arith.constant 0 : index
    %630 = vector.load %arg17[%c1_317, %c9_318, %c0_319] : memref<2x10x64xf32, #tpu.memory_space<vmem>>, vector<1x1x32xf32>
    %631 = vector.shape_cast %630 : vector<1x1x32xf32> to vector<1x32xf32>
    %cst_320 = arith.constant dense<0.000000e+00> : vector<8xf32>
    %632 = vector.multi_reduction <add>, %627, %cst_320 [1] : vector<8x32xf32> to vector<8xf32>
    %633 = vector.shape_cast %632 : vector<8xf32> to vector<8x1xf32>
    %cst_321 = arith.constant 3.200000e+01 : f32
    %634 = vector.broadcast %cst_321 : f32 to vector<8x1xf32>
    %635 = arith.divf %633, %634 : vector<8x1xf32>
    %636 = vector.broadcast %635 : vector<8x1xf32> to vector<8x32xf32>
    %637 = arith.subf %627, %636 : vector<8x32xf32>
    %638 = arith.mulf %637, %637 : vector<8x32xf32>
    %cst_322 = arith.constant dense<0.000000e+00> : vector<8xf32>
    %639 = vector.multi_reduction <add>, %638, %cst_322 [1] : vector<8x32xf32> to vector<8xf32>
    %640 = vector.shape_cast %639 : vector<8xf32> to vector<8x1xf32>
    %cst_323 = arith.constant 3.200000e+01 : f32
    %641 = vector.broadcast %cst_323 : f32 to vector<8x1xf32>
    %642 = arith.divf %640, %641 : vector<8x1xf32>
    %643 = vector.broadcast %635 : vector<8x1xf32> to vector<8x32xf32>
    %644 = arith.subf %627, %643 : vector<8x32xf32>
    %cst_324 = arith.constant 9.99999974E-6 : f32
    %645 = vector.broadcast %cst_324 : f32 to vector<8x1xf32>
    %646 = arith.addf %642, %645 : vector<8x1xf32>
    %647 = math.rsqrt %646 : vector<8x1xf32>
    %648 = vector.broadcast %647 : vector<8x1xf32> to vector<8x32xf32>
    %649 = arith.mulf %644, %648 : vector<8x32xf32>
    %650 = vector.broadcast %629 : vector<1x32xf32> to vector<8x32xf32>
    %651 = arith.mulf %649, %650 : vector<8x32xf32>
    %652 = vector.broadcast %631 : vector<1x32xf32> to vector<8x32xf32>
    %653 = arith.addf %651, %652 : vector<8x32xf32>
    %654 = arith.truncf %653 : vector<8x32xf32> to vector<8x32xbf16>
    %c0_325 = arith.constant 0 : index
    %c0_326 = arith.constant 0 : index
    %655 = vector.load %arg18[%c0_325, %c0_326] : memref<32x128xbf16, #tpu.memory_space<vmem>>, vector<32x128xbf16>
    %cst_327 = arith.constant dense<0.000000e+00> : vector<8x128xf32>
    %656 = tpu.matmul %654, %655, %cst_327 {dimension_numbers = #tpu.dot_dimension_numbers<[1], [0], [0], [1], [0, 0, 1, 1], [], []>} : vector<8x32xbf16>, vector<32x128xbf16>, vector<8x128xf32> -> vector<8x128xf32>
    %c0_328 = arith.constant 0 : index
    %c0_329 = arith.constant 0 : index
    %657 = vector.load %arg19[%c0_328, %c0_329] : memref<1x128xf32, #tpu.memory_space<vmem>>, vector<1x128xf32>
    %658 = vector.broadcast %657 : vector<1x128xf32> to vector<8x128xf32>
    %659 = arith.addf %656, %658 : vector<8x128xf32>
    %c0_330 = arith.constant 0 : index
    %c0_331 = arith.constant 0 : index
    %c0_332 = arith.constant 0 : index
    %660 = vector.load %arg20[%c0_330, %c0_331, %c0_332] : memref<1x8x128xf32, #tpu.memory_space<vmem>>, vector<1x8x128xf32>
    %661 = vector.shape_cast %660 : vector<1x8x128xf32> to vector<8x128xf32>
    %662 = vector.shape_cast %659 : vector<8x128xf32> to vector<1x8x128xf32>
    tpu.vector_store %arg20[%c0_330, %c0_331, %c0_332], %662 {strides = array<i32>} : memref<1x8x128xf32, #tpu.memory_space<vmem>>, vector<1x8x128xf32>,
    return
  }
  func.func @transform_0(%arg0: i32, %arg1: memref<2xi32, #tpu.memory_space<smem>>, %arg2: memref<2xi32, #tpu.memory_space<smem>>) -> (i32, i32, i32) {
    %c0_i32 = arith.constant 0 : i32
    %c0_i32_0 = arith.constant 0 : i32
    %c0_i32_1 = arith.constant 0 : i32
    return %arg0, %c0_i32, %c0_i32_0 : i32, i32, i32
  }
  func.func @transform_1(%arg0: i32, %arg1: memref<2xi32, #tpu.memory_space<smem>>, %arg2: memref<2xi32, #tpu.memory_space<smem>>) -> (i32, i32, i32) {
    %c0_i32 = arith.constant 0 : i32
    %c0_i32_0 = arith.constant 0 : i32
    %c0_i32_1 = arith.constant 0 : i32
    return %arg0, %c0_i32, %c0_i32_0 : i32, i32, i32
  }
  func.func @transform_2(%arg0: i32, %arg1: memref<2xi32, #tpu.memory_space<smem>>, %arg2: memref<2xi32, #tpu.memory_space<smem>>) -> (i32, i32, i32, i32) {
    %c0_i32 = arith.constant 0 : i32
    %c0_i32_0 = arith.constant 0 : i32
    %c0_i32_1 = arith.constant 0 : i32
    %c0_i32_2 = arith.constant 0 : i32
    %c0_i32_3 = arith.constant 0 : i32
    return %c0_i32, %c0_i32_0, %c0_i32_1, %c0_i32_2 : i32, i32, i32, i32
  }
  func.func @transform_3(%arg0: i32, %arg1: memref<2xi32, #tpu.memory_space<smem>>, %arg2: memref<2xi32, #tpu.memory_space<smem>>) -> (i32, i32, i32, i32) {
    %c0_i32 = arith.constant 0 : i32
    %c0_i32_0 = arith.constant 0 : i32
    %c0_i32_1 = arith.constant 0 : i32
    %c0_i32_2 = arith.constant 0 : i32
    %c0_i32_3 = arith.constant 0 : i32
    return %c0_i32, %c0_i32_0, %c0_i32_1, %c0_i32_2 : i32, i32, i32, i32
  }
  func.func @transform_4(%arg0: i32, %arg1: memref<2xi32, #tpu.memory_space<smem>>, %arg2: memref<2xi32, #tpu.memory_space<smem>>) -> (i32, i32, i32, i32) {
    %c0_i32 = arith.constant 0 : i32
    %c0_i32_0 = arith.constant 0 : i32
    %c0_i32_1 = arith.constant 0 : i32
    %c0_i32_2 = arith.constant 0 : i32
    %c0_i32_3 = arith.constant 0 : i32
    return %c0_i32, %c0_i32_0, %c0_i32_1, %c0_i32_2 : i32, i32, i32, i32
  }
  func.func @transform_5(%arg0: i32, %arg1: memref<2xi32, #tpu.memory_space<smem>>, %arg2: memref<2xi32, #tpu.memory_space<smem>>) -> (i32, i32, i32) {
    %c0_i32 = arith.constant 0 : i32
    %c0_i32_0 = arith.constant 0 : i32
    %c0_i32_1 = arith.constant 0 : i32
    %c0_i32_2 = arith.constant 0 : i32
    return %c0_i32, %c0_i32_0, %c0_i32_1 : i32, i32, i32
  }
  func.func @transform_6(%arg0: i32, %arg1: memref<2xi32, #tpu.memory_space<smem>>, %arg2: memref<2xi32, #tpu.memory_space<smem>>) -> (i32, i32, i32) {
    %c0_i32 = arith.constant 0 : i32
    %c0_i32_0 = arith.constant 0 : i32
    %c0_i32_1 = arith.constant 0 : i32
    %c0_i32_2 = arith.constant 0 : i32
    return %c0_i32, %c0_i32_0, %c0_i32_1 : i32, i32, i32
  }
  func.func @transform_7(%arg0: i32, %arg1: memref<2xi32, #tpu.memory_space<smem>>, %arg2: memref<2xi32, #tpu.memory_space<smem>>) -> (i32, i32, i32) {
    %c0_i32 = arith.constant 0 : i32
    %c0_i32_0 = arith.constant 0 : i32
    %c0_i32_1 = arith.constant 0 : i32
    %c0_i32_2 = arith.constant 0 : i32
    return %c0_i32, %c0_i32_0, %c0_i32_1 : i32, i32, i32
  }
  func.func @transform_8(%arg0: i32, %arg1: memref<2xi32, #tpu.memory_space<smem>>, %arg2: memref<2xi32, #tpu.memory_space<smem>>) -> (i32, i32, i32, i32) {
    %c0_i32 = arith.constant 0 : i32
    %c0_i32_0 = arith.constant 0 : i32
    %c0_i32_1 = arith.constant 0 : i32
    %c0_i32_2 = arith.constant 0 : i32
    %c0_i32_3 = arith.constant 0 : i32
    return %c0_i32, %c0_i32_0, %c0_i32_1, %c0_i32_2 : i32, i32, i32, i32
  }
  func.func @transform_9(%arg0: i32, %arg1: memref<2xi32, #tpu.memory_space<smem>>, %arg2: memref<2xi32, #tpu.memory_space<smem>>) -> (i32, i32, i32, i32) {
    %c0_i32 = arith.constant 0 : i32
    %c0_i32_0 = arith.constant 0 : i32
    %c0_i32_1 = arith.constant 0 : i32
    %c0_i32_2 = arith.constant 0 : i32
    %c0_i32_3 = arith.constant 0 : i32
    return %c0_i32, %c0_i32_0, %c0_i32_1, %c0_i32_2 : i32, i32, i32, i32
  }
  func.func @transform_10(%arg0: i32, %arg1: memref<2xi32, #tpu.memory_space<smem>>, %arg2: memref<2xi32, #tpu.memory_space<smem>>) -> (i32, i32, i32, i32) {
    %c0_i32 = arith.constant 0 : i32
    %c0_i32_0 = arith.constant 0 : i32
    %c0_i32_1 = arith.constant 0 : i32
    %c0_i32_2 = arith.constant 0 : i32
    %c0_i32_3 = arith.constant 0 : i32
    return %c0_i32, %c0_i32_0, %c0_i32_1, %c0_i32_2 : i32, i32, i32, i32
  }
  func.func @transform_11(%arg0: i32, %arg1: memref<2xi32, #tpu.memory_space<smem>>, %arg2: memref<2xi32, #tpu.memory_space<smem>>) -> (i32, i32, i32, i32) {
    %c0_i32 = arith.constant 0 : i32
    %c0_i32_0 = arith.constant 0 : i32
    %c0_i32_1 = arith.constant 0 : i32
    %c0_i32_2 = arith.constant 0 : i32
    %c0_i32_3 = arith.constant 0 : i32
    return %c0_i32, %c0_i32_0, %c0_i32_1, %c0_i32_2 : i32, i32, i32, i32
  }
  func.func @transform_12(%arg0: i32, %arg1: memref<2xi32, #tpu.memory_space<smem>>, %arg2: memref<2xi32, #tpu.memory_space<smem>>) -> (i32, i32, i32) {
    %c0_i32 = arith.constant 0 : i32
    %c0_i32_0 = arith.constant 0 : i32
    %c0_i32_1 = arith.constant 0 : i32
    %c0_i32_2 = arith.constant 0 : i32
    return %c0_i32, %c0_i32_0, %c0_i32_1 : i32, i32, i32
  }
  func.func @transform_13(%arg0: i32, %arg1: memref<2xi32, #tpu.memory_space<smem>>, %arg2: memref<2xi32, #tpu.memory_space<smem>>) -> (i32, i32, i32) {
    %c0_i32 = arith.constant 0 : i32
    %c0_i32_0 = arith.constant 0 : i32
    %c0_i32_1 = arith.constant 0 : i32
    %c0_i32_2 = arith.constant 0 : i32
    return %c0_i32, %c0_i32_0, %c0_i32_1 : i32, i32, i32
  }
  func.func @transform_14(%arg0: i32, %arg1: memref<2xi32, #tpu.memory_space<smem>>, %arg2: memref<2xi32, #tpu.memory_space<smem>>) -> (i32, i32, i32) {
    %c0_i32 = arith.constant 0 : i32
    %c0_i32_0 = arith.constant 0 : i32
    %c0_i32_1 = arith.constant 0 : i32
    %c0_i32_2 = arith.constant 0 : i32
    return %c0_i32, %c0_i32_0, %c0_i32_1 : i32, i32, i32
  }
  func.func @transform_15(%arg0: i32, %arg1: memref<2xi32, #tpu.memory_space<smem>>, %arg2: memref<2xi32, #tpu.memory_space<smem>>) -> (i32, i32) {
    %c0_i32 = arith.constant 0 : i32
    %c0_i32_0 = arith.constant 0 : i32
    %c0_i32_1 = arith.constant 0 : i32
    return %c0_i32, %c0_i32_0 : i32, i32
  }
  func.func @transform_16(%arg0: i32, %arg1: memref<2xi32, #tpu.memory_space<smem>>, %arg2: memref<2xi32, #tpu.memory_space<smem>>) -> (i32, i32) {
    %c0_i32 = arith.constant 0 : i32
    %c0_i32_0 = arith.constant 0 : i32
    %c0_i32_1 = arith.constant 0 : i32
    return %c0_i32, %c0_i32_0 : i32, i32
  }
  func.func @transform_17(%arg0: i32, %arg1: memref<2xi32, #tpu.memory_space<smem>>, %arg2: memref<2xi32, #tpu.memory_space<smem>>) -> (i32, i32, i32) {
    %c0_i32 = arith.constant 0 : i32
    %c0_i32_0 = arith.constant 0 : i32
    %c0_i32_1 = arith.constant 0 : i32
    return %arg0, %c0_i32, %c0_i32_0 : i32, i32, i32
  }
}

</mosaic_0001>

<llo_original>
// kernel: _lambda_.1
$region0: #{_lambda_.1}
  #allocation0 [shape = 'u32[]', space=smem, size = 0x4, offset = 0x4, fixed_abs, tag = 'smem constant byte address 0x4 - core index']
  #allocation1 [shape = 'u32[144,128]{1,0:T(1,128)}', space=vmem, size = 0x12000, scoped, tag = 'internal scratch']
  #allocation2 [shape = 's32[1]{0}', space=sflag, size = 0x4, scoped, tag = 'scoped memory for _lambda_.1']
  #allocation3 [shape = 'u8[512]{0}', space=smem, size = 0x200, scoped, tag = 'prefetched SMEM operand 0']
  #allocation4 [shape = 'u8[512]{0}', space=smem, size = 0x200, scoped, tag = 'prefetched SMEM operand 1']
  %s0 = inlined_call_operand.vmem [shape: s32[2], index: 0, kind: input, shape index: {}]
  %s1 = inlined_call_operand.vmem [shape: s32[2], index: 1, kind: input, shape index: {}]
  %s2 = inlined_call_operand.vmem [shape: f32[2,8,32], index: 2, kind: input, shape index: {}]
  %s3 = inlined_call_operand.vmem [shape: f32[2,8,32], index: 3, kind: input, shape index: {}]
  %s4 = inlined_call_operand.vmem [shape: bf16[2,4,32,24], index: 4, kind: input, shape index: {}]
  %s5 = inlined_call_operand.vmem [shape: f32[2,4,1,24], index: 5, kind: input, shape index: {}]
  %s6 = inlined_call_operand.vmem [shape: bf16[2,4,8,32], index: 6, kind: input, shape index: {}]
  %s7 = inlined_call_operand.vmem [shape: bf16[2,32,64], index: 7, kind: input, shape index: {}]
  %s8 = inlined_call_operand.vmem [shape: bf16[2,64,32], index: 8, kind: input, shape index: {}]
  %s9 = inlined_call_operand.vmem [shape: f32[2,7,64], index: 9, kind: input, shape index: {}]
  %s10 = inlined_call_operand.vmem [shape: bf16[2,4,32,48], index: 10, kind: input, shape index: {}]
  %s11 = inlined_call_operand.vmem [shape: f32[2,4,1,48], index: 11, kind: input, shape index: {}]
  %s12 = inlined_call_operand.vmem [shape: bf16[2,4,8,32], index: 12, kind: input, shape index: {}]
  %s13 = inlined_call_operand.vmem [shape: bf16[2,4,8,32], index: 13, kind: input, shape index: {}]
  %s14 = inlined_call_operand.vmem [shape: bf16[2,32,64], index: 14, kind: input, shape index: {}]
  %s15 = inlined_call_operand.vmem [shape: bf16[2,64,32], index: 15, kind: input, shape index: {}]
  %s16 = inlined_call_operand.vmem [shape: f32[2,10,64], index: 16, kind: input, shape index: {}]
  %s17 = inlined_call_operand.vmem [shape: bf16[32,128], index: 17, kind: input, shape index: {}]
  %s18 = inlined_call_operand.vmem [shape: f32[1,128], index: 18, kind: input, shape index: {}]
  %s19 = inlined_call_operand.hbm [shape: f32[2,8,128], index: 19, kind: output, shape index: {}]
  %s20 = sld [smem:[#allocation0]]
  $region101: #{_lambda_.1} parent=0
    _
  %s22 = ssub.s32 1, %s20
  %s23 = scalar_select 0, %s22, %s20
  %s24 = sshll.u32 %s0, 4
  %s25 = int_to_ptr.vmem [resolvable:$true] %s24
  %27 = dma.vmem_to_smem %s25, 16, [#allocation3], [#allocation2]
  %s28 = sshll.u32 %s1, 4
  %s29 = int_to_ptr.vmem [resolvable:$true] %s28
  %31 = dma.vmem_to_smem %s29, 16, [#allocation4], [#allocation2]
  %32 = dma.done [#allocation2], 32
  %33 = sfence
  $region1: #{_lambda_.1} parent=0
    #allocation5 [shape = 'u8[8192]{0}', space=vmem, size = 0x2000, scoped, tag = 'output window, operand 0']
    #allocation6 [shape = 's32[2]{0}', space=sflag, size = 0x8, scoped, tag = 'scoped memory for _lambda_.1']
    %34 = vsyncpa [#allocation6], 0
    %s35 = scalar_lea.sflag [#allocation6], 1
    %36 = vsyncpa %s35, 0
    loop: start=0, step=1, limit=4
    $region2: #{_lambda_.1} parent=1 // loop_pre_header
      _
    $region3: #{_lambda_.1} parent=1 // loop_header
      %s38 = sphi 0, %s42
      %p39 = scmp.ge.s32.totalorder %s38, 4
      %s48 = sphi 0, %s50
      %s51 = sphi 0, %s48
      %s52 = sphi 0, %s51
      %s68 = sphi 0, %s52
      %s74 = sphi 0, %s76
      %s77 = sphi 0, %s74
      %s78 = sphi 0, %s77
      %s94 = sphi 0, %s78
      %s98 = sphi 0, %s98
      %s100 = sphi 0, %s98
      %s101 = sphi 0, %s100
      %s115 = sphi 0, %s101
      %s119 = sphi 0, %s119
      %s121 = sphi 0, %s119
      %s122 = sphi 0, %s121
      %s136 = sphi 0, %s122
      %s140 = sphi 0, %s140
      %s142 = sphi 0, %s140
      %s143 = sphi 0, %s142
      %s157 = sphi 0, %s143
      %s161 = sphi 0, %s161
      %s163 = sphi 0, %s161
      %s164 = sphi 0, %s163
      %s178 = sphi 0, %s164
      %s182 = sphi 0, %s182
      %s184 = sphi 0, %s182
      %s185 = sphi 0, %s184
      %s199 = sphi 0, %s185
      %s203 = sphi 0, %s203
      %s205 = sphi 0, %s203
      %s206 = sphi 0, %s205
      %s220 = sphi 0, %s206
      %s224 = sphi 0, %s224
      %s226 = sphi 0, %s224
      %s227 = sphi 0, %s226
      %s241 = sphi 0, %s227
      %s245 = sphi 0, %s245
      %s247 = sphi 0, %s245
      %s248 = sphi 0, %s247
      %s262 = sphi 0, %s248
      %s266 = sphi 0, %s266
      %s268 = sphi 0, %s266
      %s269 = sphi 0, %s268
      %s283 = sphi 0, %s269
      %s287 = sphi 0, %s287
      %s289 = sphi 0, %s287
      %s290 = sphi 0, %s289
      %s304 = sphi 0, %s290
      %s308 = sphi 0, %s308
      %s310 = sphi 0, %s308
      %s311 = sphi 0, %s310
      %s325 = sphi 0, %s311
      %s329 = sphi 0, %s329
      %s331 = sphi 0, %s329
      %s332 = sphi 0, %s331
      %s346 = sphi 0, %s332
      %s350 = sphi 0, %s350
      %s352 = sphi 0, %s350
      %s353 = sphi 0, %s352
      %s367 = sphi 0, %s353
      %s371 = sphi 0, %s371
      %s373 = sphi 0, %s371
      %s374 = sphi 0, %s373
      %s388 = sphi 0, %s374
      %s392 = sphi 0, %s392
      %s394 = sphi 0, %s392
      %s395 = sphi 0, %s394
      %s409 = sphi 0, %s395
      %s415 = sphi 0, %s417
      %s418 = sphi 0, %s415
      %s419 = sphi 0, %s418
      %s435 = sphi 0, %s419
    $region4: #{_lambda_.1} parent=1 // loop_header_branch
      %41 = sbr.rel (%p39) target = $region8
    $region5: #{_lambda_.1} parent=1 // loop_body
      %s43 = ssub.s32 %s38, 1
      %s44 = ssub.s32 %s38, 2
      %s45 = sadd.s32 %s38, 1
      %s46 = ssub.s32 %s38, %s45
      %p47 = scmp.eq.s32.totalorder %s46, 0
      %s49 = sadd.s32 %s48, 1
      %s50 = scalar_select %p47, %s48, %s49
      %p53 = pneg %p47
      %p54 = scmp.eq.s32.totalorder %s38, 1
      %p55 = por %p53, %p54
      %p56 = scmp.ne.s32.totalorder %s48, %s51
      %p57 = scmp.eq.s32.totalorder %s38, 0
      %p58 = por %p56, %p57
      %p59 = scmp.ne.s32.totalorder %s48, %s51
      %p60 = scmp.eq.s32.totalorder %s43, 1
      %p61 = por %p59, %p60
      %p62 = scmp.ne.s32.totalorder %s51, %s52
      %p63 = scmp.eq.s32.totalorder %s43, 0
      %p64 = por %p62, %p63
      %p65 = scmp.ne.s32.totalorder %s51, %s52
      %p66 = scmp.eq.s32.totalorder %s44, 1
      %p67 = por %p65, %p66
      %p69 = scmp.ne.s32.totalorder %s52, %s68
      %p70 = scmp.eq.s32.totalorder %s44, 0
      %p71 = por %p69, %p70
      %s72 = ssub.s32 %s38, %s45
      %p73 = scmp.eq.s32.totalorder %s72, 0
      %s75 = sadd.s32 %s74, 1
      %s76 = scalar_select %p73, %s74, %s75
      %p79 = pneg %p73
      %p80 = scmp.eq.s32.totalorder %s38, 1
      %p81 = por %p79, %p80
      %p82 = scmp.ne.s32.totalorder %s74, %s77
      %p83 = scmp.eq.s32.totalorder %s38, 0
      %p84 = por %p82, %p83
      %p85 = scmp.ne.s32.totalorder %s74, %s77
      %p86 = scmp.eq.s32.totalorder %s43, 1
      %p87 = por %p85, %p86
      %p88 = scmp.ne.s32.totalorder %s77, %s78
      %p89 = scmp.eq.s32.totalorder %s43, 0
      %p90 = por %p88, %p89
      %p91 = scmp.ne.s32.totalorder %s77, %s78
      %p92 = scmp.eq.s32.totalorder %s44, 1
      %p93 = por %p91, %p92
      %p95 = scmp.ne.s32.totalorder %s78, %s94
      %p96 = scmp.eq.s32.totalorder %s44, 0
      %p97 = por %p95, %p96
      %s99 = sadd.s32 %s98, 1
      %p102 = scmp.eq.s32.totalorder %s38, 1
      %p103 = scmp.ne.s32.totalorder %s98, %s100
      %p104 = scmp.eq.s32.totalorder %s38, 0
      %p105 = por %p103, %p104
      %p106 = scmp.ne.s32.totalorder %s98, %s100
      %p107 = scmp.eq.s32.totalorder %s43, 1
      %p108 = por %p106, %p107
      %p109 = scmp.ne.s32.totalorder %s100, %s101
      %p110 = scmp.eq.s32.totalorder %s43, 0
      %p111 = por %p109, %p110
      %p112 = scmp.ne.s32.totalorder %s100, %s101
      %p113 = scmp.eq.s32.totalorder %s44, 1
      %p114 = por %p112, %p113
      %p116 = scmp.ne.s32.totalorder %s101, %s115
      %p117 = scmp.eq.s32.totalorder %s44, 0
      %p118 = por %p116, %p117
      %s120 = sadd.s32 %s119, 1
      %p123 = scmp.eq.s32.totalorder %s38, 1
      %p124 = scmp.ne.s32.totalorder %s119, %s121
      %p125 = scmp.eq.s32.totalorder %s38, 0
      %p126 = por %p124, %p125
      %p127 = scmp.ne.s32.totalorder %s119, %s121
      %p128 = scmp.eq.s32.totalorder %s43, 1
      %p129 = por %p127, %p128
      %p130 = scmp.ne.s32.totalorder %s121, %s122
      %p131 = scmp.eq.s32.totalorder %s43, 0
      %p132 = por %p130, %p131
      %p133 = scmp.ne.s32.totalorder %s121, %s122
      %p134 = scmp.eq.s32.totalorder %s44, 1
      %p135 = por %p133, %p134
      %p137 = scmp.ne.s32.totalorder %s122, %s136
      %p138 = scmp.eq.s32.totalorder %s44, 0
      %p139 = por %p137, %p138
      %s141 = sadd.s32 %s140, 1
      %p144 = scmp.eq.s32.totalorder %s38, 1
      %p145 = scmp.ne.s32.totalorder %s140, %s142
      %p146 = scmp.eq.s32.totalorder %s38, 0
      %p147 = por %p145, %p146
      %p148 = scmp.ne.s32.totalorder %s140, %s142
      %p149 = scmp.eq.s32.totalorder %s43, 1
      %p150 = por %p148, %p149
      %p151 = scmp.ne.s32.totalorder %s142, %s143
      %p152 = scmp.eq.s32.totalorder %s43, 0
      %p153 = por %p151, %p152
      %p154 = scmp.ne.s32.totalorder %s142, %s143
      %p155 = scmp.eq.s32.totalorder %s44, 1
      %p156 = por %p154, %p155
      %p158 = scmp.ne.s32.totalorder %s143, %s157
      %p159 = scmp.eq.s32.totalorder %s44, 0
      %p160 = por %p158, %p159
      %s162 = sadd.s32 %s161, 1
      %p165 = scmp.eq.s32.totalorder %s38, 1
      %p166 = scmp.ne.s32.totalorder %s161, %s163
      %p167 = scmp.eq.s32.totalorder %s38, 0
      %p168 = por %p166, %p167
      %p169 = scmp.ne.s32.totalorder %s161, %s163
      %p170 = scmp.eq.s32.totalorder %s43, 1
      %p171 = por %p169, %p170
      %p172 = scmp.ne.s32.totalorder %s163, %s164
      %p173 = scmp.eq.s32.totalorder %s43, 0
      %p174 = por %p172, %p173
      %p175 = scmp.ne.s32.totalorder %s163, %s164
      %p176 = scmp.eq.s32.totalorder %s44, 1
      %p177 = por %p175, %p176
      %p179 = scmp.ne.s32.totalorder %s164, %s178
      %p180 = scmp.eq.s32.totalorder %s44, 0
      %p181 = por %p179, %p180
      %s183 = sadd.s32 %s182, 1
      %p186 = scmp.eq.s32.totalorder %s38, 1
      %p187 = scmp.ne.s32.totalorder %s182, %s184
      %p188 = scmp.eq.s32.totalorder %s38, 0
      %p189 = por %p187, %p188
      %p190 = scmp.ne.s32.totalorder %s182, %s184
      %p191 = scmp.eq.s32.totalorder %s43, 1
      %p192 = por %p190, %p191
      %p193 = scmp.ne.s32.totalorder %s184, %s185
      %p194 = scmp.eq.s32.totalorder %s43, 0
      %p195 = por %p193, %p194
      %p196 = scmp.ne.s32.totalorder %s184, %s185
      %p197 = scmp.eq.s32.totalorder %s44, 1
      %p198 = por %p196, %p197
      %p200 = scmp.ne.s32.totalorder %s185, %s199
      %p201 = scmp.eq.s32.totalorder %s44, 0
      %p202 = por %p200, %p201
      %s204 = sadd.s32 %s203, 1
      %p207 = scmp.eq.s32.totalorder %s38, 1
      %p208 = scmp.ne.s32.totalorder %s203, %s205
      %p209 = scmp.eq.s32.totalorder %s38, 0
      %p210 = por %p208, %p209
      %p211 = scmp.ne.s32.totalorder %s203, %s205
      %p212 = scmp.eq.s32.totalorder %s43, 1
      %p213 = por %p211, %p212
      %p214 = scmp.ne.s32.totalorder %s205, %s206
      %p215 = scmp.eq.s32.totalorder %s43, 0
      %p216 = por %p214, %p215
      %p217 = scmp.ne.s32.totalorder %s205, %s206
      %p218 = scmp.eq.s32.totalorder %s44, 1
      %p219 = por %p217, %p218
      %p221 = scmp.ne.s32.totalorder %s206, %s220
      %p222 = scmp.eq.s32.totalorder %s44, 0
      %p223 = por %p221, %p222
      %s225 = sadd.s32 %s224, 1
      %p228 = scmp.eq.s32.totalorder %s38, 1
      %p229 = scmp.ne.s32.totalorder %s224, %s226
      %p230 = scmp.eq.s32.totalorder %s38, 0
      %p231 = por %p229, %p230
      %p232 = scmp.ne.s32.totalorder %s224, %s226
      %p233 = scmp.eq.s32.totalorder %s43, 1
      %p234 = por %p232, %p233
      %p235 = scmp.ne.s32.totalorder %s226, %s227
      %p236 = scmp.eq.s32.totalorder %s43, 0
      %p237 = por %p235, %p236
      %p238 = scmp.ne.s32.totalorder %s226, %s227
      %p239 = scmp.eq.s32.totalorder %s44, 1
      %p240 = por %p238, %p239
      %p242 = scmp.ne.s32.totalorder %s227, %s241
      %p243 = scmp.eq.s32.totalorder %s44, 0
      %p244 = por %p242, %p243
      %s246 = sadd.s32 %s245, 1
      %p249 = scmp.eq.s32.totalorder %s38, 1
      %p250 = scmp.ne.s32.totalorder %s245, %s247
      %p251 = scmp.eq.s32.totalorder %s38, 0
      %p252 = por %p250, %p251
      %p253 = scmp.ne.s32.totalorder %s245, %s247
      %p254 = scmp.eq.s32.totalorder %s43, 1
      %p255 = por %p253, %p254
      %p256 = scmp.ne.s32.totalorder %s247, %s248
      %p257 = scmp.eq.s32.totalorder %s43, 0
      %p258 = por %p256, %p257
      %p259 = scmp.ne.s32.totalorder %s247, %s248
      %p260 = scmp.eq.s32.totalorder %s44, 1
      %p261 = por %p259, %p260
      %p263 = scmp.ne.s32.totalorder %s248, %s262
      %p264 = scmp.eq.s32.totalorder %s44, 0
      %p265 = por %p263, %p264
      %s267 = sadd.s32 %s266, 1
      %p270 = scmp.eq.s32.totalorder %s38, 1
      %p271 = scmp.ne.s32.totalorder %s266, %s268
      %p272 = scmp.eq.s32.totalorder %s38, 0
      %p273 = por %p271, %p272
      %p274 = scmp.ne.s32.totalorder %s266, %s268
      %p275 = scmp.eq.s32.totalorder %s43, 1
      %p276 = por %p274, %p275
      %p277 = scmp.ne.s32.totalorder %s268, %s269
      %p278 = scmp.eq.s32.totalorder %s43, 0
      %p279 = por %p277, %p278
      %p280 = scmp.ne.s32.totalorder %s268, %s269
      %p281 = scmp.eq.s32.totalorder %s44, 1
      %p282 = por %p280, %p281
      %p284 = scmp.ne.s32.totalorder %s269, %s283
      %p285 = scmp.eq.s32.totalorder %s44, 0
      %p286 = por %p284, %p285
      %s288 = sadd.s32 %s287, 1
      %p291 = scmp.eq.s32.totalorder %s38, 1
      %p292 = scmp.ne.s32.totalorder %s287, %s289
      %p293 = scmp.eq.s32.totalorder %s38, 0
      %p294 = por %p292, %p293
      %p295 = scmp.ne.s32.totalorder %s287, %s289
      %p296 = scmp.eq.s32.totalorder %s43, 1
      %p297 = por %p295, %p296
      %p298 = scmp.ne.s32.totalorder %s289, %s290
      %p299 = scmp.eq.s32.totalorder %s43, 0
      %p300 = por %p298, %p299
      %p301 = scmp.ne.s32.totalorder %s289, %s290
      %p302 = scmp.eq.s32.totalorder %s44, 1
      %p303 = por %p301, %p302
      %p305 = scmp.ne.s32.totalorder %s290, %s304
      %p306 = scmp.eq.s32.totalorder %s44, 0
      %p307 = por %p305, %p306
      %s309 = sadd.s32 %s308, 1
      %p312 = scmp.eq.s32.totalorder %s38, 1
      %p313 = scmp.ne.s32.totalorder %s308, %s310
      %p314 = scmp.eq.s32.totalorder %s38, 0
      %p315 = por %p313, %p314
      %p316 = scmp.ne.s32.totalorder %s308, %s310
      %p317 = scmp.eq.s32.totalorder %s43, 1
      %p318 = por %p316, %p317
      %p319 = scmp.ne.s32.totalorder %s310, %s311
      %p320 = scmp.eq.s32.totalorder %s43, 0
      %p321 = por %p319, %p320
      %p322 = scmp.ne.s32.totalorder %s310, %s311
      %p323 = scmp.eq.s32.totalorder %s44, 1
      %p324 = por %p322, %p323
      %p326 = scmp.ne.s32.totalorder %s311, %s325
      %p327 = scmp.eq.s32.totalorder %s44, 0
      %p328 = por %p326, %p327
      %s330 = sadd.s32 %s329, 1
      %p333 = scmp.eq.s32.totalorder %s38, 1
      %p334 = scmp.ne.s32.totalorder %s329, %s331
      %p335 = scmp.eq.s32.totalorder %s38, 0
      %p336 = por %p334, %p335
      %p337 = scmp.ne.s32.totalorder %s329, %s331
      %p338 = scmp.eq.s32.totalorder %s43, 1
      %p339 = por %p337, %p338
      %p340 = scmp.ne.s32.totalorder %s331, %s332
      %p341 = scmp.eq.s32.totalorder %s43, 0
      %p342 = por %p340, %p341
      %p343 = scmp.ne.s32.totalorder %s331, %s332
      %p344 = scmp.eq.s32.totalorder %s44, 1
      %p345 = por %p343, %p344
      %p347 = scmp.ne.s32.totalorder %s332, %s346
      %p348 = scmp.eq.s32.totalorder %s44, 0
      %p349 = por %p347, %p348
      %s351 = sadd.s32 %s350, 1
      %p354 = scmp.eq.s32.totalorder %s38, 1
      %p355 = scmp.ne.s32.totalorder %s350, %s352
      %p356 = scmp.eq.s32.totalorder %s38, 0
      %p357 = por %p355, %p356
      %p358 = scmp.ne.s32.totalorder %s350, %s352
      %p359 = scmp.eq.s32.totalorder %s43, 1
      %p360 = por %p358, %p359
      %p361 = scmp.ne.s32.totalorder %s352, %s353
      %p362 = scmp.eq.s32.totalorder %s43, 0
      %p363 = por %p361, %p362
      %p364 = scmp.ne.s32.totalorder %s352, %s353
      %p365 = scmp.eq.s32.totalorder %s44, 1
      %p366 = por %p364, %p365
      %p368 = scmp.ne.s32.totalorder %s353, %s367
      %p369 = scmp.eq.s32.totalorder %s44, 0
      %p370 = por %p368, %p369
      %s372 = sadd.s32 %s371, 1
      %p375 = scmp.eq.s32.totalorder %s38, 1
      %p376 = scmp.ne.s32.totalorder %s371, %s373
      %p377 = scmp.eq.s32.totalorder %s38, 0
      %p378 = por %p376, %p377
      %p379 = scmp.ne.s32.totalorder %s371, %s373
      %p380 = scmp.eq.s32.totalorder %s43, 1
      %p381 = por %p379, %p380
      %p382 = scmp.ne.s32.totalorder %s373, %s374
      %p383 = scmp.eq.s32.totalorder %s43, 0
      %p384 = por %p382, %p383
      %p385 = scmp.ne.s32.totalorder %s373, %s374
      %p386 = scmp.eq.s32.totalorder %s44, 1
      %p387 = por %p385, %p386
      %p389 = scmp.ne.s32.totalorder %s374, %s388
      %p390 = scmp.eq.s32.totalorder %s44, 0
      %p391 = por %p389, %p390
      %s393 = sadd.s32 %s392, 1
      %p396 = scmp.eq.s32.totalorder %s38, 1
      %p397 = scmp.ne.s32.totalorder %s392, %s394
      %p398 = scmp.eq.s32.totalorder %s38, 0
      %p399 = por %p397, %p398
      %p400 = scmp.ne.s32.totalorder %s392, %s394
      %p401 = scmp.eq.s32.totalorder %s43, 1
      %p402 = por %p400, %p401
      %p403 = scmp.ne.s32.totalorder %s394, %s395
      %p404 = scmp.eq.s32.totalorder %s43, 0
      %p405 = por %p403, %p404
      %p406 = scmp.ne.s32.totalorder %s394, %s395
      %p407 = scmp.eq.s32.totalorder %s44, 1
      %p408 = por %p406, %p407
      %p410 = scmp.ne.s32.totalorder %s395, %s409
      %p411 = scmp.eq.s32.totalorder %s44, 0
      %p412 = por %p410, %p411
      %s413 = ssub.s32 %s38, %s45
      %p414 = scmp.eq.s32.totalorder %s413, 0
      %s416 = sadd.s32 %s415, 1
      %s417 = scalar_select %p414, %s415, %s416
      %p420 = pneg %p414
      %p421 = scmp.eq.s32.totalorder %s38, 1
      %p422 = por %p420, %p421
      %p423 = scmp.ne.s32.totalorder %s415, %s418
      %p424 = scmp.eq.s32.totalorder %s38, 0
      %p425 = por %p423, %p424
      %p426 = scmp.ne.s32.totalorder %s415, %s418
      %p427 = scmp.eq.s32.totalorder %s43, 1
      %p428 = por %p426, %p427
      %p429 = scmp.ne.s32.totalorder %s418, %s419
      %p430 = scmp.eq.s32.totalorder %s43, 0
      %p431 = por %p429, %p430
      %p432 = scmp.ne.s32.totalorder %s418, %s419
      %p433 = scmp.eq.s32.totalorder %s44, 1
      %p434 = por %p432, %p433
      %p436 = scmp.ne.s32.totalorder %s419, %s435
      %p437 = scmp.eq.s32.totalorder %s44, 0
      %p438 = por %p436, %p437
      %p439 = scmp.le.s32.totalorder 1, %s38
      %p440 = scmp.lt.s32.totalorder %s38, 3
      %p441 = pnand %p439, %p440
      %p442 = pneg %p441
      // Predicated region
      $region9: #{_lambda_.1} parent=5 // pred_check
        _
      $region10: #{_lambda_.1} parent=5 // pred_check_branch
        %444 = sbr.rel (%p441) target = $region12
      $region11: #{_lambda_.1} parent=5 // pred_region
        %s445 = ssub.s32 %s38, 1
        // Predicated region
        $region13: #{_lambda_.1} parent=11 // pred_check
          %p446 = pneg %p111
        $region14: #{_lambda_.1} parent=11 // pred_check_branch
          %448 = sbr.rel (%p446) target = $region16
        $region15: #{_lambda_.1} parent=11 // pred_region
          _
        $region16: #{_lambda_.1} parent=11 // pred_fallthru
          _
        // Predicated region
        $region17: #{_lambda_.1} parent=11 // pred_check
          %p449 = pneg %p132
        $region18: #{_lambda_.1} parent=11 // pred_check_branch
          %451 = sbr.rel (%p449) target = $region20
        $region19: #{_lambda_.1} parent=11 // pred_region
          _
        $region20: #{_lambda_.1} parent=11 // pred_fallthru
          _
        // Predicated region
        $region21: #{_lambda_.1} parent=11 // pred_check
          %p452 = pneg %p153
        $region22: #{_lambda_.1} parent=11 // pred_check_branch
          %454 = sbr.rel (%p452) target = $region24
        $region23: #{_lambda_.1} parent=11 // pred_region
          _
        $region24: #{_lambda_.1} parent=11 // pred_fallthru
          _
        // Predicated region
        $region25: #{_lambda_.1} parent=11 // pred_check
          %p455 = pneg %p174
        $region26: #{_lambda_.1} parent=11 // pred_check_branch
          %457 = sbr.rel (%p455) target = $region28
        $region27: #{_lambda_.1} parent=11 // pred_region
          _
        $region28: #{_lambda_.1} parent=11 // pred_fallthru
          _
        // Predicated region
        $region29: #{_lambda_.1} parent=11 // pred_check
          %p458 = pneg %p195
        $region30: #{_lambda_.1} parent=11 // pred_check_branch
          %460 = sbr.rel (%p458) target = $region32
        $region31: #{_lambda_.1} parent=11 // pred_region
          _
        $region32: #{_lambda_.1} parent=11 // pred_fallthru
          _
        // Predicated region
        $region33: #{_lambda_.1} parent=11 // pred_check
          %p461 = pneg %p216
        $region34: #{_lambda_.1} parent=11 // pred_check_branch
          %463 = sbr.rel (%p461) target = $region36
        $region35: #{_lambda_.1} parent=11 // pred_region
          _
        $region36: #{_lambda_.1} parent=11 // pred_fallthru
          _
        // Predicated region
        $region37: #{_lambda_.1} parent=11 // pred_check
          %p464 = pneg %p237
        $region38: #{_lambda_.1} parent=11 // pred_check_branch
          %466 = sbr.rel (%p464) target = $region40
        $region39: #{_lambda_.1} parent=11 // pred_region
          _
        $region40: #{_lambda_.1} parent=11 // pred_fallthru
          _
        // Predicated region
        $region41: #{_lambda_.1} parent=11 // pred_check
          %p467 = pneg %p258
        $region42: #{_lambda_.1} parent=11 // pred_check_branch
          %469 = sbr.rel (%p467) target = $region44
        $region43: #{_lambda_.1} parent=11 // pred_region
          _
        $region44: #{_lambda_.1} parent=11 // pred_fallthru
          _
        // Predicated region
        $region45: #{_lambda_.1} parent=11 // pred_check
          %p470 = pneg %p279
        $region46: #{_lambda_.1} parent=11 // pred_check_branch
          %472 = sbr.rel (%p470) target = $region48
        $region47: #{_lambda_.1} parent=11 // pred_region
          _
        $region48: #{_lambda_.1} parent=11 // pred_fallthru
          _
        // Predicated region
        $region49: #{_lambda_.1} parent=11 // pred_check
          %p473 = pneg %p300
        $region50: #{_lambda_.1} parent=11 // pred_check_branch
          %475 = sbr.rel (%p473) target = $region52
        $region51: #{_lambda_.1} parent=11 // pred_region
          _
        $region52: #{_lambda_.1} parent=11 // pred_fallthru
          _
        // Predicated region
        $region53: #{_lambda_.1} parent=11 // pred_check
          %p476 = pneg %p321
        $region54: #{_lambda_.1} parent=11 // pred_check_branch
          %478 = sbr.rel (%p476) target = $region56
        $region55: #{_lambda_.1} parent=11 // pred_region
          _
        $region56: #{_lambda_.1} parent=11 // pred_fallthru
          _
        // Predicated region
        $region57: #{_lambda_.1} parent=11 // pred_check
          %p479 = pneg %p342
        $region58: #{_lambda_.1} parent=11 // pred_check_branch
          %481 = sbr.rel (%p479) target = $region60
        $region59: #{_lambda_.1} parent=11 // pred_region
          _
        $region60: #{_lambda_.1} parent=11 // pred_fallthru
          _
        // Predicated region
        $region61: #{_lambda_.1} parent=11 // pred_check
          %p482 = pneg %p363
        $region62: #{_lambda_.1} parent=11 // pred_check_branch
          %484 = sbr.rel (%p482) target = $region64
        $region63: #{_lambda_.1} parent=11 // pred_region
          _
        $region64: #{_lambda_.1} parent=11 // pred_fallthru
          _
        // Predicated region
        $region65: #{_lambda_.1} parent=11 // pred_check
          %p485 = pneg %p384
        $region66: #{_lambda_.1} parent=11 // pred_check_branch
          %487 = sbr.rel (%p485) target = $region68
        $region67: #{_lambda_.1} parent=11 // pred_region
          _
        $region68: #{_lambda_.1} parent=11 // pred_fallthru
          _
        // Predicated region
        $region69: #{_lambda_.1} parent=11 // pred_check
          %p488 = pneg %p405
        $region70: #{_lambda_.1} parent=11 // pred_check_branch
          %490 = sbr.rel (%p488) target = $region72
        $region71: #{_lambda_.1} parent=11 // pred_region
          _
        $region72: #{_lambda_.1} parent=11 // pred_fallthru
          _
      $region12: #{_lambda_.1} parent=5 // pred_fallthru
        _
      %p491 = scmp.lt.s32.totalorder %s38, 2
      // Predicated region
      $region73: #{_lambda_.1} parent=5 // pred_check
        %p492 = pneg %p491
      $region74: #{_lambda_.1} parent=5 // pred_check_branch
        %494 = sbr.rel (%p492) target = $region76
      $region75: #{_lambda_.1} parent=5 // pred_region
        // Predicated region
        $region77: #{_lambda_.1} parent=75 // pred_check
          %p495 = pneg %p58
        $region78: #{_lambda_.1} parent=75 // pred_check_branch
          %497 = sbr.rel (%p495) target = $region80
        $region79: #{_lambda_.1} parent=75 // pred_region
          %p498 = scmp.lt.s32.totalorder %s38, 1
          %s499 = scalar_select %p498, %s38, 1
          %s500 = smul.addr %s499, 8
          %s501 = scalar_lea.vmem %s2, %s500
        $region80: #{_lambda_.1} parent=75 // pred_fallthru
          _
        // Predicated region
        $region81: #{_lambda_.1} parent=75 // pred_check
          %p502 = pneg %p84
        $region82: #{_lambda_.1} parent=75 // pred_check_branch
          %504 = sbr.rel (%p502) target = $region84
        $region83: #{_lambda_.1} parent=75 // pred_region
          %p505 = scmp.lt.s32.totalorder %s38, 1
          %s506 = scalar_select %p505, %s38, 1
          %s507 = smul.addr %s506, 8
          %s508 = scalar_lea.vmem %s3, %s507
        $region84: #{_lambda_.1} parent=75 // pred_fallthru
          _
      $region76: #{_lambda_.1} parent=5 // pred_fallthru
        _
      %p509 = scmp.le.s32.totalorder 1, %s38
      %p510 = scmp.lt.s32.totalorder %s38, 3
      %p511 = pnand %p509, %p510
      %p512 = pneg %p511
      // Predicated region
      $region85: #{_lambda_.1} parent=5 // pred_check
        _
      $region86: #{_lambda_.1} parent=5 // pred_check_branch
        %514 = sbr.rel (%p511) target = $region88
      $region87: #{_lambda_.1} parent=5 // pred_region
        %s515 = ssub.s32 %s38, 1
        %p516 = scmp.lt.s32.totalorder %s43, 1
        %s517 = scalar_select %p516, %s43, 1
        %s518 = smul.addr %s517, 8
        %s519 = scalar_lea.vmem %s2, %s518
        %p520 = pneg %p64
        %p521 = pneg %p61
        %p522 = scmp.lt.s32.totalorder %s43, 1
        %s523 = scalar_select %p522, %s43, 1
        %s524 = smul.addr %s523, 8
        %s525 = scalar_lea.vmem %s3, %s524
        %p526 = pneg %p90
        %p527 = pneg %p87
        %p528 = pneg %p111
        %p529 = pneg %p108
        %p530 = pneg %p132
        %p531 = pneg %p129
        %p532 = pneg %p153
        %p533 = pneg %p150
        %p534 = pneg %p174
        %p535 = pneg %p171
        %p536 = pneg %p195
        %p537 = pneg %p192
        %p538 = pneg %p216
        %p539 = pneg %p213
        %p540 = pneg %p237
        %p541 = pneg %p234
        %p542 = pneg %p258
        %p543 = pneg %p255
        %p544 = pneg %p279
        %p545 = pneg %p276
        %p546 = pneg %p300
        %p547 = pneg %p297
        %p548 = pneg %p321
        %p549 = pneg %p318
        %p550 = pneg %p342
        %p551 = pneg %p339
        %p552 = pneg %p363
        %p553 = pneg %p360
        %p554 = pneg %p384
        %p555 = pneg %p381
        %p556 = pneg %p405
        %p557 = pneg %p402
        %p558 = pneg %p431
        %p559 = pneg %p428
        %s560 = sand.u32 %s418, 1
        %s561 = scalar_lea.sflag [#allocation6], %s560
        %s562 = sand.u32 %s418, 1
        %s563 = smul.addr %s562, 8
        %s564 = scalar_lea.vmem [#allocation5], %s563
        %p565 = scmp.lt.s32.totalorder %s43, 1
        %s566 = scalar_select %p565, %s43, 1
        %s567 = smul.addr %s566, 8
        %s568 = scalar_lea.vmem %s2, %s567
        %p569 = scmp.lt.s32.totalorder %s43, 1
        %s570 = scalar_select %p569, %s43, 1
        %s571 = smul.addr %s570, 8
        %s572 = scalar_lea.vmem %s3, %s571
        %s574 = sld [smem:[#allocation3 + %s43]]
        %s575 = sld [smem:[#allocation4 + %s43]]
        %v576 = vlaneseq
        %v577 = vand.u32 %v576, 127
        %v578 = vstv %s574
        %vm579 = vcmp.lt.s32.totalorder %v577, %v578
        %v580 = vlaneseq
        %v581 = vshrl.u32 %v580, 7
        %v582 = vstv %s575
        %vm583 = vcmp.lt.s32.totalorder %v577, %v582
        %vm584 = vcmp.le.s32.totalorder %v577, %v581
        %vm585 = vmand %vm583, %vm584
        %v586 = vld [vmem:[%s568] sm:$0xff]
        %v587 = vld [vmem:[%s4] sm:$0xf]
        %v588 = vld [vmem:[%s4 + $0x4] sm:$0xf]
        %v589 = vld [vmem:[%s4 + $0x8] sm:$0xf]
        %v590 = vld [vmem:[%s4 + $0xc] sm:$0xf]
        %v591 = vld [vmem:[%s4 + $0x10] sm:$0xf]
        %v592 = vld [vmem:[%s4 + $0x14] sm:$0xf]
        %v593 = vld [vmem:[%s4 + $0x18] sm:$0xf]
        %v594 = vld [vmem:[%s4 + $0x1c] sm:$0xf]
        %v595 = vld [vmem:[%s4 + $0x20] sm:$0xf]
        %v596 = vld [vmem:[%s4 + $0x24] sm:$0xf]
        %v597 = vld [vmem:[%s4 + $0x28] sm:$0xf]
        %v598 = vld [vmem:[%s4 + $0x2c] sm:$0xf]
        %v599 = vld [vmem:[%s4 + $0x30] sm:$0xf]
        %v600 = vld [vmem:[%s4 + $0x34] sm:$0xf]
        %v601 = vld [vmem:[%s4 + $0x38] sm:$0xf]
        %v602 = vld [vmem:[%s4 + $0x3c] sm:$0xf]
        %v603 = vld [vmem:[%s5] sm:$0x1]
        %v604 = vld [vmem:[%s5 + $0x1] sm:$0x1]
        %v605 = vld [vmem:[%s5 + $0x2] sm:$0x1]
        %v606 = vld [vmem:[%s5 + $0x3] sm:$0x1]
        %v607 = vpack.c.bf16 %v586, %v586
        %v612 = vlaneseq
        %v613 = vshrl.u32 %v612, 7
        %v614 = vsub.s32 0, %v613
        %v615 = vrot.slane %v603, %v614
        %v616 = vlaneseq
        %v617 = vshrl.u32 %v616, 7
        %v618 = vsub.s32 0, %v617
        %v619 = vrot.slane %v604, %v618
        %v620 = vlaneseq
        %v621 = vshrl.u32 %v620, 7
        %v622 = vsub.s32 0, %v621
        %v623 = vrot.slane %v605, %v622
        %v624 = vlaneseq
        %v625 = vshrl.u32 %v624, 7
        %v626 = vsub.s32 0, %v625
        %v627 = vrot.slane %v606, %v626
        %v636 = vunpack.c.l.b16 %v587
        %v637 = vunpack.c.l.b16 %v588
        %v638 = vunpack.c.l.b16 %v589
        %v639 = vunpack.c.l.b16 %v590
        %v640 = vpack.c.b16 %v637, %v636
        %v641 = vpack.c.b16 %v639, %v638
        %vm644 = vcmask 261120
        %v646 = vsel %vm644, %v607, 0
        %648 = vmatprep.subr.bf16.mxu0 0
        %649 = vmatpush1.bf16.msra.mxu0 0
        %650 = vmatprep.subr.bf16.mxu0 0
        %651 = vmatpush1.bf16.msra.mxu0 0
        %652 = vmatprep.subr.bf16.mxu0 0
        %653 = vmatpush1.bf16.msra.mxu0 0
        %654 = vmatprep.subr.bf16.mxu0 0
        %655 = vmatpush1.bf16.msra.mxu0 0
        %656 = vmatprep.subr.bf16.mxu0 0
        %657 = vmatpush1.bf16.msra.mxu0 0
        %658 = vmatprep.subr.bf16.mxu0 0
        %659 = vmatpush1.bf16.msra.mxu0 0
        %660 = vmatprep.subr.bf16.mxu0 0
        %661 = vmatpush1.bf16.msra.mxu0 %v641
        %662 = vmatprep.subr.bf16.mxu0 0
        %663 = vmatpush1.bf16.msra.mxu0 %v640
        %664 = vmatprep.subr.bf16.mxu0 0
        %665 = vmatpush2.bf16.msra.mxu0 0
        %666 = vmatprep.subr.bf16.mxu0 0
        %667 = vmatpush2.bf16.msra.mxu0 0
        %668 = vmatprep.subr.bf16.mxu0 0
        %669 = vmatpush2.bf16.msra.mxu0 0
        %670 = vmatprep.subr.bf16.mxu0 0
        %671 = vmatpush2.bf16.msra.mxu0 0
        %672 = vmatprep.subr.bf16.mxu0 0
        %673 = vmatpush2.bf16.msra.mxu0 0
        %674 = vmatprep.subr.bf16.mxu0 0
        %675 = vmatpush2.bf16.msra.mxu0 0
        %676 = vmatprep.subr.bf16.mxu0 0
        %677 = vmatpush2.bf16.msra.mxu0 0
        %678 = vmatprep.subr.bf16.mxu0 0
        %679 = vmatpush2.bf16.msra.mxu0 0
        %680 = vmatprep.mubr.bf16.mxu0 0
        %681 = vmatmul.mubr.bf16.gmra.mxu0 %v646
        %v682 = vpop.f32.mrf.mxu0
        %v683 = vadd.f32 %v615, %v682
        %v684 = vpop.f32.mrf.mxu0
        %v685 = vpop.f32.mrf.mxu0
        %v686 = vpop.f32.mrf.mxu0
        %687 = vdwg.mxu0
        %v692 = vunpack.c.l.b16 %v591
        %v693 = vunpack.c.l.b16 %v592
        %v694 = vunpack.c.l.b16 %v593
        %v695 = vunpack.c.l.b16 %v594
        %v696 = vpack.c.b16 %v693, %v692
        %v697 = vpack.c.b16 %v695, %v694
        %700 = vmatprep.subr.bf16.mxu0 0
        %701 = vmatpush1.bf16.msra.mxu0 0
        %702 = vmatprep.subr.bf16.mxu0 0
        %703 = vmatpush1.bf16.msra.mxu0 0
        %704 = vmatprep.subr.bf16.mxu0 0
        %705 = vmatpush1.bf16.msra.mxu0 0
        %706 = vmatprep.subr.bf16.mxu0 0
        %707 = vmatpush1.bf16.msra.mxu0 0
        %708 = vmatprep.subr.bf16.mxu0 0
        %709 = vmatpush1.bf16.msra.mxu0 0
        %710 = vmatprep.subr.bf16.mxu0 0
        %711 = vmatpush1.bf16.msra.mxu0 0
        %712 = vmatprep.subr.bf16.mxu0 0
        %713 = vmatpush1.bf16.msra.mxu0 %v697
        %714 = vmatprep.subr.bf16.mxu0 0
        %715 = vmatpush1.bf16.msra.mxu0 %v696
        %716 = vmatprep.subr.bf16.mxu0 0
        %717 = vmatpush2.bf16.msra.mxu0 0
        %718 = vmatprep.subr.bf16.mxu0 0
        %719 = vmatpush2.bf16.msra.mxu0 0
        %720 = vmatprep.subr.bf16.mxu0 0
        %721 = vmatpush2.bf16.msra.mxu0 0
        %722 = vmatprep.subr.bf16.mxu0 0
        %723 = vmatpush2.bf16.msra.mxu0 0
        %724 = vmatprep.subr.bf16.mxu0 0
        %725 = vmatpush2.bf16.msra.mxu0 0
        %726 = vmatprep.subr.bf16.mxu0 0
        %727 = vmatpush2.bf16.msra.mxu0 0
        %728 = vmatprep.subr.bf16.mxu0 0
        %729 = vmatpush2.bf16.msra.mxu0 0
        %730 = vmatprep.subr.bf16.mxu0 0
        %731 = vmatpush2.bf16.msra.mxu0 0
        %732 = vmatprep.mubr.bf16.mxu0 0
        %733 = vmatmul.mubr.bf16.gmra.mxu0 %v646
        %v734 = vpop.f32.mrf.mxu0
        %v735 = vadd.f32 %v619, %v734
        %v736 = vpop.f32.mrf.mxu0
        %v737 = vpop.f32.mrf.mxu0
        %v738 = vpop.f32.mrf.mxu0
        %739 = vdwg.mxu0
        %v744 = vunpack.c.l.b16 %v595
        %v745 = vunpack.c.l.b16 %v596
        %v746 = vunpack.c.l.b16 %v597
        %v747 = vunpack.c.l.b16 %v598
        %v748 = vpack.c.b16 %v745, %v744
        %v749 = vpack.c.b16 %v747, %v746
        %752 = vmatprep.subr.bf16.mxu0 0
        %753 = vmatpush1.bf16.msra.mxu0 0
        %754 = vmatprep.subr.bf16.mxu0 0
        %755 = vmatpush1.bf16.msra.mxu0 0
        %756 = vmatprep.subr.bf16.mxu0 0
        %757 = vmatpush1.bf16.msra.mxu0 0
        %758 = vmatprep.subr.bf16.mxu0 0
        %759 = vmatpush1.bf16.msra.mxu0 0
        %760 = vmatprep.subr.bf16.mxu0 0
        %761 = vmatpush1.bf16.msra.mxu0 0
        %762 = vmatprep.subr.bf16.mxu0 0
        %763 = vmatpush1.bf16.msra.mxu0 0
        %764 = vmatprep.subr.bf16.mxu0 0
        %765 = vmatpush1.bf16.msra.mxu0 %v749
        %766 = vmatprep.subr.bf16.mxu0 0
        %767 = vmatpush1.bf16.msra.mxu0 %v748
        %768 = vmatprep.subr.bf16.mxu0 0
        %769 = vmatpush2.bf16.msra.mxu0 0
        %770 = vmatprep.subr.bf16.mxu0 0
        %771 = vmatpush2.bf16.msra.mxu0 0
        %772 = vmatprep.subr.bf16.mxu0 0
        %773 = vmatpush2.bf16.msra.mxu0 0
        %774 = vmatprep.subr.bf16.mxu0 0
        %775 = vmatpush2.bf16.msra.mxu0 0
        %776 = vmatprep.subr.bf16.mxu0 0
        %777 = vmatpush2.bf16.msra.mxu0 0
        %778 = vmatprep.subr.bf16.mxu0 0
        %779 = vmatpush2.bf16.msra.mxu0 0
        %780 = vmatprep.subr.bf16.mxu0 0
        %781 = vmatpush2.bf16.msra.mxu0 0
        %782 = vmatprep.subr.bf16.mxu0 0
        %783 = vmatpush2.bf16.msra.mxu0 0
        %784 = vmatprep.mubr.bf16.mxu0 0
        %785 = vmatmul.mubr.bf16.gmra.mxu0 %v646
        %v786 = vpop.f32.mrf.mxu0
        %v787 = vadd.f32 %v623, %v786
        %v788 = vpop.f32.mrf.mxu0
        %v789 = vpop.f32.mrf.mxu0
        %v790 = vpop.f32.mrf.mxu0
        %791 = vdwg.mxu0
        %v796 = vunpack.c.l.b16 %v599
        %v797 = vunpack.c.l.b16 %v600
        %v798 = vunpack.c.l.b16 %v601
        %v799 = vunpack.c.l.b16 %v602
        %v800 = vpack.c.b16 %v797, %v796
        %v801 = vpack.c.b16 %v799, %v798
        %804 = vmatprep.subr.bf16.mxu0 0
        %805 = vmatpush1.bf16.msra.mxu0 0
        %806 = vmatprep.subr.bf16.mxu0 0
        %807 = vmatpush1.bf16.msra.mxu0 0
        %808 = vmatprep.subr.bf16.mxu0 0
        %809 = vmatpush1.bf16.msra.mxu0 0
        %810 = vmatprep.subr.bf16.mxu0 0
        %811 = vmatpush1.bf16.msra.mxu0 0
        %812 = vmatprep.subr.bf16.mxu0 0
        %813 = vmatpush1.bf16.msra.mxu0 0
        %814 = vmatprep.subr.bf16.mxu0 0
        %815 = vmatpush1.bf16.msra.mxu0 0
        %816 = vmatprep.subr.bf16.mxu0 0
        %817 = vmatpush1.bf16.msra.mxu0 %v801
        %818 = vmatprep.subr.bf16.mxu0 0
        %819 = vmatpush1.bf16.msra.mxu0 %v800
        %820 = vmatprep.subr.bf16.mxu0 0
        %821 = vmatpush2.bf16.msra.mxu0 0
        %822 = vmatprep.subr.bf16.mxu0 0
        %823 = vmatpush2.bf16.msra.mxu0 0
        %824 = vmatprep.subr.bf16.mxu0 0
        %825 = vmatpush2.bf16.msra.mxu0 0
        %826 = vmatprep.subr.bf16.mxu0 0
        %827 = vmatpush2.bf16.msra.mxu0 0
        %828 = vmatprep.subr.bf16.mxu0 0
        %829 = vmatpush2.bf16.msra.mxu0 0
        %830 = vmatprep.subr.bf16.mxu0 0
        %831 = vmatpush2.bf16.msra.mxu0 0
        %832 = vmatprep.subr.bf16.mxu0 0
        %833 = vmatpush2.bf16.msra.mxu0 0
        %834 = vmatprep.subr.bf16.mxu0 0
        %835 = vmatpush2.bf16.msra.mxu0 0
        %836 = vmatprep.mubr.bf16.mxu0 0
        %837 = vmatmul.mubr.bf16.gmra.mxu0 %v646
        %v838 = vpop.f32.mrf.mxu0
        %v839 = vadd.f32 %v627, %v838
        %v840 = vpop.f32.mrf.mxu0
        %v841 = vpop.f32.mrf.mxu0
        %v842 = vpop.f32.mrf.mxu0
        %843 = vdwg.mxu0
        %v844 = vld [vmem:[%s6] sm:$0xf]
        %v845 = vld [vmem:[%s6 + $0x4] sm:$0xf]
        %v846 = vld [vmem:[%s6 + $0x8] sm:$0xf]
        %v847 = vld [vmem:[%s6 + $0xc] sm:$0xf]
        %v848 = vld [vmem:[%s9] sm:$0x1]
        %v849 = vpack.c.bf16 %v683, %v683
        %v850 = vpack.c.bf16 %v735, %v735
        %v851 = vpack.c.bf16 %v787, %v787
        %v852 = vpack.c.bf16 %v839, %v839
        %854 = vrot.lane.b32.xlu0 %v849, 120
        %v855 = vpop.permute.xlu0 %854
        %vm856 = vcmask 64512
        %v858 = vsel %vm856, %v849, 0
        %v861 = vsel %vm856, %v855, 0
        %863 = vmatprep.subr.bf16.mxu0 0
        %864 = vmatpush1.bf16.xpose.msra.mxu0 0
        %865 = vmatprep.subr.bf16.mxu0 0
        %866 = vmatpush1.bf16.xpose.msra.mxu0 0
        %867 = vmatprep.subr.bf16.mxu0 0
        %868 = vmatpush1.bf16.xpose.msra.mxu0 0
        %869 = vmatprep.subr.bf16.mxu0 0
        %870 = vmatpush1.bf16.xpose.msra.mxu0 0
        %871 = vmatprep.subr.bf16.mxu0 0
        %872 = vmatpush1.bf16.xpose.msra.mxu0 0
        %873 = vmatprep.subr.bf16.mxu0 0
        %874 = vmatpush1.bf16.xpose.msra.mxu0 0
        %875 = vmatprep.subr.bf16.mxu0 0
        %876 = vmatpush1.bf16.xpose.msra.mxu0 0
        %877 = vmatprep.subr.bf16.mxu0 0
        %878 = vmatpush1.bf16.xpose.msra.mxu0 %v861
        %879 = vmatprep.subr.bf16.mxu0 0
        %880 = vmatpush2.bf16.xpose.msra.mxu0 0
        %881 = vmatprep.subr.bf16.mxu0 0
        %882 = vmatpush2.bf16.xpose.msra.mxu0 0
        %883 = vmatprep.subr.bf16.mxu0 0
        %884 = vmatpush2.bf16.xpose.msra.mxu0 0
        %885 = vmatprep.subr.bf16.mxu0 0
        %886 = vmatpush2.bf16.xpose.msra.mxu0 0
        %887 = vmatprep.subr.bf16.mxu0 0
        %888 = vmatpush2.bf16.xpose.msra.mxu0 0
        %889 = vmatprep.subr.bf16.mxu0 0
        %890 = vmatpush2.bf16.xpose.msra.mxu0 0
        %891 = vmatprep.subr.bf16.mxu0 0
        %892 = vmatpush2.bf16.xpose.msra.mxu0 0
        %893 = vmatprep.subr.bf16.mxu0 0
        %894 = vmatpush2.bf16.xpose.msra.mxu0 0
        %895 = vmatprep.mubr.bf16.mxu0 0
        %896 = vmatmul.mubr.bf16.gmra.mxu0 %v858
        %v897 = vpop.f32.mrf.mxu0
        %v898 = vadd.f32 0.0, %v897
        %v899 = vpop.f32.mrf.mxu0
        %v900 = vpop.f32.mrf.mxu0
        %v901 = vpop.f32.mrf.mxu0
        %902 = vdwg.mxu0
        %904 = vrot.lane.b32.xlu0 %v850, 120
        %v905 = vpop.permute.xlu0 %904
        %v907 = vsel %vm856, %v850, 0
        %v910 = vsel %vm856, %v905, 0
        %912 = vmatprep.subr.bf16.mxu0 0
        %913 = vmatpush1.bf16.xpose.msra.mxu0 0
        %914 = vmatprep.subr.bf16.mxu0 0
        %915 = vmatpush1.bf16.xpose.msra.mxu0 0
        %916 = vmatprep.subr.bf16.mxu0 0
        %917 = vmatpush1.bf16.xpose.msra.mxu0 0
        %918 = vmatprep.subr.bf16.mxu0 0
        %919 = vmatpush1.bf16.xpose.msra.mxu0 0
        %920 = vmatprep.subr.bf16.mxu0 0
        %921 = vmatpush1.bf16.xpose.msra.mxu0 0
        %922 = vmatprep.subr.bf16.mxu0 0
        %923 = vmatpush1.bf16.xpose.msra.mxu0 0
        %924 = vmatprep.subr.bf16.mxu0 0
        %925 = vmatpush1.bf16.xpose.msra.mxu0 0
        %926 = vmatprep.subr.bf16.mxu0 0
        %927 = vmatpush1.bf16.xpose.msra.mxu0 %v910
        %928 = vmatprep.subr.bf16.mxu0 0
        %929 = vmatpush2.bf16.xpose.msra.mxu0 0
        %930 = vmatprep.subr.bf16.mxu0 0
        %931 = vmatpush2.bf16.xpose.msra.mxu0 0
        %932 = vmatprep.subr.bf16.mxu0 0
        %933 = vmatpush2.bf16.xpose.msra.mxu0 0
        %934 = vmatprep.subr.bf16.mxu0 0
        %935 = vmatpush2.bf16.xpose.msra.mxu0 0
        %936 = vmatprep.subr.bf16.mxu0 0
        %937 = vmatpush2.bf16.xpose.msra.mxu0 0
        %938 = vmatprep.subr.bf16.mxu0 0
        %939 = vmatpush2.bf16.xpose.msra.mxu0 0
        %940 = vmatprep.subr.bf16.mxu0 0
        %941 = vmatpush2.bf16.xpose.msra.mxu0 0
        %942 = vmatprep.subr.bf16.mxu0 0
        %943 = vmatpush2.bf16.xpose.msra.mxu0 0
        %944 = vmatprep.mubr.bf16.mxu0 0
        %945 = vmatmul.mubr.bf16.gmra.mxu0 %v907
        %v946 = vpop.f32.mrf.mxu0
        %v947 = vadd.f32 0.0, %v946
        %v948 = vpop.f32.mrf.mxu0
        %v949 = vpop.f32.mrf.mxu0
        %v950 = vpop.f32.mrf.mxu0
        %951 = vdwg.mxu0
        %953 = vrot.lane.b32.xlu0 %v851, 120
        %v954 = vpop.permute.xlu0 %953
        %v956 = vsel %vm856, %v851, 0
        %v959 = vsel %vm856, %v954, 0
        %961 = vmatprep.subr.bf16.mxu0 0
        %962 = vmatpush1.bf16.xpose.msra.mxu0 0
        %963 = vmatprep.subr.bf16.mxu0 0
        %964 = vmatpush1.bf16.xpose.msra.mxu0 0
        %965 = vmatprep.subr.bf16.mxu0 0
        %966 = vmatpush1.bf16.xpose.msra.mxu0 0
        %967 = vmatprep.subr.bf16.mxu0 0
        %968 = vmatpush1.bf16.xpose.msra.mxu0 0
        %969 = vmatprep.subr.bf16.mxu0 0
        %970 = vmatpush1.bf16.xpose.msra.mxu0 0
        %971 = vmatprep.subr.bf16.mxu0 0
        %972 = vmatpush1.bf16.xpose.msra.mxu0 0
        %973 = vmatprep.subr.bf16.mxu0 0
        %974 = vmatpush1.bf16.xpose.msra.mxu0 0
        %975 = vmatprep.subr.bf16.mxu0 0
        %976 = vmatpush1.bf16.xpose.msra.mxu0 %v959
        %977 = vmatprep.subr.bf16.mxu0 0
        %978 = vmatpush2.bf16.xpose.msra.mxu0 0
        %979 = vmatprep.subr.bf16.mxu0 0
        %980 = vmatpush2.bf16.xpose.msra.mxu0 0
        %981 = vmatprep.subr.bf16.mxu0 0
        %982 = vmatpush2.bf16.xpose.msra.mxu0 0
        %983 = vmatprep.subr.bf16.mxu0 0
        %984 = vmatpush2.bf16.xpose.msra.mxu0 0
        %985 = vmatprep.subr.bf16.mxu0 0
        %986 = vmatpush2.bf16.xpose.msra.mxu0 0
        %987 = vmatprep.subr.bf16.mxu0 0
        %988 = vmatpush2.bf16.xpose.msra.mxu0 0
        %989 = vmatprep.subr.bf16.mxu0 0
        %990 = vmatpush2.bf16.xpose.msra.mxu0 0
        %991 = vmatprep.subr.bf16.mxu0 0
        %992 = vmatpush2.bf16.xpose.msra.mxu0 0
        %993 = vmatprep.mubr.bf16.mxu0 0
        %994 = vmatmul.mubr.bf16.gmra.mxu0 %v956
        %v995 = vpop.f32.mrf.mxu0
        %v996 = vadd.f32 0.0, %v995
        %v997 = vpop.f32.mrf.mxu0
        %v998 = vpop.f32.mrf.mxu0
        %v999 = vpop.f32.mrf.mxu0
        %1000 = vdwg.mxu0
        %1002 = vrot.lane.b32.xlu0 %v852, 120
        %v1003 = vpop.permute.xlu0 %1002
        %v1005 = vsel %vm856, %v852, 0
        %v1008 = vsel %vm856, %v1003, 0
        %1010 = vmatprep.subr.bf16.mxu0 0
        %1011 = vmatpush1.bf16.xpose.msra.mxu0 0
        %1012 = vmatprep.subr.bf16.mxu0 0
        %1013 = vmatpush1.bf16.xpose.msra.mxu0 0
        %1014 = vmatprep.subr.bf16.mxu0 0
        %1015 = vmatpush1.bf16.xpose.msra.mxu0 0
        %1016 = vmatprep.subr.bf16.mxu0 0
        %1017 = vmatpush1.bf16.xpose.msra.mxu0 0
        %1018 = vmatprep.subr.bf16.mxu0 0
        %1019 = vmatpush1.bf16.xpose.msra.mxu0 0
        %1020 = vmatprep.subr.bf16.mxu0 0
        %1021 = vmatpush1.bf16.xpose.msra.mxu0 0
        %1022 = vmatprep.subr.bf16.mxu0 0
        %1023 = vmatpush1.bf16.xpose.msra.mxu0 0
        %1024 = vmatprep.subr.bf16.mxu0 0
        %1025 = vmatpush1.bf16.xpose.msra.mxu0 %v1008
        %1026 = vmatprep.subr.bf16.mxu0 0
        %1027 = vmatpush2.bf16.xpose.msra.mxu0 0
        %1028 = vmatprep.subr.bf16.mxu0 0
        %1029 = vmatpush2.bf16.xpose.msra.mxu0 0
        %1030 = vmatprep.subr.bf16.mxu0 0
        %1031 = vmatpush2.bf16.xpose.msra.mxu0 0
        %1032 = vmatprep.subr.bf16.mxu0 0
        %1033 = vmatpush2.bf16.xpose.msra.mxu0 0
        %1034 = vmatprep.subr.bf16.mxu0 0
        %1035 = vmatpush2.bf16.xpose.msra.mxu0 0
        %1036 = vmatprep.subr.bf16.mxu0 0
        %1037 = vmatpush2.bf16.xpose.msra.mxu0 0
        %1038 = vmatprep.subr.bf16.mxu0 0
        %1039 = vmatpush2.bf16.xpose.msra.mxu0 0
        %1040 = vmatprep.subr.bf16.mxu0 0
        %1041 = vmatpush2.bf16.xpose.msra.mxu0 0
        %1042 = vmatprep.mubr.bf16.mxu0 0
        %1043 = vmatmul.mubr.bf16.gmra.mxu0 %v1005
        %v1044 = vpop.f32.mrf.mxu0
        %v1045 = vadd.f32 0.0, %v1044
        %v1046 = vpop.f32.mrf.mxu0
        %v1047 = vpop.f32.mrf.mxu0
        %v1048 = vpop.f32.mrf.mxu0
        %1049 = vdwg.mxu0
        %v1050 = vmul.f32 %v898, 0.35355338
        %v1051 = vmul.f32 %v947, 0.35355338
        %v1052 = vmul.f32 %v996, 0.35355338
        %v1053 = vmul.f32 %v1045, 0.35355338
        %v1054 = vsel %vm579, 1, 0
        %vm1055 = vcmp.eq.s32.totalorder %v1054, 1
        %v1056 = vsel %vm1055, %v1050, -1e+10
        %v1057 = vsel %vm1055, %v1051, -1e+10
        %v1058 = vsel %vm1055, %v1052, -1e+10
        %v1059 = vsel %vm1055, %v1053, -1e+10
        %v1060 = vsel %vm856, %v1056, -inf
        %1061 = vmax.xlane.f32.xlu0 %v1060
        %v1062 = vpop.xlane.xlu0 %1061
        %v1063 = vsel %vm856, %v1057, -inf
        %1064 = vmax.xlane.f32.xlu0 %v1063
        %v1065 = vpop.xlane.xlu0 %1064
        %v1066 = vsel %vm856, %v1058, -inf
        %1067 = vmax.xlane.f32.xlu0 %v1066
        %v1068 = vpop.xlane.xlu0 %1067
        %v1069 = vsel %vm856, %v1059, -inf
        %1070 = vmax.xlane.f32.xlu0 %v1069
        %v1071 = vpop.xlane.xlu0 %1070
        %v1072 = vsub.f32 %v1056, %v1062
        %v1073 = vsub.f32 %v1057, %v1065
        %v1074 = vsub.f32 %v1058, %v1068
        %v1075 = vsub.f32 %v1059, %v1071
        %v1076 = vmul.f32 %v1072, 1.442695
        %v1077 = vpow.pop %v1076
        %v1078 = vmul.f32 %v1073, 1.442695
        %v1079 = vpow.pop %v1078
        %v1080 = vmul.f32 %v1074, 1.442695
        %v1081 = vpow.pop %v1080
        %v1082 = vmul.f32 %v1075, 1.442695
        %v1083 = vpow.pop %v1082
        %v1084 = vsel %vm856, %v1077, 0.0
        %1085 = vadd.xlane.f32.xlu0 %v1084
        %v1086 = vpop.xlane.xlu0 %1085
        %v1087 = vsel %vm856, %v1079, 0.0
        %1088 = vadd.xlane.f32.xlu0 %v1087
        %v1089 = vpop.xlane.xlu0 %1088
        %v1090 = vsel %vm856, %v1081, 0.0
        %1091 = vadd.xlane.f32.xlu0 %v1090
        %v1092 = vpop.xlane.xlu0 %1091
        %v1093 = vsel %vm856, %v1083, 0.0
        %1094 = vadd.xlane.f32.xlu0 %v1093
        %v1095 = vpop.xlane.xlu0 %1094
        %v1096 = vrcp.pop %v1086
        %v1097 = vmul.f32 %v1077, %v1096
        %v1098 = vrcp.pop %v1089
        %v1099 = vmul.f32 %v1079, %v1098
        %v1100 = vrcp.pop %v1092
        %v1101 = vmul.f32 %v1081, %v1100
        %v1102 = vrcp.pop %v1095
        %v1103 = vmul.f32 %v1083, %v1102
        %v1104 = vpack.c.bf16 %v1097, %v1097
        %v1105 = vpack.c.bf16 %v1099, %v1099
        %v1106 = vpack.c.bf16 %v1101, %v1101
        %v1107 = vpack.c.bf16 %v1103, %v1103
        %1108 = vrot.lane.b32.xlu0 %v849, 112
        %v1109 = vpop.permute.xlu0 %1108
        %v1111 = vsel %vm856, %v1104, 0
        %vm1113 = vcmask 1043456
        %v1115 = vsel %vm1113, %v1109, 0
        %1117 = vmatprep.subr.bf16.mxu0 0
        %1118 = vmatpush1.bf16.msra.mxu0 0
        %1119 = vmatprep.subr.bf16.mxu0 0
        %1120 = vmatpush1.bf16.msra.mxu0 0
        %1121 = vmatprep.subr.bf16.mxu0 0
        %1122 = vmatpush1.bf16.msra.mxu0 0
        %1123 = vmatprep.subr.bf16.mxu0 0
        %1124 = vmatpush1.bf16.msra.mxu0 0
        %1125 = vmatprep.subr.bf16.mxu0 0
        %1126 = vmatpush1.bf16.msra.mxu0 0
        %1127 = vmatprep.subr.bf16.mxu0 0
        %1128 = vmatpush1.bf16.msra.mxu0 0
        %1129 = vmatprep.subr.bf16.mxu0 0
        %1130 = vmatpush1.bf16.msra.mxu0 0
        %1131 = vmatprep.subr.bf16.mxu0 0
        %1132 = vmatpush1.bf16.msra.mxu0 %v1115
        %1133 = vmatprep.subr.bf16.mxu0 0
        %1134 = vmatpush2.bf16.msra.mxu0 0
        %1135 = vmatprep.subr.bf16.mxu0 0
        %1136 = vmatpush2.bf16.msra.mxu0 0
        %1137 = vmatprep.subr.bf16.mxu0 0
        %1138 = vmatpush2.bf16.msra.mxu0 0
        %1139 = vmatprep.subr.bf16.mxu0 0
        %1140 = vmatpush2.bf16.msra.mxu0 0
        %1141 = vmatprep.subr.bf16.mxu0 0
        %1142 = vmatpush2.bf16.msra.mxu0 0
        %1143 = vmatprep.subr.bf16.mxu0 0
        %1144 = vmatpush2.bf16.msra.mxu0 0
        %1145 = vmatprep.subr.bf16.mxu0 0
        %1146 = vmatpush2.bf16.msra.mxu0 0
        %1147 = vmatprep.subr.bf16.mxu0 0
        %1148 = vmatpush2.bf16.msra.mxu0 0
        %1149 = vmatprep.mubr.bf16.mxu0 0
        %1150 = vmatmul.mubr.bf16.gmra.mxu0 %v1111
        %v1151 = vpop.f32.mrf.mxu0
        %v1152 = vadd.f32 0.0, %v1151
        %v1153 = vpop.f32.mrf.mxu0
        %v1154 = vpop.f32.mrf.mxu0
        %v1155 = vpop.f32.mrf.mxu0
        %1156 = vdwg.mxu0
        %1157 = vrot.lane.b32.xlu0 %v850, 112
        %v1158 = vpop.permute.xlu0 %1157
        %v1160 = vsel %vm856, %v1105, 0
        %v1163 = vsel %vm1113, %v1158, 0
        %1165 = vmatprep.subr.bf16.mxu0 0
        %1166 = vmatpush1.bf16.msra.mxu0 0
        %1167 = vmatprep.subr.bf16.mxu0 0
        %1168 = vmatpush1.bf16.msra.mxu0 0
        %1169 = vmatprep.subr.bf16.mxu0 0
        %1170 = vmatpush1.bf16.msra.mxu0 0
        %1171 = vmatprep.subr.bf16.mxu0 0
        %1172 = vmatpush1.bf16.msra.mxu0 0
        %1173 = vmatprep.subr.bf16.mxu0 0
        %1174 = vmatpush1.bf16.msra.mxu0 0
        %1175 = vmatprep.subr.bf16.mxu0 0
        %1176 = vmatpush1.bf16.msra.mxu0 0
        %1177 = vmatprep.subr.bf16.mxu0 0
        %1178 = vmatpush1.bf16.msra.mxu0 0
        %1179 = vmatprep.subr.bf16.mxu0 0
        %1180 = vmatpush1.bf16.msra.mxu0 %v1163
        %1181 = vmatprep.subr.bf16.mxu0 0
        %1182 = vmatpush2.bf16.msra.mxu0 0
        %1183 = vmatprep.subr.bf16.mxu0 0
        %1184 = vmatpush2.bf16.msra.mxu0 0
        %1185 = vmatprep.subr.bf16.mxu0 0
        %1186 = vmatpush2.bf16.msra.mxu0 0
        %1187 = vmatprep.subr.bf16.mxu0 0
        %1188 = vmatpush2.bf16.msra.mxu0 0
        %1189 = vmatprep.subr.bf16.mxu0 0
        %1190 = vmatpush2.bf16.msra.mxu0 0
        %1191 = vmatprep.subr.bf16.mxu0 0
        %1192 = vmatpush2.bf16.msra.mxu0 0
        %1193 = vmatprep.subr.bf16.mxu0 0
        %1194 = vmatpush2.bf16.msra.mxu0 0
        %1195 = vmatprep.subr.bf16.mxu0 0
        %1196 = vmatpush2.bf16.msra.mxu0 0
        %1197 = vmatprep.mubr.bf16.mxu0 0
        %1198 = vmatmul.mubr.bf16.gmra.mxu0 %v1160
        %v1199 = vpop.f32.mrf.mxu0
        %v1200 = vadd.f32 0.0, %v1199
        %v1201 = vpop.f32.mrf.mxu0
        %v1202 = vpop.f32.mrf.mxu0
        %v1203 = vpop.f32.mrf.mxu0
        %1204 = vdwg.mxu0
        %1205 = vrot.lane.b32.xlu0 %v851, 112
        %v1206 = vpop.permute.xlu0 %1205
        %v1208 = vsel %vm856, %v1106, 0
        %v1211 = vsel %vm1113, %v1206, 0
        %1213 = vmatprep.subr.bf16.mxu0 0
        %1214 = vmatpush1.bf16.msra.mxu0 0
        %1215 = vmatprep.subr.bf16.mxu0 0
        %1216 = vmatpush1.bf16.msra.mxu0 0
        %1217 = vmatprep.subr.bf16.mxu0 0
        %1218 = vmatpush1.bf16.msra.mxu0 0
        %1219 = vmatprep.subr.bf16.mxu0 0
        %1220 = vmatpush1.bf16.msra.mxu0 0
        %1221 = vmatprep.subr.bf16.mxu0 0
        %1222 = vmatpush1.bf16.msra.mxu0 0
        %1223 = vmatprep.subr.bf16.mxu0 0
        %1224 = vmatpush1.bf16.msra.mxu0 0
        %1225 = vmatprep.subr.bf16.mxu0 0
        %1226 = vmatpush1.bf16.msra.mxu0 0
        %1227 = vmatprep.subr.bf16.mxu0 0
        %1228 = vmatpush1.bf16.msra.mxu0 %v1211
        %1229 = vmatprep.subr.bf16.mxu0 0
        %1230 = vmatpush2.bf16.msra.mxu0 0
        %1231 = vmatprep.subr.bf16.mxu0 0
        %1232 = vmatpush2.bf16.msra.mxu0 0
        %1233 = vmatprep.subr.bf16.mxu0 0
        %1234 = vmatpush2.bf16.msra.mxu0 0
        %1235 = vmatprep.subr.bf16.mxu0 0
        %1236 = vmatpush2.bf16.msra.mxu0 0
        %1237 = vmatprep.subr.bf16.mxu0 0
        %1238 = vmatpush2.bf16.msra.mxu0 0
        %1239 = vmatprep.subr.bf16.mxu0 0
        %1240 = vmatpush2.bf16.msra.mxu0 0
        %1241 = vmatprep.subr.bf16.mxu0 0
        %1242 = vmatpush2.bf16.msra.mxu0 0
        %1243 = vmatprep.subr.bf16.mxu0 0
        %1244 = vmatpush2.bf16.msra.mxu0 0
        %1245 = vmatprep.mubr.bf16.mxu0 0
        %1246 = vmatmul.mubr.bf16.gmra.mxu0 %v1208
        %v1247 = vpop.f32.mrf.mxu0
        %v1248 = vadd.f32 0.0, %v1247
        %v1249 = vpop.f32.mrf.mxu0
        %v1250 = vpop.f32.mrf.mxu0
        %v1251 = vpop.f32.mrf.mxu0
        %1252 = vdwg.mxu0
        %1253 = vrot.lane.b32.xlu0 %v852, 112
        %v1254 = vpop.permute.xlu0 %1253
        %v1256 = vsel %vm856, %v1107, 0
        %v1259 = vsel %vm1113, %v1254, 0
        %1261 = vmatprep.subr.bf16.mxu0 0
        %1262 = vmatpush1.bf16.msra.mxu0 0
        %1263 = vmatprep.subr.bf16.mxu0 0
        %1264 = vmatpush1.bf16.msra.mxu0 0
        %1265 = vmatprep.subr.bf16.mxu0 0
        %1266 = vmatpush1.bf16.msra.mxu0 0
        %1267 = vmatprep.subr.bf16.mxu0 0
        %1268 = vmatpush1.bf16.msra.mxu0 0
        %1269 = vmatprep.subr.bf16.mxu0 0
        %1270 = vmatpush1.bf16.msra.mxu0 0
        %1271 = vmatprep.subr.bf16.mxu0 0
        %1272 = vmatpush1.bf16.msra.mxu0 0
        %1273 = vmatprep.subr.bf16.mxu0 0
        %1274 = vmatpush1.bf16.msra.mxu0 0
        %1275 = vmatprep.subr.bf16.mxu0 0
        %1276 = vmatpush1.bf16.msra.mxu0 %v1259
        %1277 = vmatprep.subr.bf16.mxu0 0
        %1278 = vmatpush2.bf16.msra.mxu0 0
        %1279 = vmatprep.subr.bf16.mxu0 0
        %1280 = vmatpush2.bf16.msra.mxu0 0
        %1281 = vmatprep.subr.bf16.mxu0 0
        %1282 = vmatpush2.bf16.msra.mxu0 0
        %1283 = vmatprep.subr.bf16.mxu0 0
        %1284 = vmatpush2.bf16.msra.mxu0 0
        %1285 = vmatprep.subr.bf16.mxu0 0
        %1286 = vmatpush2.bf16.msra.mxu0 0
        %1287 = vmatprep.subr.bf16.mxu0 0
        %1288 = vmatpush2.bf16.msra.mxu0 0
        %1289 = vmatprep.subr.bf16.mxu0 0
        %1290 = vmatpush2.bf16.msra.mxu0 0
        %1291 = vmatprep.subr.bf16.mxu0 0
        %1292 = vmatpush2.bf16.msra.mxu0 0
        %1293 = vmatprep.mubr.bf16.mxu0 0
        %1294 = vmatmul.mubr.bf16.gmra.mxu0 %v1256
        %v1295 = vpop.f32.mrf.mxu0
        %v1296 = vadd.f32 0.0, %v1295
        %v1297 = vpop.f32.mrf.mxu0
        %v1298 = vpop.f32.mrf.mxu0
        %v1299 = vpop.f32.mrf.mxu0
        %1300 = vdwg.mxu0
        %v1301 = vpack.c.bf16 %v1152, %v1152
        %v1302 = vpack.c.bf16 %v1200, %v1200
        %v1303 = vpack.c.bf16 %v1248, %v1248
        %v1304 = vpack.c.bf16 %v1296, %v1296
        %v1306 = vsel %vm856, %v1301, 0
        %v1309 = vsel %vm1113, %v844, 0
        %1311 = vmatprep.subr.bf16.mxu0 0
        %1312 = vmatpush1.bf16.msra.mxu0 0
        %1313 = vmatprep.subr.bf16.mxu0 0
        %1314 = vmatpush1.bf16.msra.mxu0 0
        %1315 = vmatprep.subr.bf16.mxu0 0
        %1316 = vmatpush1.bf16.msra.mxu0 0
        %1317 = vmatprep.subr.bf16.mxu0 0
        %1318 = vmatpush1.bf16.msra.mxu0 0
        %1319 = vmatprep.subr.bf16.mxu0 0
        %1320 = vmatpush1.bf16.msra.mxu0 0
        %1321 = vmatprep.subr.bf16.mxu0 0
        %1322 = vmatpush1.bf16.msra.mxu0 0
        %1323 = vmatprep.subr.bf16.mxu0 0
        %1324 = vmatpush1.bf16.msra.mxu0 0
        %1325 = vmatprep.subr.bf16.mxu0 0
        %1326 = vmatpush1.bf16.msra.mxu0 %v1309
        %1327 = vmatprep.subr.bf16.mxu0 0
        %1328 = vmatpush2.bf16.msra.mxu0 0
        %1329 = vmatprep.subr.bf16.mxu0 0
        %1330 = vmatpush2.bf16.msra.mxu0 0
        %1331 = vmatprep.subr.bf16.mxu0 0
        %1332 = vmatpush2.bf16.msra.mxu0 0
        %1333 = vmatprep.subr.bf16.mxu0 0
        %1334 = vmatpush2.bf16.msra.mxu0 0
        %1335 = vmatprep.subr.bf16.mxu0 0
        %1336 = vmatpush2.bf16.msra.mxu0 0
        %1337 = vmatprep.subr.bf16.mxu0 0
        %1338 = vmatpush2.bf16.msra.mxu0 0
        %1339 = vmatprep.subr.bf16.mxu0 0
        %1340 = vmatpush2.bf16.msra.mxu0 0
        %1341 = vmatprep.subr.bf16.mxu0 0
        %1342 = vmatpush2.bf16.msra.mxu0 0
        %1343 = vmatprep.mubr.bf16.mxu0 0
        %1344 = vmatmul.mubr.bf16.gmra.mxu0 %v1306
        %v1345 = vpop.f32.mrf.mxu0
        %v1346 = vadd.f32 0.0, %v1345
        %v1347 = vpop.f32.mrf.mxu0
        %v1348 = vpop.f32.mrf.mxu0
        %v1349 = vpop.f32.mrf.mxu0
        %1350 = vdwg.mxu0
        %v1352 = vsel %vm856, %v1302, 0
        %v1355 = vsel %vm1113, %v845, 0
        %1357 = vmatprep.subr.bf16.mxu0 0
        %1358 = vmatpush1.bf16.msra.mxu0 0
        %1359 = vmatprep.subr.bf16.mxu0 0
        %1360 = vmatpush1.bf16.msra.mxu0 0
        %1361 = vmatprep.subr.bf16.mxu0 0
        %1362 = vmatpush1.bf16.msra.mxu0 0
        %1363 = vmatprep.subr.bf16.mxu0 0
        %1364 = vmatpush1.bf16.msra.mxu0 0
        %1365 = vmatprep.subr.bf16.mxu0 0
        %1366 = vmatpush1.bf16.msra.mxu0 0
        %1367 = vmatprep.subr.bf16.mxu0 0
        %1368 = vmatpush1.bf16.msra.mxu0 0
        %1369 = vmatprep.subr.bf16.mxu0 0
        %1370 = vmatpush1.bf16.msra.mxu0 0
        %1371 = vmatprep.subr.bf16.mxu0 0
        %1372 = vmatpush1.bf16.msra.mxu0 %v1355
        %1373 = vmatprep.subr.bf16.mxu0 0
        %1374 = vmatpush2.bf16.msra.mxu0 0
        %1375 = vmatprep.subr.bf16.mxu0 0
        %1376 = vmatpush2.bf16.msra.mxu0 0
        %1377 = vmatprep.subr.bf16.mxu0 0
        %1378 = vmatpush2.bf16.msra.mxu0 0
        %1379 = vmatprep.subr.bf16.mxu0 0
        %1380 = vmatpush2.bf16.msra.mxu0 0
        %1381 = vmatprep.subr.bf16.mxu0 0
        %1382 = vmatpush2.bf16.msra.mxu0 0
        %1383 = vmatprep.subr.bf16.mxu0 0
        %1384 = vmatpush2.bf16.msra.mxu0 0
        %1385 = vmatprep.subr.bf16.mxu0 0
        %1386 = vmatpush2.bf16.msra.mxu0 0
        %1387 = vmatprep.subr.bf16.mxu0 0
        %1388 = vmatpush2.bf16.msra.mxu0 0
        %1389 = vmatprep.mubr.bf16.mxu0 0
        %1390 = vmatmul.mubr.bf16.gmra.mxu0 %v1352
        %v1391 = vpop.f32.mrf.mxu0
        %v1392 = vadd.f32 0.0, %v1391
        %v1393 = vpop.f32.mrf.mxu0
        %v1394 = vpop.f32.mrf.mxu0
        %v1395 = vpop.f32.mrf.mxu0
        %1396 = vdwg.mxu0
        %v1398 = vsel %vm856, %v1303, 0
        %v1401 = vsel %vm1113, %v846, 0
        %1403 = vmatprep.subr.bf16.mxu0 0
        %1404 = vmatpush1.bf16.msra.mxu0 0
        %1405 = vmatprep.subr.bf16.mxu0 0
        %1406 = vmatpush1.bf16.msra.mxu0 0
        %1407 = vmatprep.subr.bf16.mxu0 0
        %1408 = vmatpush1.bf16.msra.mxu0 0
        %1409 = vmatprep.subr.bf16.mxu0 0
        %1410 = vmatpush1.bf16.msra.mxu0 0
        %1411 = vmatprep.subr.bf16.mxu0 0
        %1412 = vmatpush1.bf16.msra.mxu0 0
        %1413 = vmatprep.subr.bf16.mxu0 0
        %1414 = vmatpush1.bf16.msra.mxu0 0
        %1415 = vmatprep.subr.bf16.mxu0 0
        %1416 = vmatpush1.bf16.msra.mxu0 0
        %1417 = vmatprep.subr.bf16.mxu0 0
        %1418 = vmatpush1.bf16.msra.mxu0 %v1401
        %1419 = vmatprep.subr.bf16.mxu0 0
        %1420 = vmatpush2.bf16.msra.mxu0 0
        %1421 = vmatprep.subr.bf16.mxu0 0
        %1422 = vmatpush2.bf16.msra.mxu0 0
        %1423 = vmatprep.subr.bf16.mxu0 0
        %1424 = vmatpush2.bf16.msra.mxu0 0
        %1425 = vmatprep.subr.bf16.mxu0 0
        %1426 = vmatpush2.bf16.msra.mxu0 0
        %1427 = vmatprep.subr.bf16.mxu0 0
        %1428 = vmatpush2.bf16.msra.mxu0 0
        %1429 = vmatprep.subr.bf16.mxu0 0
        %1430 = vmatpush2.bf16.msra.mxu0 0
        %1431 = vmatprep.subr.bf16.mxu0 0
        %1432 = vmatpush2.bf16.msra.mxu0 0
        %1433 = vmatprep.subr.bf16.mxu0 0
        %1434 = vmatpush2.bf16.msra.mxu0 0
        %1435 = vmatprep.mubr.bf16.mxu0 0
        %1436 = vmatmul.mubr.bf16.gmra.mxu0 %v1398
        %v1437 = vpop.f32.mrf.mxu0
        %v1438 = vadd.f32 0.0, %v1437
        %v1439 = vpop.f32.mrf.mxu0
        %v1440 = vpop.f32.mrf.mxu0
        %v1441 = vpop.f32.mrf.mxu0
        %1442 = vdwg.mxu0
        %v1444 = vsel %vm856, %v1304, 0
        %v1447 = vsel %vm1113, %v847, 0
        %1449 = vmatprep.subr.bf16.mxu0 0
        %1450 = vmatpush1.bf16.msra.mxu0 0
        %1451 = vmatprep.subr.bf16.mxu0 0
        %1452 = vmatpush1.bf16.msra.mxu0 0
        %1453 = vmatprep.subr.bf16.mxu0 0
        %1454 = vmatpush1.bf16.msra.mxu0 0
        %1455 = vmatprep.subr.bf16.mxu0 0
        %1456 = vmatpush1.bf16.msra.mxu0 0
        %1457 = vmatprep.subr.bf16.mxu0 0
        %1458 = vmatpush1.bf16.msra.mxu0 0
        %1459 = vmatprep.subr.bf16.mxu0 0
        %1460 = vmatpush1.bf16.msra.mxu0 0
        %1461 = vmatprep.subr.bf16.mxu0 0
        %1462 = vmatpush1.bf16.msra.mxu0 0
        %1463 = vmatprep.subr.bf16.mxu0 0
        %1464 = vmatpush1.bf16.msra.mxu0 %v1447
        %1465 = vmatprep.subr.bf16.mxu0 0
        %1466 = vmatpush2.bf16.msra.mxu0 0
        %1467 = vmatprep.subr.bf16.mxu0 0
        %1468 = vmatpush2.bf16.msra.mxu0 0
        %1469 = vmatprep.subr.bf16.mxu0 0
        %1470 = vmatpush2.bf16.msra.mxu0 0
        %1471 = vmatprep.subr.bf16.mxu0 0
        %1472 = vmatpush2.bf16.msra.mxu0 0
        %1473 = vmatprep.subr.bf16.mxu0 0
        %1474 = vmatpush2.bf16.msra.mxu0 0
        %1475 = vmatprep.subr.bf16.mxu0 0
        %1476 = vmatpush2.bf16.msra.mxu0 0
        %1477 = vmatprep.subr.bf16.mxu0 0
        %1478 = vmatpush2.bf16.msra.mxu0 0
        %1479 = vmatprep.subr.bf16.mxu0 0
        %1480 = vmatpush2.bf16.msra.mxu0 0
        %1481 = vmatprep.mubr.bf16.mxu0 0
        %1482 = vmatmul.mubr.bf16.gmra.mxu0 %v1444
        %v1483 = vpop.f32.mrf.mxu0
        %v1484 = vadd.f32 0.0, %v1483
        %v1485 = vpop.f32.mrf.mxu0
        %v1486 = vpop.f32.mrf.mxu0
        %v1487 = vpop.f32.mrf.mxu0
        %1488 = vdwg.mxu0
        %v1489 = vsel %vm644, %v1346, 0.0
        %v1490 = vsel %vm644, %v1392, 0.0
        %v1491 = vadd.f32 %v1489, %v1490
        %v1492 = vsel %vm644, %v1438, 0.0
        %v1493 = vadd.f32 %v1491, %v1492
        %v1494 = vsel %vm644, %v1484, 0.0
        %v1495 = vadd.f32 %v1493, %v1494
        %v1496 = vlaneseq
        %v1497 = vshrl.u32 %v1496, 7
        %v1498 = vsub.s32 0, %v1497
        %v1499 = vrot.slane %v848, %v1498
        %v1500 = vadd.f32 %v1495, %v1499
        %v1501 = vadd.f32 %v586, %v1500
        %v1502 = vld [vmem:[%s9 + $0x1] sm:$0x1]
        %v1503 = vld [vmem:[%s9 + $0x2] sm:$0x1]
        %v1504 = vsel %vm644, %v1501, 0.0
        %1505 = vadd.xlane.f32.xlu0 %v1504
        %v1506 = vpop.xlane.xlu0 %1505
        %v1507 = vrcp.pop 32.0
        %v1508 = vmul.f32 %v1506, %v1507
        %v1509 = vsub.f32 %v1501, %v1508
        %v1510 = vmul.f32 %v1509, %v1509
        %v1511 = vsel %vm644, %v1510, 0.0
        %1512 = vadd.xlane.f32.xlu0 %v1511
        %v1513 = vpop.xlane.xlu0 %1512
        %v1514 = vmul.f32 %v1513, %v1507
        %v1515 = vadd.f32 %v1514, 1e-05
        %v1516 = vrsqrt.pop %v1515
        %v1517 = vmul.f32 %v1509, %v1516
        %v1518 = vlaneseq
        %v1519 = vshrl.u32 %v1518, 7
        %v1520 = vsub.s32 0, %v1519
        %v1521 = vrot.slane %v1502, %v1520
        %v1522 = vmul.f32 %v1517, %v1521
        %v1523 = vlaneseq
        %v1524 = vshrl.u32 %v1523, 7
        %v1525 = vsub.s32 0, %v1524
        %v1526 = vrot.slane %v1503, %v1525
        %v1527 = vadd.f32 %v1522, %v1526
        %v1528 = vld [vmem:[%s7] sm:$0xf]
        %v1529 = vld [vmem:[%s7 + $0x4] sm:$0xf]
        %v1530 = vld [vmem:[%s7 + $0x8] sm:$0xf]
        %v1531 = vld [vmem:[%s7 + $0xc] sm:$0xf]
        %v1532 = vld [vmem:[%s9 + $0x3] sm:$0x1]
        %v1533 = vld [vmem:[%s8] sm:$0xf]
        %v1534 = vld [vmem:[%s8 + $0x4] sm:$0xf]
        %v1535 = vld [vmem:[%s8 + $0x8] sm:$0xf]
        %v1536 = vld [vmem:[%s8 + $0xc] sm:$0xf]
        %v1537 = vld [vmem:[%s8 + $0x10] sm:$0xf]
        %v1538 = vld [vmem:[%s8 + $0x14] sm:$0xf]
        %v1539 = vld [vmem:[%s8 + $0x18] sm:$0xf]
        %v1540 = vld [vmem:[%s8 + $0x1c] sm:$0xf]
        %v1541 = vld [vmem:[%s9 + $0x4] sm:$0x1]
        %v1542 = vpack.c.bf16 %v1527, %v1527
        %v1543 = vlaneseq
        %v1544 = vshrl.u32 %v1543, 7
        %v1545 = vsub.s32 0, %v1544
        %v1546 = vrot.slane %v1532, %v1545
        %v1551 = vunpack.c.l.b16 %v1528
        %v1552 = vunpack.c.l.b16 %v1529
        %v1553 = vunpack.c.l.b16 %v1530
        %v1554 = vunpack.c.l.b16 %v1531
        %v1555 = vpack.c.b16 %v1552, %v1551
        %v1556 = vpack.c.b16 %v1554, %v1553
        %v1560 = vsel %vm644, %v1542, 0
        %1562 = vmatprep.subr.bf16.mxu0 0
        %1563 = vmatpush1.bf16.msra.mxu0 0
        %1564 = vmatprep.subr.bf16.mxu0 0
        %1565 = vmatpush1.bf16.msra.mxu0 0
        %1566 = vmatprep.subr.bf16.mxu0 0
        %1567 = vmatpush1.bf16.msra.mxu0 0
        %1568 = vmatprep.subr.bf16.mxu0 0
        %1569 = vmatpush1.bf16.msra.mxu0 0
        %1570 = vmatprep.subr.bf16.mxu0 0
        %1571 = vmatpush1.bf16.msra.mxu0 0
        %1572 = vmatprep.subr.bf16.mxu0 0
        %1573 = vmatpush1.bf16.msra.mxu0 0
        %1574 = vmatprep.subr.bf16.mxu0 0
        %1575 = vmatpush1.bf16.msra.mxu0 %v1556
        %1576 = vmatprep.subr.bf16.mxu0 0
        %1577 = vmatpush1.bf16.msra.mxu0 %v1555
        %1578 = vmatprep.subr.bf16.mxu0 0
        %1579 = vmatpush2.bf16.msra.mxu0 0
        %1580 = vmatprep.subr.bf16.mxu0 0
        %1581 = vmatpush2.bf16.msra.mxu0 0
        %1582 = vmatprep.subr.bf16.mxu0 0
        %1583 = vmatpush2.bf16.msra.mxu0 0
        %1584 = vmatprep.subr.bf16.mxu0 0
        %1585 = vmatpush2.bf16.msra.mxu0 0
        %1586 = vmatprep.subr.bf16.mxu0 0
        %1587 = vmatpush2.bf16.msra.mxu0 0
        %1588 = vmatprep.subr.bf16.mxu0 0
        %1589 = vmatpush2.bf16.msra.mxu0 0
        %1590 = vmatprep.subr.bf16.mxu0 0
        %1591 = vmatpush2.bf16.msra.mxu0 0
        %1592 = vmatprep.subr.bf16.mxu0 0
        %1593 = vmatpush2.bf16.msra.mxu0 0
        %1594 = vmatprep.mubr.bf16.mxu0 0
        %1595 = vmatmul.mubr.bf16.gmra.mxu0 %v1560
        %v1596 = vpop.f32.mrf.mxu0
        %v1597 = vadd.f32 %v1546, %v1596
        %v1598 = vpop.f32.mrf.mxu0
        %v1599 = vpop.f32.mrf.mxu0
        %v1600 = vpop.f32.mrf.mxu0
        %1601 = vdwg.mxu0
        %v1602 = vmax.f32 %v1597, 0.0
        %v1603 = vpack.c.bf16 %v1602, %v1602
        %v1604 = vlaneseq
        %v1605 = vshrl.u32 %v1604, 7
        %v1606 = vsub.s32 0, %v1605
        %v1607 = vrot.slane %v1541, %v1606
        %v1616 = vunpack.c.l.b16 %v1533
        %v1617 = vunpack.c.l.b16 %v1534
        %v1618 = vunpack.c.l.b16 %v1535
        %v1619 = vunpack.c.l.b16 %v1536
        %v1620 = vunpack.c.l.b16 %v1537
        %v1621 = vunpack.c.l.b16 %v1538
        %v1622 = vunpack.c.l.b16 %v1539
        %v1623 = vunpack.c.l.b16 %v1540
        %v1624 = vpack.c.b16 %v1617, %v1616
        %v1625 = vpack.c.b16 %v1619, %v1618
        %v1626 = vpack.c.b16 %v1621, %v1620
        %v1627 = vpack.c.b16 %v1623, %v1622
        %vm1632 = vcmask 523264
        %v1634 = vsel %vm1632, %v1603, 0
        %1636 = vmatprep.subr.bf16.mxu0 0
        %1637 = vmatpush1.bf16.msra.mxu0 0
        %1638 = vmatprep.subr.bf16.mxu0 0
        %1639 = vmatpush1.bf16.msra.mxu0 0
        %1640 = vmatprep.subr.bf16.mxu0 0
        %1641 = vmatpush1.bf16.msra.mxu0 0
        %1642 = vmatprep.subr.bf16.mxu0 0
        %1643 = vmatpush1.bf16.msra.mxu0 0
        %1644 = vmatprep.subr.bf16.mxu0 0
        %1645 = vmatpush1.bf16.msra.mxu0 %v1627
        %1646 = vmatprep.subr.bf16.mxu0 0
        %1647 = vmatpush1.bf16.msra.mxu0 %v1626
        %1648 = vmatprep.subr.bf16.mxu0 0
        %1649 = vmatpush1.bf16.msra.mxu0 %v1625
        %1650 = vmatprep.subr.bf16.mxu0 0
        %1651 = vmatpush1.bf16.msra.mxu0 %v1624
        %1652 = vmatprep.subr.bf16.mxu0 0
        %1653 = vmatpush2.bf16.msra.mxu0 0
        %1654 = vmatprep.subr.bf16.mxu0 0
        %1655 = vmatpush2.bf16.msra.mxu0 0
        %1656 = vmatprep.subr.bf16.mxu0 0
        %1657 = vmatpush2.bf16.msra.mxu0 0
        %1658 = vmatprep.subr.bf16.mxu0 0
        %1659 = vmatpush2.bf16.msra.mxu0 0
        %1660 = vmatprep.subr.bf16.mxu0 0
        %1661 = vmatpush2.bf16.msra.mxu0 0
        %1662 = vmatprep.subr.bf16.mxu0 0
        %1663 = vmatpush2.bf16.msra.mxu0 0
        %1664 = vmatprep.subr.bf16.mxu0 0
        %1665 = vmatpush2.bf16.msra.mxu0 0
        %1666 = vmatprep.subr.bf16.mxu0 0
        %1667 = vmatpush2.bf16.msra.mxu0 0
        %1668 = vmatprep.mubr.bf16.mxu0 0
        %1669 = vmatmul.mubr.bf16.gmra.mxu0 %v1634
        %v1670 = vpop.f32.mrf.mxu0
        %v1671 = vadd.f32 %v1607, %v1670
        %v1672 = vpop.f32.mrf.mxu0
        %v1673 = vpop.f32.mrf.mxu0
        %v1674 = vpop.f32.mrf.mxu0
        %1675 = vdwg.mxu0
        %v1676 = vadd.f32 %v1527, %v1671
        %v1677 = vld [vmem:[%s9 + $0x5] sm:$0x1]
        %v1678 = vld [vmem:[%s9 + $0x6] sm:$0x1]
        %v1679 = vsel %vm644, %v1676, 0.0
        %1680 = vadd.xlane.f32.xlu0 %v1679
        %v1681 = vpop.xlane.xlu0 %1680
        %v1682 = vmul.f32 %v1681, %v1507
        %v1683 = vsub.f32 %v1676, %v1682
        %v1684 = vmul.f32 %v1683, %v1683
        %v1685 = vsel %vm644, %v1684, 0.0
        %1686 = vadd.xlane.f32.xlu0 %v1685
        %v1687 = vpop.xlane.xlu0 %1686
        %v1688 = vmul.f32 %v1687, %v1507
        %v1689 = vadd.f32 %v1688, 1e-05
        %v1690 = vrsqrt.pop %v1689
        %v1691 = vmul.f32 %v1683, %v1690
        %v1692 = vlaneseq
        %v1693 = vshrl.u32 %v1692, 7
        %v1694 = vsub.s32 0, %v1693
        %v1695 = vrot.slane %v1677, %v1694
        %v1696 = vmul.f32 %v1691, %v1695
        %v1697 = vlaneseq
        %v1698 = vshrl.u32 %v1697, 7
        %v1699 = vsub.s32 0, %v1698
        %v1700 = vrot.slane %v1678, %v1699
        %v1701 = vadd.f32 %v1696, %v1700
        %s1702 = scalar_lea.vmem %s4, 64
        %v1703 = vld [vmem:[%s1702] sm:$0xf]
        %v1704 = vld [vmem:[%s1702 + $0x4] sm:$0xf]
        %v1705 = vld [vmem:[%s1702 + $0x8] sm:$0xf]
        %v1706 = vld [vmem:[%s1702 + $0xc] sm:$0xf]
        %v1707 = vld [vmem:[%s1702 + $0x10] sm:$0xf]
        %v1708 = vld [vmem:[%s1702 + $0x14] sm:$0xf]
        %v1709 = vld [vmem:[%s1702 + $0x18] sm:$0xf]
        %v1710 = vld [vmem:[%s1702 + $0x1c] sm:$0xf]
        %v1711 = vld [vmem:[%s1702 + $0x20] sm:$0xf]
        %v1712 = vld [vmem:[%s1702 + $0x24] sm:$0xf]
        %v1713 = vld [vmem:[%s1702 + $0x28] sm:$0xf]
        %v1714 = vld [vmem:[%s1702 + $0x2c] sm:$0xf]
        %v1715 = vld [vmem:[%s1702 + $0x30] sm:$0xf]
        %v1716 = vld [vmem:[%s1702 + $0x34] sm:$0xf]
        %v1717 = vld [vmem:[%s1702 + $0x38] sm:$0xf]
        %v1718 = vld [vmem:[%s1702 + $0x3c] sm:$0xf]
        %s1719 = scalar_lea.vmem %s5, 4
        %v1720 = vld [vmem:[%s1719] sm:$0x1]
        %v1721 = vld [vmem:[%s1719 + $0x1] sm:$0x1]
        %v1722 = vld [vmem:[%s1719 + $0x2] sm:$0x1]
        %v1723 = vld [vmem:[%s1719 + $0x3] sm:$0x1]
        %v1724 = vpack.c.bf16 %v1701, %v1701
        %v1729 = vlaneseq
        %v1730 = vshrl.u32 %v1729, 7
        %v1731 = vsub.s32 0, %v1730
        %v1732 = vrot.slane %v1720, %v1731
        %v1733 = vlaneseq
        %v1734 = vshrl.u32 %v1733, 7
        %v1735 = vsub.s32 0, %v1734
        %v1736 = vrot.slane %v1721, %v1735
        %v1737 = vlaneseq
        %v1738 = vshrl.u32 %v1737, 7
        %v1739 = vsub.s32 0, %v1738
        %v1740 = vrot.slane %v1722, %v1739
        %v1741 = vlaneseq
        %v1742 = vshrl.u32 %v1741, 7
        %v1743 = vsub.s32 0, %v1742
        %v1744 = vrot.slane %v1723, %v1743
        %v1753 = vunpack.c.l.b16 %v1703
        %v1754 = vunpack.c.l.b16 %v1704
        %v1755 = vunpack.c.l.b16 %v1705
        %v1756 = vunpack.c.l.b16 %v1706
        %v1757 = vpack.c.b16 %v1754, %v1753
        %v1758 = vpack.c.b16 %v1756, %v1755
        %v1762 = vsel %vm644, %v1724, 0
        %1764 = vmatprep.subr.bf16.mxu0 0
        %1765 = vmatpush1.bf16.msra.mxu0 0
        %1766 = vmatprep.subr.bf16.mxu0 0
        %1767 = vmatpush1.bf16.msra.mxu0 0
        %1768 = vmatprep.subr.bf16.mxu0 0
        %1769 = vmatpush1.bf16.msra.mxu0 0
        %1770 = vmatprep.subr.bf16.mxu0 0
        %1771 = vmatpush1.bf16.msra.mxu0 0
        %1772 = vmatprep.subr.bf16.mxu0 0
        %1773 = vmatpush1.bf16.msra.mxu0 0
        %1774 = vmatprep.subr.bf16.mxu0 0
        %1775 = vmatpush1.bf16.msra.mxu0 0
        %1776 = vmatprep.subr.bf16.mxu0 0
        %1777 = vmatpush1.bf16.msra.mxu0 %v1758
        %1778 = vmatprep.subr.bf16.mxu0 0
        %1779 = vmatpush1.bf16.msra.mxu0 %v1757
        %1780 = vmatprep.subr.bf16.mxu0 0
        %1781 = vmatpush2.bf16.msra.mxu0 0
        %1782 = vmatprep.subr.bf16.mxu0 0
        %1783 = vmatpush2.bf16.msra.mxu0 0
        %1784 = vmatprep.subr.bf16.mxu0 0
        %1785 = vmatpush2.bf16.msra.mxu0 0
        %1786 = vmatprep.subr.bf16.mxu0 0
        %1787 = vmatpush2.bf16.msra.mxu0 0
        %1788 = vmatprep.subr.bf16.mxu0 0
        %1789 = vmatpush2.bf16.msra.mxu0 0
        %1790 = vmatprep.subr.bf16.mxu0 0
        %1791 = vmatpush2.bf16.msra.mxu0 0
        %1792 = vmatprep.subr.bf16.mxu0 0
        %1793 = vmatpush2.bf16.msra.mxu0 0
        %1794 = vmatprep.subr.bf16.mxu0 0
        %1795 = vmatpush2.bf16.msra.mxu0 0
        %1796 = vmatprep.mubr.bf16.mxu0 0
        %1797 = vmatmul.mubr.bf16.gmra.mxu0 %v1762
        %v1798 = vpop.f32.mrf.mxu0
        %v1799 = vadd.f32 %v1732, %v1798
        %v1800 = vpop.f32.mrf.mxu0
        %v1801 = vpop.f32.mrf.mxu0
        %v1802 = vpop.f32.mrf.mxu0
        %1803 = vdwg.mxu0
        %v1808 = vunpack.c.l.b16 %v1707
        %v1809 = vunpack.c.l.b16 %v1708
        %v1810 = vunpack.c.l.b16 %v1709
        %v1811 = vunpack.c.l.b16 %v1710
        %v1812 = vpack.c.b16 %v1809, %v1808
        %v1813 = vpack.c.b16 %v1811, %v1810
        %1816 = vmatprep.subr.bf16.mxu0 0
        %1817 = vmatpush1.bf16.msra.mxu0 0
        %1818 = vmatprep.subr.bf16.mxu0 0
        %1819 = vmatpush1.bf16.msra.mxu0 0
        %1820 = vmatprep.subr.bf16.mxu0 0
        %1821 = vmatpush1.bf16.msra.mxu0 0
        %1822 = vmatprep.subr.bf16.mxu0 0
        %1823 = vmatpush1.bf16.msra.mxu0 0
        %1824 = vmatprep.subr.bf16.mxu0 0
        %1825 = vmatpush1.bf16.msra.mxu0 0
        %1826 = vmatprep.subr.bf16.mxu0 0
        %1827 = vmatpush1.bf16.msra.mxu0 0
        %1828 = vmatprep.subr.bf16.mxu0 0
        %1829 = vmatpush1.bf16.msra.mxu0 %v1813
        %1830 = vmatprep.subr.bf16.mxu0 0
        %1831 = vmatpush1.bf16.msra.mxu0 %v1812
        %1832 = vmatprep.subr.bf16.mxu0 0
        %1833 = vmatpush2.bf16.msra.mxu0 0
        %1834 = vmatprep.subr.bf16.mxu0 0
        %1835 = vmatpush2.bf16.msra.mxu0 0
        %1836 = vmatprep.subr.bf16.mxu0 0
        %1837 = vmatpush2.bf16.msra.mxu0 0
        %1838 = vmatprep.subr.bf16.mxu0 0
        %1839 = vmatpush2.bf16.msra.mxu0 0
        %1840 = vmatprep.subr.bf16.mxu0 0
        %1841 = vmatpush2.bf16.msra.mxu0 0
        %1842 = vmatprep.subr.bf16.mxu0 0
        %1843 = vmatpush2.bf16.msra.mxu0 0
        %1844 = vmatprep.subr.bf16.mxu0 0
        %1845 = vmatpush2.bf16.msra.mxu0 0
        %1846 = vmatprep.subr.bf16.mxu0 0
        %1847 = vmatpush2.bf16.msra.mxu0 0
        %1848 = vmatprep.mubr.bf16.mxu0 0
        %1849 = vmatmul.mubr.bf16.gmra.mxu0 %v1762
        %v1850 = vpop.f32.mrf.mxu0
        %v1851 = vadd.f32 %v1736, %v1850
        %v1852 = vpop.f32.mrf.mxu0
        %v1853 = vpop.f32.mrf.mxu0
        %v1854 = vpop.f32.mrf.mxu0
        %1855 = vdwg.mxu0
        %v1860 = vunpack.c.l.b16 %v1711
        %v1861 = vunpack.c.l.b16 %v1712
        %v1862 = vunpack.c.l.b16 %v1713
        %v1863 = vunpack.c.l.b16 %v1714
        %v1864 = vpack.c.b16 %v1861, %v1860
        %v1865 = vpack.c.b16 %v1863, %v1862
        %1868 = vmatprep.subr.bf16.mxu0 0
        %1869 = vmatpush1.bf16.msra.mxu0 0
        %1870 = vmatprep.subr.bf16.mxu0 0
        %1871 = vmatpush1.bf16.msra.mxu0 0
        %1872 = vmatprep.subr.bf16.mxu0 0
        %1873 = vmatpush1.bf16.msra.mxu0 0
        %1874 = vmatprep.subr.bf16.mxu0 0
        %1875 = vmatpush1.bf16.msra.mxu0 0
        %1876 = vmatprep.subr.bf16.mxu0 0
        %1877 = vmatpush1.bf16.msra.mxu0 0
        %1878 = vmatprep.subr.bf16.mxu0 0
        %1879 = vmatpush1.bf16.msra.mxu0 0
        %1880 = vmatprep.subr.bf16.mxu0 0
        %1881 = vmatpush1.bf16.msra.mxu0 %v1865
        %1882 = vmatprep.subr.bf16.mxu0 0
        %1883 = vmatpush1.bf16.msra.mxu0 %v1864
        %1884 = vmatprep.subr.bf16.mxu0 0
        %1885 = vmatpush2.bf16.msra.mxu0 0
        %1886 = vmatprep.subr.bf16.mxu0 0
        %1887 = vmatpush2.bf16.msra.mxu0 0
        %1888 = vmatprep.subr.bf16.mxu0 0
        %1889 = vmatpush2.bf16.msra.mxu0 0
        %1890 = vmatprep.subr.bf16.mxu0 0
        %1891 = vmatpush2.bf16.msra.mxu0 0
        %1892 = vmatprep.subr.bf16.mxu0 0
        %1893 = vmatpush2.bf16.msra.mxu0 0
        %1894 = vmatprep.subr.bf16.mxu0 0
        %1895 = vmatpush2.bf16.msra.mxu0 0
        %1896 = vmatprep.subr.bf16.mxu0 0
        %1897 = vmatpush2.bf16.msra.mxu0 0
        %1898 = vmatprep.subr.bf16.mxu0 0
        %1899 = vmatpush2.bf16.msra.mxu0 0
        %1900 = vmatprep.mubr.bf16.mxu0 0
        %1901 = vmatmul.mubr.bf16.gmra.mxu0 %v1762
        %v1902 = vpop.f32.mrf.mxu0
        %v1903 = vadd.f32 %v1740, %v1902
        %v1904 = vpop.f32.mrf.mxu0
        %v1905 = vpop.f32.mrf.mxu0
        %v1906 = vpop.f32.mrf.mxu0
        %1907 = vdwg.mxu0
        %v1912 = vunpack.c.l.b16 %v1715
        %v1913 = vunpack.c.l.b16 %v1716
        %v1914 = vunpack.c.l.b16 %v1717
        %v1915 = vunpack.c.l.b16 %v1718
        %v1916 = vpack.c.b16 %v1913, %v1912
        %v1917 = vpack.c.b16 %v1915, %v1914
        %1920 = vmatprep.subr.bf16.mxu0 0
        %1921 = vmatpush1.bf16.msra.mxu0 0
        %1922 = vmatprep.subr.bf16.mxu0 0
        %1923 = vmatpush1.bf16.msra.mxu0 0
        %1924 = vmatprep.subr.bf16.mxu0 0
        %1925 = vmatpush1.bf16.msra.mxu0 0
        %1926 = vmatprep.subr.bf16.mxu0 0
        %1927 = vmatpush1.bf16.msra.mxu0 0
        %1928 = vmatprep.subr.bf16.mxu0 0
        %1929 = vmatpush1.bf16.msra.mxu0 0
        %1930 = vmatprep.subr.bf16.mxu0 0
        %1931 = vmatpush1.bf16.msra.mxu0 0
        %1932 = vmatprep.subr.bf16.mxu0 0
        %1933 = vmatpush1.bf16.msra.mxu0 %v1917
        %1934 = vmatprep.subr.bf16.mxu0 0
        %1935 = vmatpush1.bf16.msra.mxu0 %v1916
        %1936 = vmatprep.subr.bf16.mxu0 0
        %1937 = vmatpush2.bf16.msra.mxu0 0
        %1938 = vmatprep.subr.bf16.mxu0 0
        %1939 = vmatpush2.bf16.msra.mxu0 0
        %1940 = vmatprep.subr.bf16.mxu0 0
        %1941 = vmatpush2.bf16.msra.mxu0 0
        %1942 = vmatprep.subr.bf16.mxu0 0
        %1943 = vmatpush2.bf16.msra.mxu0 0
        %1944 = vmatprep.subr.bf16.mxu0 0
        %1945 = vmatpush2.bf16.msra.mxu0 0
        %1946 = vmatprep.subr.bf16.mxu0 0
        %1947 = vmatpush2.bf16.msra.mxu0 0
        %1948 = vmatprep.subr.bf16.mxu0 0
        %1949 = vmatpush2.bf16.msra.mxu0 0
        %1950 = vmatprep.subr.bf16.mxu0 0
        %1951 = vmatpush2.bf16.msra.mxu0 0
        %1952 = vmatprep.mubr.bf16.mxu0 0
        %1953 = vmatmul.mubr.bf16.gmra.mxu0 %v1762
        %v1954 = vpop.f32.mrf.mxu0
        %v1955 = vadd.f32 %v1744, %v1954
        %v1956 = vpop.f32.mrf.mxu0
        %v1957 = vpop.f32.mrf.mxu0
        %v1958 = vpop.f32.mrf.mxu0
        %1959 = vdwg.mxu0
        %s1960 = scalar_lea.vmem %s6, 16
        %v1961 = vld [vmem:[%s1960] sm:$0xf]
        %v1962 = vld [vmem:[%s1960 + $0x4] sm:$0xf]
        %v1963 = vld [vmem:[%s1960 + $0x8] sm:$0xf]
        %v1964 = vld [vmem:[%s1960 + $0xc] sm:$0xf]
        %s1965 = scalar_lea.vmem %s9, 8
        %v1966 = vld [vmem:[%s1965] sm:$0x1]
        %v1967 = vpack.c.bf16 %v1799, %v1799
        %v1968 = vpack.c.bf16 %v1851, %v1851
        %v1969 = vpack.c.bf16 %v1903, %v1903
        %v1970 = vpack.c.bf16 %v1955, %v1955
        %1972 = vrot.lane.b32.xlu0 %v1967, 120
        %v1973 = vpop.permute.xlu0 %1972
        %v1975 = vsel %vm856, %v1967, 0
        %v1978 = vsel %vm856, %v1973, 0
        %1980 = vmatprep.subr.bf16.mxu0 0
        %1981 = vmatpush1.bf16.xpose.msra.mxu0 0
        %1982 = vmatprep.subr.bf16.mxu0 0
        %1983 = vmatpush1.bf16.xpose.msra.mxu0 0
        %1984 = vmatprep.subr.bf16.mxu0 0
        %1985 = vmatpush1.bf16.xpose.msra.mxu0 0
        %1986 = vmatprep.subr.bf16.mxu0 0
        %1987 = vmatpush1.bf16.xpose.msra.mxu0 0
        %1988 = vmatprep.subr.bf16.mxu0 0
        %1989 = vmatpush1.bf16.xpose.msra.mxu0 0
        %1990 = vmatprep.subr.bf16.mxu0 0
        %1991 = vmatpush1.bf16.xpose.msra.mxu0 0
        %1992 = vmatprep.subr.bf16.mxu0 0
        %1993 = vmatpush1.bf16.xpose.msra.mxu0 0
        %1994 = vmatprep.subr.bf16.mxu0 0
        %1995 = vmatpush1.bf16.xpose.msra.mxu0 %v1978
        %1996 = vmatprep.subr.bf16.mxu0 0
        %1997 = vmatpush2.bf16.xpose.msra.mxu0 0
        %1998 = vmatprep.subr.bf16.mxu0 0
        %1999 = vmatpush2.bf16.xpose.msra.mxu0 0
        %2000 = vmatprep.subr.bf16.mxu0 0
        %2001 = vmatpush2.bf16.xpose.msra.mxu0 0
        %2002 = vmatprep.subr.bf16.mxu0 0
        %2003 = vmatpush2.bf16.xpose.msra.mxu0 0
        %2004 = vmatprep.subr.bf16.mxu0 0
        %2005 = vmatpush2.bf16.xpose.msra.mxu0 0
        %2006 = vmatprep.subr.bf16.mxu0 0
        %2007 = vmatpush2.bf16.xpose.msra.mxu0 0
        %2008 = vmatprep.subr.bf16.mxu0 0
        %2009 = vmatpush2.bf16.xpose.msra.mxu0 0
        %2010 = vmatprep.subr.bf16.mxu0 0
        %2011 = vmatpush2.bf16.xpose.msra.mxu0 0
        %2012 = vmatprep.mubr.bf16.mxu0 0
        %2013 = vmatmul.mubr.bf16.gmra.mxu0 %v1975
        %v2014 = vpop.f32.mrf.mxu0
        %v2015 = vadd.f32 0.0, %v2014
        %v2016 = vpop.f32.mrf.mxu0
        %v2017 = vpop.f32.mrf.mxu0
        %v2018 = vpop.f32.mrf.mxu0
        %2019 = vdwg.mxu0
        %2021 = vrot.lane.b32.xlu0 %v1968, 120
        %v2022 = vpop.permute.xlu0 %2021
        %v2024 = vsel %vm856, %v1968, 0
        %v2027 = vsel %vm856, %v2022, 0
        %2029 = vmatprep.subr.bf16.mxu0 0
        %2030 = vmatpush1.bf16.xpose.msra.mxu0 0
        %2031 = vmatprep.subr.bf16.mxu0 0
        %2032 = vmatpush1.bf16.xpose.msra.mxu0 0
        %2033 = vmatprep.subr.bf16.mxu0 0
        %2034 = vmatpush1.bf16.xpose.msra.mxu0 0
        %2035 = vmatprep.subr.bf16.mxu0 0
        %2036 = vmatpush1.bf16.xpose.msra.mxu0 0
        %2037 = vmatprep.subr.bf16.mxu0 0
        %2038 = vmatpush1.bf16.xpose.msra.mxu0 0
        %2039 = vmatprep.subr.bf16.mxu0 0
        %2040 = vmatpush1.bf16.xpose.msra.mxu0 0
        %2041 = vmatprep.subr.bf16.mxu0 0
        %2042 = vmatpush1.bf16.xpose.msra.mxu0 0
        %2043 = vmatprep.subr.bf16.mxu0 0
        %2044 = vmatpush1.bf16.xpose.msra.mxu0 %v2027
        %2045 = vmatprep.subr.bf16.mxu0 0
        %2046 = vmatpush2.bf16.xpose.msra.mxu0 0
        %2047 = vmatprep.subr.bf16.mxu0 0
        %2048 = vmatpush2.bf16.xpose.msra.mxu0 0
        %2049 = vmatprep.subr.bf16.mxu0 0
        %2050 = vmatpush2.bf16.xpose.msra.mxu0 0
        %2051 = vmatprep.subr.bf16.mxu0 0
        %2052 = vmatpush2.bf16.xpose.msra.mxu0 0
        %2053 = vmatprep.subr.bf16.mxu0 0
        %2054 = vmatpush2.bf16.xpose.msra.mxu0 0
        %2055 = vmatprep.subr.bf16.mxu0 0
        %2056 = vmatpush2.bf16.xpose.msra.mxu0 0
        %2057 = vmatprep.subr.bf16.mxu0 0
        %2058 = vmatpush2.bf16.xpose.msra.mxu0 0
        %2059 = vmatprep.subr.bf16.mxu0 0
        %2060 = vmatpush2.bf16.xpose.msra.mxu0 0
        %2061 = vmatprep.mubr.bf16.mxu0 0
        %2062 = vmatmul.mubr.bf16.gmra.mxu0 %v2024
        %v2063 = vpop.f32.mrf.mxu0
        %v2064 = vadd.f32 0.0, %v2063
        %v2065 = vpop.f32.mrf.mxu0
        %v2066 = vpop.f32.mrf.mxu0
        %v2067 = vpop.f32.mrf.mxu0
        %2068 = vdwg.mxu0
        %2070 = vrot.lane.b32.xlu0 %v1969, 120
        %v2071 = vpop.permute.xlu0 %2070
        %v2073 = vsel %vm856, %v1969, 0
        %v2076 = vsel %vm856, %v2071, 0
        %2078 = vmatprep.subr.bf16.mxu0 0
        %2079 = vmatpush1.bf16.xpose.msra.mxu0 0
        %2080 = vmatprep.subr.bf16.mxu0 0
        %2081 = vmatpush1.bf16.xpose.msra.mxu0 0
        %2082 = vmatprep.subr.bf16.mxu0 0
        %2083 = vmatpush1.bf16.xpose.msra.mxu0 0
        %2084 = vmatprep.subr.bf16.mxu0 0
        %2085 = vmatpush1.bf16.xpose.msra.mxu0 0
        %2086 = vmatprep.subr.bf16.mxu0 0
        %2087 = vmatpush1.bf16.xpose.msra.mxu0 0
        %2088 = vmatprep.subr.bf16.mxu0 0
        %2089 = vmatpush1.bf16.xpose.msra.mxu0 0
        %2090 = vmatprep.subr.bf16.mxu0 0
        %2091 = vmatpush1.bf16.xpose.msra.mxu0 0
        %2092 = vmatprep.subr.bf16.mxu0 0
        %2093 = vmatpush1.bf16.xpose.msra.mxu0 %v2076
        %2094 = vmatprep.subr.bf16.mxu0 0
        %2095 = vmatpush2.bf16.xpose.msra.mxu0 0
        %2096 = vmatprep.subr.bf16.mxu0 0
        %2097 = vmatpush2.bf16.xpose.msra.mxu0 0
        %2098 = vmatprep.subr.bf16.mxu0 0
        %2099 = vmatpush2.bf16.xpose.msra.mxu0 0
        %2100 = vmatprep.subr.bf16.mxu0 0
        %2101 = vmatpush2.bf16.xpose.msra.mxu0 0
        %2102 = vmatprep.subr.bf16.mxu0 0
        %2103 = vmatpush2.bf16.xpose.msra.mxu0 0
        %2104 = vmatprep.subr.bf16.mxu0 0
        %2105 = vmatpush2.bf16.xpose.msra.mxu0 0
        %2106 = vmatprep.subr.bf16.mxu0 0
        %2107 = vmatpush2.bf16.xpose.msra.mxu0 0
        %2108 = vmatprep.subr.bf16.mxu0 0
        %2109 = vmatpush2.bf16.xpose.msra.mxu0 0
        %2110 = vmatprep.mubr.bf16.mxu0 0
        %2111 = vmatmul.mubr.bf16.gmra.mxu0 %v2073
        %v2112 = vpop.f32.mrf.mxu0
        %v2113 = vadd.f32 0.0, %v2112
        %v2114 = vpop.f32.mrf.mxu0
        %v2115 = vpop.f32.mrf.mxu0
        %v2116 = vpop.f32.mrf.mxu0
        %2117 = vdwg.mxu0
        %2119 = vrot.lane.b32.xlu0 %v1970, 120
        %v2120 = vpop.permute.xlu0 %2119
        %v2122 = vsel %vm856, %v1970, 0
        %v2125 = vsel %vm856, %v2120, 0
        %2127 = vmatprep.subr.bf16.mxu0 0
        %2128 = vmatpush1.bf16.xpose.msra.mxu0 0
        %2129 = vmatprep.subr.bf16.mxu0 0
        %2130 = vmatpush1.bf16.xpose.msra.mxu0 0
        %2131 = vmatprep.subr.bf16.mxu0 0
        %2132 = vmatpush1.bf16.xpose.msra.mxu0 0
        %2133 = vmatprep.subr.bf16.mxu0 0
        %2134 = vmatpush1.bf16.xpose.msra.mxu0 0
        %2135 = vmatprep.subr.bf16.mxu0 0
        %2136 = vmatpush1.bf16.xpose.msra.mxu0 0
        %2137 = vmatprep.subr.bf16.mxu0 0
        %2138 = vmatpush1.bf16.xpose.msra.mxu0 0
        %2139 = vmatprep.subr.bf16.mxu0 0
        %2140 = vmatpush1.bf16.xpose.msra.mxu0 0
        %2141 = vmatprep.subr.bf16.mxu0 0
        %2142 = vmatpush1.bf16.xpose.msra.mxu0 %v2125
        %2143 = vmatprep.subr.bf16.mxu0 0
        %2144 = vmatpush2.bf16.xpose.msra.mxu0 0
        %2145 = vmatprep.subr.bf16.mxu0 0
        %2146 = vmatpush2.bf16.xpose.msra.mxu0 0
        %2147 = vmatprep.subr.bf16.mxu0 0
        %2148 = vmatpush2.bf16.xpose.msra.mxu0 0
        %2149 = vmatprep.subr.bf16.mxu0 0
        %2150 = vmatpush2.bf16.xpose.msra.mxu0 0
        %2151 = vmatprep.subr.bf16.mxu0 0
        %2152 = vmatpush2.bf16.xpose.msra.mxu0 0
        %2153 = vmatprep.subr.bf16.mxu0 0
        %2154 = vmatpush2.bf16.xpose.msra.mxu0 0
        %2155 = vmatprep.subr.bf16.mxu0 0
        %2156 = vmatpush2.bf16.xpose.msra.mxu0 0
        %2157 = vmatprep.subr.bf16.mxu0 0
        %2158 = vmatpush2.bf16.xpose.msra.mxu0 0
        %2159 = vmatprep.mubr.bf16.mxu0 0
        %2160 = vmatmul.mubr.bf16.gmra.mxu0 %v2122
        %v2161 = vpop.f32.mrf.mxu0
        %v2162 = vadd.f32 0.0, %v2161
        %v2163 = vpop.f32.mrf.mxu0
        %v2164 = vpop.f32.mrf.mxu0
        %v2165 = vpop.f32.mrf.mxu0
        %2166 = vdwg.mxu0
        %v2167 = vmul.f32 %v2015, 0.35355338
        %v2168 = vmul.f32 %v2064, 0.35355338
        %v2169 = vmul.f32 %v2113, 0.35355338
        %v2170 = vmul.f32 %v2162, 0.35355338
        %v2171 = vsel %vm1055, %v2167, -1e+10
        %v2172 = vsel %vm1055, %v2168, -1e+10
        %v2173 = vsel %vm1055, %v2169, -1e+10
        %v2174 = vsel %vm1055, %v2170, -1e+10
        %v2175 = vsel %vm856, %v2171, -inf
        %2176 = vmax.xlane.f32.xlu0 %v2175
        %v2177 = vpop.xlane.xlu0 %2176
        %v2178 = vsel %vm856, %v2172, -inf
        %2179 = vmax.xlane.f32.xlu0 %v2178
        %v2180 = vpop.xlane.xlu0 %2179
        %v2181 = vsel %vm856, %v2173, -inf
        %2182 = vmax.xlane.f32.xlu0 %v2181
        %v2183 = vpop.xlane.xlu0 %2182
        %v2184 = vsel %vm856, %v2174, -inf
        %2185 = vmax.xlane.f32.xlu0 %v2184
        %v2186 = vpop.xlane.xlu0 %2185
        %v2187 = vsub.f32 %v2171, %v2177
        %v2188 = vsub.f32 %v2172, %v2180
        %v2189 = vsub.f32 %v2173, %v2183
        %v2190 = vsub.f32 %v2174, %v2186
        %v2191 = vmul.f32 %v2187, 1.442695
        %v2192 = vpow.pop %v2191
        %v2193 = vmul.f32 %v2188, 1.442695
        %v2194 = vpow.pop %v2193
        %v2195 = vmul.f32 %v2189, 1.442695
        %v2196 = vpow.pop %v2195
        %v2197 = vmul.f32 %v2190, 1.442695
        %v2198 = vpow.pop %v2197
        %v2199 = vsel %vm856, %v2192, 0.0
        %2200 = vadd.xlane.f32.xlu0 %v2199
        %v2201 = vpop.xlane.xlu0 %2200
        %v2202 = vsel %vm856, %v2194, 0.0
        %2203 = vadd.xlane.f32.xlu0 %v2202
        %v2204 = vpop.xlane.xlu0 %2203
        %v2205 = vsel %vm856, %v2196, 0.0
        %2206 = vadd.xlane.f32.xlu0 %v2205
        %v2207 = vpop.xlane.xlu0 %2206
        %v2208 = vsel %vm856, %v2198, 0.0
        %2209 = vadd.xlane.f32.xlu0 %v2208
        %v2210 = vpop.xlane.xlu0 %2209
        %v2211 = vrcp.pop %v2201
        %v2212 = vmul.f32 %v2192, %v2211
        %v2213 = vrcp.pop %v2204
        %v2214 = vmul.f32 %v2194, %v2213
        %v2215 = vrcp.pop %v2207
        %v2216 = vmul.f32 %v2196, %v2215
        %v2217 = vrcp.pop %v2210
        %v2218 = vmul.f32 %v2198, %v2217
        %v2219 = vpack.c.bf16 %v2212, %v2212
        %v2220 = vpack.c.bf16 %v2214, %v2214
        %v2221 = vpack.c.bf16 %v2216, %v2216
        %v2222 = vpack.c.bf16 %v2218, %v2218
        %2223 = vrot.lane.b32.xlu0 %v1967, 112
        %v2224 = vpop.permute.xlu0 %2223
        %v2226 = vsel %vm856, %v2219, 0
        %v2229 = vsel %vm1113, %v2224, 0
        %2231 = vmatprep.subr.bf16.mxu0 0
        %2232 = vmatpush1.bf16.msra.mxu0 0
        %2233 = vmatprep.subr.bf16.mxu0 0
        %2234 = vmatpush1.bf16.msra.mxu0 0
        %2235 = vmatprep.subr.bf16.mxu0 0
        %2236 = vmatpush1.bf16.msra.mxu0 0
        %2237 = vmatprep.subr.bf16.mxu0 0
        %2238 = vmatpush1.bf16.msra.mxu0 0
        %2239 = vmatprep.subr.bf16.mxu0 0
        %2240 = vmatpush1.bf16.msra.mxu0 0
        %2241 = vmatprep.subr.bf16.mxu0 0
        %2242 = vmatpush1.bf16.msra.mxu0 0
        %2243 = vmatprep.subr.bf16.mxu0 0
        %2244 = vmatpush1.bf16.msra.mxu0 0
        %2245 = vmatprep.subr.bf16.mxu0 0
        %2246 = vmatpush1.bf16.msra.mxu0 %v2229
        %2247 = vmatprep.subr.bf16.mxu0 0
        %2248 = vmatpush2.bf16.msra.mxu0 0
        %2249 = vmatprep.subr.bf16.mxu0 0
        %2250 = vmatpush2.bf16.msra.mxu0 0
        %2251 = vmatprep.subr.bf16.mxu0 0
        %2252 = vmatpush2.bf16.msra.mxu0 0
        %2253 = vmatprep.subr.bf16.mxu0 0
        %2254 = vmatpush2.bf16.msra.mxu0 0
        %2255 = vmatprep.subr.bf16.mxu0 0
        %2256 = vmatpush2.bf16.msra.mxu0 0
        %2257 = vmatprep.subr.bf16.mxu0 0
        %2258 = vmatpush2.bf16.msra.mxu0 0
        %2259 = vmatprep.subr.bf16.mxu0 0
        %2260 = vmatpush2.bf16.msra.mxu0 0
        %2261 = vmatprep.subr.bf16.mxu0 0
        %2262 = vmatpush2.bf16.msra.mxu0 0
        %2263 = vmatprep.mubr.bf16.mxu0 0
        %2264 = vmatmul.mubr.bf16.gmra.mxu0 %v2226
        %v2265 = vpop.f32.mrf.mxu0
        %v2266 = vadd.f32 0.0, %v2265
        %v2267 = vpop.f32.mrf.mxu0
        %v2268 = vpop.f32.mrf.mxu0
        %v2269 = vpop.f32.mrf.mxu0
        %2270 = vdwg.mxu0
        %2271 = vrot.lane.b32.xlu0 %v1968, 112
        %v2272 = vpop.permute.xlu0 %2271
        %v2274 = vsel %vm856, %v2220, 0
        %v2277 = vsel %vm1113, %v2272, 0
        %2279 = vmatprep.subr.bf16.mxu0 0
        %2280 = vmatpush1.bf16.msra.mxu0 0
        %2281 = vmatprep.subr.bf16.mxu0 0
        %2282 = vmatpush1.bf16.msra.mxu0 0
        %2283 = vmatprep.subr.bf16.mxu0 0
        %2284 = vmatpush1.bf16.msra.mxu0 0
        %2285 = vmatprep.subr.bf16.mxu0 0
        %2286 = vmatpush1.bf16.msra.mxu0 0
        %2287 = vmatprep.subr.bf16.mxu0 0
        %2288 = vmatpush1.bf16.msra.mxu0 0
        %2289 = vmatprep.subr.bf16.mxu0 0
        %2290 = vmatpush1.bf16.msra.mxu0 0
        %2291 = vmatprep.subr.bf16.mxu0 0
        %2292 = vmatpush1.bf16.msra.mxu0 0
        %2293 = vmatprep.subr.bf16.mxu0 0
        %2294 = vmatpush1.bf16.msra.mxu0 %v2277
        %2295 = vmatprep.subr.bf16.mxu0 0
        %2296 = vmatpush2.bf16.msra.mxu0 0
        %2297 = vmatprep.subr.bf16.mxu0 0
        %2298 = vmatpush2.bf16.msra.mxu0 0
        %2299 = vmatprep.subr.bf16.mxu0 0
        %2300 = vmatpush2.bf16.msra.mxu0 0
        %2301 = vmatprep.subr.bf16.mxu0 0
        %2302 = vmatpush2.bf16.msra.mxu0 0
        %2303 = vmatprep.subr.bf16.mxu0 0
        %2304 = vmatpush2.bf16.msra.mxu0 0
        %2305 = vmatprep.subr.bf16.mxu0 0
        %2306 = vmatpush2.bf16.msra.mxu0 0
        %2307 = vmatprep.subr.bf16.mxu0 0
        %2308 = vmatpush2.bf16.msra.mxu0 0
        %2309 = vmatprep.subr.bf16.mxu0 0
        %2310 = vmatpush2.bf16.msra.mxu0 0
        %2311 = vmatprep.mubr.bf16.mxu0 0
        %2312 = vmatmul.mubr.bf16.gmra.mxu0 %v2274
        %v2313 = vpop.f32.mrf.mxu0
        %v2314 = vadd.f32 0.0, %v2313
        %v2315 = vpop.f32.mrf.mxu0
        %v2316 = vpop.f32.mrf.mxu0
        %v2317 = vpop.f32.mrf.mxu0
        %2318 = vdwg.mxu0
        %2319 = vrot.lane.b32.xlu0 %v1969, 112
        %v2320 = vpop.permute.xlu0 %2319
        %v2322 = vsel %vm856, %v2221, 0
        %v2325 = vsel %vm1113, %v2320, 0
        %2327 = vmatprep.subr.bf16.mxu0 0
        %2328 = vmatpush1.bf16.msra.mxu0 0
        %2329 = vmatprep.subr.bf16.mxu0 0
        %2330 = vmatpush1.bf16.msra.mxu0 0
        %2331 = vmatprep.subr.bf16.mxu0 0
        %2332 = vmatpush1.bf16.msra.mxu0 0
        %2333 = vmatprep.subr.bf16.mxu0 0
        %2334 = vmatpush1.bf16.msra.mxu0 0
        %2335 = vmatprep.subr.bf16.mxu0 0
        %2336 = vmatpush1.bf16.msra.mxu0 0
        %2337 = vmatprep.subr.bf16.mxu0 0
        %2338 = vmatpush1.bf16.msra.mxu0 0
        %2339 = vmatprep.subr.bf16.mxu0 0
        %2340 = vmatpush1.bf16.msra.mxu0 0
        %2341 = vmatprep.subr.bf16.mxu0 0
        %2342 = vmatpush1.bf16.msra.mxu0 %v2325
        %2343 = vmatprep.subr.bf16.mxu0 0
        %2344 = vmatpush2.bf16.msra.mxu0 0
        %2345 = vmatprep.subr.bf16.mxu0 0
        %2346 = vmatpush2.bf16.msra.mxu0 0
        %2347 = vmatprep.subr.bf16.mxu0 0
        %2348 = vmatpush2.bf16.msra.mxu0 0
        %2349 = vmatprep.subr.bf16.mxu0 0
        %2350 = vmatpush2.bf16.msra.mxu0 0
        %2351 = vmatprep.subr.bf16.mxu0 0
        %2352 = vmatpush2.bf16.msra.mxu0 0
        %2353 = vmatprep.subr.bf16.mxu0 0
        %2354 = vmatpush2.bf16.msra.mxu0 0
        %2355 = vmatprep.subr.bf16.mxu0 0
        %2356 = vmatpush2.bf16.msra.mxu0 0
        %2357 = vmatprep.subr.bf16.mxu0 0
        %2358 = vmatpush2.bf16.msra.mxu0 0
        %2359 = vmatprep.mubr.bf16.mxu0 0
        %2360 = vmatmul.mubr.bf16.gmra.mxu0 %v2322
        %v2361 = vpop.f32.mrf.mxu0
        %v2362 = vadd.f32 0.0, %v2361
        %v2363 = vpop.f32.mrf.mxu0
        %v2364 = vpop.f32.mrf.mxu0
        %v2365 = vpop.f32.mrf.mxu0
        %2366 = vdwg.mxu0
        %2367 = vrot.lane.b32.xlu0 %v1970, 112
        %v2368 = vpop.permute.xlu0 %2367
        %v2370 = vsel %vm856, %v2222, 0
        %v2373 = vsel %vm1113, %v2368, 0
        %2375 = vmatprep.subr.bf16.mxu0 0
        %2376 = vmatpush1.bf16.msra.mxu0 0
        %2377 = vmatprep.subr.bf16.mxu0 0
        %2378 = vmatpush1.bf16.msra.mxu0 0
        %2379 = vmatprep.subr.bf16.mxu0 0
        %2380 = vmatpush1.bf16.msra.mxu0 0
        %2381 = vmatprep.subr.bf16.mxu0 0
        %2382 = vmatpush1.bf16.msra.mxu0 0
        %2383 = vmatprep.subr.bf16.mxu0 0
        %2384 = vmatpush1.bf16.msra.mxu0 0
        %2385 = vmatprep.subr.bf16.mxu0 0
        %2386 = vmatpush1.bf16.msra.mxu0 0
        %2387 = vmatprep.subr.bf16.mxu0 0
        %2388 = vmatpush1.bf16.msra.mxu0 0
        %2389 = vmatprep.subr.bf16.mxu0 0
        %2390 = vmatpush1.bf16.msra.mxu0 %v2373
        %2391 = vmatprep.subr.bf16.mxu0 0
        %2392 = vmatpush2.bf16.msra.mxu0 0
        %2393 = vmatprep.subr.bf16.mxu0 0
        %2394 = vmatpush2.bf16.msra.mxu0 0
        %2395 = vmatprep.subr.bf16.mxu0 0
        %2396 = vmatpush2.bf16.msra.mxu0 0
        %2397 = vmatprep.subr.bf16.mxu0 0
        %2398 = vmatpush2.bf16.msra.mxu0 0
        %2399 = vmatprep.subr.bf16.mxu0 0
        %2400 = vmatpush2.bf16.msra.mxu0 0
        %2401 = vmatprep.subr.bf16.mxu0 0
        %2402 = vmatpush2.bf16.msra.mxu0 0
        %2403 = vmatprep.subr.bf16.mxu0 0
        %2404 = vmatpush2.bf16.msra.mxu0 0
        %2405 = vmatprep.subr.bf16.mxu0 0
        %2406 = vmatpush2.bf16.msra.mxu0 0
        %2407 = vmatprep.mubr.bf16.mxu0 0
        %2408 = vmatmul.mubr.bf16.gmra.mxu0 %v2370
        %v2409 = vpop.f32.mrf.mxu0
        %v2410 = vadd.f32 0.0, %v2409
        %v2411 = vpop.f32.mrf.mxu0
        %v2412 = vpop.f32.mrf.mxu0
        %v2413 = vpop.f32.mrf.mxu0
        %2414 = vdwg.mxu0
        %v2415 = vpack.c.bf16 %v2266, %v2266
        %v2416 = vpack.c.bf16 %v2314, %v2314
        %v2417 = vpack.c.bf16 %v2362, %v2362
        %v2418 = vpack.c.bf16 %v2410, %v2410
        %v2420 = vsel %vm856, %v2415, 0
        %v2423 = vsel %vm1113, %v1961, 0
        %2425 = vmatprep.subr.bf16.mxu0 0
        %2426 = vmatpush1.bf16.msra.mxu0 0
        %2427 = vmatprep.subr.bf16.mxu0 0
        %2428 = vmatpush1.bf16.msra.mxu0 0
        %2429 = vmatprep.subr.bf16.mxu0 0
        %2430 = vmatpush1.bf16.msra.mxu0 0
        %2431 = vmatprep.subr.bf16.mxu0 0
        %2432 = vmatpush1.bf16.msra.mxu0 0
        %2433 = vmatprep.subr.bf16.mxu0 0
        %2434 = vmatpush1.bf16.msra.mxu0 0
        %2435 = vmatprep.subr.bf16.mxu0 0
        %2436 = vmatpush1.bf16.msra.mxu0 0
        %2437 = vmatprep.subr.bf16.mxu0 0
        %2438 = vmatpush1.bf16.msra.mxu0 0
        %2439 = vmatprep.subr.bf16.mxu0 0
        %2440 = vmatpush1.bf16.msra.mxu0 %v2423
        %2441 = vmatprep.subr.bf16.mxu0 0
        %2442 = vmatpush2.bf16.msra.mxu0 0
        %2443 = vmatprep.subr.bf16.mxu0 0
        %2444 = vmatpush2.bf16.msra.mxu0 0
        %2445 = vmatprep.subr.bf16.mxu0 0
        %2446 = vmatpush2.bf16.msra.mxu0 0
        %2447 = vmatprep.subr.bf16.mxu0 0
        %2448 = vmatpush2.bf16.msra.mxu0 0
        %2449 = vmatprep.subr.bf16.mxu0 0
        %2450 = vmatpush2.bf16.msra.mxu0 0
        %2451 = vmatprep.subr.bf16.mxu0 0
        %2452 = vmatpush2.bf16.msra.mxu0 0
        %2453 = vmatprep.subr.bf16.mxu0 0
        %2454 = vmatpush2.bf16.msra.mxu0 0
        %2455 = vmatprep.subr.bf16.mxu0 0
        %2456 = vmatpush2.bf16.msra.mxu0 0
        %2457 = vmatprep.mubr.bf16.mxu0 0
        %2458 = vmatmul.mubr.bf16.gmra.mxu0 %v2420
        %v2459 = vpop.f32.mrf.mxu0
        %v2460 = vadd.f32 0.0, %v2459
        %v2461 = vpop.f32.mrf.mxu0
        %v2462 = vpop.f32.mrf.mxu0
        %v2463 = vpop.f32.mrf.mxu0
        %2464 = vdwg.mxu0
        %v2466 = vsel %vm856, %v2416, 0
        %v2469 = vsel %vm1113, %v1962, 0
        %2471 = vmatprep.subr.bf16.mxu0 0
        %2472 = vmatpush1.bf16.msra.mxu0 0
        %2473 = vmatprep.subr.bf16.mxu0 0
        %2474 = vmatpush1.bf16.msra.mxu0 0
        %2475 = vmatprep.subr.bf16.mxu0 0
        %2476 = vmatpush1.bf16.msra.mxu0 0
        %2477 = vmatprep.subr.bf16.mxu0 0
        %2478 = vmatpush1.bf16.msra.mxu0 0
        %2479 = vmatprep.subr.bf16.mxu0 0
        %2480 = vmatpush1.bf16.msra.mxu0 0
        %2481 = vmatprep.subr.bf16.mxu0 0
        %2482 = vmatpush1.bf16.msra.mxu0 0
        %2483 = vmatprep.subr.bf16.mxu0 0
        %2484 = vmatpush1.bf16.msra.mxu0 0
        %2485 = vmatprep.subr.bf16.mxu0 0
        %2486 = vmatpush1.bf16.msra.mxu0 %v2469
        %2487 = vmatprep.subr.bf16.mxu0 0
        %2488 = vmatpush2.bf16.msra.mxu0 0
        %2489 = vmatprep.subr.bf16.mxu0 0
        %2490 = vmatpush2.bf16.msra.mxu0 0
        %2491 = vmatprep.subr.bf16.mxu0 0
        %2492 = vmatpush2.bf16.msra.mxu0 0
        %2493 = vmatprep.subr.bf16.mxu0 0
        %2494 = vmatpush2.bf16.msra.mxu0 0
        %2495 = vmatprep.subr.bf16.mxu0 0
        %2496 = vmatpush2.bf16.msra.mxu0 0
        %2497 = vmatprep.subr.bf16.mxu0 0
        %2498 = vmatpush2.bf16.msra.mxu0 0
        %2499 = vmatprep.subr.bf16.mxu0 0
        %2500 = vmatpush2.bf16.msra.mxu0 0
        %2501 = vmatprep.subr.bf16.mxu0 0
        %2502 = vmatpush2.bf16.msra.mxu0 0
        %2503 = vmatprep.mubr.bf16.mxu0 0
        %2504 = vmatmul.mubr.bf16.gmra.mxu0 %v2466
        %v2505 = vpop.f32.mrf.mxu0
        %v2506 = vadd.f32 0.0, %v2505
        %v2507 = vpop.f32.mrf.mxu0
        %v2508 = vpop.f32.mrf.mxu0
        %v2509 = vpop.f32.mrf.mxu0
        %2510 = vdwg.mxu0
        %v2512 = vsel %vm856, %v2417, 0
        %v2515 = vsel %vm1113, %v1963, 0
        %2517 = vmatprep.subr.bf16.mxu0 0
        %2518 = vmatpush1.bf16.msra.mxu0 0
        %2519 = vmatprep.subr.bf16.mxu0 0
        %2520 = vmatpush1.bf16.msra.mxu0 0
        %2521 = vmatprep.subr.bf16.mxu0 0
        %2522 = vmatpush1.bf16.msra.mxu0 0
        %2523 = vmatprep.subr.bf16.mxu0 0
        %2524 = vmatpush1.bf16.msra.mxu0 0
        %2525 = vmatprep.subr.bf16.mxu0 0
        %2526 = vmatpush1.bf16.msra.mxu0 0
        %2527 = vmatprep.subr.bf16.mxu0 0
        %2528 = vmatpush1.bf16.msra.mxu0 0
        %2529 = vmatprep.subr.bf16.mxu0 0
        %2530 = vmatpush1.bf16.msra.mxu0 0
        %2531 = vmatprep.subr.bf16.mxu0 0
        %2532 = vmatpush1.bf16.msra.mxu0 %v2515
        %2533 = vmatprep.subr.bf16.mxu0 0
        %2534 = vmatpush2.bf16.msra.mxu0 0
        %2535 = vmatprep.subr.bf16.mxu0 0
        %2536 = vmatpush2.bf16.msra.mxu0 0
        %2537 = vmatprep.subr.bf16.mxu0 0
        %2538 = vmatpush2.bf16.msra.mxu0 0
        %2539 = vmatprep.subr.bf16.mxu0 0
        %2540 = vmatpush2.bf16.msra.mxu0 0
        %2541 = vmatprep.subr.bf16.mxu0 0
        %2542 = vmatpush2.bf16.msra.mxu0 0
        %2543 = vmatprep.subr.bf16.mxu0 0
        %2544 = vmatpush2.bf16.msra.mxu0 0
        %2545 = vmatprep.subr.bf16.mxu0 0
        %2546 = vmatpush2.bf16.msra.mxu0 0
        %2547 = vmatprep.subr.bf16.mxu0 0
        %2548 = vmatpush2.bf16.msra.mxu0 0
        %2549 = vmatprep.mubr.bf16.mxu0 0
        %2550 = vmatmul.mubr.bf16.gmra.mxu0 %v2512
        %v2551 = vpop.f32.mrf.mxu0
        %v2552 = vadd.f32 0.0, %v2551
        %v2553 = vpop.f32.mrf.mxu0
        %v2554 = vpop.f32.mrf.mxu0
        %v2555 = vpop.f32.mrf.mxu0
        %2556 = vdwg.mxu0
        %v2558 = vsel %vm856, %v2418, 0
        %v2561 = vsel %vm1113, %v1964, 0
        %2563 = vmatprep.subr.bf16.mxu0 0
        %2564 = vmatpush1.bf16.msra.mxu0 0
        %2565 = vmatprep.subr.bf16.mxu0 0
        %2566 = vmatpush1.bf16.msra.mxu0 0
        %2567 = vmatprep.subr.bf16.mxu0 0
        %2568 = vmatpush1.bf16.msra.mxu0 0
        %2569 = vmatprep.subr.bf16.mxu0 0
        %2570 = vmatpush1.bf16.msra.mxu0 0
        %2571 = vmatprep.subr.bf16.mxu0 0
        %2572 = vmatpush1.bf16.msra.mxu0 0
        %2573 = vmatprep.subr.bf16.mxu0 0
        %2574 = vmatpush1.bf16.msra.mxu0 0
        %2575 = vmatprep.subr.bf16.mxu0 0
        %2576 = vmatpush1.bf16.msra.mxu0 0
        %2577 = vmatprep.subr.bf16.mxu0 0
        %2578 = vmatpush1.bf16.msra.mxu0 %v2561
        %2579 = vmatprep.subr.bf16.mxu0 0
        %2580 = vmatpush2.bf16.msra.mxu0 0
        %2581 = vmatprep.subr.bf16.mxu0 0
        %2582 = vmatpush2.bf16.msra.mxu0 0
        %2583 = vmatprep.subr.bf16.mxu0 0
        %2584 = vmatpush2.bf16.msra.mxu0 0
        %2585 = vmatprep.subr.bf16.mxu0 0
        %2586 = vmatpush2.bf16.msra.mxu0 0
        %2587 = vmatprep.subr.bf16.mxu0 0
        %2588 = vmatpush2.bf16.msra.mxu0 0
        %2589 = vmatprep.subr.bf16.mxu0 0
        %2590 = vmatpush2.bf16.msra.mxu0 0
        %2591 = vmatprep.subr.bf16.mxu0 0
        %2592 = vmatpush2.bf16.msra.mxu0 0
        %2593 = vmatprep.subr.bf16.mxu0 0
        %2594 = vmatpush2.bf16.msra.mxu0 0
        %2595 = vmatprep.mubr.bf16.mxu0 0
        %2596 = vmatmul.mubr.bf16.gmra.mxu0 %v2558
        %v2597 = vpop.f32.mrf.mxu0
        %v2598 = vadd.f32 0.0, %v2597
        %v2599 = vpop.f32.mrf.mxu0
        %v2600 = vpop.f32.mrf.mxu0
        %v2601 = vpop.f32.mrf.mxu0
        %2602 = vdwg.mxu0
        %v2603 = vsel %vm644, %v2460, 0.0
        %v2604 = vsel %vm644, %v2506, 0.0
        %v2605 = vadd.f32 %v2603, %v2604
        %v2606 = vsel %vm644, %v2552, 0.0
        %v2607 = vadd.f32 %v2605, %v2606
        %v2608 = vsel %vm644, %v2598, 0.0
        %v2609 = vadd.f32 %v2607, %v2608
        %v2610 = vlaneseq
        %v2611 = vshrl.u32 %v2610, 7
        %v2612 = vsub.s32 0, %v2611
        %v2613 = vrot.slane %v1966, %v2612
        %v2614 = vadd.f32 %v2609, %v2613
        %v2615 = vadd.f32 %v1701, %v2614
        %v2616 = vld [vmem:[%s1965 + $0x1] sm:$0x1]
        %v2617 = vld [vmem:[%s1965 + $0x2] sm:$0x1]
        %v2618 = vsel %vm644, %v2615, 0.0
        %2619 = vadd.xlane.f32.xlu0 %v2618
        %v2620 = vpop.xlane.xlu0 %2619
        %v2621 = vmul.f32 %v2620, %v1507
        %v2622 = vsub.f32 %v2615, %v2621
        %v2623 = vmul.f32 %v2622, %v2622
        %v2624 = vsel %vm644, %v2623, 0.0
        %2625 = vadd.xlane.f32.xlu0 %v2624
        %v2626 = vpop.xlane.xlu0 %2625
        %v2627 = vmul.f32 %v2626, %v1507
        %v2628 = vadd.f32 %v2627, 1e-05
        %v2629 = vrsqrt.pop %v2628
        %v2630 = vmul.f32 %v2622, %v2629
        %v2631 = vlaneseq
        %v2632 = vshrl.u32 %v2631, 7
        %v2633 = vsub.s32 0, %v2632
        %v2634 = vrot.slane %v2616, %v2633
        %v2635 = vmul.f32 %v2630, %v2634
        %v2636 = vlaneseq
        %v2637 = vshrl.u32 %v2636, 7
        %v2638 = vsub.s32 0, %v2637
        %v2639 = vrot.slane %v2617, %v2638
        %v2640 = vadd.f32 %v2635, %v2639
        %s2641 = scalar_lea.vmem %s7, 16
        %v2642 = vld [vmem:[%s2641] sm:$0xf]
        %v2643 = vld [vmem:[%s2641 + $0x4] sm:$0xf]
        %v2644 = vld [vmem:[%s2641 + $0x8] sm:$0xf]
        %v2645 = vld [vmem:[%s2641 + $0xc] sm:$0xf]
        %v2646 = vld [vmem:[%s1965 + $0x3] sm:$0x1]
        %s2647 = scalar_lea.vmem %s8, 32
        %v2648 = vld [vmem:[%s2647] sm:$0xf]
        %v2649 = vld [vmem:[%s2647 + $0x4] sm:$0xf]
        %v2650 = vld [vmem:[%s2647 + $0x8] sm:$0xf]
        %v2651 = vld [vmem:[%s2647 + $0xc] sm:$0xf]
        %v2652 = vld [vmem:[%s2647 + $0x10] sm:$0xf]
        %v2653 = vld [vmem:[%s2647 + $0x14] sm:$0xf]
        %v2654 = vld [vmem:[%s2647 + $0x18] sm:$0xf]
        %v2655 = vld [vmem:[%s2647 + $0x1c] sm:$0xf]
        %v2656 = vld [vmem:[%s1965 + $0x4] sm:$0x1]
        %v2657 = vpack.c.bf16 %v2640, %v2640
        %v2658 = vlaneseq
        %v2659 = vshrl.u32 %v2658, 7
        %v2660 = vsub.s32 0, %v2659
        %v2661 = vrot.slane %v2646, %v2660
        %v2666 = vunpack.c.l.b16 %v2642
        %v2667 = vunpack.c.l.b16 %v2643
        %v2668 = vunpack.c.l.b16 %v2644
        %v2669 = vunpack.c.l.b16 %v2645
        %v2670 = vpack.c.b16 %v2667, %v2666
        %v2671 = vpack.c.b16 %v2669, %v2668
        %v2675 = vsel %vm644, %v2657, 0
        %2677 = vmatprep.subr.bf16.mxu0 0
        %2678 = vmatpush1.bf16.msra.mxu0 0
        %2679 = vmatprep.subr.bf16.mxu0 0
        %2680 = vmatpush1.bf16.msra.mxu0 0
        %2681 = vmatprep.subr.bf16.mxu0 0
        %2682 = vmatpush1.bf16.msra.mxu0 0
        %2683 = vmatprep.subr.bf16.mxu0 0
        %2684 = vmatpush1.bf16.msra.mxu0 0
        %2685 = vmatprep.subr.bf16.mxu0 0
        %2686 = vmatpush1.bf16.msra.mxu0 0
        %2687 = vmatprep.subr.bf16.mxu0 0
        %2688 = vmatpush1.bf16.msra.mxu0 0
        %2689 = vmatprep.subr.bf16.mxu0 0
        %2690 = vmatpush1.bf16.msra.mxu0 %v2671
        %2691 = vmatprep.subr.bf16.mxu0 0
        %2692 = vmatpush1.bf16.msra.mxu0 %v2670
        %2693 = vmatprep.subr.bf16.mxu0 0
        %2694 = vmatpush2.bf16.msra.mxu0 0
        %2695 = vmatprep.subr.bf16.mxu0 0
        %2696 = vmatpush2.bf16.msra.mxu0 0
        %2697 = vmatprep.subr.bf16.mxu0 0
        %2698 = vmatpush2.bf16.msra.mxu0 0
        %2699 = vmatprep.subr.bf16.mxu0 0
        %2700 = vmatpush2.bf16.msra.mxu0 0
        %2701 = vmatprep.subr.bf16.mxu0 0
        %2702 = vmatpush2.bf16.msra.mxu0 0
        %2703 = vmatprep.subr.bf16.mxu0 0
        %2704 = vmatpush2.bf16.msra.mxu0 0
        %2705 = vmatprep.subr.bf16.mxu0 0
        %2706 = vmatpush2.bf16.msra.mxu0 0
        %2707 = vmatprep.subr.bf16.mxu0 0
        %2708 = vmatpush2.bf16.msra.mxu0 0
        %2709 = vmatprep.mubr.bf16.mxu0 0
        %2710 = vmatmul.mubr.bf16.gmra.mxu0 %v2675
        %v2711 = vpop.f32.mrf.mxu0
        %v2712 = vadd.f32 %v2661, %v2711
        %v2713 = vpop.f32.mrf.mxu0
        %v2714 = vpop.f32.mrf.mxu0
        %v2715 = vpop.f32.mrf.mxu0
        %2716 = vdwg.mxu0
        %v2717 = vmax.f32 %v2712, 0.0
        %v2718 = vpack.c.bf16 %v2717, %v2717
        %v2719 = vlaneseq
        %v2720 = vshrl.u32 %v2719, 7
        %v2721 = vsub.s32 0, %v2720
        %v2722 = vrot.slane %v2656, %v2721
        %v2731 = vunpack.c.l.b16 %v2648
        %v2732 = vunpack.c.l.b16 %v2649
        %v2733 = vunpack.c.l.b16 %v2650
        %v2734 = vunpack.c.l.b16 %v2651
        %v2735 = vunpack.c.l.b16 %v2652
        %v2736 = vunpack.c.l.b16 %v2653
        %v2737 = vunpack.c.l.b16 %v2654
        %v2738 = vunpack.c.l.b16 %v2655
        %v2739 = vpack.c.b16 %v2732, %v2731
        %v2740 = vpack.c.b16 %v2734, %v2733
        %v2741 = vpack.c.b16 %v2736, %v2735
        %v2742 = vpack.c.b16 %v2738, %v2737
        %v2748 = vsel %vm1632, %v2718, 0
        %2750 = vmatprep.subr.bf16.mxu0 0
        %2751 = vmatpush1.bf16.msra.mxu0 0
        %2752 = vmatprep.subr.bf16.mxu0 0
        %2753 = vmatpush1.bf16.msra.mxu0 0
        %2754 = vmatprep.subr.bf16.mxu0 0
        %2755 = vmatpush1.bf16.msra.mxu0 0
        %2756 = vmatprep.subr.bf16.mxu0 0
        %2757 = vmatpush1.bf16.msra.mxu0 0
        %2758 = vmatprep.subr.bf16.mxu0 0
        %2759 = vmatpush1.bf16.msra.mxu0 %v2742
        %2760 = vmatprep.subr.bf16.mxu0 0
        %2761 = vmatpush1.bf16.msra.mxu0 %v2741
        %2762 = vmatprep.subr.bf16.mxu0 0
        %2763 = vmatpush1.bf16.msra.mxu0 %v2740
        %2764 = vmatprep.subr.bf16.mxu0 0
        %2765 = vmatpush1.bf16.msra.mxu0 %v2739
        %2766 = vmatprep.subr.bf16.mxu0 0
        %2767 = vmatpush2.bf16.msra.mxu0 0
        %2768 = vmatprep.subr.bf16.mxu0 0
        %2769 = vmatpush2.bf16.msra.mxu0 0
        %2770 = vmatprep.subr.bf16.mxu0 0
        %2771 = vmatpush2.bf16.msra.mxu0 0
        %2772 = vmatprep.subr.bf16.mxu0 0
        %2773 = vmatpush2.bf16.msra.mxu0 0
        %2774 = vmatprep.subr.bf16.mxu0 0
        %2775 = vmatpush2.bf16.msra.mxu0 0
        %2776 = vmatprep.subr.bf16.mxu0 0
        %2777 = vmatpush2.bf16.msra.mxu0 0
        %2778 = vmatprep.subr.bf16.mxu0 0
        %2779 = vmatpush2.bf16.msra.mxu0 0
        %2780 = vmatprep.subr.bf16.mxu0 0
        %2781 = vmatpush2.bf16.msra.mxu0 0
        %2782 = vmatprep.mubr.bf16.mxu0 0
        %2783 = vmatmul.mubr.bf16.gmra.mxu0 %v2748
        %v2784 = vpop.f32.mrf.mxu0
        %v2785 = vadd.f32 %v2722, %v2784
        %v2786 = vpop.f32.mrf.mxu0
        %v2787 = vpop.f32.mrf.mxu0
        %v2788 = vpop.f32.mrf.mxu0
        %2789 = vdwg.mxu0
        %v2790 = vadd.f32 %v2640, %v2785
        %v2791 = vld [vmem:[%s1965 + $0x5] sm:$0x1]
        %v2792 = vld [vmem:[%s1965 + $0x6] sm:$0x1]
        %v2793 = vsel %vm644, %v2790, 0.0
        %2794 = vadd.xlane.f32.xlu0 %v2793
        %v2795 = vpop.xlane.xlu0 %2794
        %v2796 = vmul.f32 %v2795, %v1507
        %v2797 = vsub.f32 %v2790, %v2796
        %v2798 = vmul.f32 %v2797, %v2797
        %v2799 = vsel %vm644, %v2798, 0.0
        %2800 = vadd.xlane.f32.xlu0 %v2799
        %v2801 = vpop.xlane.xlu0 %2800
        %v2802 = vmul.f32 %v2801, %v1507
        %v2803 = vadd.f32 %v2802, 1e-05
        %v2804 = vrsqrt.pop %v2803
        %v2805 = vmul.f32 %v2797, %v2804
        %v2806 = vlaneseq
        %v2807 = vshrl.u32 %v2806, 7
        %v2808 = vsub.s32 0, %v2807
        %v2809 = vrot.slane %v2791, %v2808
        %v2810 = vmul.f32 %v2805, %v2809
        %v2811 = vlaneseq
        %v2812 = vshrl.u32 %v2811, 7
        %v2813 = vsub.s32 0, %v2812
        %v2814 = vrot.slane %v2792, %v2813
        %v2815 = vadd.f32 %v2810, %v2814
        %v2816 = vld [vmem:[%s572] sm:$0xff]
        %v2817 = vld [vmem:[%s10] sm:$0xf]
        %v2818 = vld [vmem:[%s10 + $0x4] sm:$0xf]
        %v2819 = vld [vmem:[%s10 + $0x8] sm:$0xf]
        %v2820 = vld [vmem:[%s10 + $0xc] sm:$0xf]
        %v2821 = vld [vmem:[%s10 + $0x10] sm:$0xf]
        %v2822 = vld [vmem:[%s10 + $0x14] sm:$0xf]
        %v2823 = vld [vmem:[%s10 + $0x18] sm:$0xf]
        %v2824 = vld [vmem:[%s10 + $0x1c] sm:$0xf]
        %v2825 = vld [vmem:[%s10 + $0x20] sm:$0xf]
        %v2826 = vld [vmem:[%s10 + $0x24] sm:$0xf]
        %v2827 = vld [vmem:[%s10 + $0x28] sm:$0xf]
        %v2828 = vld [vmem:[%s10 + $0x2c] sm:$0xf]
        %v2829 = vld [vmem:[%s10 + $0x30] sm:$0xf]
        %v2830 = vld [vmem:[%s10 + $0x34] sm:$0xf]
        %v2831 = vld [vmem:[%s10 + $0x38] sm:$0xf]
        %v2832 = vld [vmem:[%s10 + $0x3c] sm:$0xf]
        %v2833 = vld [vmem:[%s11] sm:$0x1]
        %v2834 = vld [vmem:[%s11 + $0x1] sm:$0x1]
        %v2835 = vld [vmem:[%s11 + $0x2] sm:$0x1]
        %v2836 = vld [vmem:[%s11 + $0x3] sm:$0x1]
        %v2837 = vpack.c.bf16 %v2816, %v2816
        %v2842 = vlaneseq
        %v2843 = vshrl.u32 %v2842, 7
        %v2844 = vsub.s32 0, %v2843
        %v2845 = vrot.slane %v2833, %v2844
        %v2846 = vlaneseq
        %v2847 = vshrl.u32 %v2846, 7
        %v2848 = vsub.s32 0, %v2847
        %v2849 = vrot.slane %v2834, %v2848
        %v2850 = vlaneseq
        %v2851 = vshrl.u32 %v2850, 7
        %v2852 = vsub.s32 0, %v2851
        %v2853 = vrot.slane %v2835, %v2852
        %v2854 = vlaneseq
        %v2855 = vshrl.u32 %v2854, 7
        %v2856 = vsub.s32 0, %v2855
        %v2857 = vrot.slane %v2836, %v2856
        %v2866 = vunpack.c.l.b16 %v2817
        %v2867 = vunpack.c.l.b16 %v2818
        %v2868 = vunpack.c.l.b16 %v2819
        %v2869 = vunpack.c.l.b16 %v2820
        %v2870 = vpack.c.b16 %v2867, %v2866
        %v2871 = vpack.c.b16 %v2869, %v2868
        %v2875 = vsel %vm644, %v2837, 0
        %2877 = vmatprep.subr.bf16.mxu0 0
        %2878 = vmatpush1.bf16.msra.mxu0 0
        %2879 = vmatprep.subr.bf16.mxu0 0
        %2880 = vmatpush1.bf16.msra.mxu0 0
        %2881 = vmatprep.subr.bf16.mxu0 0
        %2882 = vmatpush1.bf16.msra.mxu0 0
        %2883 = vmatprep.subr.bf16.mxu0 0
        %2884 = vmatpush1.bf16.msra.mxu0 0
        %2885 = vmatprep.subr.bf16.mxu0 0
        %2886 = vmatpush1.bf16.msra.mxu0 0
        %2887 = vmatprep.subr.bf16.mxu0 0
        %2888 = vmatpush1.bf16.msra.mxu0 0
        %2889 = vmatprep.subr.bf16.mxu0 0
        %2890 = vmatpush1.bf16.msra.mxu0 %v2871
        %2891 = vmatprep.subr.bf16.mxu0 0
        %2892 = vmatpush1.bf16.msra.mxu0 %v2870
        %2893 = vmatprep.subr.bf16.mxu0 0
        %2894 = vmatpush2.bf16.msra.mxu0 0
        %2895 = vmatprep.subr.bf16.mxu0 0
        %2896 = vmatpush2.bf16.msra.mxu0 0
        %2897 = vmatprep.subr.bf16.mxu0 0
        %2898 = vmatpush2.bf16.msra.mxu0 0
        %2899 = vmatprep.subr.bf16.mxu0 0
        %2900 = vmatpush2.bf16.msra.mxu0 0
        %2901 = vmatprep.subr.bf16.mxu0 0
        %2902 = vmatpush2.bf16.msra.mxu0 0
        %2903 = vmatprep.subr.bf16.mxu0 0
        %2904 = vmatpush2.bf16.msra.mxu0 0
        %2905 = vmatprep.subr.bf16.mxu0 0
        %2906 = vmatpush2.bf16.msra.mxu0 0
        %2907 = vmatprep.subr.bf16.mxu0 0
        %2908 = vmatpush2.bf16.msra.mxu0 0
        %2909 = vmatprep.mubr.bf16.mxu0 0
        %2910 = vmatmul.mubr.bf16.gmra.mxu0 %v2875
        %v2911 = vpop.f32.mrf.mxu0
        %v2912 = vadd.f32 %v2845, %v2911
        %v2913 = vpop.f32.mrf.mxu0
        %v2914 = vpop.f32.mrf.mxu0
        %v2915 = vpop.f32.mrf.mxu0
        %2916 = vdwg.mxu0
        %v2921 = vunpack.c.l.b16 %v2821
        %v2922 = vunpack.c.l.b16 %v2822
        %v2923 = vunpack.c.l.b16 %v2823
        %v2924 = vunpack.c.l.b16 %v2824
        %v2925 = vpack.c.b16 %v2922, %v2921
        %v2926 = vpack.c.b16 %v2924, %v2923
        %2929 = vmatprep.subr.bf16.mxu0 0
        %2930 = vmatpush1.bf16.msra.mxu0 0
        %2931 = vmatprep.subr.bf16.mxu0 0
        %2932 = vmatpush1.bf16.msra.mxu0 0
        %2933 = vmatprep.subr.bf16.mxu0 0
        %2934 = vmatpush1.bf16.msra.mxu0 0
        %2935 = vmatprep.subr.bf16.mxu0 0
        %2936 = vmatpush1.bf16.msra.mxu0 0
        %2937 = vmatprep.subr.bf16.mxu0 0
        %2938 = vmatpush1.bf16.msra.mxu0 0
        %2939 = vmatprep.subr.bf16.mxu0 0
        %2940 = vmatpush1.bf16.msra.mxu0 0
        %2941 = vmatprep.subr.bf16.mxu0 0
        %2942 = vmatpush1.bf16.msra.mxu0 %v2926
        %2943 = vmatprep.subr.bf16.mxu0 0
        %2944 = vmatpush1.bf16.msra.mxu0 %v2925
        %2945 = vmatprep.subr.bf16.mxu0 0
        %2946 = vmatpush2.bf16.msra.mxu0 0
        %2947 = vmatprep.subr.bf16.mxu0 0
        %2948 = vmatpush2.bf16.msra.mxu0 0
        %2949 = vmatprep.subr.bf16.mxu0 0
        %2950 = vmatpush2.bf16.msra.mxu0 0
        %2951 = vmatprep.subr.bf16.mxu0 0
        %2952 = vmatpush2.bf16.msra.mxu0 0
        %2953 = vmatprep.subr.bf16.mxu0 0
        %2954 = vmatpush2.bf16.msra.mxu0 0
        %2955 = vmatprep.subr.bf16.mxu0 0
        %2956 = vmatpush2.bf16.msra.mxu0 0
        %2957 = vmatprep.subr.bf16.mxu0 0
        %2958 = vmatpush2.bf16.msra.mxu0 0
        %2959 = vmatprep.subr.bf16.mxu0 0
        %2960 = vmatpush2.bf16.msra.mxu0 0
        %2961 = vmatprep.mubr.bf16.mxu0 0
        %2962 = vmatmul.mubr.bf16.gmra.mxu0 %v2875
        %v2963 = vpop.f32.mrf.mxu0
        %v2964 = vadd.f32 %v2849, %v2963
        %v2965 = vpop.f32.mrf.mxu0
        %v2966 = vpop.f32.mrf.mxu0
        %v2967 = vpop.f32.mrf.mxu0
        %2968 = vdwg.mxu0
        %v2973 = vunpack.c.l.b16 %v2825
        %v2974 = vunpack.c.l.b16 %v2826
        %v2975 = vunpack.c.l.b16 %v2827
        %v2976 = vunpack.c.l.b16 %v2828
        %v2977 = vpack.c.b16 %v2974, %v2973
        %v2978 = vpack.c.b16 %v2976, %v2975
        %2981 = vmatprep.subr.bf16.mxu0 0
        %2982 = vmatpush1.bf16.msra.mxu0 0
        %2983 = vmatprep.subr.bf16.mxu0 0
        %2984 = vmatpush1.bf16.msra.mxu0 0
        %2985 = vmatprep.subr.bf16.mxu0 0
        %2986 = vmatpush1.bf16.msra.mxu0 0
        %2987 = vmatprep.subr.bf16.mxu0 0
        %2988 = vmatpush1.bf16.msra.mxu0 0
        %2989 = vmatprep.subr.bf16.mxu0 0
        %2990 = vmatpush1.bf16.msra.mxu0 0
        %2991 = vmatprep.subr.bf16.mxu0 0
        %2992 = vmatpush1.bf16.msra.mxu0 0
        %2993 = vmatprep.subr.bf16.mxu0 0
        %2994 = vmatpush1.bf16.msra.mxu0 %v2978
        %2995 = vmatprep.subr.bf16.mxu0 0
        %2996 = vmatpush1.bf16.msra.mxu0 %v2977
        %2997 = vmatprep.subr.bf16.mxu0 0
        %2998 = vmatpush2.bf16.msra.mxu0 0
        %2999 = vmatprep.subr.bf16.mxu0 0
        %3000 = vmatpush2.bf16.msra.mxu0 0
        %3001 = vmatprep.subr.bf16.mxu0 0
        %3002 = vmatpush2.bf16.msra.mxu0 0
        %3003 = vmatprep.subr.bf16.mxu0 0
        %3004 = vmatpush2.bf16.msra.mxu0 0
        %3005 = vmatprep.subr.bf16.mxu0 0
        %3006 = vmatpush2.bf16.msra.mxu0 0
        %3007 = vmatprep.subr.bf16.mxu0 0
        %3008 = vmatpush2.bf16.msra.mxu0 0
        %3009 = vmatprep.subr.bf16.mxu0 0
        %3010 = vmatpush2.bf16.msra.mxu0 0
        %3011 = vmatprep.subr.bf16.mxu0 0
        %3012 = vmatpush2.bf16.msra.mxu0 0
        %3013 = vmatprep.mubr.bf16.mxu0 0
        %3014 = vmatmul.mubr.bf16.gmra.mxu0 %v2875
        %v3015 = vpop.f32.mrf.mxu0
        %v3016 = vadd.f32 %v2853, %v3015
        %v3017 = vpop.f32.mrf.mxu0
        %v3018 = vpop.f32.mrf.mxu0
        %v3019 = vpop.f32.mrf.mxu0
        %3020 = vdwg.mxu0
        %v3025 = vunpack.c.l.b16 %v2829
        %v3026 = vunpack.c.l.b16 %v2830
        %v3027 = vunpack.c.l.b16 %v2831
        %v3028 = vunpack.c.l.b16 %v2832
        %v3029 = vpack.c.b16 %v3026, %v3025
        %v3030 = vpack.c.b16 %v3028, %v3027
        %3033 = vmatprep.subr.bf16.mxu0 0
        %3034 = vmatpush1.bf16.msra.mxu0 0
        %3035 = vmatprep.subr.bf16.mxu0 0
        %3036 = vmatpush1.bf16.msra.mxu0 0
        %3037 = vmatprep.subr.bf16.mxu0 0
        %3038 = vmatpush1.bf16.msra.mxu0 0
        %3039 = vmatprep.subr.bf16.mxu0 0
        %3040 = vmatpush1.bf16.msra.mxu0 0
        %3041 = vmatprep.subr.bf16.mxu0 0
        %3042 = vmatpush1.bf16.msra.mxu0 0
        %3043 = vmatprep.subr.bf16.mxu0 0
        %3044 = vmatpush1.bf16.msra.mxu0 0
        %3045 = vmatprep.subr.bf16.mxu0 0
        %3046 = vmatpush1.bf16.msra.mxu0 %v3030
        %3047 = vmatprep.subr.bf16.mxu0 0
        %3048 = vmatpush1.bf16.msra.mxu0 %v3029
        %3049 = vmatprep.subr.bf16.mxu0 0
        %3050 = vmatpush2.bf16.msra.mxu0 0
        %3051 = vmatprep.subr.bf16.mxu0 0
        %3052 = vmatpush2.bf16.msra.mxu0 0
        %3053 = vmatprep.subr.bf16.mxu0 0
        %3054 = vmatpush2.bf16.msra.mxu0 0
        %3055 = vmatprep.subr.bf16.mxu0 0
        %3056 = vmatpush2.bf16.msra.mxu0 0
        %3057 = vmatprep.subr.bf16.mxu0 0
        %3058 = vmatpush2.bf16.msra.mxu0 0
        %3059 = vmatprep.subr.bf16.mxu0 0
        %3060 = vmatpush2.bf16.msra.mxu0 0
        %3061 = vmatprep.subr.bf16.mxu0 0
        %3062 = vmatpush2.bf16.msra.mxu0 0
        %3063 = vmatprep.subr.bf16.mxu0 0
        %3064 = vmatpush2.bf16.msra.mxu0 0
        %3065 = vmatprep.mubr.bf16.mxu0 0
        %3066 = vmatmul.mubr.bf16.gmra.mxu0 %v2875
        %v3067 = vpop.f32.mrf.mxu0
        %v3068 = vadd.f32 %v2857, %v3067
        %v3069 = vpop.f32.mrf.mxu0
        %v3070 = vpop.f32.mrf.mxu0
        %v3071 = vpop.f32.mrf.mxu0
        %3072 = vdwg.mxu0
        %v3073 = vld [vmem:[%s12] sm:$0xf]
        %v3074 = vld [vmem:[%s12 + $0x4] sm:$0xf]
        %v3075 = vld [vmem:[%s12 + $0x8] sm:$0xf]
        %v3076 = vld [vmem:[%s12 + $0xc] sm:$0xf]
        %v3077 = vld [vmem:[%s16] sm:$0x1]
        %v3078 = vpack.c.bf16 %v2912, %v2912
        %v3079 = vpack.c.bf16 %v2964, %v2964
        %v3080 = vpack.c.bf16 %v3016, %v3016
        %v3081 = vpack.c.bf16 %v3068, %v3068
        %3083 = vrot.lane.b32.xlu0 %v3078, 120
        %v3084 = vpop.permute.xlu0 %3083
        %v3086 = vsel %vm856, %v3078, 0
        %v3089 = vsel %vm856, %v3084, 0
        %3091 = vmatprep.subr.bf16.mxu0 0
        %3092 = vmatpush1.bf16.xpose.msra.mxu0 0
        %3093 = vmatprep.subr.bf16.mxu0 0
        %3094 = vmatpush1.bf16.xpose.msra.mxu0 0
        %3095 = vmatprep.subr.bf16.mxu0 0
        %3096 = vmatpush1.bf16.xpose.msra.mxu0 0
        %3097 = vmatprep.subr.bf16.mxu0 0
        %3098 = vmatpush1.bf16.xpose.msra.mxu0 0
        %3099 = vmatprep.subr.bf16.mxu0 0
        %3100 = vmatpush1.bf16.xpose.msra.mxu0 0
        %3101 = vmatprep.subr.bf16.mxu0 0
        %3102 = vmatpush1.bf16.xpose.msra.mxu0 0
        %3103 = vmatprep.subr.bf16.mxu0 0
        %3104 = vmatpush1.bf16.xpose.msra.mxu0 0
        %3105 = vmatprep.subr.bf16.mxu0 0
        %3106 = vmatpush1.bf16.xpose.msra.mxu0 %v3089
        %3107 = vmatprep.subr.bf16.mxu0 0
        %3108 = vmatpush2.bf16.xpose.msra.mxu0 0
        %3109 = vmatprep.subr.bf16.mxu0 0
        %3110 = vmatpush2.bf16.xpose.msra.mxu0 0
        %3111 = vmatprep.subr.bf16.mxu0 0
        %3112 = vmatpush2.bf16.xpose.msra.mxu0 0
        %3113 = vmatprep.subr.bf16.mxu0 0
        %3114 = vmatpush2.bf16.xpose.msra.mxu0 0
        %3115 = vmatprep.subr.bf16.mxu0 0
        %3116 = vmatpush2.bf16.xpose.msra.mxu0 0
        %3117 = vmatprep.subr.bf16.mxu0 0
        %3118 = vmatpush2.bf16.xpose.msra.mxu0 0
        %3119 = vmatprep.subr.bf16.mxu0 0
        %3120 = vmatpush2.bf16.xpose.msra.mxu0 0
        %3121 = vmatprep.subr.bf16.mxu0 0
        %3122 = vmatpush2.bf16.xpose.msra.mxu0 0
        %3123 = vmatprep.mubr.bf16.mxu0 0
        %3124 = vmatmul.mubr.bf16.gmra.mxu0 %v3086
        %v3125 = vpop.f32.mrf.mxu0
        %v3126 = vadd.f32 0.0, %v3125
        %v3127 = vpop.f32.mrf.mxu0
        %v3128 = vpop.f32.mrf.mxu0
        %v3129 = vpop.f32.mrf.mxu0
        %3130 = vdwg.mxu0
        %3132 = vrot.lane.b32.xlu0 %v3079, 120
        %v3133 = vpop.permute.xlu0 %3132
        %v3135 = vsel %vm856, %v3079, 0
        %v3138 = vsel %vm856, %v3133, 0
        %3140 = vmatprep.subr.bf16.mxu0 0
        %3141 = vmatpush1.bf16.xpose.msra.mxu0 0
        %3142 = vmatprep.subr.bf16.mxu0 0
        %3143 = vmatpush1.bf16.xpose.msra.mxu0 0
        %3144 = vmatprep.subr.bf16.mxu0 0
        %3145 = vmatpush1.bf16.xpose.msra.mxu0 0
        %3146 = vmatprep.subr.bf16.mxu0 0
        %3147 = vmatpush1.bf16.xpose.msra.mxu0 0
        %3148 = vmatprep.subr.bf16.mxu0 0
        %3149 = vmatpush1.bf16.xpose.msra.mxu0 0
        %3150 = vmatprep.subr.bf16.mxu0 0
        %3151 = vmatpush1.bf16.xpose.msra.mxu0 0
        %3152 = vmatprep.subr.bf16.mxu0 0
        %3153 = vmatpush1.bf16.xpose.msra.mxu0 0
        %3154 = vmatprep.subr.bf16.mxu0 0
        %3155 = vmatpush1.bf16.xpose.msra.mxu0 %v3138
        %3156 = vmatprep.subr.bf16.mxu0 0
        %3157 = vmatpush2.bf16.xpose.msra.mxu0 0
        %3158 = vmatprep.subr.bf16.mxu0 0
        %3159 = vmatpush2.bf16.xpose.msra.mxu0 0
        %3160 = vmatprep.subr.bf16.mxu0 0
        %3161 = vmatpush2.bf16.xpose.msra.mxu0 0
        %3162 = vmatprep.subr.bf16.mxu0 0
        %3163 = vmatpush2.bf16.xpose.msra.mxu0 0
        %3164 = vmatprep.subr.bf16.mxu0 0
        %3165 = vmatpush2.bf16.xpose.msra.mxu0 0
        %3166 = vmatprep.subr.bf16.mxu0 0
        %3167 = vmatpush2.bf16.xpose.msra.mxu0 0
        %3168 = vmatprep.subr.bf16.mxu0 0
        %3169 = vmatpush2.bf16.xpose.msra.mxu0 0
        %3170 = vmatprep.subr.bf16.mxu0 0
        %3171 = vmatpush2.bf16.xpose.msra.mxu0 0
        %3172 = vmatprep.mubr.bf16.mxu0 0
        %3173 = vmatmul.mubr.bf16.gmra.mxu0 %v3135
        %v3174 = vpop.f32.mrf.mxu0
        %v3175 = vadd.f32 0.0, %v3174
        %v3176 = vpop.f32.mrf.mxu0
        %v3177 = vpop.f32.mrf.mxu0
        %v3178 = vpop.f32.mrf.mxu0
        %3179 = vdwg.mxu0
        %3181 = vrot.lane.b32.xlu0 %v3080, 120
        %v3182 = vpop.permute.xlu0 %3181
        %v3184 = vsel %vm856, %v3080, 0
        %v3187 = vsel %vm856, %v3182, 0
        %3189 = vmatprep.subr.bf16.mxu0 0
        %3190 = vmatpush1.bf16.xpose.msra.mxu0 0
        %3191 = vmatprep.subr.bf16.mxu0 0
        %3192 = vmatpush1.bf16.xpose.msra.mxu0 0
        %3193 = vmatprep.subr.bf16.mxu0 0
        %3194 = vmatpush1.bf16.xpose.msra.mxu0 0
        %3195 = vmatprep.subr.bf16.mxu0 0
        %3196 = vmatpush1.bf16.xpose.msra.mxu0 0
        %3197 = vmatprep.subr.bf16.mxu0 0
        %3198 = vmatpush1.bf16.xpose.msra.mxu0 0
        %3199 = vmatprep.subr.bf16.mxu0 0
        %3200 = vmatpush1.bf16.xpose.msra.mxu0 0
        %3201 = vmatprep.subr.bf16.mxu0 0
        %3202 = vmatpush1.bf16.xpose.msra.mxu0 0
        %3203 = vmatprep.subr.bf16.mxu0 0
        %3204 = vmatpush1.bf16.xpose.msra.mxu0 %v3187
        %3205 = vmatprep.subr.bf16.mxu0 0
        %3206 = vmatpush2.bf16.xpose.msra.mxu0 0
        %3207 = vmatprep.subr.bf16.mxu0 0
        %3208 = vmatpush2.bf16.xpose.msra.mxu0 0
        %3209 = vmatprep.subr.bf16.mxu0 0
        %3210 = vmatpush2.bf16.xpose.msra.mxu0 0
        %3211 = vmatprep.subr.bf16.mxu0 0
        %3212 = vmatpush2.bf16.xpose.msra.mxu0 0
        %3213 = vmatprep.subr.bf16.mxu0 0
        %3214 = vmatpush2.bf16.xpose.msra.mxu0 0
        %3215 = vmatprep.subr.bf16.mxu0 0
        %3216 = vmatpush2.bf16.xpose.msra.mxu0 0
        %3217 = vmatprep.subr.bf16.mxu0 0
        %3218 = vmatpush2.bf16.xpose.msra.mxu0 0
        %3219 = vmatprep.subr.bf16.mxu0 0
        %3220 = vmatpush2.bf16.xpose.msra.mxu0 0
        %3221 = vmatprep.mubr.bf16.mxu0 0
        %3222 = vmatmul.mubr.bf16.gmra.mxu0 %v3184
        %v3223 = vpop.f32.mrf.mxu0
        %v3224 = vadd.f32 0.0, %v3223
        %v3225 = vpop.f32.mrf.mxu0
        %v3226 = vpop.f32.mrf.mxu0
        %v3227 = vpop.f32.mrf.mxu0
        %3228 = vdwg.mxu0
        %3230 = vrot.lane.b32.xlu0 %v3081, 120
        %v3231 = vpop.permute.xlu0 %3230
        %v3233 = vsel %vm856, %v3081, 0
        %v3236 = vsel %vm856, %v3231, 0
        %3238 = vmatprep.subr.bf16.mxu0 0
        %3239 = vmatpush1.bf16.xpose.msra.mxu0 0
        %3240 = vmatprep.subr.bf16.mxu0 0
        %3241 = vmatpush1.bf16.xpose.msra.mxu0 0
        %3242 = vmatprep.subr.bf16.mxu0 0
        %3243 = vmatpush1.bf16.xpose.msra.mxu0 0
        %3244 = vmatprep.subr.bf16.mxu0 0
        %3245 = vmatpush1.bf16.xpose.msra.mxu0 0
        %3246 = vmatprep.subr.bf16.mxu0 0
        %3247 = vmatpush1.bf16.xpose.msra.mxu0 0
        %3248 = vmatprep.subr.bf16.mxu0 0
        %3249 = vmatpush1.bf16.xpose.msra.mxu0 0
        %3250 = vmatprep.subr.bf16.mxu0 0
        %3251 = vmatpush1.bf16.xpose.msra.mxu0 0
        %3252 = vmatprep.subr.bf16.mxu0 0
        %3253 = vmatpush1.bf16.xpose.msra.mxu0 %v3236
        %3254 = vmatprep.subr.bf16.mxu0 0
        %3255 = vmatpush2.bf16.xpose.msra.mxu0 0
        %3256 = vmatprep.subr.bf16.mxu0 0
        %3257 = vmatpush2.bf16.xpose.msra.mxu0 0
        %3258 = vmatprep.subr.bf16.mxu0 0
        %3259 = vmatpush2.bf16.xpose.msra.mxu0 0
        %3260 = vmatprep.subr.bf16.mxu0 0
        %3261 = vmatpush2.bf16.xpose.msra.mxu0 0
        %3262 = vmatprep.subr.bf16.mxu0 0
        %3263 = vmatpush2.bf16.xpose.msra.mxu0 0
        %3264 = vmatprep.subr.bf16.mxu0 0
        %3265 = vmatpush2.bf16.xpose.msra.mxu0 0
        %3266 = vmatprep.subr.bf16.mxu0 0
        %3267 = vmatpush2.bf16.xpose.msra.mxu0 0
        %3268 = vmatprep.subr.bf16.mxu0 0
        %3269 = vmatpush2.bf16.xpose.msra.mxu0 0
        %3270 = vmatprep.mubr.bf16.mxu0 0
        %3271 = vmatmul.mubr.bf16.gmra.mxu0 %v3233
        %v3272 = vpop.f32.mrf.mxu0
        %v3273 = vadd.f32 0.0, %v3272
        %v3274 = vpop.f32.mrf.mxu0
        %v3275 = vpop.f32.mrf.mxu0
        %v3276 = vpop.f32.mrf.mxu0
        %3277 = vdwg.mxu0
        %v3278 = vmul.f32 %v3126, 0.35355338
        %v3279 = vmul.f32 %v3175, 0.35355338
        %v3280 = vmul.f32 %v3224, 0.35355338
        %v3281 = vmul.f32 %v3273, 0.35355338
        %v3282 = vsel %vm585, 1, 0
        %vm3283 = vcmp.eq.s32.totalorder %v3282, 1
        %v3284 = vsel %vm3283, %v3278, -1e+10
        %v3285 = vsel %vm3283, %v3279, -1e+10
        %v3286 = vsel %vm3283, %v3280, -1e+10
        %v3287 = vsel %vm3283, %v3281, -1e+10
        %v3288 = vsel %vm856, %v3284, -inf
        %3289 = vmax.xlane.f32.xlu0 %v3288
        %v3290 = vpop.xlane.xlu0 %3289
        %v3291 = vsel %vm856, %v3285, -inf
        %3292 = vmax.xlane.f32.xlu0 %v3291
        %v3293 = vpop.xlane.xlu0 %3292
        %v3294 = vsel %vm856, %v3286, -inf
        %3295 = vmax.xlane.f32.xlu0 %v3294
        %v3296 = vpop.xlane.xlu0 %3295
        %v3297 = vsel %vm856, %v3287, -inf
        %3298 = vmax.xlane.f32.xlu0 %v3297
        %v3299 = vpop.xlane.xlu0 %3298
        %v3300 = vsub.f32 %v3284, %v3290
        %v3301 = vsub.f32 %v3285, %v3293
        %v3302 = vsub.f32 %v3286, %v3296
        %v3303 = vsub.f32 %v3287, %v3299
        %v3304 = vmul.f32 %v3300, 1.442695
        %v3305 = vpow.pop %v3304
        %v3306 = vmul.f32 %v3301, 1.442695
        %v3307 = vpow.pop %v3306
        %v3308 = vmul.f32 %v3302, 1.442695
        %v3309 = vpow.pop %v3308
        %v3310 = vmul.f32 %v3303, 1.442695
        %v3311 = vpow.pop %v3310
        %v3312 = vsel %vm856, %v3305, 0.0
        %3313 = vadd.xlane.f32.xlu0 %v3312
        %v3314 = vpop.xlane.xlu0 %3313
        %v3315 = vsel %vm856, %v3307, 0.0
        %3316 = vadd.xlane.f32.xlu0 %v3315
        %v3317 = vpop.xlane.xlu0 %3316
        %v3318 = vsel %vm856, %v3309, 0.0
        %3319 = vadd.xlane.f32.xlu0 %v3318
        %v3320 = vpop.xlane.xlu0 %3319
        %v3321 = vsel %vm856, %v3311, 0.0
        %3322 = vadd.xlane.f32.xlu0 %v3321
        %v3323 = vpop.xlane.xlu0 %3322
        %v3324 = vrcp.pop %v3314
        %v3325 = vmul.f32 %v3305, %v3324
        %v3326 = vrcp.pop %v3317
        %v3327 = vmul.f32 %v3307, %v3326
        %v3328 = vrcp.pop %v3320
        %v3329 = vmul.f32 %v3309, %v3328
        %v3330 = vrcp.pop %v3323
        %v3331 = vmul.f32 %v3311, %v3330
        %v3332 = vpack.c.bf16 %v3325, %v3325
        %v3333 = vpack.c.bf16 %v3327, %v3327
        %v3334 = vpack.c.bf16 %v3329, %v3329
        %v3335 = vpack.c.bf16 %v3331, %v3331
        %3336 = vrot.lane.b32.xlu0 %v3078, 112
        %v3337 = vpop.permute.xlu0 %3336
        %v3339 = vsel %vm856, %v3332, 0
        %v3342 = vsel %vm1113, %v3337, 0
        %3344 = vmatprep.subr.bf16.mxu0 0
        %3345 = vmatpush1.bf16.msra.mxu0 0
        %3346 = vmatprep.subr.bf16.mxu0 0
        %3347 = vmatpush1.bf16.msra.mxu0 0
        %3348 = vmatprep.subr.bf16.mxu0 0
        %3349 = vmatpush1.bf16.msra.mxu0 0
        %3350 = vmatprep.subr.bf16.mxu0 0
        %3351 = vmatpush1.bf16.msra.mxu0 0
        %3352 = vmatprep.subr.bf16.mxu0 0
        %3353 = vmatpush1.bf16.msra.mxu0 0
        %3354 = vmatprep.subr.bf16.mxu0 0
        %3355 = vmatpush1.bf16.msra.mxu0 0
        %3356 = vmatprep.subr.bf16.mxu0 0
        %3357 = vmatpush1.bf16.msra.mxu0 0
        %3358 = vmatprep.subr.bf16.mxu0 0
        %3359 = vmatpush1.bf16.msra.mxu0 %v3342
        %3360 = vmatprep.subr.bf16.mxu0 0
        %3361 = vmatpush2.bf16.msra.mxu0 0
        %3362 = vmatprep.subr.bf16.mxu0 0
        %3363 = vmatpush2.bf16.msra.mxu0 0
        %3364 = vmatprep.subr.bf16.mxu0 0
        %3365 = vmatpush2.bf16.msra.mxu0 0
        %3366 = vmatprep.subr.bf16.mxu0 0
        %3367 = vmatpush2.bf16.msra.mxu0 0
        %3368 = vmatprep.subr.bf16.mxu0 0
        %3369 = vmatpush2.bf16.msra.mxu0 0
        %3370 = vmatprep.subr.bf16.mxu0 0
        %3371 = vmatpush2.bf16.msra.mxu0 0
        %3372 = vmatprep.subr.bf16.mxu0 0
        %3373 = vmatpush2.bf16.msra.mxu0 0
        %3374 = vmatprep.subr.bf16.mxu0 0
        %3375 = vmatpush2.bf16.msra.mxu0 0
        %3376 = vmatprep.mubr.bf16.mxu0 0
        %3377 = vmatmul.mubr.bf16.gmra.mxu0 %v3339
        %v3378 = vpop.f32.mrf.mxu0
        %v3379 = vadd.f32 0.0, %v3378
        %v3380 = vpop.f32.mrf.mxu0
        %v3381 = vpop.f32.mrf.mxu0
        %v3382 = vpop.f32.mrf.mxu0
        %3383 = vdwg.mxu0
        %3384 = vrot.lane.b32.xlu0 %v3079, 112
        %v3385 = vpop.permute.xlu0 %3384
        %v3387 = vsel %vm856, %v3333, 0
        %v3390 = vsel %vm1113, %v3385, 0
        %3392 = vmatprep.subr.bf16.mxu0 0
        %3393 = vmatpush1.bf16.msra.mxu0 0
        %3394 = vmatprep.subr.bf16.mxu0 0
        %3395 = vmatpush1.bf16.msra.mxu0 0
        %3396 = vmatprep.subr.bf16.mxu0 0
        %3397 = vmatpush1.bf16.msra.mxu0 0
        %3398 = vmatprep.subr.bf16.mxu0 0
        %3399 = vmatpush1.bf16.msra.mxu0 0
        %3400 = vmatprep.subr.bf16.mxu0 0
        %3401 = vmatpush1.bf16.msra.mxu0 0
        %3402 = vmatprep.subr.bf16.mxu0 0
        %3403 = vmatpush1.bf16.msra.mxu0 0
        %3404 = vmatprep.subr.bf16.mxu0 0
        %3405 = vmatpush1.bf16.msra.mxu0 0
        %3406 = vmatprep.subr.bf16.mxu0 0
        %3407 = vmatpush1.bf16.msra.mxu0 %v3390
        %3408 = vmatprep.subr.bf16.mxu0 0
        %3409 = vmatpush2.bf16.msra.mxu0 0
        %3410 = vmatprep.subr.bf16.mxu0 0
        %3411 = vmatpush2.bf16.msra.mxu0 0
        %3412 = vmatprep.subr.bf16.mxu0 0
        %3413 = vmatpush2.bf16.msra.mxu0 0
        %3414 = vmatprep.subr.bf16.mxu0 0
        %3415 = vmatpush2.bf16.msra.mxu0 0
        %3416 = vmatprep.subr.bf16.mxu0 0
        %3417 = vmatpush2.bf16.msra.mxu0 0
        %3418 = vmatprep.subr.bf16.mxu0 0
        %3419 = vmatpush2.bf16.msra.mxu0 0
        %3420 = vmatprep.subr.bf16.mxu0 0
        %3421 = vmatpush2.bf16.msra.mxu0 0
        %3422 = vmatprep.subr.bf16.mxu0 0
        %3423 = vmatpush2.bf16.msra.mxu0 0
        %3424 = vmatprep.mubr.bf16.mxu0 0
        %3425 = vmatmul.mubr.bf16.gmra.mxu0 %v3387
        %v3426 = vpop.f32.mrf.mxu0
        %v3427 = vadd.f32 0.0, %v3426
        %v3428 = vpop.f32.mrf.mxu0
        %v3429 = vpop.f32.mrf.mxu0
        %v3430 = vpop.f32.mrf.mxu0
        %3431 = vdwg.mxu0
        %3432 = vrot.lane.b32.xlu0 %v3080, 112
        %v3433 = vpop.permute.xlu0 %3432
        %v3435 = vsel %vm856, %v3334, 0
        %v3438 = vsel %vm1113, %v3433, 0
        %3440 = vmatprep.subr.bf16.mxu0 0
        %3441 = vmatpush1.bf16.msra.mxu0 0
        %3442 = vmatprep.subr.bf16.mxu0 0
        %3443 = vmatpush1.bf16.msra.mxu0 0
        %3444 = vmatprep.subr.bf16.mxu0 0
        %3445 = vmatpush1.bf16.msra.mxu0 0
        %3446 = vmatprep.subr.bf16.mxu0 0
        %3447 = vmatpush1.bf16.msra.mxu0 0
        %3448 = vmatprep.subr.bf16.mxu0 0
        %3449 = vmatpush1.bf16.msra.mxu0 0
        %3450 = vmatprep.subr.bf16.mxu0 0
        %3451 = vmatpush1.bf16.msra.mxu0 0
        %3452 = vmatprep.subr.bf16.mxu0 0
        %3453 = vmatpush1.bf16.msra.mxu0 0
        %3454 = vmatprep.subr.bf16.mxu0 0
        %3455 = vmatpush1.bf16.msra.mxu0 %v3438
        %3456 = vmatprep.subr.bf16.mxu0 0
        %3457 = vmatpush2.bf16.msra.mxu0 0
        %3458 = vmatprep.subr.bf16.mxu0 0
        %3459 = vmatpush2.bf16.msra.mxu0 0
        %3460 = vmatprep.subr.bf16.mxu0 0
        %3461 = vmatpush2.bf16.msra.mxu0 0
        %3462 = vmatprep.subr.bf16.mxu0 0
        %3463 = vmatpush2.bf16.msra.mxu0 0
        %3464 = vmatprep.subr.bf16.mxu0 0
        %3465 = vmatpush2.bf16.msra.mxu0 0
        %3466 = vmatprep.subr.bf16.mxu0 0
        %3467 = vmatpush2.bf16.msra.mxu0 0
        %3468 = vmatprep.subr.bf16.mxu0 0
        %3469 = vmatpush2.bf16.msra.mxu0 0
        %3470 = vmatprep.subr.bf16.mxu0 0
        %3471 = vmatpush2.bf16.msra.mxu0 0
        %3472 = vmatprep.mubr.bf16.mxu0 0
        %3473 = vmatmul.mubr.bf16.gmra.mxu0 %v3435
        %v3474 = vpop.f32.mrf.mxu0
        %v3475 = vadd.f32 0.0, %v3474
        %v3476 = vpop.f32.mrf.mxu0
        %v3477 = vpop.f32.mrf.mxu0
        %v3478 = vpop.f32.mrf.mxu0
        %3479 = vdwg.mxu0
        %3480 = vrot.lane.b32.xlu0 %v3081, 112
        %v3481 = vpop.permute.xlu0 %3480
        %v3483 = vsel %vm856, %v3335, 0
        %v3486 = vsel %vm1113, %v3481, 0
        %3488 = vmatprep.subr.bf16.mxu0 0
        %3489 = vmatpush1.bf16.msra.mxu0 0
        %3490 = vmatprep.subr.bf16.mxu0 0
        %3491 = vmatpush1.bf16.msra.mxu0 0
        %3492 = vmatprep.subr.bf16.mxu0 0
        %3493 = vmatpush1.bf16.msra.mxu0 0
        %3494 = vmatprep.subr.bf16.mxu0 0
        %3495 = vmatpush1.bf16.msra.mxu0 0
        %3496 = vmatprep.subr.bf16.mxu0 0
        %3497 = vmatpush1.bf16.msra.mxu0 0
        %3498 = vmatprep.subr.bf16.mxu0 0
        %3499 = vmatpush1.bf16.msra.mxu0 0
        %3500 = vmatprep.subr.bf16.mxu0 0
        %3501 = vmatpush1.bf16.msra.mxu0 0
        %3502 = vmatprep.subr.bf16.mxu0 0
        %3503 = vmatpush1.bf16.msra.mxu0 %v3486
        %3504 = vmatprep.subr.bf16.mxu0 0
        %3505 = vmatpush2.bf16.msra.mxu0 0
        %3506 = vmatprep.subr.bf16.mxu0 0
        %3507 = vmatpush2.bf16.msra.mxu0 0
        %3508 = vmatprep.subr.bf16.mxu0 0
        %3509 = vmatpush2.bf16.msra.mxu0 0
        %3510 = vmatprep.subr.bf16.mxu0 0
        %3511 = vmatpush2.bf16.msra.mxu0 0
        %3512 = vmatprep.subr.bf16.mxu0 0
        %3513 = vmatpush2.bf16.msra.mxu0 0
        %3514 = vmatprep.subr.bf16.mxu0 0
        %3515 = vmatpush2.bf16.msra.mxu0 0
        %3516 = vmatprep.subr.bf16.mxu0 0
        %3517 = vmatpush2.bf16.msra.mxu0 0
        %3518 = vmatprep.subr.bf16.mxu0 0
        %3519 = vmatpush2.bf16.msra.mxu0 0
        %3520 = vmatprep.mubr.bf16.mxu0 0
        %3521 = vmatmul.mubr.bf16.gmra.mxu0 %v3483
        %v3522 = vpop.f32.mrf.mxu0
        %v3523 = vadd.f32 0.0, %v3522
        %v3524 = vpop.f32.mrf.mxu0
        %v3525 = vpop.f32.mrf.mxu0
        %v3526 = vpop.f32.mrf.mxu0
        %3527 = vdwg.mxu0
        %v3528 = vpack.c.bf16 %v3379, %v3379
        %v3529 = vpack.c.bf16 %v3427, %v3427
        %v3530 = vpack.c.bf16 %v3475, %v3475
        %v3531 = vpack.c.bf16 %v3523, %v3523
        %v3533 = vsel %vm856, %v3528, 0
        %v3536 = vsel %vm1113, %v3073, 0
        %3538 = vmatprep.subr.bf16.mxu0 0
        %3539 = vmatpush1.bf16.msra.mxu0 0
        %3540 = vmatprep.subr.bf16.mxu0 0
        %3541 = vmatpush1.bf16.msra.mxu0 0
        %3542 = vmatprep.subr.bf16.mxu0 0
        %3543 = vmatpush1.bf16.msra.mxu0 0
        %3544 = vmatprep.subr.bf16.mxu0 0
        %3545 = vmatpush1.bf16.msra.mxu0 0
        %3546 = vmatprep.subr.bf16.mxu0 0
        %3547 = vmatpush1.bf16.msra.mxu0 0
        %3548 = vmatprep.subr.bf16.mxu0 0
        %3549 = vmatpush1.bf16.msra.mxu0 0
        %3550 = vmatprep.subr.bf16.mxu0 0
        %3551 = vmatpush1.bf16.msra.mxu0 0
        %3552 = vmatprep.subr.bf16.mxu0 0
        %3553 = vmatpush1.bf16.msra.mxu0 %v3536
        %3554 = vmatprep.subr.bf16.mxu0 0
        %3555 = vmatpush2.bf16.msra.mxu0 0
        %3556 = vmatprep.subr.bf16.mxu0 0
        %3557 = vmatpush2.bf16.msra.mxu0 0
        %3558 = vmatprep.subr.bf16.mxu0 0
        %3559 = vmatpush2.bf16.msra.mxu0 0
        %3560 = vmatprep.subr.bf16.mxu0 0
        %3561 = vmatpush2.bf16.msra.mxu0 0
        %3562 = vmatprep.subr.bf16.mxu0 0
        %3563 = vmatpush2.bf16.msra.mxu0 0
        %3564 = vmatprep.subr.bf16.mxu0 0
        %3565 = vmatpush2.bf16.msra.mxu0 0
        %3566 = vmatprep.subr.bf16.mxu0 0
        %3567 = vmatpush2.bf16.msra.mxu0 0
        %3568 = vmatprep.subr.bf16.mxu0 0
        %3569 = vmatpush2.bf16.msra.mxu0 0
        %3570 = vmatprep.mubr.bf16.mxu0 0
        %3571 = vmatmul.mubr.bf16.gmra.mxu0 %v3533
        %v3572 = vpop.f32.mrf.mxu0
        %v3573 = vadd.f32 0.0, %v3572
        %v3574 = vpop.f32.mrf.mxu0
        %v3575 = vpop.f32.mrf.mxu0
        %v3576 = vpop.f32.mrf.mxu0
        %3577 = vdwg.mxu0
        %v3579 = vsel %vm856, %v3529, 0
        %v3582 = vsel %vm1113, %v3074, 0
        %3584 = vmatprep.subr.bf16.mxu0 0
        %3585 = vmatpush1.bf16.msra.mxu0 0
        %3586 = vmatprep.subr.bf16.mxu0 0
        %3587 = vmatpush1.bf16.msra.mxu0 0
        %3588 = vmatprep.subr.bf16.mxu0 0
        %3589 = vmatpush1.bf16.msra.mxu0 0
        %3590 = vmatprep.subr.bf16.mxu0 0
        %3591 = vmatpush1.bf16.msra.mxu0 0
        %3592 = vmatprep.subr.bf16.mxu0 0
        %3593 = vmatpush1.bf16.msra.mxu0 0
        %3594 = vmatprep.subr.bf16.mxu0 0
        %3595 = vmatpush1.bf16.msra.mxu0 0
        %3596 = vmatprep.subr.bf16.mxu0 0
        %3597 = vmatpush1.bf16.msra.mxu0 0
        %3598 = vmatprep.subr.bf16.mxu0 0
        %3599 = vmatpush1.bf16.msra.mxu0 %v3582
        %3600 = vmatprep.subr.bf16.mxu0 0
        %3601 = vmatpush2.bf16.msra.mxu0 0
        %3602 = vmatprep.subr.bf16.mxu0 0
        %3603 = vmatpush2.bf16.msra.mxu0 0
        %3604 = vmatprep.subr.bf16.mxu0 0
        %3605 = vmatpush2.bf16.msra.mxu0 0
        %3606 = vmatprep.subr.bf16.mxu0 0
        %3607 = vmatpush2.bf16.msra.mxu0 0
        %3608 = vmatprep.subr.bf16.mxu0 0
        %3609 = vmatpush2.bf16.msra.mxu0 0
        %3610 = vmatprep.subr.bf16.mxu0 0
        %3611 = vmatpush2.bf16.msra.mxu0 0
        %3612 = vmatprep.subr.bf16.mxu0 0
        %3613 = vmatpush2.bf16.msra.mxu0 0
        %3614 = vmatprep.subr.bf16.mxu0 0
        %3615 = vmatpush2.bf16.msra.mxu0 0
        %3616 = vmatprep.mubr.bf16.mxu0 0
        %3617 = vmatmul.mubr.bf16.gmra.mxu0 %v3579
        %v3618 = vpop.f32.mrf.mxu0
        %v3619 = vadd.f32 0.0, %v3618
        %v3620 = vpop.f32.mrf.mxu0
        %v3621 = vpop.f32.mrf.mxu0
        %v3622 = vpop.f32.mrf.mxu0
        %3623 = vdwg.mxu0
        %v3625 = vsel %vm856, %v3530, 0
        %v3628 = vsel %vm1113, %v3075, 0
        %3630 = vmatprep.subr.bf16.mxu0 0
        %3631 = vmatpush1.bf16.msra.mxu0 0
        %3632 = vmatprep.subr.bf16.mxu0 0
        %3633 = vmatpush1.bf16.msra.mxu0 0
        %3634 = vmatprep.subr.bf16.mxu0 0
        %3635 = vmatpush1.bf16.msra.mxu0 0
        %3636 = vmatprep.subr.bf16.mxu0 0
        %3637 = vmatpush1.bf16.msra.mxu0 0
        %3638 = vmatprep.subr.bf16.mxu0 0
        %3639 = vmatpush1.bf16.msra.mxu0 0
        %3640 = vmatprep.subr.bf16.mxu0 0
        %3641 = vmatpush1.bf16.msra.mxu0 0
        %3642 = vmatprep.subr.bf16.mxu0 0
        %3643 = vmatpush1.bf16.msra.mxu0 0
        %3644 = vmatprep.subr.bf16.mxu0 0
        %3645 = vmatpush1.bf16.msra.mxu0 %v3628
        %3646 = vmatprep.subr.bf16.mxu0 0
        %3647 = vmatpush2.bf16.msra.mxu0 0
        %3648 = vmatprep.subr.bf16.mxu0 0
        %3649 = vmatpush2.bf16.msra.mxu0 0
        %3650 = vmatprep.subr.bf16.mxu0 0
        %3651 = vmatpush2.bf16.msra.mxu0 0
        %3652 = vmatprep.subr.bf16.mxu0 0
        %3653 = vmatpush2.bf16.msra.mxu0 0
        %3654 = vmatprep.subr.bf16.mxu0 0
        %3655 = vmatpush2.bf16.msra.mxu0 0
        %3656 = vmatprep.subr.bf16.mxu0 0
        %3657 = vmatpush2.bf16.msra.mxu0 0
        %3658 = vmatprep.subr.bf16.mxu0 0
        %3659 = vmatpush2.bf16.msra.mxu0 0
        %3660 = vmatprep.subr.bf16.mxu0 0
        %3661 = vmatpush2.bf16.msra.mxu0 0
        %3662 = vmatprep.mubr.bf16.mxu0 0
        %3663 = vmatmul.mubr.bf16.gmra.mxu0 %v3625
        %v3664 = vpop.f32.mrf.mxu0
        %v3665 = vadd.f32 0.0, %v3664
        %v3666 = vpop.f32.mrf.mxu0
        %v3667 = vpop.f32.mrf.mxu0
        %v3668 = vpop.f32.mrf.mxu0
        %3669 = vdwg.mxu0
        %v3671 = vsel %vm856, %v3531, 0
        %v3674 = vsel %vm1113, %v3076, 0
        %3676 = vmatprep.subr.bf16.mxu0 0
        %3677 = vmatpush1.bf16.msra.mxu0 0
        %3678 = vmatprep.subr.bf16.mxu0 0
        %3679 = vmatpush1.bf16.msra.mxu0 0
        %3680 = vmatprep.subr.bf16.mxu0 0
        %3681 = vmatpush1.bf16.msra.mxu0 0
        %3682 = vmatprep.subr.bf16.mxu0 0
        %3683 = vmatpush1.bf16.msra.mxu0 0
        %3684 = vmatprep.subr.bf16.mxu0 0
        %3685 = vmatpush1.bf16.msra.mxu0 0
        %3686 = vmatprep.subr.bf16.mxu0 0
        %3687 = vmatpush1.bf16.msra.mxu0 0
        %3688 = vmatprep.subr.bf16.mxu0 0
        %3689 = vmatpush1.bf16.msra.mxu0 0
        %3690 = vmatprep.subr.bf16.mxu0 0
        %3691 = vmatpush1.bf16.msra.mxu0 %v3674
        %3692 = vmatprep.subr.bf16.mxu0 0
        %3693 = vmatpush2.bf16.msra.mxu0 0
        %3694 = vmatprep.subr.bf16.mxu0 0
        %3695 = vmatpush2.bf16.msra.mxu0 0
        %3696 = vmatprep.subr.bf16.mxu0 0
        %3697 = vmatpush2.bf16.msra.mxu0 0
        %3698 = vmatprep.subr.bf16.mxu0 0
        %3699 = vmatpush2.bf16.msra.mxu0 0
        %3700 = vmatprep.subr.bf16.mxu0 0
        %3701 = vmatpush2.bf16.msra.mxu0 0
        %3702 = vmatprep.subr.bf16.mxu0 0
        %3703 = vmatpush2.bf16.msra.mxu0 0
        %3704 = vmatprep.subr.bf16.mxu0 0
        %3705 = vmatpush2.bf16.msra.mxu0 0
        %3706 = vmatprep.subr.bf16.mxu0 0
        %3707 = vmatpush2.bf16.msra.mxu0 0
        %3708 = vmatprep.mubr.bf16.mxu0 0
        %3709 = vmatmul.mubr.bf16.gmra.mxu0 %v3671
        %v3710 = vpop.f32.mrf.mxu0
        %v3711 = vadd.f32 0.0, %v3710
        %v3712 = vpop.f32.mrf.mxu0
        %v3713 = vpop.f32.mrf.mxu0
        %v3714 = vpop.f32.mrf.mxu0
        %3715 = vdwg.mxu0
        %v3716 = vsel %vm644, %v3573, 0.0
        %v3717 = vsel %vm644, %v3619, 0.0
        %v3718 = vadd.f32 %v3716, %v3717
        %v3719 = vsel %vm644, %v3665, 0.0
        %v3720 = vadd.f32 %v3718, %v3719
        %v3721 = vsel %vm644, %v3711, 0.0
        %v3722 = vadd.f32 %v3720, %v3721
        %v3723 = vlaneseq
        %v3724 = vshrl.u32 %v3723, 7
        %v3725 = vsub.s32 0, %v3724
        %v3726 = vrot.slane %v3077, %v3725
        %v3727 = vadd.f32 %v3722, %v3726
        %v3728 = vadd.f32 %v2816, %v3727
        %v3729 = vld [vmem:[%s16 + $0x1] sm:$0x1]
        %v3730 = vld [vmem:[%s16 + $0x2] sm:$0x1]
        %v3731 = vsel %vm644, %v3728, 0.0
        %3732 = vadd.xlane.f32.xlu0 %v3731
        %v3733 = vpop.xlane.xlu0 %3732
        %v3734 = vmul.f32 %v3733, %v1507
        %v3735 = vsub.f32 %v3728, %v3734
        %v3736 = vmul.f32 %v3735, %v3735
        %v3737 = vsel %vm644, %v3736, 0.0
        %3738 = vadd.xlane.f32.xlu0 %v3737
        %v3739 = vpop.xlane.xlu0 %3738
        %v3740 = vmul.f32 %v3739, %v1507
        %v3741 = vadd.f32 %v3740, 1e-05
        %v3742 = vrsqrt.pop %v3741
        %v3743 = vmul.f32 %v3735, %v3742
        %v3744 = vlaneseq
        %v3745 = vshrl.u32 %v3744, 7
        %v3746 = vsub.s32 0, %v3745
        %v3747 = vrot.slane %v3729, %v3746
        %v3748 = vmul.f32 %v3743, %v3747
        %v3749 = vlaneseq
        %v3750 = vshrl.u32 %v3749, 7
        %v3751 = vsub.s32 0, %v3750
        %v3752 = vrot.slane %v3730, %v3751
        %v3753 = vadd.f32 %v3748, %v3752
        %v3754 = vpack.c.bf16 %v3753, %v3753
        %3755 = vrot.lane.b32.xlu0 %v2870, 104
        %v3756 = vpop.permute.xlu0 %3755
        %3757 = vrot.lane.b32.xlu0 %v2871, 104
        %v3758 = vpop.permute.xlu0 %3757
        %3761 = vrot.lane.b32.xlu0 %v2845, 104
        %v3762 = vpop.permute.xlu0 %3761
        %v3765 = vsel %vm644, %v3754, 0
        %3767 = vmatprep.subr.bf16.mxu0 0
        %3768 = vmatpush1.bf16.msra.mxu0 0
        %3769 = vmatprep.subr.bf16.mxu0 0
        %3770 = vmatpush1.bf16.msra.mxu0 0
        %3771 = vmatprep.subr.bf16.mxu0 0
        %3772 = vmatpush1.bf16.msra.mxu0 0
        %3773 = vmatprep.subr.bf16.mxu0 0
        %3774 = vmatpush1.bf16.msra.mxu0 0
        %3775 = vmatprep.subr.bf16.mxu0 0
        %3776 = vmatpush1.bf16.msra.mxu0 0
        %3777 = vmatprep.subr.bf16.mxu0 0
        %3778 = vmatpush1.bf16.msra.mxu0 0
        %3779 = vmatprep.subr.bf16.mxu0 0
        %3780 = vmatpush1.bf16.msra.mxu0 %v3758
        %3781 = vmatprep.subr.bf16.mxu0 0
        %3782 = vmatpush1.bf16.msra.mxu0 %v3756
        %3783 = vmatprep.subr.bf16.mxu0 0
        %3784 = vmatpush2.bf16.msra.mxu0 0
        %3785 = vmatprep.subr.bf16.mxu0 0
        %3786 = vmatpush2.bf16.msra.mxu0 0
        %3787 = vmatprep.subr.bf16.mxu0 0
        %3788 = vmatpush2.bf16.msra.mxu0 0
        %3789 = vmatprep.subr.bf16.mxu0 0
        %3790 = vmatpush2.bf16.msra.mxu0 0
        %3791 = vmatprep.subr.bf16.mxu0 0
        %3792 = vmatpush2.bf16.msra.mxu0 0
        %3793 = vmatprep.subr.bf16.mxu0 0
        %3794 = vmatpush2.bf16.msra.mxu0 0
        %3795 = vmatprep.subr.bf16.mxu0 0
        %3796 = vmatpush2.bf16.msra.mxu0 0
        %3797 = vmatprep.subr.bf16.mxu0 0
        %3798 = vmatpush2.bf16.msra.mxu0 0
        %3799 = vmatprep.mubr.bf16.mxu0 0
        %3800 = vmatmul.mubr.bf16.gmra.mxu0 %v3765
        %v3801 = vpop.f32.mrf.mxu0
        %v3802 = vadd.f32 %v3762, %v3801
        %v3803 = vpop.f32.mrf.mxu0
        %v3804 = vpop.f32.mrf.mxu0
        %v3805 = vpop.f32.mrf.mxu0
        %3806 = vdwg.mxu0
        %3807 = vrot.lane.b32.xlu0 %v2925, 104
        %v3808 = vpop.permute.xlu0 %3807
        %3809 = vrot.lane.b32.xlu0 %v2926, 104
        %v3810 = vpop.permute.xlu0 %3809
        %3813 = vrot.lane.b32.xlu0 %v2849, 104
        %v3814 = vpop.permute.xlu0 %3813
        %3816 = vmatprep.subr.bf16.mxu0 0
        %3817 = vmatpush1.bf16.msra.mxu0 0
        %3818 = vmatprep.subr.bf16.mxu0 0
        %3819 = vmatpush1.bf16.msra.mxu0 0
        %3820 = vmatprep.subr.bf16.mxu0 0
        %3821 = vmatpush1.bf16.msra.mxu0 0
        %3822 = vmatprep.subr.bf16.mxu0 0
        %3823 = vmatpush1.bf16.msra.mxu0 0
        %3824 = vmatprep.subr.bf16.mxu0 0
        %3825 = vmatpush1.bf16.msra.mxu0 0
        %3826 = vmatprep.subr.bf16.mxu0 0
        %3827 = vmatpush1.bf16.msra.mxu0 0
        %3828 = vmatprep.subr.bf16.mxu0 0
        %3829 = vmatpush1.bf16.msra.mxu0 %v3810
        %3830 = vmatprep.subr.bf16.mxu0 0
        %3831 = vmatpush1.bf16.msra.mxu0 %v3808
        %3832 = vmatprep.subr.bf16.mxu0 0
        %3833 = vmatpush2.bf16.msra.mxu0 0
        %3834 = vmatprep.subr.bf16.mxu0 0
        %3835 = vmatpush2.bf16.msra.mxu0 0
        %3836 = vmatprep.subr.bf16.mxu0 0
        %3837 = vmatpush2.bf16.msra.mxu0 0
        %3838 = vmatprep.subr.bf16.mxu0 0
        %3839 = vmatpush2.bf16.msra.mxu0 0
        %3840 = vmatprep.subr.bf16.mxu0 0
        %3841 = vmatpush2.bf16.msra.mxu0 0
        %3842 = vmatprep.subr.bf16.mxu0 0
        %3843 = vmatpush2.bf16.msra.mxu0 0
        %3844 = vmatprep.subr.bf16.mxu0 0
        %3845 = vmatpush2.bf16.msra.mxu0 0
        %3846 = vmatprep.subr.bf16.mxu0 0
        %3847 = vmatpush2.bf16.msra.mxu0 0
        %3848 = vmatprep.mubr.bf16.mxu0 0
        %3849 = vmatmul.mubr.bf16.gmra.mxu0 %v3765
        %v3850 = vpop.f32.mrf.mxu0
        %v3851 = vadd.f32 %v3814, %v3850
        %v3852 = vpop.f32.mrf.mxu0
        %v3853 = vpop.f32.mrf.mxu0
        %v3854 = vpop.f32.mrf.mxu0
        %3855 = vdwg.mxu0
        %3856 = vrot.lane.b32.xlu0 %v2977, 104
        %v3857 = vpop.permute.xlu0 %3856
        %3858 = vrot.lane.b32.xlu0 %v2978, 104
        %v3859 = vpop.permute.xlu0 %3858
        %3862 = vrot.lane.b32.xlu0 %v2853, 104
        %v3863 = vpop.permute.xlu0 %3862
        %3865 = vmatprep.subr.bf16.mxu0 0
        %3866 = vmatpush1.bf16.msra.mxu0 0
        %3867 = vmatprep.subr.bf16.mxu0 0
        %3868 = vmatpush1.bf16.msra.mxu0 0
        %3869 = vmatprep.subr.bf16.mxu0 0
        %3870 = vmatpush1.bf16.msra.mxu0 0
        %3871 = vmatprep.subr.bf16.mxu0 0
        %3872 = vmatpush1.bf16.msra.mxu0 0
        %3873 = vmatprep.subr.bf16.mxu0 0
        %3874 = vmatpush1.bf16.msra.mxu0 0
        %3875 = vmatprep.subr.bf16.mxu0 0
        %3876 = vmatpush1.bf16.msra.mxu0 0
        %3877 = vmatprep.subr.bf16.mxu0 0
        %3878 = vmatpush1.bf16.msra.mxu0 %v3859
        %3879 = vmatprep.subr.bf16.mxu0 0
        %3880 = vmatpush1.bf16.msra.mxu0 %v3857
        %3881 = vmatprep.subr.bf16.mxu0 0
        %3882 = vmatpush2.bf16.msra.mxu0 0
        %3883 = vmatprep.subr.bf16.mxu0 0
        %3884 = vmatpush2.bf16.msra.mxu0 0
        %3885 = vmatprep.subr.bf16.mxu0 0
        %3886 = vmatpush2.bf16.msra.mxu0 0
        %3887 = vmatprep.subr.bf16.mxu0 0
        %3888 = vmatpush2.bf16.msra.mxu0 0
        %3889 = vmatprep.subr.bf16.mxu0 0
        %3890 = vmatpush2.bf16.msra.mxu0 0
        %3891 = vmatprep.subr.bf16.mxu0 0
        %3892 = vmatpush2.bf16.msra.mxu0 0
        %3893 = vmatprep.subr.bf16.mxu0 0
        %3894 = vmatpush2.bf16.msra.mxu0 0
        %3895 = vmatprep.subr.bf16.mxu0 0
        %3896 = vmatpush2.bf16.msra.mxu0 0
        %3897 = vmatprep.mubr.bf16.mxu0 0
        %3898 = vmatmul.mubr.bf16.gmra.mxu0 %v3765
        %v3899 = vpop.f32.mrf.mxu0
        %v3900 = vadd.f32 %v3863, %v3899
        %v3901 = vpop.f32.mrf.mxu0
        %v3902 = vpop.f32.mrf.mxu0
        %v3903 = vpop.f32.mrf.mxu0
        %3904 = vdwg.mxu0
        %3905 = vrot.lane.b32.xlu0 %v3029, 104
        %v3906 = vpop.permute.xlu0 %3905
        %3907 = vrot.lane.b32.xlu0 %v3030, 104
        %v3908 = vpop.permute.xlu0 %3907
        %3911 = vrot.lane.b32.xlu0 %v2857, 104
        %v3912 = vpop.permute.xlu0 %3911
        %3914 = vmatprep.subr.bf16.mxu0 0
        %3915 = vmatpush1.bf16.msra.mxu0 0
        %3916 = vmatprep.subr.bf16.mxu0 0
        %3917 = vmatpush1.bf16.msra.mxu0 0
        %3918 = vmatprep.subr.bf16.mxu0 0
        %3919 = vmatpush1.bf16.msra.mxu0 0
        %3920 = vmatprep.subr.bf16.mxu0 0
        %3921 = vmatpush1.bf16.msra.mxu0 0
        %3922 = vmatprep.subr.bf16.mxu0 0
        %3923 = vmatpush1.bf16.msra.mxu0 0
        %3924 = vmatprep.subr.bf16.mxu0 0
        %3925 = vmatpush1.bf16.msra.mxu0 0
        %3926 = vmatprep.subr.bf16.mxu0 0
        %3927 = vmatpush1.bf16.msra.mxu0 %v3908
        %3928 = vmatprep.subr.bf16.mxu0 0
        %3929 = vmatpush1.bf16.msra.mxu0 %v3906
        %3930 = vmatprep.subr.bf16.mxu0 0
        %3931 = vmatpush2.bf16.msra.mxu0 0
        %3932 = vmatprep.subr.bf16.mxu0 0
        %3933 = vmatpush2.bf16.msra.mxu0 0
        %3934 = vmatprep.subr.bf16.mxu0 0
        %3935 = vmatpush2.bf16.msra.mxu0 0
        %3936 = vmatprep.subr.bf16.mxu0 0
        %3937 = vmatpush2.bf16.msra.mxu0 0
        %3938 = vmatprep.subr.bf16.mxu0 0
        %3939 = vmatpush2.bf16.msra.mxu0 0
        %3940 = vmatprep.subr.bf16.mxu0 0
        %3941 = vmatpush2.bf16.msra.mxu0 0
        %3942 = vmatprep.subr.bf16.mxu0 0
        %3943 = vmatpush2.bf16.msra.mxu0 0
        %3944 = vmatprep.subr.bf16.mxu0 0
        %3945 = vmatpush2.bf16.msra.mxu0 0
        %3946 = vmatprep.mubr.bf16.mxu0 0
        %3947 = vmatmul.mubr.bf16.gmra.mxu0 %v3765
        %v3948 = vpop.f32.mrf.mxu0
        %v3949 = vadd.f32 %v3912, %v3948
        %v3950 = vpop.f32.mrf.mxu0
        %v3951 = vpop.f32.mrf.mxu0
        %v3952 = vpop.f32.mrf.mxu0
        %3953 = vdwg.mxu0
        %v3954 = vpack.c.bf16 %v2815, %v2815
        %3955 = vrot.lane.b32.xlu0 %v2870, 96
        %v3956 = vpop.permute.xlu0 %3955
        %3957 = vrot.lane.b32.xlu0 %v2871, 96
        %v3958 = vpop.permute.xlu0 %3957
        %3961 = vrot.lane.b32.xlu0 %v2845, 96
        %v3962 = vpop.permute.xlu0 %3961
        %v3965 = vsel %vm644, %v3954, 0
        %3967 = vmatprep.subr.bf16.mxu0 0
        %3968 = vmatpush1.bf16.msra.mxu0 0
        %3969 = vmatprep.subr.bf16.mxu0 0
        %3970 = vmatpush1.bf16.msra.mxu0 0
        %3971 = vmatprep.subr.bf16.mxu0 0
        %3972 = vmatpush1.bf16.msra.mxu0 0
        %3973 = vmatprep.subr.bf16.mxu0 0
        %3974 = vmatpush1.bf16.msra.mxu0 0
        %3975 = vmatprep.subr.bf16.mxu0 0
        %3976 = vmatpush1.bf16.msra.mxu0 0
        %3977 = vmatprep.subr.bf16.mxu0 0
        %3978 = vmatpush1.bf16.msra.mxu0 0
        %3979 = vmatprep.subr.bf16.mxu0 0
        %3980 = vmatpush1.bf16.msra.mxu0 %v3958
        %3981 = vmatprep.subr.bf16.mxu0 0
        %3982 = vmatpush1.bf16.msra.mxu0 %v3956
        %3983 = vmatprep.subr.bf16.mxu0 0
        %3984 = vmatpush2.bf16.msra.mxu0 0
        %3985 = vmatprep.subr.bf16.mxu0 0
        %3986 = vmatpush2.bf16.msra.mxu0 0
        %3987 = vmatprep.subr.bf16.mxu0 0
        %3988 = vmatpush2.bf16.msra.mxu0 0
        %3989 = vmatprep.subr.bf16.mxu0 0
        %3990 = vmatpush2.bf16.msra.mxu0 0
        %3991 = vmatprep.subr.bf16.mxu0 0
        %3992 = vmatpush2.bf16.msra.mxu0 0
        %3993 = vmatprep.subr.bf16.mxu0 0
        %3994 = vmatpush2.bf16.msra.mxu0 0
        %3995 = vmatprep.subr.bf16.mxu0 0
        %3996 = vmatpush2.bf16.msra.mxu0 0
        %3997 = vmatprep.subr.bf16.mxu0 0
        %3998 = vmatpush2.bf16.msra.mxu0 0
        %3999 = vmatprep.mubr.bf16.mxu0 0
        %4000 = vmatmul.mubr.bf16.gmra.mxu0 %v3965
        %v4001 = vpop.f32.mrf.mxu0
        %v4002 = vadd.f32 %v3962, %v4001
        %v4003 = vpop.f32.mrf.mxu0
        %v4004 = vpop.f32.mrf.mxu0
        %v4005 = vpop.f32.mrf.mxu0
        %4006 = vdwg.mxu0
        %4007 = vrot.lane.b32.xlu0 %v2925, 96
        %v4008 = vpop.permute.xlu0 %4007
        %4009 = vrot.lane.b32.xlu0 %v2926, 96
        %v4010 = vpop.permute.xlu0 %4009
        %4013 = vrot.lane.b32.xlu0 %v2849, 96
        %v4014 = vpop.permute.xlu0 %4013
        %4016 = vmatprep.subr.bf16.mxu0 0
        %4017 = vmatpush1.bf16.msra.mxu0 0
        %4018 = vmatprep.subr.bf16.mxu0 0
        %4019 = vmatpush1.bf16.msra.mxu0 0
        %4020 = vmatprep.subr.bf16.mxu0 0
        %4021 = vmatpush1.bf16.msra.mxu0 0
        %4022 = vmatprep.subr.bf16.mxu0 0
        %4023 = vmatpush1.bf16.msra.mxu0 0
        %4024 = vmatprep.subr.bf16.mxu0 0
        %4025 = vmatpush1.bf16.msra.mxu0 0
        %4026 = vmatprep.subr.bf16.mxu0 0
        %4027 = vmatpush1.bf16.msra.mxu0 0
        %4028 = vmatprep.subr.bf16.mxu0 0
        %4029 = vmatpush1.bf16.msra.mxu0 %v4010
        %4030 = vmatprep.subr.bf16.mxu0 0
        %4031 = vmatpush1.bf16.msra.mxu0 %v4008
        %4032 = vmatprep.subr.bf16.mxu0 0
        %4033 = vmatpush2.bf16.msra.mxu0 0
        %4034 = vmatprep.subr.bf16.mxu0 0
        %4035 = vmatpush2.bf16.msra.mxu0 0
        %4036 = vmatprep.subr.bf16.mxu0 0
        %4037 = vmatpush2.bf16.msra.mxu0 0
        %4038 = vmatprep.subr.bf16.mxu0 0
        %4039 = vmatpush2.bf16.msra.mxu0 0
        %4040 = vmatprep.subr.bf16.mxu0 0
        %4041 = vmatpush2.bf16.msra.mxu0 0
        %4042 = vmatprep.subr.bf16.mxu0 0
        %4043 = vmatpush2.bf16.msra.mxu0 0
        %4044 = vmatprep.subr.bf16.mxu0 0
        %4045 = vmatpush2.bf16.msra.mxu0 0
        %4046 = vmatprep.subr.bf16.mxu0 0
        %4047 = vmatpush2.bf16.msra.mxu0 0
        %4048 = vmatprep.mubr.bf16.mxu0 0
        %4049 = vmatmul.mubr.bf16.gmra.mxu0 %v3965
        %v4050 = vpop.f32.mrf.mxu0
        %v4051 = vadd.f32 %v4014, %v4050
        %v4052 = vpop.f32.mrf.mxu0
        %v4053 = vpop.f32.mrf.mxu0
        %v4054 = vpop.f32.mrf.mxu0
        %4055 = vdwg.mxu0
        %4056 = vrot.lane.b32.xlu0 %v2977, 96
        %v4057 = vpop.permute.xlu0 %4056
        %4058 = vrot.lane.b32.xlu0 %v2978, 96
        %v4059 = vpop.permute.xlu0 %4058
        %4062 = vrot.lane.b32.xlu0 %v2853, 96
        %v4063 = vpop.permute.xlu0 %4062
        %4065 = vmatprep.subr.bf16.mxu0 0
        %4066 = vmatpush1.bf16.msra.mxu0 0
        %4067 = vmatprep.subr.bf16.mxu0 0
        %4068 = vmatpush1.bf16.msra.mxu0 0
        %4069 = vmatprep.subr.bf16.mxu0 0
        %4070 = vmatpush1.bf16.msra.mxu0 0
        %4071 = vmatprep.subr.bf16.mxu0 0
        %4072 = vmatpush1.bf16.msra.mxu0 0
        %4073 = vmatprep.subr.bf16.mxu0 0
        %4074 = vmatpush1.bf16.msra.mxu0 0
        %4075 = vmatprep.subr.bf16.mxu0 0
        %4076 = vmatpush1.bf16.msra.mxu0 0
        %4077 = vmatprep.subr.bf16.mxu0 0
        %4078 = vmatpush1.bf16.msra.mxu0 %v4059
        %4079 = vmatprep.subr.bf16.mxu0 0
        %4080 = vmatpush1.bf16.msra.mxu0 %v4057
        %4081 = vmatprep.subr.bf16.mxu0 0
        %4082 = vmatpush2.bf16.msra.mxu0 0
        %4083 = vmatprep.subr.bf16.mxu0 0
        %4084 = vmatpush2.bf16.msra.mxu0 0
        %4085 = vmatprep.subr.bf16.mxu0 0
        %4086 = vmatpush2.bf16.msra.mxu0 0
        %4087 = vmatprep.subr.bf16.mxu0 0
        %4088 = vmatpush2.bf16.msra.mxu0 0
        %4089 = vmatprep.subr.bf16.mxu0 0
        %4090 = vmatpush2.bf16.msra.mxu0 0
        %4091 = vmatprep.subr.bf16.mxu0 0
        %4092 = vmatpush2.bf16.msra.mxu0 0
        %4093 = vmatprep.subr.bf16.mxu0 0
        %4094 = vmatpush2.bf16.msra.mxu0 0
        %4095 = vmatprep.subr.bf16.mxu0 0
        %4096 = vmatpush2.bf16.msra.mxu0 0
        %4097 = vmatprep.mubr.bf16.mxu0 0
        %4098 = vmatmul.mubr.bf16.gmra.mxu0 %v3965
        %v4099 = vpop.f32.mrf.mxu0
        %v4100 = vadd.f32 %v4063, %v4099
        %v4101 = vpop.f32.mrf.mxu0
        %v4102 = vpop.f32.mrf.mxu0
        %v4103 = vpop.f32.mrf.mxu0
        %4104 = vdwg.mxu0
        %4105 = vrot.lane.b32.xlu0 %v3029, 96
        %v4106 = vpop.permute.xlu0 %4105
        %4107 = vrot.lane.b32.xlu0 %v3030, 96
        %v4108 = vpop.permute.xlu0 %4107
        %4111 = vrot.lane.b32.xlu0 %v2857, 96
        %v4112 = vpop.permute.xlu0 %4111
        %4114 = vmatprep.subr.bf16.mxu0 0
        %4115 = vmatpush1.bf16.msra.mxu0 0
        %4116 = vmatprep.subr.bf16.mxu0 0
        %4117 = vmatpush1.bf16.msra.mxu0 0
        %4118 = vmatprep.subr.bf16.mxu0 0
        %4119 = vmatpush1.bf16.msra.mxu0 0
        %4120 = vmatprep.subr.bf16.mxu0 0
        %4121 = vmatpush1.bf16.msra.mxu0 0
        %4122 = vmatprep.subr.bf16.mxu0 0
        %4123 = vmatpush1.bf16.msra.mxu0 0
        %4124 = vmatprep.subr.bf16.mxu0 0
        %4125 = vmatpush1.bf16.msra.mxu0 0
        %4126 = vmatprep.subr.bf16.mxu0 0
        %4127 = vmatpush1.bf16.msra.mxu0 %v4108
        %4128 = vmatprep.subr.bf16.mxu0 0
        %4129 = vmatpush1.bf16.msra.mxu0 %v4106
        %4130 = vmatprep.subr.bf16.mxu0 0
        %4131 = vmatpush2.bf16.msra.mxu0 0
        %4132 = vmatprep.subr.bf16.mxu0 0
        %4133 = vmatpush2.bf16.msra.mxu0 0
        %4134 = vmatprep.subr.bf16.mxu0 0
        %4135 = vmatpush2.bf16.msra.mxu0 0
        %4136 = vmatprep.subr.bf16.mxu0 0
        %4137 = vmatpush2.bf16.msra.mxu0 0
        %4138 = vmatprep.subr.bf16.mxu0 0
        %4139 = vmatpush2.bf16.msra.mxu0 0
        %4140 = vmatprep.subr.bf16.mxu0 0
        %4141 = vmatpush2.bf16.msra.mxu0 0
        %4142 = vmatprep.subr.bf16.mxu0 0
        %4143 = vmatpush2.bf16.msra.mxu0 0
        %4144 = vmatprep.subr.bf16.mxu0 0
        %4145 = vmatpush2.bf16.msra.mxu0 0
        %4146 = vmatprep.mubr.bf16.mxu0 0
        %4147 = vmatmul.mubr.bf16.gmra.mxu0 %v3965
        %v4148 = vpop.f32.mrf.mxu0
        %v4149 = vadd.f32 %v4112, %v4148
        %v4150 = vpop.f32.mrf.mxu0
        %v4151 = vpop.f32.mrf.mxu0
        %v4152 = vpop.f32.mrf.mxu0
        %4153 = vdwg.mxu0
        %v4154 = vld [vmem:[%s13] sm:$0xf]
        %v4155 = vld [vmem:[%s13 + $0x4] sm:$0xf]
        %v4156 = vld [vmem:[%s13 + $0x8] sm:$0xf]
        %v4157 = vld [vmem:[%s13 + $0xc] sm:$0xf]
        %v4158 = vld [vmem:[%s16 + $0x3] sm:$0x1]
        %v4159 = vpack.c.bf16 %v3802, %v3802
        %v4160 = vpack.c.bf16 %v3851, %v3851
        %v4161 = vpack.c.bf16 %v3900, %v3900
        %v4162 = vpack.c.bf16 %v3949, %v3949
        %v4163 = vpack.c.bf16 %v4002, %v4002
        %v4164 = vpack.c.bf16 %v4051, %v4051
        %v4165 = vpack.c.bf16 %v4100, %v4100
        %v4166 = vpack.c.bf16 %v4149, %v4149
        %v4168 = vsel %vm856, %v4159, 0
        %v4171 = vsel %vm856, %v4163, 0
        %4173 = vmatprep.subr.bf16.mxu0 0
        %4174 = vmatpush1.bf16.xpose.msra.mxu0 0
        %4175 = vmatprep.subr.bf16.mxu0 0
        %4176 = vmatpush1.bf16.xpose.msra.mxu0 0
        %4177 = vmatprep.subr.bf16.mxu0 0
        %4178 = vmatpush1.bf16.xpose.msra.mxu0 0
        %4179 = vmatprep.subr.bf16.mxu0 0
        %4180 = vmatpush1.bf16.xpose.msra.mxu0 0
        %4181 = vmatprep.subr.bf16.mxu0 0
        %4182 = vmatpush1.bf16.xpose.msra.mxu0 0
        %4183 = vmatprep.subr.bf16.mxu0 0
        %4184 = vmatpush1.bf16.xpose.msra.mxu0 0
        %4185 = vmatprep.subr.bf16.mxu0 0
        %4186 = vmatpush1.bf16.xpose.msra.mxu0 0
        %4187 = vmatprep.subr.bf16.mxu0 0
        %4188 = vmatpush1.bf16.xpose.msra.mxu0 %v4171
        %4189 = vmatprep.subr.bf16.mxu0 0
        %4190 = vmatpush2.bf16.xpose.msra.mxu0 0
        %4191 = vmatprep.subr.bf16.mxu0 0
        %4192 = vmatpush2.bf16.xpose.msra.mxu0 0
        %4193 = vmatprep.subr.bf16.mxu0 0
        %4194 = vmatpush2.bf16.xpose.msra.mxu0 0
        %4195 = vmatprep.subr.bf16.mxu0 0
        %4196 = vmatpush2.bf16.xpose.msra.mxu0 0
        %4197 = vmatprep.subr.bf16.mxu0 0
        %4198 = vmatpush2.bf16.xpose.msra.mxu0 0
        %4199 = vmatprep.subr.bf16.mxu0 0
        %4200 = vmatpush2.bf16.xpose.msra.mxu0 0
        %4201 = vmatprep.subr.bf16.mxu0 0
        %4202 = vmatpush2.bf16.xpose.msra.mxu0 0
        %4203 = vmatprep.subr.bf16.mxu0 0
        %4204 = vmatpush2.bf16.xpose.msra.mxu0 0
        %4205 = vmatprep.mubr.bf16.mxu0 0
        %4206 = vmatmul.mubr.bf16.gmra.mxu0 %v4168
        %v4207 = vpop.f32.mrf.mxu0
        %v4208 = vadd.f32 0.0, %v4207
        %v4209 = vpop.f32.mrf.mxu0
        %v4210 = vpop.f32.mrf.mxu0
        %v4211 = vpop.f32.mrf.mxu0
        %4212 = vdwg.mxu0
        %v4214 = vsel %vm856, %v4160, 0
        %v4217 = vsel %vm856, %v4164, 0
        %4219 = vmatprep.subr.bf16.mxu0 0
        %4220 = vmatpush1.bf16.xpose.msra.mxu0 0
        %4221 = vmatprep.subr.bf16.mxu0 0
        %4222 = vmatpush1.bf16.xpose.msra.mxu0 0
        %4223 = vmatprep.subr.bf16.mxu0 0
        %4224 = vmatpush1.bf16.xpose.msra.mxu0 0
        %4225 = vmatprep.subr.bf16.mxu0 0
        %4226 = vmatpush1.bf16.xpose.msra.mxu0 0
        %4227 = vmatprep.subr.bf16.mxu0 0
        %4228 = vmatpush1.bf16.xpose.msra.mxu0 0
        %4229 = vmatprep.subr.bf16.mxu0 0
        %4230 = vmatpush1.bf16.xpose.msra.mxu0 0
        %4231 = vmatprep.subr.bf16.mxu0 0
        %4232 = vmatpush1.bf16.xpose.msra.mxu0 0
        %4233 = vmatprep.subr.bf16.mxu0 0
        %4234 = vmatpush1.bf16.xpose.msra.mxu0 %v4217
        %4235 = vmatprep.subr.bf16.mxu0 0
        %4236 = vmatpush2.bf16.xpose.msra.mxu0 0
        %4237 = vmatprep.subr.bf16.mxu0 0
        %4238 = vmatpush2.bf16.xpose.msra.mxu0 0
        %4239 = vmatprep.subr.bf16.mxu0 0
        %4240 = vmatpush2.bf16.xpose.msra.mxu0 0
        %4241 = vmatprep.subr.bf16.mxu0 0
        %4242 = vmatpush2.bf16.xpose.msra.mxu0 0
        %4243 = vmatprep.subr.bf16.mxu0 0
        %4244 = vmatpush2.bf16.xpose.msra.mxu0 0
        %4245 = vmatprep.subr.bf16.mxu0 0
        %4246 = vmatpush2.bf16.xpose.msra.mxu0 0
        %4247 = vmatprep.subr.bf16.mxu0 0
        %4248 = vmatpush2.bf16.xpose.msra.mxu0 0
        %4249 = vmatprep.subr.bf16.mxu0 0
        %4250 = vmatpush2.bf16.xpose.msra.mxu0 0
        %4251 = vmatprep.mubr.bf16.mxu0 0
        %4252 = vmatmul.mubr.bf16.gmra.mxu0 %v4214
        %v4253 = vpop.f32.mrf.mxu0
        %v4254 = vadd.f32 0.0, %v4253
        %v4255 = vpop.f32.mrf.mxu0
        %v4256 = vpop.f32.mrf.mxu0
        %v4257 = vpop.f32.mrf.mxu0
        %4258 = vdwg.mxu0
        %v4260 = vsel %vm856, %v4161, 0
        %v4263 = vsel %vm856, %v4165, 0
        %4265 = vmatprep.subr.bf16.mxu0 0
        %4266 = vmatpush1.bf16.xpose.msra.mxu0 0
        %4267 = vmatprep.subr.bf16.mxu0 0
        %4268 = vmatpush1.bf16.xpose.msra.mxu0 0
        %4269 = vmatprep.subr.bf16.mxu0 0
        %4270 = vmatpush1.bf16.xpose.msra.mxu0 0
        %4271 = vmatprep.subr.bf16.mxu0 0
        %4272 = vmatpush1.bf16.xpose.msra.mxu0 0
        %4273 = vmatprep.subr.bf16.mxu0 0
        %4274 = vmatpush1.bf16.xpose.msra.mxu0 0
        %4275 = vmatprep.subr.bf16.mxu0 0
        %4276 = vmatpush1.bf16.xpose.msra.mxu0 0
        %4277 = vmatprep.subr.bf16.mxu0 0
        %4278 = vmatpush1.bf16.xpose.msra.mxu0 0
        %4279 = vmatprep.subr.bf16.mxu0 0
        %4280 = vmatpush1.bf16.xpose.msra.mxu0 %v4263
        %4281 = vmatprep.subr.bf16.mxu0 0
        %4282 = vmatpush2.bf16.xpose.msra.mxu0 0
        %4283 = vmatprep.subr.bf16.mxu0 0
        %4284 = vmatpush2.bf16.xpose.msra.mxu0 0
        %4285 = vmatprep.subr.bf16.mxu0 0
        %4286 = vmatpush2.bf16.xpose.msra.mxu0 0
        %4287 = vmatprep.subr.bf16.mxu0 0
        %4288 = vmatpush2.bf16.xpose.msra.mxu0 0
        %4289 = vmatprep.subr.bf16.mxu0 0
        %4290 = vmatpush2.bf16.xpose.msra.mxu0 0
        %4291 = vmatprep.subr.bf16.mxu0 0
        %4292 = vmatpush2.bf16.xpose.msra.mxu0 0
        %4293 = vmatprep.subr.bf16.mxu0 0
        %4294 = vmatpush2.bf16.xpose.msra.mxu0 0
        %4295 = vmatprep.subr.bf16.mxu0 0
        %4296 = vmatpush2.bf16.xpose.msra.mxu0 0
        %4297 = vmatprep.mubr.bf16.mxu0 0
        %4298 = vmatmul.mubr.bf16.gmra.mxu0 %v4260
        %v4299 = vpop.f32.mrf.mxu0
        %v4300 = vadd.f32 0.0, %v4299
        %v4301 = vpop.f32.mrf.mxu0
        %v4302 = vpop.f32.mrf.mxu0
        %v4303 = vpop.f32.mrf.mxu0
        %4304 = vdwg.mxu0
        %v4306 = vsel %vm856, %v4162, 0
        %v4309 = vsel %vm856, %v4166, 0
        %4311 = vmatprep.subr.bf16.mxu0 0
        %4312 = vmatpush1.bf16.xpose.msra.mxu0 0
        %4313 = vmatprep.subr.bf16.mxu0 0
        %4314 = vmatpush1.bf16.xpose.msra.mxu0 0
        %4315 = vmatprep.subr.bf16.mxu0 0
        %4316 = vmatpush1.bf16.xpose.msra.mxu0 0
        %4317 = vmatprep.subr.bf16.mxu0 0
        %4318 = vmatpush1.bf16.xpose.msra.mxu0 0
        %4319 = vmatprep.subr.bf16.mxu0 0
        %4320 = vmatpush1.bf16.xpose.msra.mxu0 0
        %4321 = vmatprep.subr.bf16.mxu0 0
        %4322 = vmatpush1.bf16.xpose.msra.mxu0 0
        %4323 = vmatprep.subr.bf16.mxu0 0
        %4324 = vmatpush1.bf16.xpose.msra.mxu0 0
        %4325 = vmatprep.subr.bf16.mxu0 0
        %4326 = vmatpush1.bf16.xpose.msra.mxu0 %v4309
        %4327 = vmatprep.subr.bf16.mxu0 0
        %4328 = vmatpush2.bf16.xpose.msra.mxu0 0
        %4329 = vmatprep.subr.bf16.mxu0 0
        %4330 = vmatpush2.bf16.xpose.msra.mxu0 0
        %4331 = vmatprep.subr.bf16.mxu0 0
        %4332 = vmatpush2.bf16.xpose.msra.mxu0 0
        %4333 = vmatprep.subr.bf16.mxu0 0
        %4334 = vmatpush2.bf16.xpose.msra.mxu0 0
        %4335 = vmatprep.subr.bf16.mxu0 0
        %4336 = vmatpush2.bf16.xpose.msra.mxu0 0
        %4337 = vmatprep.subr.bf16.mxu0 0
        %4338 = vmatpush2.bf16.xpose.msra.mxu0 0
        %4339 = vmatprep.subr.bf16.mxu0 0
        %4340 = vmatpush2.bf16.xpose.msra.mxu0 0
        %4341 = vmatprep.subr.bf16.mxu0 0
        %4342 = vmatpush2.bf16.xpose.msra.mxu0 0
        %4343 = vmatprep.mubr.bf16.mxu0 0
        %4344 = vmatmul.mubr.bf16.gmra.mxu0 %v4306
        %v4345 = vpop.f32.mrf.mxu0
        %v4346 = vadd.f32 0.0, %v4345
        %v4347 = vpop.f32.mrf.mxu0
        %v4348 = vpop.f32.mrf.mxu0
        %v4349 = vpop.f32.mrf.mxu0
        %4350 = vdwg.mxu0
        %v4351 = vmul.f32 %v4208, 0.35355338
        %v4352 = vmul.f32 %v4254, 0.35355338
        %v4353 = vmul.f32 %v4300, 0.35355338
        %v4354 = vmul.f32 %v4346, 0.35355338
        %v4355 = vsel %vm1055, %v4351, -1e+10
        %v4356 = vsel %vm1055, %v4352, -1e+10
        %v4357 = vsel %vm1055, %v4353, -1e+10
        %v4358 = vsel %vm1055, %v4354, -1e+10
        %v4359 = vsel %vm856, %v4355, -inf
        %4360 = vmax.xlane.f32.xlu0 %v4359
        %v4361 = vpop.xlane.xlu0 %4360
        %v4362 = vsel %vm856, %v4356, -inf
        %4363 = vmax.xlane.f32.xlu0 %v4362
        %v4364 = vpop.xlane.xlu0 %4363
        %v4365 = vsel %vm856, %v4357, -inf
        %4366 = vmax.xlane.f32.xlu0 %v4365
        %v4367 = vpop.xlane.xlu0 %4366
        %v4368 = vsel %vm856, %v4358, -inf
        %4369 = vmax.xlane.f32.xlu0 %v4368
        %v4370 = vpop.xlane.xlu0 %4369
        %v4371 = vsub.f32 %v4355, %v4361
        %v4372 = vsub.f32 %v4356, %v4364
        %v4373 = vsub.f32 %v4357, %v4367
        %v4374 = vsub.f32 %v4358, %v4370
        %v4375 = vmul.f32 %v4371, 1.442695
        %v4376 = vpow.pop %v4375
        %v4377 = vmul.f32 %v4372, 1.442695
        %v4378 = vpow.pop %v4377
        %v4379 = vmul.f32 %v4373, 1.442695
        %v4380 = vpow.pop %v4379
        %v4381 = vmul.f32 %v4374, 1.442695
        %v4382 = vpow.pop %v4381
        %v4383 = vsel %vm856, %v4376, 0.0
        %4384 = vadd.xlane.f32.xlu0 %v4383
        %v4385 = vpop.xlane.xlu0 %4384
        %v4386 = vsel %vm856, %v4378, 0.0
        %4387 = vadd.xlane.f32.xlu0 %v4386
        %v4388 = vpop.xlane.xlu0 %4387
        %v4389 = vsel %vm856, %v4380, 0.0
        %4390 = vadd.xlane.f32.xlu0 %v4389
        %v4391 = vpop.xlane.xlu0 %4390
        %v4392 = vsel %vm856, %v4382, 0.0
        %4393 = vadd.xlane.f32.xlu0 %v4392
        %v4394 = vpop.xlane.xlu0 %4393
        %v4395 = vrcp.pop %v4385
        %v4396 = vmul.f32 %v4376, %v4395
        %v4397 = vrcp.pop %v4388
        %v4398 = vmul.f32 %v4378, %v4397
        %v4399 = vrcp.pop %v4391
        %v4400 = vmul.f32 %v4380, %v4399
        %v4401 = vrcp.pop %v4394
        %v4402 = vmul.f32 %v4382, %v4401
        %v4403 = vpack.c.bf16 %v4396, %v4396
        %v4404 = vpack.c.bf16 %v4398, %v4398
        %v4405 = vpack.c.bf16 %v4400, %v4400
        %v4406 = vpack.c.bf16 %v4402, %v4402
        %4408 = vrot.lane.b32.xlu0 %v4163, 120
        %v4409 = vpop.permute.xlu0 %4408
        %v4411 = vsel %vm856, %v4403, 0
        %v4414 = vsel %vm1113, %v4409, 0
        %4416 = vmatprep.subr.bf16.mxu0 0
        %4417 = vmatpush1.bf16.msra.mxu0 0
        %4418 = vmatprep.subr.bf16.mxu0 0
        %4419 = vmatpush1.bf16.msra.mxu0 0
        %4420 = vmatprep.subr.bf16.mxu0 0
        %4421 = vmatpush1.bf16.msra.mxu0 0
        %4422 = vmatprep.subr.bf16.mxu0 0
        %4423 = vmatpush1.bf16.msra.mxu0 0
        %4424 = vmatprep.subr.bf16.mxu0 0
        %4425 = vmatpush1.bf16.msra.mxu0 0
        %4426 = vmatprep.subr.bf16.mxu0 0
        %4427 = vmatpush1.bf16.msra.mxu0 0
        %4428 = vmatprep.subr.bf16.mxu0 0
        %4429 = vmatpush1.bf16.msra.mxu0 0
        %4430 = vmatprep.subr.bf16.mxu0 0
        %4431 = vmatpush1.bf16.msra.mxu0 %v4414
        %4432 = vmatprep.subr.bf16.mxu0 0
        %4433 = vmatpush2.bf16.msra.mxu0 0
        %4434 = vmatprep.subr.bf16.mxu0 0
        %4435 = vmatpush2.bf16.msra.mxu0 0
        %4436 = vmatprep.subr.bf16.mxu0 0
        %4437 = vmatpush2.bf16.msra.mxu0 0
        %4438 = vmatprep.subr.bf16.mxu0 0
        %4439 = vmatpush2.bf16.msra.mxu0 0
        %4440 = vmatprep.subr.bf16.mxu0 0
        %4441 = vmatpush2.bf16.msra.mxu0 0
        %4442 = vmatprep.subr.bf16.mxu0 0
        %4443 = vmatpush2.bf16.msra.mxu0 0
        %4444 = vmatprep.subr.bf16.mxu0 0
        %4445 = vmatpush2.bf16.msra.mxu0 0
        %4446 = vmatprep.subr.bf16.mxu0 0
        %4447 = vmatpush2.bf16.msra.mxu0 0
        %4448 = vmatprep.mubr.bf16.mxu0 0
        %4449 = vmatmul.mubr.bf16.gmra.mxu0 %v4411
        %v4450 = vpop.f32.mrf.mxu0
        %v4451 = vadd.f32 0.0, %v4450
        %v4452 = vpop.f32.mrf.mxu0
        %v4453 = vpop.f32.mrf.mxu0
        %v4454 = vpop.f32.mrf.mxu0
        %4455 = vdwg.mxu0
        %4457 = vrot.lane.b32.xlu0 %v4164, 120
        %v4458 = vpop.permute.xlu0 %4457
        %v4460 = vsel %vm856, %v4404, 0
        %v4463 = vsel %vm1113, %v4458, 0
        %4465 = vmatprep.subr.bf16.mxu0 0
        %4466 = vmatpush1.bf16.msra.mxu0 0
        %4467 = vmatprep.subr.bf16.mxu0 0
        %4468 = vmatpush1.bf16.msra.mxu0 0
        %4469 = vmatprep.subr.bf16.mxu0 0
        %4470 = vmatpush1.bf16.msra.mxu0 0
        %4471 = vmatprep.subr.bf16.mxu0 0
        %4472 = vmatpush1.bf16.msra.mxu0 0
        %4473 = vmatprep.subr.bf16.mxu0 0
        %4474 = vmatpush1.bf16.msra.mxu0 0
        %4475 = vmatprep.subr.bf16.mxu0 0
        %4476 = vmatpush1.bf16.msra.mxu0 0
        %4477 = vmatprep.subr.bf16.mxu0 0
        %4478 = vmatpush1.bf16.msra.mxu0 0
        %4479 = vmatprep.subr.bf16.mxu0 0
        %4480 = vmatpush1.bf16.msra.mxu0 %v4463
        %4481 = vmatprep.subr.bf16.mxu0 0
        %4482 = vmatpush2.bf16.msra.mxu0 0
        %4483 = vmatprep.subr.bf16.mxu0 0
        %4484 = vmatpush2.bf16.msra.mxu0 0
        %4485 = vmatprep.subr.bf16.mxu0 0
        %4486 = vmatpush2.bf16.msra.mxu0 0
        %4487 = vmatprep.subr.bf16.mxu0 0
        %4488 = vmatpush2.bf16.msra.mxu0 0
        %4489 = vmatprep.subr.bf16.mxu0 0
        %4490 = vmatpush2.bf16.msra.mxu0 0
        %4491 = vmatprep.subr.bf16.mxu0 0
        %4492 = vmatpush2.bf16.msra.mxu0 0
        %4493 = vmatprep.subr.bf16.mxu0 0
        %4494 = vmatpush2.bf16.msra.mxu0 0
        %4495 = vmatprep.subr.bf16.mxu0 0
        %4496 = vmatpush2.bf16.msra.mxu0 0
        %4497 = vmatprep.mubr.bf16.mxu0 0
        %4498 = vmatmul.mubr.bf16.gmra.mxu0 %v4460
        %v4499 = vpop.f32.mrf.mxu0
        %v4500 = vadd.f32 0.0, %v4499
        %v4501 = vpop.f32.mrf.mxu0
        %v4502 = vpop.f32.mrf.mxu0
        %v4503 = vpop.f32.mrf.mxu0
        %4504 = vdwg.mxu0
        %4506 = vrot.lane.b32.xlu0 %v4165, 120
        %v4507 = vpop.permute.xlu0 %4506
        %v4509 = vsel %vm856, %v4405, 0
        %v4512 = vsel %vm1113, %v4507, 0
        %4514 = vmatprep.subr.bf16.mxu0 0
        %4515 = vmatpush1.bf16.msra.mxu0 0
        %4516 = vmatprep.subr.bf16.mxu0 0
        %4517 = vmatpush1.bf16.msra.mxu0 0
        %4518 = vmatprep.subr.bf16.mxu0 0
        %4519 = vmatpush1.bf16.msra.mxu0 0
        %4520 = vmatprep.subr.bf16.mxu0 0
        %4521 = vmatpush1.bf16.msra.mxu0 0
        %4522 = vmatprep.subr.bf16.mxu0 0
        %4523 = vmatpush1.bf16.msra.mxu0 0
        %4524 = vmatprep.subr.bf16.mxu0 0
        %4525 = vmatpush1.bf16.msra.mxu0 0
        %4526 = vmatprep.subr.bf16.mxu0 0
        %4527 = vmatpush1.bf16.msra.mxu0 0
        %4528 = vmatprep.subr.bf16.mxu0 0
        %4529 = vmatpush1.bf16.msra.mxu0 %v4512
        %4530 = vmatprep.subr.bf16.mxu0 0
        %4531 = vmatpush2.bf16.msra.mxu0 0
        %4532 = vmatprep.subr.bf16.mxu0 0
        %4533 = vmatpush2.bf16.msra.mxu0 0
        %4534 = vmatprep.subr.bf16.mxu0 0
        %4535 = vmatpush2.bf16.msra.mxu0 0
        %4536 = vmatprep.subr.bf16.mxu0 0
        %4537 = vmatpush2.bf16.msra.mxu0 0
        %4538 = vmatprep.subr.bf16.mxu0 0
        %4539 = vmatpush2.bf16.msra.mxu0 0
        %4540 = vmatprep.subr.bf16.mxu0 0
        %4541 = vmatpush2.bf16.msra.mxu0 0
        %4542 = vmatprep.subr.bf16.mxu0 0
        %4543 = vmatpush2.bf16.msra.mxu0 0
        %4544 = vmatprep.subr.bf16.mxu0 0
        %4545 = vmatpush2.bf16.msra.mxu0 0
        %4546 = vmatprep.mubr.bf16.mxu0 0
        %4547 = vmatmul.mubr.bf16.gmra.mxu0 %v4509
        %v4548 = vpop.f32.mrf.mxu0
        %v4549 = vadd.f32 0.0, %v4548
        %v4550 = vpop.f32.mrf.mxu0
        %v4551 = vpop.f32.mrf.mxu0
        %v4552 = vpop.f32.mrf.mxu0
        %4553 = vdwg.mxu0
        %4555 = vrot.lane.b32.xlu0 %v4166, 120
        %v4556 = vpop.permute.xlu0 %4555
        %v4558 = vsel %vm856, %v4406, 0
        %v4561 = vsel %vm1113, %v4556, 0
        %4563 = vmatprep.subr.bf16.mxu0 0
        %4564 = vmatpush1.bf16.msra.mxu0 0
        %4565 = vmatprep.subr.bf16.mxu0 0
        %4566 = vmatpush1.bf16.msra.mxu0 0
        %4567 = vmatprep.subr.bf16.mxu0 0
        %4568 = vmatpush1.bf16.msra.mxu0 0
        %4569 = vmatprep.subr.bf16.mxu0 0
        %4570 = vmatpush1.bf16.msra.mxu0 0
        %4571 = vmatprep.subr.bf16.mxu0 0
        %4572 = vmatpush1.bf16.msra.mxu0 0
        %4573 = vmatprep.subr.bf16.mxu0 0
        %4574 = vmatpush1.bf16.msra.mxu0 0
        %4575 = vmatprep.subr.bf16.mxu0 0
        %4576 = vmatpush1.bf16.msra.mxu0 0
        %4577 = vmatprep.subr.bf16.mxu0 0
        %4578 = vmatpush1.bf16.msra.mxu0 %v4561
        %4579 = vmatprep.subr.bf16.mxu0 0
        %4580 = vmatpush2.bf16.msra.mxu0 0
        %4581 = vmatprep.subr.bf16.mxu0 0
        %4582 = vmatpush2.bf16.msra.mxu0 0
        %4583 = vmatprep.subr.bf16.mxu0 0
        %4584 = vmatpush2.bf16.msra.mxu0 0
        %4585 = vmatprep.subr.bf16.mxu0 0
        %4586 = vmatpush2.bf16.msra.mxu0 0
        %4587 = vmatprep.subr.bf16.mxu0 0
        %4588 = vmatpush2.bf16.msra.mxu0 0
        %4589 = vmatprep.subr.bf16.mxu0 0
        %4590 = vmatpush2.bf16.msra.mxu0 0
        %4591 = vmatprep.subr.bf16.mxu0 0
        %4592 = vmatpush2.bf16.msra.mxu0 0
        %4593 = vmatprep.subr.bf16.mxu0 0
        %4594 = vmatpush2.bf16.msra.mxu0 0
        %4595 = vmatprep.mubr.bf16.mxu0 0
        %4596 = vmatmul.mubr.bf16.gmra.mxu0 %v4558
        %v4597 = vpop.f32.mrf.mxu0
        %v4598 = vadd.f32 0.0, %v4597
        %v4599 = vpop.f32.mrf.mxu0
        %v4600 = vpop.f32.mrf.mxu0
        %v4601 = vpop.f32.mrf.mxu0
        %4602 = vdwg.mxu0
        %v4603 = vpack.c.bf16 %v4451, %v4451
        %v4604 = vpack.c.bf16 %v4500, %v4500
        %v4605 = vpack.c.bf16 %v4549, %v4549
        %v4606 = vpack.c.bf16 %v4598, %v4598
        %v4608 = vsel %vm856, %v4603, 0
        %v4611 = vsel %vm1113, %v4154, 0
        %4613 = vmatprep.subr.bf16.mxu0 0
        %4614 = vmatpush1.bf16.msra.mxu0 0
        %4615 = vmatprep.subr.bf16.mxu0 0
        %4616 = vmatpush1.bf16.msra.mxu0 0
        %4617 = vmatprep.subr.bf16.mxu0 0
        %4618 = vmatpush1.bf16.msra.mxu0 0
        %4619 = vmatprep.subr.bf16.mxu0 0
        %4620 = vmatpush1.bf16.msra.mxu0 0
        %4621 = vmatprep.subr.bf16.mxu0 0
        %4622 = vmatpush1.bf16.msra.mxu0 0
        %4623 = vmatprep.subr.bf16.mxu0 0
        %4624 = vmatpush1.bf16.msra.mxu0 0
        %4625 = vmatprep.subr.bf16.mxu0 0
        %4626 = vmatpush1.bf16.msra.mxu0 0
        %4627 = vmatprep.subr.bf16.mxu0 0
        %4628 = vmatpush1.bf16.msra.mxu0 %v4611
        %4629 = vmatprep.subr.bf16.mxu0 0
        %4630 = vmatpush2.bf16.msra.mxu0 0
        %4631 = vmatprep.subr.bf16.mxu0 0
        %4632 = vmatpush2.bf16.msra.mxu0 0
        %4633 = vmatprep.subr.bf16.mxu0 0
        %4634 = vmatpush2.bf16.msra.mxu0 0
        %4635 = vmatprep.subr.bf16.mxu0 0
        %4636 = vmatpush2.bf16.msra.mxu0 0
        %4637 = vmatprep.subr.bf16.mxu0 0
        %4638 = vmatpush2.bf16.msra.mxu0 0
        %4639 = vmatprep.subr.bf16.mxu0 0
        %4640 = vmatpush2.bf16.msra.mxu0 0
        %4641 = vmatprep.subr.bf16.mxu0 0
        %4642 = vmatpush2.bf16.msra.mxu0 0
        %4643 = vmatprep.subr.bf16.mxu0 0
        %4644 = vmatpush2.bf16.msra.mxu0 0
        %4645 = vmatprep.mubr.bf16.mxu0 0
        %4646 = vmatmul.mubr.bf16.gmra.mxu0 %v4608
        %v4647 = vpop.f32.mrf.mxu0
        %v4648 = vadd.f32 0.0, %v4647
        %v4649 = vpop.f32.mrf.mxu0
        %v4650 = vpop.f32.mrf.mxu0
        %v4651 = vpop.f32.mrf.mxu0
        %4652 = vdwg.mxu0
        %v4654 = vsel %vm856, %v4604, 0
        %v4657 = vsel %vm1113, %v4155, 0
        %4659 = vmatprep.subr.bf16.mxu0 0
        %4660 = vmatpush1.bf16.msra.mxu0 0
        %4661 = vmatprep.subr.bf16.mxu0 0
        %4662 = vmatpush1.bf16.msra.mxu0 0
        %4663 = vmatprep.subr.bf16.mxu0 0
        %4664 = vmatpush1.bf16.msra.mxu0 0
        %4665 = vmatprep.subr.bf16.mxu0 0
        %4666 = vmatpush1.bf16.msra.mxu0 0
        %4667 = vmatprep.subr.bf16.mxu0 0
        %4668 = vmatpush1.bf16.msra.mxu0 0
        %4669 = vmatprep.subr.bf16.mxu0 0
        %4670 = vmatpush1.bf16.msra.mxu0 0
        %4671 = vmatprep.subr.bf16.mxu0 0
        %4672 = vmatpush1.bf16.msra.mxu0 0
        %4673 = vmatprep.subr.bf16.mxu0 0
        %4674 = vmatpush1.bf16.msra.mxu0 %v4657
        %4675 = vmatprep.subr.bf16.mxu0 0
        %4676 = vmatpush2.bf16.msra.mxu0 0
        %4677 = vmatprep.subr.bf16.mxu0 0
        %4678 = vmatpush2.bf16.msra.mxu0 0
        %4679 = vmatprep.subr.bf16.mxu0 0
        %4680 = vmatpush2.bf16.msra.mxu0 0
        %4681 = vmatprep.subr.bf16.mxu0 0
        %4682 = vmatpush2.bf16.msra.mxu0 0
        %4683 = vmatprep.subr.bf16.mxu0 0
        %4684 = vmatpush2.bf16.msra.mxu0 0
        %4685 = vmatprep.subr.bf16.mxu0 0
        %4686 = vmatpush2.bf16.msra.mxu0 0
        %4687 = vmatprep.subr.bf16.mxu0 0
        %4688 = vmatpush2.bf16.msra.mxu0 0
        %4689 = vmatprep.subr.bf16.mxu0 0
        %4690 = vmatpush2.bf16.msra.mxu0 0
        %4691 = vmatprep.mubr.bf16.mxu0 0
        %4692 = vmatmul.mubr.bf16.gmra.mxu0 %v4654
        %v4693 = vpop.f32.mrf.mxu0
        %v4694 = vadd.f32 0.0, %v4693
        %v4695 = vpop.f32.mrf.mxu0
        %v4696 = vpop.f32.mrf.mxu0
        %v4697 = vpop.f32.mrf.mxu0
        %4698 = vdwg.mxu0
        %v4700 = vsel %vm856, %v4605, 0
        %v4703 = vsel %vm1113, %v4156, 0
        %4705 = vmatprep.subr.bf16.mxu0 0
        %4706 = vmatpush1.bf16.msra.mxu0 0
        %4707 = vmatprep.subr.bf16.mxu0 0
        %4708 = vmatpush1.bf16.msra.mxu0 0
        %4709 = vmatprep.subr.bf16.mxu0 0
        %4710 = vmatpush1.bf16.msra.mxu0 0
        %4711 = vmatprep.subr.bf16.mxu0 0
        %4712 = vmatpush1.bf16.msra.mxu0 0
        %4713 = vmatprep.subr.bf16.mxu0 0
        %4714 = vmatpush1.bf16.msra.mxu0 0
        %4715 = vmatprep.subr.bf16.mxu0 0
        %4716 = vmatpush1.bf16.msra.mxu0 0
        %4717 = vmatprep.subr.bf16.mxu0 0
        %4718 = vmatpush1.bf16.msra.mxu0 0
        %4719 = vmatprep.subr.bf16.mxu0 0
        %4720 = vmatpush1.bf16.msra.mxu0 %v4703
        %4721 = vmatprep.subr.bf16.mxu0 0
        %4722 = vmatpush2.bf16.msra.mxu0 0
        %4723 = vmatprep.subr.bf16.mxu0 0
        %4724 = vmatpush2.bf16.msra.mxu0 0
        %4725 = vmatprep.subr.bf16.mxu0 0
        %4726 = vmatpush2.bf16.msra.mxu0 0
        %4727 = vmatprep.subr.bf16.mxu0 0
        %4728 = vmatpush2.bf16.msra.mxu0 0
        %4729 = vmatprep.subr.bf16.mxu0 0
        %4730 = vmatpush2.bf16.msra.mxu0 0
        %4731 = vmatprep.subr.bf16.mxu0 0
        %4732 = vmatpush2.bf16.msra.mxu0 0
        %4733 = vmatprep.subr.bf16.mxu0 0
        %4734 = vmatpush2.bf16.msra.mxu0 0
        %4735 = vmatprep.subr.bf16.mxu0 0
        %4736 = vmatpush2.bf16.msra.mxu0 0
        %4737 = vmatprep.mubr.bf16.mxu0 0
        %4738 = vmatmul.mubr.bf16.gmra.mxu0 %v4700
        %v4739 = vpop.f32.mrf.mxu0
        %v4740 = vadd.f32 0.0, %v4739
        %v4741 = vpop.f32.mrf.mxu0
        %v4742 = vpop.f32.mrf.mxu0
        %v4743 = vpop.f32.mrf.mxu0
        %4744 = vdwg.mxu0
        %v4746 = vsel %vm856, %v4606, 0
        %v4749 = vsel %vm1113, %v4157, 0
        %4751 = vmatprep.subr.bf16.mxu0 0
        %4752 = vmatpush1.bf16.msra.mxu0 0
        %4753 = vmatprep.subr.bf16.mxu0 0
        %4754 = vmatpush1.bf16.msra.mxu0 0
        %4755 = vmatprep.subr.bf16.mxu0 0
        %4756 = vmatpush1.bf16.msra.mxu0 0
        %4757 = vmatprep.subr.bf16.mxu0 0
        %4758 = vmatpush1.bf16.msra.mxu0 0
        %4759 = vmatprep.subr.bf16.mxu0 0
        %4760 = vmatpush1.bf16.msra.mxu0 0
        %4761 = vmatprep.subr.bf16.mxu0 0
        %4762 = vmatpush1.bf16.msra.mxu0 0
        %4763 = vmatprep.subr.bf16.mxu0 0
        %4764 = vmatpush1.bf16.msra.mxu0 0
        %4765 = vmatprep.subr.bf16.mxu0 0
        %4766 = vmatpush1.bf16.msra.mxu0 %v4749
        %4767 = vmatprep.subr.bf16.mxu0 0
        %4768 = vmatpush2.bf16.msra.mxu0 0
        %4769 = vmatprep.subr.bf16.mxu0 0
        %4770 = vmatpush2.bf16.msra.mxu0 0
        %4771 = vmatprep.subr.bf16.mxu0 0
        %4772 = vmatpush2.bf16.msra.mxu0 0
        %4773 = vmatprep.subr.bf16.mxu0 0
        %4774 = vmatpush2.bf16.msra.mxu0 0
        %4775 = vmatprep.subr.bf16.mxu0 0
        %4776 = vmatpush2.bf16.msra.mxu0 0
        %4777 = vmatprep.subr.bf16.mxu0 0
        %4778 = vmatpush2.bf16.msra.mxu0 0
        %4779 = vmatprep.subr.bf16.mxu0 0
        %4780 = vmatpush2.bf16.msra.mxu0 0
        %4781 = vmatprep.subr.bf16.mxu0 0
        %4782 = vmatpush2.bf16.msra.mxu0 0
        %4783 = vmatprep.mubr.bf16.mxu0 0
        %4784 = vmatmul.mubr.bf16.gmra.mxu0 %v4746
        %v4785 = vpop.f32.mrf.mxu0
        %v4786 = vadd.f32 0.0, %v4785
        %v4787 = vpop.f32.mrf.mxu0
        %v4788 = vpop.f32.mrf.mxu0
        %v4789 = vpop.f32.mrf.mxu0
        %4790 = vdwg.mxu0
        %v4791 = vsel %vm644, %v4648, 0.0
        %v4792 = vsel %vm644, %v4694, 0.0
        %v4793 = vadd.f32 %v4791, %v4792
        %v4794 = vsel %vm644, %v4740, 0.0
        %v4795 = vadd.f32 %v4793, %v4794
        %v4796 = vsel %vm644, %v4786, 0.0
        %v4797 = vadd.f32 %v4795, %v4796
        %v4798 = vlaneseq
        %v4799 = vshrl.u32 %v4798, 7
        %v4800 = vsub.s32 0, %v4799
        %v4801 = vrot.slane %v4158, %v4800
        %v4802 = vadd.f32 %v4797, %v4801
        %v4803 = vadd.f32 %v3753, %v4802
        %v4804 = vld [vmem:[%s16 + $0x4] sm:$0x1]
        %v4805 = vld [vmem:[%s16 + $0x5] sm:$0x1]
        %v4806 = vsel %vm644, %v4803, 0.0
        %4807 = vadd.xlane.f32.xlu0 %v4806
        %v4808 = vpop.xlane.xlu0 %4807
        %v4809 = vmul.f32 %v4808, %v1507
        %v4810 = vsub.f32 %v4803, %v4809
        %v4811 = vmul.f32 %v4810, %v4810
        %v4812 = vsel %vm644, %v4811, 0.0
        %4813 = vadd.xlane.f32.xlu0 %v4812
        %v4814 = vpop.xlane.xlu0 %4813
        %v4815 = vmul.f32 %v4814, %v1507
        %v4816 = vadd.f32 %v4815, 1e-05
        %v4817 = vrsqrt.pop %v4816
        %v4818 = vmul.f32 %v4810, %v4817
        %v4819 = vlaneseq
        %v4820 = vshrl.u32 %v4819, 7
        %v4821 = vsub.s32 0, %v4820
        %v4822 = vrot.slane %v4804, %v4821
        %v4823 = vmul.f32 %v4818, %v4822
        %v4824 = vlaneseq
        %v4825 = vshrl.u32 %v4824, 7
        %v4826 = vsub.s32 0, %v4825
        %v4827 = vrot.slane %v4805, %v4826
        %v4828 = vadd.f32 %v4823, %v4827
        %v4829 = vld [vmem:[%s14] sm:$0xf]
        %v4830 = vld [vmem:[%s14 + $0x4] sm:$0xf]
        %v4831 = vld [vmem:[%s14 + $0x8] sm:$0xf]
        %v4832 = vld [vmem:[%s14 + $0xc] sm:$0xf]
        %v4833 = vld [vmem:[%s16 + $0x6] sm:$0x1]
        %v4834 = vld [vmem:[%s15] sm:$0xf]
        %v4835 = vld [vmem:[%s15 + $0x4] sm:$0xf]
        %v4836 = vld [vmem:[%s15 + $0x8] sm:$0xf]
        %v4837 = vld [vmem:[%s15 + $0xc] sm:$0xf]
        %v4838 = vld [vmem:[%s15 + $0x10] sm:$0xf]
        %v4839 = vld [vmem:[%s15 + $0x14] sm:$0xf]
        %v4840 = vld [vmem:[%s15 + $0x18] sm:$0xf]
        %v4841 = vld [vmem:[%s15 + $0x1c] sm:$0xf]
        %v4842 = vld [vmem:[%s16 + $0x7] sm:$0x1]
        %v4843 = vpack.c.bf16 %v4828, %v4828
        %v4844 = vlaneseq
        %v4845 = vshrl.u32 %v4844, 7
        %v4846 = vsub.s32 0, %v4845
        %v4847 = vrot.slane %v4833, %v4846
        %v4852 = vunpack.c.l.b16 %v4829
        %v4853 = vunpack.c.l.b16 %v4830
        %v4854 = vunpack.c.l.b16 %v4831
        %v4855 = vunpack.c.l.b16 %v4832
        %v4856 = vpack.c.b16 %v4853, %v4852
        %v4857 = vpack.c.b16 %v4855, %v4854
        %v4861 = vsel %vm644, %v4843, 0
        %4863 = vmatprep.subr.bf16.mxu0 0
        %4864 = vmatpush1.bf16.msra.mxu0 0
        %4865 = vmatprep.subr.bf16.mxu0 0
        %4866 = vmatpush1.bf16.msra.mxu0 0
        %4867 = vmatprep.subr.bf16.mxu0 0
        %4868 = vmatpush1.bf16.msra.mxu0 0
        %4869 = vmatprep.subr.bf16.mxu0 0
        %4870 = vmatpush1.bf16.msra.mxu0 0
        %4871 = vmatprep.subr.bf16.mxu0 0
        %4872 = vmatpush1.bf16.msra.mxu0 0
        %4873 = vmatprep.subr.bf16.mxu0 0
        %4874 = vmatpush1.bf16.msra.mxu0 0
        %4875 = vmatprep.subr.bf16.mxu0 0
        %4876 = vmatpush1.bf16.msra.mxu0 %v4857
        %4877 = vmatprep.subr.bf16.mxu0 0
        %4878 = vmatpush1.bf16.msra.mxu0 %v4856
        %4879 = vmatprep.subr.bf16.mxu0 0
        %4880 = vmatpush2.bf16.msra.mxu0 0
        %4881 = vmatprep.subr.bf16.mxu0 0
        %4882 = vmatpush2.bf16.msra.mxu0 0
        %4883 = vmatprep.subr.bf16.mxu0 0
        %4884 = vmatpush2.bf16.msra.mxu0 0
        %4885 = vmatprep.subr.bf16.mxu0 0
        %4886 = vmatpush2.bf16.msra.mxu0 0
        %4887 = vmatprep.subr.bf16.mxu0 0
        %4888 = vmatpush2.bf16.msra.mxu0 0
        %4889 = vmatprep.subr.bf16.mxu0 0
        %4890 = vmatpush2.bf16.msra.mxu0 0
        %4891 = vmatprep.subr.bf16.mxu0 0
        %4892 = vmatpush2.bf16.msra.mxu0 0
        %4893 = vmatprep.subr.bf16.mxu0 0
        %4894 = vmatpush2.bf16.msra.mxu0 0
        %4895 = vmatprep.mubr.bf16.mxu0 0
        %4896 = vmatmul.mubr.bf16.gmra.mxu0 %v4861
        %v4897 = vpop.f32.mrf.mxu0
        %v4898 = vadd.f32 %v4847, %v4897
        %v4899 = vpop.f32.mrf.mxu0
        %v4900 = vpop.f32.mrf.mxu0
        %v4901 = vpop.f32.mrf.mxu0
        %4902 = vdwg.mxu0
        %v4903 = vmax.f32 %v4898, 0.0
        %v4904 = vpack.c.bf16 %v4903, %v4903
        %v4905 = vlaneseq
        %v4906 = vshrl.u32 %v4905, 7
        %v4907 = vsub.s32 0, %v4906
        %v4908 = vrot.slane %v4842, %v4907
        %v4917 = vunpack.c.l.b16 %v4834
        %v4918 = vunpack.c.l.b16 %v4835
        %v4919 = vunpack.c.l.b16 %v4836
        %v4920 = vunpack.c.l.b16 %v4837
        %v4921 = vunpack.c.l.b16 %v4838
        %v4922 = vunpack.c.l.b16 %v4839
        %v4923 = vunpack.c.l.b16 %v4840
        %v4924 = vunpack.c.l.b16 %v4841
        %v4925 = vpack.c.b16 %v4918, %v4917
        %v4926 = vpack.c.b16 %v4920, %v4919
        %v4927 = vpack.c.b16 %v4922, %v4921
        %v4928 = vpack.c.b16 %v4924, %v4923
        %v4934 = vsel %vm1632, %v4904, 0
        %4936 = vmatprep.subr.bf16.mxu0 0
        %4937 = vmatpush1.bf16.msra.mxu0 0
        %4938 = vmatprep.subr.bf16.mxu0 0
        %4939 = vmatpush1.bf16.msra.mxu0 0
        %4940 = vmatprep.subr.bf16.mxu0 0
        %4941 = vmatpush1.bf16.msra.mxu0 0
        %4942 = vmatprep.subr.bf16.mxu0 0
        %4943 = vmatpush1.bf16.msra.mxu0 0
        %4944 = vmatprep.subr.bf16.mxu0 0
        %4945 = vmatpush1.bf16.msra.mxu0 %v4928
        %4946 = vmatprep.subr.bf16.mxu0 0
        %4947 = vmatpush1.bf16.msra.mxu0 %v4927
        %4948 = vmatprep.subr.bf16.mxu0 0
        %4949 = vmatpush1.bf16.msra.mxu0 %v4926
        %4950 = vmatprep.subr.bf16.mxu0 0
        %4951 = vmatpush1.bf16.msra.mxu0 %v4925
        %4952 = vmatprep.subr.bf16.mxu0 0
        %4953 = vmatpush2.bf16.msra.mxu0 0
        %4954 = vmatprep.subr.bf16.mxu0 0
        %4955 = vmatpush2.bf16.msra.mxu0 0
        %4956 = vmatprep.subr.bf16.mxu0 0
        %4957 = vmatpush2.bf16.msra.mxu0 0
        %4958 = vmatprep.subr.bf16.mxu0 0
        %4959 = vmatpush2.bf16.msra.mxu0 0
        %4960 = vmatprep.subr.bf16.mxu0 0
        %4961 = vmatpush2.bf16.msra.mxu0 0
        %4962 = vmatprep.subr.bf16.mxu0 0
        %4963 = vmatpush2.bf16.msra.mxu0 0
        %4964 = vmatprep.subr.bf16.mxu0 0
        %4965 = vmatpush2.bf16.msra.mxu0 0
        %4966 = vmatprep.subr.bf16.mxu0 0
        %4967 = vmatpush2.bf16.msra.mxu0 0
        %4968 = vmatprep.mubr.bf16.mxu0 0
        %4969 = vmatmul.mubr.bf16.gmra.mxu0 %v4934
        %v4970 = vpop.f32.mrf.mxu0
        %v4971 = vadd.f32 %v4908, %v4970
        %v4972 = vpop.f32.mrf.mxu0
        %v4973 = vpop.f32.mrf.mxu0
        %v4974 = vpop.f32.mrf.mxu0
        %4975 = vdwg.mxu0
        %v4976 = vadd.f32 %v4828, %v4971
        %v4977 = vld [vmem:[%s16 + $0x8] sm:$0x1]
        %v4978 = vld [vmem:[%s16 + $0x9] sm:$0x1]
        %v4979 = vsel %vm644, %v4976, 0.0
        %4980 = vadd.xlane.f32.xlu0 %v4979
        %v4981 = vpop.xlane.xlu0 %4980
        %v4982 = vmul.f32 %v4981, %v1507
        %v4983 = vsub.f32 %v4976, %v4982
        %v4984 = vmul.f32 %v4983, %v4983
        %v4985 = vsel %vm644, %v4984, 0.0
        %4986 = vadd.xlane.f32.xlu0 %v4985
        %v4987 = vpop.xlane.xlu0 %4986
        %v4988 = vmul.f32 %v4987, %v1507
        %v4989 = vadd.f32 %v4988, 1e-05
        %v4990 = vrsqrt.pop %v4989
        %v4991 = vmul.f32 %v4983, %v4990
        %v4992 = vlaneseq
        %v4993 = vshrl.u32 %v4992, 7
        %v4994 = vsub.s32 0, %v4993
        %v4995 = vrot.slane %v4977, %v4994
        %v4996 = vmul.f32 %v4991, %v4995
        %v4997 = vlaneseq
        %v4998 = vshrl.u32 %v4997, 7
        %v4999 = vsub.s32 0, %v4998
        %v5000 = vrot.slane %v4978, %v4999
        %v5001 = vadd.f32 %v4996, %v5000
        %s5002 = scalar_lea.vmem %s10, 64
        %v5003 = vld [vmem:[%s5002] sm:$0xf]
        %v5004 = vld [vmem:[%s5002 + $0x4] sm:$0xf]
        %v5005 = vld [vmem:[%s5002 + $0x8] sm:$0xf]
        %v5006 = vld [vmem:[%s5002 + $0xc] sm:$0xf]
        %v5007 = vld [vmem:[%s5002 + $0x10] sm:$0xf]
        %v5008 = vld [vmem:[%s5002 + $0x14] sm:$0xf]
        %v5009 = vld [vmem:[%s5002 + $0x18] sm:$0xf]
        %v5010 = vld [vmem:[%s5002 + $0x1c] sm:$0xf]
        %v5011 = vld [vmem:[%s5002 + $0x20] sm:$0xf]
        %v5012 = vld [vmem:[%s5002 + $0x24] sm:$0xf]
        %v5013 = vld [vmem:[%s5002 + $0x28] sm:$0xf]
        %v5014 = vld [vmem:[%s5002 + $0x2c] sm:$0xf]
        %v5015 = vld [vmem:[%s5002 + $0x30] sm:$0xf]
        %v5016 = vld [vmem:[%s5002 + $0x34] sm:$0xf]
        %v5017 = vld [vmem:[%s5002 + $0x38] sm:$0xf]
        %v5018 = vld [vmem:[%s5002 + $0x3c] sm:$0xf]
        %s5019 = scalar_lea.vmem %s11, 4
        %v5020 = vld [vmem:[%s5019] sm:$0x1]
        %v5021 = vld [vmem:[%s5019 + $0x1] sm:$0x1]
        %v5022 = vld [vmem:[%s5019 + $0x2] sm:$0x1]
        %v5023 = vld [vmem:[%s5019 + $0x3] sm:$0x1]
        %v5024 = vpack.c.bf16 %v5001, %v5001
        %v5029 = vlaneseq
        %v5030 = vshrl.u32 %v5029, 7
        %v5031 = vsub.s32 0, %v5030
        %v5032 = vrot.slane %v5020, %v5031
        %v5033 = vlaneseq
        %v5034 = vshrl.u32 %v5033, 7
        %v5035 = vsub.s32 0, %v5034
        %v5036 = vrot.slane %v5021, %v5035
        %v5037 = vlaneseq
        %v5038 = vshrl.u32 %v5037, 7
        %v5039 = vsub.s32 0, %v5038
        %v5040 = vrot.slane %v5022, %v5039
        %v5041 = vlaneseq
        %v5042 = vshrl.u32 %v5041, 7
        %v5043 = vsub.s32 0, %v5042
        %v5044 = vrot.slane %v5023, %v5043
        %v5053 = vunpack.c.l.b16 %v5003
        %v5054 = vunpack.c.l.b16 %v5004
        %v5055 = vunpack.c.l.b16 %v5005
        %v5056 = vunpack.c.l.b16 %v5006
        %v5057 = vpack.c.b16 %v5054, %v5053
        %v5058 = vpack.c.b16 %v5056, %v5055
        %v5062 = vsel %vm644, %v5024, 0
        %5064 = vmatprep.subr.bf16.mxu0 0
        %5065 = vmatpush1.bf16.msra.mxu0 0
        %5066 = vmatprep.subr.bf16.mxu0 0
        %5067 = vmatpush1.bf16.msra.mxu0 0
        %5068 = vmatprep.subr.bf16.mxu0 0
        %5069 = vmatpush1.bf16.msra.mxu0 0
        %5070 = vmatprep.subr.bf16.mxu0 0
        %5071 = vmatpush1.bf16.msra.mxu0 0
        %5072 = vmatprep.subr.bf16.mxu0 0
        %5073 = vmatpush1.bf16.msra.mxu0 0
        %5074 = vmatprep.subr.bf16.mxu0 0
        %5075 = vmatpush1.bf16.msra.mxu0 0
        %5076 = vmatprep.subr.bf16.mxu0 0
        %5077 = vmatpush1.bf16.msra.mxu0 %v5058
        %5078 = vmatprep.subr.bf16.mxu0 0
        %5079 = vmatpush1.bf16.msra.mxu0 %v5057
        %5080 = vmatprep.subr.bf16.mxu0 0
        %5081 = vmatpush2.bf16.msra.mxu0 0
        %5082 = vmatprep.subr.bf16.mxu0 0
        %5083 = vmatpush2.bf16.msra.mxu0 0
        %5084 = vmatprep.subr.bf16.mxu0 0
        %5085 = vmatpush2.bf16.msra.mxu0 0
        %5086 = vmatprep.subr.bf16.mxu0 0
        %5087 = vmatpush2.bf16.msra.mxu0 0
        %5088 = vmatprep.subr.bf16.mxu0 0
        %5089 = vmatpush2.bf16.msra.mxu0 0
        %5090 = vmatprep.subr.bf16.mxu0 0
        %5091 = vmatpush2.bf16.msra.mxu0 0
        %5092 = vmatprep.subr.bf16.mxu0 0
        %5093 = vmatpush2.bf16.msra.mxu0 0
        %5094 = vmatprep.subr.bf16.mxu0 0
        %5095 = vmatpush2.bf16.msra.mxu0 0
        %5096 = vmatprep.mubr.bf16.mxu0 0
        %5097 = vmatmul.mubr.bf16.gmra.mxu0 %v5062
        %v5098 = vpop.f32.mrf.mxu0
        %v5099 = vadd.f32 %v5032, %v5098
        %v5100 = vpop.f32.mrf.mxu0
        %v5101 = vpop.f32.mrf.mxu0
        %v5102 = vpop.f32.mrf.mxu0
        %5103 = vdwg.mxu0
        %v5108 = vunpack.c.l.b16 %v5007
        %v5109 = vunpack.c.l.b16 %v5008
        %v5110 = vunpack.c.l.b16 %v5009
        %v5111 = vunpack.c.l.b16 %v5010
        %v5112 = vpack.c.b16 %v5109, %v5108
        %v5113 = vpack.c.b16 %v5111, %v5110
        %5116 = vmatprep.subr.bf16.mxu0 0
        %5117 = vmatpush1.bf16.msra.mxu0 0
        %5118 = vmatprep.subr.bf16.mxu0 0
        %5119 = vmatpush1.bf16.msra.mxu0 0
        %5120 = vmatprep.subr.bf16.mxu0 0
        %5121 = vmatpush1.bf16.msra.mxu0 0
        %5122 = vmatprep.subr.bf16.mxu0 0
        %5123 = vmatpush1.bf16.msra.mxu0 0
        %5124 = vmatprep.subr.bf16.mxu0 0
        %5125 = vmatpush1.bf16.msra.mxu0 0
        %5126 = vmatprep.subr.bf16.mxu0 0
        %5127 = vmatpush1.bf16.msra.mxu0 0
        %5128 = vmatprep.subr.bf16.mxu0 0
        %5129 = vmatpush1.bf16.msra.mxu0 %v5113
        %5130 = vmatprep.subr.bf16.mxu0 0
        %5131 = vmatpush1.bf16.msra.mxu0 %v5112
        %5132 = vmatprep.subr.bf16.mxu0 0
        %5133 = vmatpush2.bf16.msra.mxu0 0
        %5134 = vmatprep.subr.bf16.mxu0 0
        %5135 = vmatpush2.bf16.msra.mxu0 0
        %5136 = vmatprep.subr.bf16.mxu0 0
        %5137 = vmatpush2.bf16.msra.mxu0 0
        %5138 = vmatprep.subr.bf16.mxu0 0
        %5139 = vmatpush2.bf16.msra.mxu0 0
        %5140 = vmatprep.subr.bf16.mxu0 0
        %5141 = vmatpush2.bf16.msra.mxu0 0
        %5142 = vmatprep.subr.bf16.mxu0 0
        %5143 = vmatpush2.bf16.msra.mxu0 0
        %5144 = vmatprep.subr.bf16.mxu0 0
        %5145 = vmatpush2.bf16.msra.mxu0 0
        %5146 = vmatprep.subr.bf16.mxu0 0
        %5147 = vmatpush2.bf16.msra.mxu0 0
        %5148 = vmatprep.mubr.bf16.mxu0 0
        %5149 = vmatmul.mubr.bf16.gmra.mxu0 %v5062
        %v5150 = vpop.f32.mrf.mxu0
        %v5151 = vadd.f32 %v5036, %v5150
        %v5152 = vpop.f32.mrf.mxu0
        %v5153 = vpop.f32.mrf.mxu0
        %v5154 = vpop.f32.mrf.mxu0
        %5155 = vdwg.mxu0
        %v5160 = vunpack.c.l.b16 %v5011
        %v5161 = vunpack.c.l.b16 %v5012
        %v5162 = vunpack.c.l.b16 %v5013
        %v5163 = vunpack.c.l.b16 %v5014
        %v5164 = vpack.c.b16 %v5161, %v5160
        %v5165 = vpack.c.b16 %v5163, %v5162
        %5168 = vmatprep.subr.bf16.mxu0 0
        %5169 = vmatpush1.bf16.msra.mxu0 0
        %5170 = vmatprep.subr.bf16.mxu0 0
        %5171 = vmatpush1.bf16.msra.mxu0 0
        %5172 = vmatprep.subr.bf16.mxu0 0
        %5173 = vmatpush1.bf16.msra.mxu0 0
        %5174 = vmatprep.subr.bf16.mxu0 0
        %5175 = vmatpush1.bf16.msra.mxu0 0
        %5176 = vmatprep.subr.bf16.mxu0 0
        %5177 = vmatpush1.bf16.msra.mxu0 0
        %5178 = vmatprep.subr.bf16.mxu0 0
        %5179 = vmatpush1.bf16.msra.mxu0 0
        %5180 = vmatprep.subr.bf16.mxu0 0
        %5181 = vmatpush1.bf16.msra.mxu0 %v5165
        %5182 = vmatprep.subr.bf16.mxu0 0
        %5183 = vmatpush1.bf16.msra.mxu0 %v5164
        %5184 = vmatprep.subr.bf16.mxu0 0
        %5185 = vmatpush2.bf16.msra.mxu0 0
        %5186 = vmatprep.subr.bf16.mxu0 0
        %5187 = vmatpush2.bf16.msra.mxu0 0
        %5188 = vmatprep.subr.bf16.mxu0 0
        %5189 = vmatpush2.bf16.msra.mxu0 0
        %5190 = vmatprep.subr.bf16.mxu0 0
        %5191 = vmatpush2.bf16.msra.mxu0 0
        %5192 = vmatprep.subr.bf16.mxu0 0
        %5193 = vmatpush2.bf16.msra.mxu0 0
        %5194 = vmatprep.subr.bf16.mxu0 0
        %5195 = vmatpush2.bf16.msra.mxu0 0
        %5196 = vmatprep.subr.bf16.mxu0 0
        %5197 = vmatpush2.bf16.msra.mxu0 0
        %5198 = vmatprep.subr.bf16.mxu0 0
        %5199 = vmatpush2.bf16.msra.mxu0 0
        %5200 = vmatprep.mubr.bf16.mxu0 0
        %5201 = vmatmul.mubr.bf16.gmra.mxu0 %v5062
        %v5202 = vpop.f32.mrf.mxu0
        %v5203 = vadd.f32 %v5040, %v5202
        %v5204 = vpop.f32.mrf.mxu0
        %v5205 = vpop.f32.mrf.mxu0
        %v5206 = vpop.f32.mrf.mxu0
        %5207 = vdwg.mxu0
        %v5212 = vunpack.c.l.b16 %v5015
        %v5213 = vunpack.c.l.b16 %v5016
        %v5214 = vunpack.c.l.b16 %v5017
        %v5215 = vunpack.c.l.b16 %v5018
        %v5216 = vpack.c.b16 %v5213, %v5212
        %v5217 = vpack.c.b16 %v5215, %v5214
        %5220 = vmatprep.subr.bf16.mxu0 0
        %5221 = vmatpush1.bf16.msra.mxu0 0
        %5222 = vmatprep.subr.bf16.mxu0 0
        %5223 = vmatpush1.bf16.msra.mxu0 0
        %5224 = vmatprep.subr.bf16.mxu0 0
        %5225 = vmatpush1.bf16.msra.mxu0 0
        %5226 = vmatprep.subr.bf16.mxu0 0
        %5227 = vmatpush1.bf16.msra.mxu0 0
        %5228 = vmatprep.subr.bf16.mxu0 0
        %5229 = vmatpush1.bf16.msra.mxu0 0
        %5230 = vmatprep.subr.bf16.mxu0 0
        %5231 = vmatpush1.bf16.msra.mxu0 0
        %5232 = vmatprep.subr.bf16.mxu0 0
        %5233 = vmatpush1.bf16.msra.mxu0 %v5217
        %5234 = vmatprep.subr.bf16.mxu0 0
        %5235 = vmatpush1.bf16.msra.mxu0 %v5216
        %5236 = vmatprep.subr.bf16.mxu0 0
        %5237 = vmatpush2.bf16.msra.mxu0 0
        %5238 = vmatprep.subr.bf16.mxu0 0
        %5239 = vmatpush2.bf16.msra.mxu0 0
        %5240 = vmatprep.subr.bf16.mxu0 0
        %5241 = vmatpush2.bf16.msra.mxu0 0
        %5242 = vmatprep.subr.bf16.mxu0 0
        %5243 = vmatpush2.bf16.msra.mxu0 0
        %5244 = vmatprep.subr.bf16.mxu0 0
        %5245 = vmatpush2.bf16.msra.mxu0 0
        %5246 = vmatprep.subr.bf16.mxu0 0
        %5247 = vmatpush2.bf16.msra.mxu0 0
        %5248 = vmatprep.subr.bf16.mxu0 0
        %5249 = vmatpush2.bf16.msra.mxu0 0
        %5250 = vmatprep.subr.bf16.mxu0 0
        %5251 = vmatpush2.bf16.msra.mxu0 0
        %5252 = vmatprep.mubr.bf16.mxu0 0
        %5253 = vmatmul.mubr.bf16.gmra.mxu0 %v5062
        %v5254 = vpop.f32.mrf.mxu0
        %v5255 = vadd.f32 %v5044, %v5254
        %v5256 = vpop.f32.mrf.mxu0
        %v5257 = vpop.f32.mrf.mxu0
        %v5258 = vpop.f32.mrf.mxu0
        %5259 = vdwg.mxu0
        %s5260 = scalar_lea.vmem %s12, 16
        %v5261 = vld [vmem:[%s5260] sm:$0xf]
        %v5262 = vld [vmem:[%s5260 + $0x4] sm:$0xf]
        %v5263 = vld [vmem:[%s5260 + $0x8] sm:$0xf]
        %v5264 = vld [vmem:[%s5260 + $0xc] sm:$0xf]
        %s5265 = scalar_lea.vmem %s16, 16
        %v5266 = vld [vmem:[%s5265] sm:$0x1]
        %v5267 = vpack.c.bf16 %v5099, %v5099
        %v5268 = vpack.c.bf16 %v5151, %v5151
        %v5269 = vpack.c.bf16 %v5203, %v5203
        %v5270 = vpack.c.bf16 %v5255, %v5255
        %5272 = vrot.lane.b32.xlu0 %v5267, 120
        %v5273 = vpop.permute.xlu0 %5272
        %v5275 = vsel %vm856, %v5267, 0
        %v5278 = vsel %vm856, %v5273, 0
        %5280 = vmatprep.subr.bf16.mxu0 0
        %5281 = vmatpush1.bf16.xpose.msra.mxu0 0
        %5282 = vmatprep.subr.bf16.mxu0 0
        %5283 = vmatpush1.bf16.xpose.msra.mxu0 0
        %5284 = vmatprep.subr.bf16.mxu0 0
        %5285 = vmatpush1.bf16.xpose.msra.mxu0 0
        %5286 = vmatprep.subr.bf16.mxu0 0
        %5287 = vmatpush1.bf16.xpose.msra.mxu0 0
        %5288 = vmatprep.subr.bf16.mxu0 0
        %5289 = vmatpush1.bf16.xpose.msra.mxu0 0
        %5290 = vmatprep.subr.bf16.mxu0 0
        %5291 = vmatpush1.bf16.xpose.msra.mxu0 0
        %5292 = vmatprep.subr.bf16.mxu0 0
        %5293 = vmatpush1.bf16.xpose.msra.mxu0 0
        %5294 = vmatprep.subr.bf16.mxu0 0
        %5295 = vmatpush1.bf16.xpose.msra.mxu0 %v5278
        %5296 = vmatprep.subr.bf16.mxu0 0
        %5297 = vmatpush2.bf16.xpose.msra.mxu0 0
        %5298 = vmatprep.subr.bf16.mxu0 0
        %5299 = vmatpush2.bf16.xpose.msra.mxu0 0
        %5300 = vmatprep.subr.bf16.mxu0 0
        %5301 = vmatpush2.bf16.xpose.msra.mxu0 0
        %5302 = vmatprep.subr.bf16.mxu0 0
        %5303 = vmatpush2.bf16.xpose.msra.mxu0 0
        %5304 = vmatprep.subr.bf16.mxu0 0
        %5305 = vmatpush2.bf16.xpose.msra.mxu0 0
        %5306 = vmatprep.subr.bf16.mxu0 0
        %5307 = vmatpush2.bf16.xpose.msra.mxu0 0
        %5308 = vmatprep.subr.bf16.mxu0 0
        %5309 = vmatpush2.bf16.xpose.msra.mxu0 0
        %5310 = vmatprep.subr.bf16.mxu0 0
        %5311 = vmatpush2.bf16.xpose.msra.mxu0 0
        %5312 = vmatprep.mubr.bf16.mxu0 0
        %5313 = vmatmul.mubr.bf16.gmra.mxu0 %v5275
        %v5314 = vpop.f32.mrf.mxu0
        %v5315 = vadd.f32 0.0, %v5314
        %v5316 = vpop.f32.mrf.mxu0
        %v5317 = vpop.f32.mrf.mxu0
        %v5318 = vpop.f32.mrf.mxu0
        %5319 = vdwg.mxu0
        %5321 = vrot.lane.b32.xlu0 %v5268, 120
        %v5322 = vpop.permute.xlu0 %5321
        %v5324 = vsel %vm856, %v5268, 0
        %v5327 = vsel %vm856, %v5322, 0
        %5329 = vmatprep.subr.bf16.mxu0 0
        %5330 = vmatpush1.bf16.xpose.msra.mxu0 0
        %5331 = vmatprep.subr.bf16.mxu0 0
        %5332 = vmatpush1.bf16.xpose.msra.mxu0 0
        %5333 = vmatprep.subr.bf16.mxu0 0
        %5334 = vmatpush1.bf16.xpose.msra.mxu0 0
        %5335 = vmatprep.subr.bf16.mxu0 0
        %5336 = vmatpush1.bf16.xpose.msra.mxu0 0
        %5337 = vmatprep.subr.bf16.mxu0 0
        %5338 = vmatpush1.bf16.xpose.msra.mxu0 0
        %5339 = vmatprep.subr.bf16.mxu0 0
        %5340 = vmatpush1.bf16.xpose.msra.mxu0 0
        %5341 = vmatprep.subr.bf16.mxu0 0
        %5342 = vmatpush1.bf16.xpose.msra.mxu0 0
        %5343 = vmatprep.subr.bf16.mxu0 0
        %5344 = vmatpush1.bf16.xpose.msra.mxu0 %v5327
        %5345 = vmatprep.subr.bf16.mxu0 0
        %5346 = vmatpush2.bf16.xpose.msra.mxu0 0
        %5347 = vmatprep.subr.bf16.mxu0 0
        %5348 = vmatpush2.bf16.xpose.msra.mxu0 0
        %5349 = vmatprep.subr.bf16.mxu0 0
        %5350 = vmatpush2.bf16.xpose.msra.mxu0 0
        %5351 = vmatprep.subr.bf16.mxu0 0
        %5352 = vmatpush2.bf16.xpose.msra.mxu0 0
        %5353 = vmatprep.subr.bf16.mxu0 0
        %5354 = vmatpush2.bf16.xpose.msra.mxu0 0
        %5355 = vmatprep.subr.bf16.mxu0 0
        %5356 = vmatpush2.bf16.xpose.msra.mxu0 0
        %5357 = vmatprep.subr.bf16.mxu0 0
        %5358 = vmatpush2.bf16.xpose.msra.mxu0 0
        %5359 = vmatprep.subr.bf16.mxu0 0
        %5360 = vmatpush2.bf16.xpose.msra.mxu0 0
        %5361 = vmatprep.mubr.bf16.mxu0 0
        %5362 = vmatmul.mubr.bf16.gmra.mxu0 %v5324
        %v5363 = vpop.f32.mrf.mxu0
        %v5364 = vadd.f32 0.0, %v5363
        %v5365 = vpop.f32.mrf.mxu0
        %v5366 = vpop.f32.mrf.mxu0
        %v5367 = vpop.f32.mrf.mxu0
        %5368 = vdwg.mxu0
        %5370 = vrot.lane.b32.xlu0 %v5269, 120
        %v5371 = vpop.permute.xlu0 %5370
        %v5373 = vsel %vm856, %v5269, 0
        %v5376 = vsel %vm856, %v5371, 0
        %5378 = vmatprep.subr.bf16.mxu0 0
        %5379 = vmatpush1.bf16.xpose.msra.mxu0 0
        %5380 = vmatprep.subr.bf16.mxu0 0
        %5381 = vmatpush1.bf16.xpose.msra.mxu0 0
        %5382 = vmatprep.subr.bf16.mxu0 0
        %5383 = vmatpush1.bf16.xpose.msra.mxu0 0
        %5384 = vmatprep.subr.bf16.mxu0 0
        %5385 = vmatpush1.bf16.xpose.msra.mxu0 0
        %5386 = vmatprep.subr.bf16.mxu0 0
        %5387 = vmatpush1.bf16.xpose.msra.mxu0 0
        %5388 = vmatprep.subr.bf16.mxu0 0
        %5389 = vmatpush1.bf16.xpose.msra.mxu0 0
        %5390 = vmatprep.subr.bf16.mxu0 0
        %5391 = vmatpush1.bf16.xpose.msra.mxu0 0
        %5392 = vmatprep.subr.bf16.mxu0 0
        %5393 = vmatpush1.bf16.xpose.msra.mxu0 %v5376
        %5394 = vmatprep.subr.bf16.mxu0 0
        %5395 = vmatpush2.bf16.xpose.msra.mxu0 0
        %5396 = vmatprep.subr.bf16.mxu0 0
        %5397 = vmatpush2.bf16.xpose.msra.mxu0 0
        %5398 = vmatprep.subr.bf16.mxu0 0
        %5399 = vmatpush2.bf16.xpose.msra.mxu0 0
        %5400 = vmatprep.subr.bf16.mxu0 0
        %5401 = vmatpush2.bf16.xpose.msra.mxu0 0
        %5402 = vmatprep.subr.bf16.mxu0 0
        %5403 = vmatpush2.bf16.xpose.msra.mxu0 0
        %5404 = vmatprep.subr.bf16.mxu0 0
        %5405 = vmatpush2.bf16.xpose.msra.mxu0 0
        %5406 = vmatprep.subr.bf16.mxu0 0
        %5407 = vmatpush2.bf16.xpose.msra.mxu0 0
        %5408 = vmatprep.subr.bf16.mxu0 0
        %5409 = vmatpush2.bf16.xpose.msra.mxu0 0
        %5410 = vmatprep.mubr.bf16.mxu0 0
        %5411 = vmatmul.mubr.bf16.gmra.mxu0 %v5373
        %v5412 = vpop.f32.mrf.mxu0
        %v5413 = vadd.f32 0.0, %v5412
        %v5414 = vpop.f32.mrf.mxu0
        %v5415 = vpop.f32.mrf.mxu0
        %v5416 = vpop.f32.mrf.mxu0
        %5417 = vdwg.mxu0
        %5419 = vrot.lane.b32.xlu0 %v5270, 120
        %v5420 = vpop.permute.xlu0 %5419
        %v5422 = vsel %vm856, %v5270, 0
        %v5425 = vsel %vm856, %v5420, 0
        %5427 = vmatprep.subr.bf16.mxu0 0
        %5428 = vmatpush1.bf16.xpose.msra.mxu0 0
        %5429 = vmatprep.subr.bf16.mxu0 0
        %5430 = vmatpush1.bf16.xpose.msra.mxu0 0
        %5431 = vmatprep.subr.bf16.mxu0 0
        %5432 = vmatpush1.bf16.xpose.msra.mxu0 0
        %5433 = vmatprep.subr.bf16.mxu0 0
        %5434 = vmatpush1.bf16.xpose.msra.mxu0 0
        %5435 = vmatprep.subr.bf16.mxu0 0
        %5436 = vmatpush1.bf16.xpose.msra.mxu0 0
        %5437 = vmatprep.subr.bf16.mxu0 0
        %5438 = vmatpush1.bf16.xpose.msra.mxu0 0
        %5439 = vmatprep.subr.bf16.mxu0 0
        %5440 = vmatpush1.bf16.xpose.msra.mxu0 0
        %5441 = vmatprep.subr.bf16.mxu0 0
        %5442 = vmatpush1.bf16.xpose.msra.mxu0 %v5425
        %5443 = vmatprep.subr.bf16.mxu0 0
        %5444 = vmatpush2.bf16.xpose.msra.mxu0 0
        %5445 = vmatprep.subr.bf16.mxu0 0
        %5446 = vmatpush2.bf16.xpose.msra.mxu0 0
        %5447 = vmatprep.subr.bf16.mxu0 0
        %5448 = vmatpush2.bf16.xpose.msra.mxu0 0
        %5449 = vmatprep.subr.bf16.mxu0 0
        %5450 = vmatpush2.bf16.xpose.msra.mxu0 0
        %5451 = vmatprep.subr.bf16.mxu0 0
        %5452 = vmatpush2.bf16.xpose.msra.mxu0 0
        %5453 = vmatprep.subr.bf16.mxu0 0
        %5454 = vmatpush2.bf16.xpose.msra.mxu0 0
        %5455 = vmatprep.subr.bf16.mxu0 0
        %5456 = vmatpush2.bf16.xpose.msra.mxu0 0
        %5457 = vmatprep.subr.bf16.mxu0 0
        %5458 = vmatpush2.bf16.xpose.msra.mxu0 0
        %5459 = vmatprep.mubr.bf16.mxu0 0
        %5460 = vmatmul.mubr.bf16.gmra.mxu0 %v5422
        %v5461 = vpop.f32.mrf.mxu0
        %v5462 = vadd.f32 0.0, %v5461
        %v5463 = vpop.f32.mrf.mxu0
        %v5464 = vpop.f32.mrf.mxu0
        %v5465 = vpop.f32.mrf.mxu0
        %5466 = vdwg.mxu0
        %v5467 = vmul.f32 %v5315, 0.35355338
        %v5468 = vmul.f32 %v5364, 0.35355338
        %v5469 = vmul.f32 %v5413, 0.35355338
        %v5470 = vmul.f32 %v5462, 0.35355338
        %v5471 = vsel %vm3283, %v5467, -1e+10
        %v5472 = vsel %vm3283, %v5468, -1e+10
        %v5473 = vsel %vm3283, %v5469, -1e+10
        %v5474 = vsel %vm3283, %v5470, -1e+10
        %v5475 = vsel %vm856, %v5471, -inf
        %5476 = vmax.xlane.f32.xlu0 %v5475
        %v5477 = vpop.xlane.xlu0 %5476
        %v5478 = vsel %vm856, %v5472, -inf
        %5479 = vmax.xlane.f32.xlu0 %v5478
        %v5480 = vpop.xlane.xlu0 %5479
        %v5481 = vsel %vm856, %v5473, -inf
        %5482 = vmax.xlane.f32.xlu0 %v5481
        %v5483 = vpop.xlane.xlu0 %5482
        %v5484 = vsel %vm856, %v5474, -inf
        %5485 = vmax.xlane.f32.xlu0 %v5484
        %v5486 = vpop.xlane.xlu0 %5485
        %v5487 = vsub.f32 %v5471, %v5477
        %v5488 = vsub.f32 %v5472, %v5480
        %v5489 = vsub.f32 %v5473, %v5483
        %v5490 = vsub.f32 %v5474, %v5486
        %v5491 = vmul.f32 %v5487, 1.442695
        %v5492 = vpow.pop %v5491
        %v5493 = vmul.f32 %v5488, 1.442695
        %v5494 = vpow.pop %v5493
        %v5495 = vmul.f32 %v5489, 1.442695
        %v5496 = vpow.pop %v5495
        %v5497 = vmul.f32 %v5490, 1.442695
        %v5498 = vpow.pop %v5497
        %v5499 = vsel %vm856, %v5492, 0.0
        %5500 = vadd.xlane.f32.xlu0 %v5499
        %v5501 = vpop.xlane.xlu0 %5500
        %v5502 = vsel %vm856, %v5494, 0.0
        %5503 = vadd.xlane.f32.xlu0 %v5502
        %v5504 = vpop.xlane.xlu0 %5503
        %v5505 = vsel %vm856, %v5496, 0.0
        %5506 = vadd.xlane.f32.xlu0 %v5505
        %v5507 = vpop.xlane.xlu0 %5506
        %v5508 = vsel %vm856, %v5498, 0.0
        %5509 = vadd.xlane.f32.xlu0 %v5508
        %v5510 = vpop.xlane.xlu0 %5509
        %v5511 = vrcp.pop %v5501
        %v5512 = vmul.f32 %v5492, %v5511
        %v5513 = vrcp.pop %v5504
        %v5514 = vmul.f32 %v5494, %v5513
        %v5515 = vrcp.pop %v5507
        %v5516 = vmul.f32 %v5496, %v5515
        %v5517 = vrcp.pop %v5510
        %v5518 = vmul.f32 %v5498, %v5517
        %v5519 = vpack.c.bf16 %v5512, %v5512
        %v5520 = vpack.c.bf16 %v5514, %v5514
        %v5521 = vpack.c.bf16 %v5516, %v5516
        %v5522 = vpack.c.bf16 %v5518, %v5518
        %5523 = vrot.lane.b32.xlu0 %v5267, 112
        %v5524 = vpop.permute.xlu0 %5523
        %v5526 = vsel %vm856, %v5519, 0
        %v5529 = vsel %vm1113, %v5524, 0
        %5531 = vmatprep.subr.bf16.mxu0 0
        %5532 = vmatpush1.bf16.msra.mxu0 0
        %5533 = vmatprep.subr.bf16.mxu0 0
        %5534 = vmatpush1.bf16.msra.mxu0 0
        %5535 = vmatprep.subr.bf16.mxu0 0
        %5536 = vmatpush1.bf16.msra.mxu0 0
        %5537 = vmatprep.subr.bf16.mxu0 0
        %5538 = vmatpush1.bf16.msra.mxu0 0
        %5539 = vmatprep.subr.bf16.mxu0 0
        %5540 = vmatpush1.bf16.msra.mxu0 0
        %5541 = vmatprep.subr.bf16.mxu0 0
        %5542 = vmatpush1.bf16.msra.mxu0 0
        %5543 = vmatprep.subr.bf16.mxu0 0
        %5544 = vmatpush1.bf16.msra.mxu0 0
        %5545 = vmatprep.subr.bf16.mxu0 0
        %5546 = vmatpush1.bf16.msra.mxu0 %v5529
        %5547 = vmatprep.subr.bf16.mxu0 0
        %5548 = vmatpush2.bf16.msra.mxu0 0
        %5549 = vmatprep.subr.bf16.mxu0 0
        %5550 = vmatpush2.bf16.msra.mxu0 0
        %5551 = vmatprep.subr.bf16.mxu0 0
        %5552 = vmatpush2.bf16.msra.mxu0 0
        %5553 = vmatprep.subr.bf16.mxu0 0
        %5554 = vmatpush2.bf16.msra.mxu0 0
        %5555 = vmatprep.subr.bf16.mxu0 0
        %5556 = vmatpush2.bf16.msra.mxu0 0
        %5557 = vmatprep.subr.bf16.mxu0 0
        %5558 = vmatpush2.bf16.msra.mxu0 0
        %5559 = vmatprep.subr.bf16.mxu0 0
        %5560 = vmatpush2.bf16.msra.mxu0 0
        %5561 = vmatprep.subr.bf16.mxu0 0
        %5562 = vmatpush2.bf16.msra.mxu0 0
        %5563 = vmatprep.mubr.bf16.mxu0 0
        %5564 = vmatmul.mubr.bf16.gmra.mxu0 %v5526
        %v5565 = vpop.f32.mrf.mxu0
        %v5566 = vadd.f32 0.0, %v5565
        %v5567 = vpop.f32.mrf.mxu0
        %v5568 = vpop.f32.mrf.mxu0
        %v5569 = vpop.f32.mrf.mxu0
        %5570 = vdwg.mxu0
        %5571 = vrot.lane.b32.xlu0 %v5268, 112
        %v5572 = vpop.permute.xlu0 %5571
        %v5574 = vsel %vm856, %v5520, 0
        %v5577 = vsel %vm1113, %v5572, 0
        %5579 = vmatprep.subr.bf16.mxu0 0
        %5580 = vmatpush1.bf16.msra.mxu0 0
        %5581 = vmatprep.subr.bf16.mxu0 0
        %5582 = vmatpush1.bf16.msra.mxu0 0
        %5583 = vmatprep.subr.bf16.mxu0 0
        %5584 = vmatpush1.bf16.msra.mxu0 0
        %5585 = vmatprep.subr.bf16.mxu0 0
        %5586 = vmatpush1.bf16.msra.mxu0 0
        %5587 = vmatprep.subr.bf16.mxu0 0
        %5588 = vmatpush1.bf16.msra.mxu0 0
        %5589 = vmatprep.subr.bf16.mxu0 0
        %5590 = vmatpush1.bf16.msra.mxu0 0
        %5591 = vmatprep.subr.bf16.mxu0 0
        %5592 = vmatpush1.bf16.msra.mxu0 0
        %5593 = vmatprep.subr.bf16.mxu0 0
        %5594 = vmatpush1.bf16.msra.mxu0 %v5577
        %5595 = vmatprep.subr.bf16.mxu0 0
        %5596 = vmatpush2.bf16.msra.mxu0 0
        %5597 = vmatprep.subr.bf16.mxu0 0
        %5598 = vmatpush2.bf16.msra.mxu0 0
        %5599 = vmatprep.subr.bf16.mxu0 0
        %5600 = vmatpush2.bf16.msra.mxu0 0
        %5601 = vmatprep.subr.bf16.mxu0 0
        %5602 = vmatpush2.bf16.msra.mxu0 0
        %5603 = vmatprep.subr.bf16.mxu0 0
        %5604 = vmatpush2.bf16.msra.mxu0 0
        %5605 = vmatprep.subr.bf16.mxu0 0
        %5606 = vmatpush2.bf16.msra.mxu0 0
        %5607 = vmatprep.subr.bf16.mxu0 0
        %5608 = vmatpush2.bf16.msra.mxu0 0
        %5609 = vmatprep.subr.bf16.mxu0 0
        %5610 = vmatpush2.bf16.msra.mxu0 0
        %5611 = vmatprep.mubr.bf16.mxu0 0
        %5612 = vmatmul.mubr.bf16.gmra.mxu0 %v5574
        %v5613 = vpop.f32.mrf.mxu0
        %v5614 = vadd.f32 0.0, %v5613
        %v5615 = vpop.f32.mrf.mxu0
        %v5616 = vpop.f32.mrf.mxu0
        %v5617 = vpop.f32.mrf.mxu0
        %5618 = vdwg.mxu0
        %5619 = vrot.lane.b32.xlu0 %v5269, 112
        %v5620 = vpop.permute.xlu0 %5619
        %v5622 = vsel %vm856, %v5521, 0
        %v5625 = vsel %vm1113, %v5620, 0
        %5627 = vmatprep.subr.bf16.mxu0 0
        %5628 = vmatpush1.bf16.msra.mxu0 0
        %5629 = vmatprep.subr.bf16.mxu0 0
        %5630 = vmatpush1.bf16.msra.mxu0 0
        %5631 = vmatprep.subr.bf16.mxu0 0
        %5632 = vmatpush1.bf16.msra.mxu0 0
        %5633 = vmatprep.subr.bf16.mxu0 0
        %5634 = vmatpush1.bf16.msra.mxu0 0
        %5635 = vmatprep.subr.bf16.mxu0 0
        %5636 = vmatpush1.bf16.msra.mxu0 0
        %5637 = vmatprep.subr.bf16.mxu0 0
        %5638 = vmatpush1.bf16.msra.mxu0 0
        %5639 = vmatprep.subr.bf16.mxu0 0
        %5640 = vmatpush1.bf16.msra.mxu0 0
        %5641 = vmatprep.subr.bf16.mxu0 0
        %5642 = vmatpush1.bf16.msra.mxu0 %v5625
        %5643 = vmatprep.subr.bf16.mxu0 0
        %5644 = vmatpush2.bf16.msra.mxu0 0
        %5645 = vmatprep.subr.bf16.mxu0 0
        %5646 = vmatpush2.bf16.msra.mxu0 0
        %5647 = vmatprep.subr.bf16.mxu0 0
        %5648 = vmatpush2.bf16.msra.mxu0 0
        %5649 = vmatprep.subr.bf16.mxu0 0
        %5650 = vmatpush2.bf16.msra.mxu0 0
        %5651 = vmatprep.subr.bf16.mxu0 0
        %5652 = vmatpush2.bf16.msra.mxu0 0
        %5653 = vmatprep.subr.bf16.mxu0 0
        %5654 = vmatpush2.bf16.msra.mxu0 0
        %5655 = vmatprep.subr.bf16.mxu0 0
        %5656 = vmatpush2.bf16.msra.mxu0 0
        %5657 = vmatprep.subr.bf16.mxu0 0
        %5658 = vmatpush2.bf16.msra.mxu0 0
        %5659 = vmatprep.mubr.bf16.mxu0 0
        %5660 = vmatmul.mubr.bf16.gmra.mxu0 %v5622
        %v5661 = vpop.f32.mrf.mxu0
        %v5662 = vadd.f32 0.0, %v5661
        %v5663 = vpop.f32.mrf.mxu0
        %v5664 = vpop.f32.mrf.mxu0
        %v5665 = vpop.f32.mrf.mxu0
        %5666 = vdwg.mxu0
        %5667 = vrot.lane.b32.xlu0 %v5270, 112
        %v5668 = vpop.permute.xlu0 %5667
        %v5670 = vsel %vm856, %v5522, 0
        %v5673 = vsel %vm1113, %v5668, 0
        %5675 = vmatprep.subr.bf16.mxu0 0
        %5676 = vmatpush1.bf16.msra.mxu0 0
        %5677 = vmatprep.subr.bf16.mxu0 0
        %5678 = vmatpush1.bf16.msra.mxu0 0
        %5679 = vmatprep.subr.bf16.mxu0 0
        %5680 = vmatpush1.bf16.msra.mxu0 0
        %5681 = vmatprep.subr.bf16.mxu0 0
        %5682 = vmatpush1.bf16.msra.mxu0 0
        %5683 = vmatprep.subr.bf16.mxu0 0
        %5684 = vmatpush1.bf16.msra.mxu0 0
        %5685 = vmatprep.subr.bf16.mxu0 0
        %5686 = vmatpush1.bf16.msra.mxu0 0
        %5687 = vmatprep.subr.bf16.mxu0 0
        %5688 = vmatpush1.bf16.msra.mxu0 0
        %5689 = vmatprep.subr.bf16.mxu0 0
        %5690 = vmatpush1.bf16.msra.mxu0 %v5673
        %5691 = vmatprep.subr.bf16.mxu0 0
        %5692 = vmatpush2.bf16.msra.mxu0 0
        %5693 = vmatprep.subr.bf16.mxu0 0
        %5694 = vmatpush2.bf16.msra.mxu0 0
        %5695 = vmatprep.subr.bf16.mxu0 0
        %5696 = vmatpush2.bf16.msra.mxu0 0
        %5697 = vmatprep.subr.bf16.mxu0 0
        %5698 = vmatpush2.bf16.msra.mxu0 0
        %5699 = vmatprep.subr.bf16.mxu0 0
        %5700 = vmatpush2.bf16.msra.mxu0 0
        %5701 = vmatprep.subr.bf16.mxu0 0
        %5702 = vmatpush2.bf16.msra.mxu0 0
        %5703 = vmatprep.subr.bf16.mxu0 0
        %5704 = vmatpush2.bf16.msra.mxu0 0
        %5705 = vmatprep.subr.bf16.mxu0 0
        %5706 = vmatpush2.bf16.msra.mxu0 0
        %5707 = vmatprep.mubr.bf16.mxu0 0
        %5708 = vmatmul.mubr.bf16.gmra.mxu0 %v5670
        %v5709 = vpop.f32.mrf.mxu0
        %v5710 = vadd.f32 0.0, %v5709
        %v5711 = vpop.f32.mrf.mxu0
        %v5712 = vpop.f32.mrf.mxu0
        %v5713 = vpop.f32.mrf.mxu0
        %5714 = vdwg.mxu0
        %v5715 = vpack.c.bf16 %v5566, %v5566
        %v5716 = vpack.c.bf16 %v5614, %v5614
        %v5717 = vpack.c.bf16 %v5662, %v5662
        %v5718 = vpack.c.bf16 %v5710, %v5710
        %v5720 = vsel %vm856, %v5715, 0
        %v5723 = vsel %vm1113, %v5261, 0
        %5725 = vmatprep.subr.bf16.mxu0 0
        %5726 = vmatpush1.bf16.msra.mxu0 0
        %5727 = vmatprep.subr.bf16.mxu0 0
        %5728 = vmatpush1.bf16.msra.mxu0 0
        %5729 = vmatprep.subr.bf16.mxu0 0
        %5730 = vmatpush1.bf16.msra.mxu0 0
        %5731 = vmatprep.subr.bf16.mxu0 0
        %5732 = vmatpush1.bf16.msra.mxu0 0
        %5733 = vmatprep.subr.bf16.mxu0 0
        %5734 = vmatpush1.bf16.msra.mxu0 0
        %5735 = vmatprep.subr.bf16.mxu0 0
        %5736 = vmatpush1.bf16.msra.mxu0 0
        %5737 = vmatprep.subr.bf16.mxu0 0
        %5738 = vmatpush1.bf16.msra.mxu0 0
        %5739 = vmatprep.subr.bf16.mxu0 0
        %5740 = vmatpush1.bf16.msra.mxu0 %v5723
        %5741 = vmatprep.subr.bf16.mxu0 0
        %5742 = vmatpush2.bf16.msra.mxu0 0
        %5743 = vmatprep.subr.bf16.mxu0 0
        %5744 = vmatpush2.bf16.msra.mxu0 0
        %5745 = vmatprep.subr.bf16.mxu0 0
        %5746 = vmatpush2.bf16.msra.mxu0 0
        %5747 = vmatprep.subr.bf16.mxu0 0
        %5748 = vmatpush2.bf16.msra.mxu0 0
        %5749 = vmatprep.subr.bf16.mxu0 0
        %5750 = vmatpush2.bf16.msra.mxu0 0
        %5751 = vmatprep.subr.bf16.mxu0 0
        %5752 = vmatpush2.bf16.msra.mxu0 0
        %5753 = vmatprep.subr.bf16.mxu0 0
        %5754 = vmatpush2.bf16.msra.mxu0 0
        %5755 = vmatprep.subr.bf16.mxu0 0
        %5756 = vmatpush2.bf16.msra.mxu0 0
        %5757 = vmatprep.mubr.bf16.mxu0 0
        %5758 = vmatmul.mubr.bf16.gmra.mxu0 %v5720
        %v5759 = vpop.f32.mrf.mxu0
        %v5760 = vadd.f32 0.0, %v5759
        %v5761 = vpop.f32.mrf.mxu0
        %v5762 = vpop.f32.mrf.mxu0
        %v5763 = vpop.f32.mrf.mxu0
        %5764 = vdwg.mxu0
        %v5766 = vsel %vm856, %v5716, 0
        %v5769 = vsel %vm1113, %v5262, 0
        %5771 = vmatprep.subr.bf16.mxu0 0
        %5772 = vmatpush1.bf16.msra.mxu0 0
        %5773 = vmatprep.subr.bf16.mxu0 0
        %5774 = vmatpush1.bf16.msra.mxu0 0
        %5775 = vmatprep.subr.bf16.mxu0 0
        %5776 = vmatpush1.bf16.msra.mxu0 0
        %5777 = vmatprep.subr.bf16.mxu0 0
        %5778 = vmatpush1.bf16.msra.mxu0 0
        %5779 = vmatprep.subr.bf16.mxu0 0
        %5780 = vmatpush1.bf16.msra.mxu0 0
        %5781 = vmatprep.subr.bf16.mxu0 0
        %5782 = vmatpush1.bf16.msra.mxu0 0
        %5783 = vmatprep.subr.bf16.mxu0 0
        %5784 = vmatpush1.bf16.msra.mxu0 0
        %5785 = vmatprep.subr.bf16.mxu0 0
        %5786 = vmatpush1.bf16.msra.mxu0 %v5769
        %5787 = vmatprep.subr.bf16.mxu0 0
        %5788 = vmatpush2.bf16.msra.mxu0 0
        %5789 = vmatprep.subr.bf16.mxu0 0
        %5790 = vmatpush2.bf16.msra.mxu0 0
        %5791 = vmatprep.subr.bf16.mxu0 0
        %5792 = vmatpush2.bf16.msra.mxu0 0
        %5793 = vmatprep.subr.bf16.mxu0 0
        %5794 = vmatpush2.bf16.msra.mxu0 0
        %5795 = vmatprep.subr.bf16.mxu0 0
        %5796 = vmatpush2.bf16.msra.mxu0 0
        %5797 = vmatprep.subr.bf16.mxu0 0
        %5798 = vmatpush2.bf16.msra.mxu0 0
        %5799 = vmatprep.subr.bf16.mxu0 0
        %5800 = vmatpush2.bf16.msra.mxu0 0
        %5801 = vmatprep.subr.bf16.mxu0 0
        %5802 = vmatpush2.bf16.msra.mxu0 0
        %5803 = vmatprep.mubr.bf16.mxu0 0
        %5804 = vmatmul.mubr.bf16.gmra.mxu0 %v5766
        %v5805 = vpop.f32.mrf.mxu0
        %v5806 = vadd.f32 0.0, %v5805
        %v5807 = vpop.f32.mrf.mxu0
        %v5808 = vpop.f32.mrf.mxu0
        %v5809 = vpop.f32.mrf.mxu0
        %5810 = vdwg.mxu0
        %v5812 = vsel %vm856, %v5717, 0
        %v5815 = vsel %vm1113, %v5263, 0
        %5817 = vmatprep.subr.bf16.mxu0 0
        %5818 = vmatpush1.bf16.msra.mxu0 0
        %5819 = vmatprep.subr.bf16.mxu0 0
        %5820 = vmatpush1.bf16.msra.mxu0 0
        %5821 = vmatprep.subr.bf16.mxu0 0
        %5822 = vmatpush1.bf16.msra.mxu0 0
        %5823 = vmatprep.subr.bf16.mxu0 0
        %5824 = vmatpush1.bf16.msra.mxu0 0
        %5825 = vmatprep.subr.bf16.mxu0 0
        %5826 = vmatpush1.bf16.msra.mxu0 0
        %5827 = vmatprep.subr.bf16.mxu0 0
        %5828 = vmatpush1.bf16.msra.mxu0 0
        %5829 = vmatprep.subr.bf16.mxu0 0
        %5830 = vmatpush1.bf16.msra.mxu0 0
        %5831 = vmatprep.subr.bf16.mxu0 0
        %5832 = vmatpush1.bf16.msra.mxu0 %v5815
        %5833 = vmatprep.subr.bf16.mxu0 0
        %5834 = vmatpush2.bf16.msra.mxu0 0
        %5835 = vmatprep.subr.bf16.mxu0 0
        %5836 = vmatpush2.bf16.msra.mxu0 0
        %5837 = vmatprep.subr.bf16.mxu0 0
        %5838 = vmatpush2.bf16.msra.mxu0 0
        %5839 = vmatprep.subr.bf16.mxu0 0
        %5840 = vmatpush2.bf16.msra.mxu0 0
        %5841 = vmatprep.subr.bf16.mxu0 0
        %5842 = vmatpush2.bf16.msra.mxu0 0
        %5843 = vmatprep.subr.bf16.mxu0 0
        %5844 = vmatpush2.bf16.msra.mxu0 0
        %5845 = vmatprep.subr.bf16.mxu0 0
        %5846 = vmatpush2.bf16.msra.mxu0 0
        %5847 = vmatprep.subr.bf16.mxu0 0
        %5848 = vmatpush2.bf16.msra.mxu0 0
        %5849 = vmatprep.mubr.bf16.mxu0 0
        %5850 = vmatmul.mubr.bf16.gmra.mxu0 %v5812
        %v5851 = vpop.f32.mrf.mxu0
        %v5852 = vadd.f32 0.0, %v5851
        %v5853 = vpop.f32.mrf.mxu0
        %v5854 = vpop.f32.mrf.mxu0
        %v5855 = vpop.f32.mrf.mxu0
        %5856 = vdwg.mxu0
        %v5858 = vsel %vm856, %v5718, 0
        %v5861 = vsel %vm1113, %v5264, 0
        %5863 = vmatprep.subr.bf16.mxu0 0
        %5864 = vmatpush1.bf16.msra.mxu0 0
        %5865 = vmatprep.subr.bf16.mxu0 0
        %5866 = vmatpush1.bf16.msra.mxu0 0
        %5867 = vmatprep.subr.bf16.mxu0 0
        %5868 = vmatpush1.bf16.msra.mxu0 0
        %5869 = vmatprep.subr.bf16.mxu0 0
        %5870 = vmatpush1.bf16.msra.mxu0 0
        %5871 = vmatprep.subr.bf16.mxu0 0
        %5872 = vmatpush1.bf16.msra.mxu0 0
        %5873 = vmatprep.subr.bf16.mxu0 0
        %5874 = vmatpush1.bf16.msra.mxu0 0
        %5875 = vmatprep.subr.bf16.mxu0 0
        %5876 = vmatpush1.bf16.msra.mxu0 0
        %5877 = vmatprep.subr.bf16.mxu0 0
        %5878 = vmatpush1.bf16.msra.mxu0 %v5861
        %5879 = vmatprep.subr.bf16.mxu0 0
        %5880 = vmatpush2.bf16.msra.mxu0 0
        %5881 = vmatprep.subr.bf16.mxu0 0
        %5882 = vmatpush2.bf16.msra.mxu0 0
        %5883 = vmatprep.subr.bf16.mxu0 0
        %5884 = vmatpush2.bf16.msra.mxu0 0
        %5885 = vmatprep.subr.bf16.mxu0 0
        %5886 = vmatpush2.bf16.msra.mxu0 0
        %5887 = vmatprep.subr.bf16.mxu0 0
        %5888 = vmatpush2.bf16.msra.mxu0 0
        %5889 = vmatprep.subr.bf16.mxu0 0
        %5890 = vmatpush2.bf16.msra.mxu0 0
        %5891 = vmatprep.subr.bf16.mxu0 0
        %5892 = vmatpush2.bf16.msra.mxu0 0
        %5893 = vmatprep.subr.bf16.mxu0 0
        %5894 = vmatpush2.bf16.msra.mxu0 0
        %5895 = vmatprep.mubr.bf16.mxu0 0
        %5896 = vmatmul.mubr.bf16.gmra.mxu0 %v5858
        %v5897 = vpop.f32.mrf.mxu0
        %v5898 = vadd.f32 0.0, %v5897
        %v5899 = vpop.f32.mrf.mxu0
        %v5900 = vpop.f32.mrf.mxu0
        %v5901 = vpop.f32.mrf.mxu0
        %5902 = vdwg.mxu0
        %v5903 = vsel %vm644, %v5760, 0.0
        %v5904 = vsel %vm644, %v5806, 0.0
        %v5905 = vadd.f32 %v5903, %v5904
        %v5906 = vsel %vm644, %v5852, 0.0
        %v5907 = vadd.f32 %v5905, %v5906
        %v5908 = vsel %vm644, %v5898, 0.0
        %v5909 = vadd.f32 %v5907, %v5908
        %v5910 = vlaneseq
        %v5911 = vshrl.u32 %v5910, 7
        %v5912 = vsub.s32 0, %v5911
        %v5913 = vrot.slane %v5266, %v5912
        %v5914 = vadd.f32 %v5909, %v5913
        %v5915 = vadd.f32 %v5001, %v5914
        %v5916 = vld [vmem:[%s5265 + $0x1] sm:$0x1]
        %v5917 = vld [vmem:[%s5265 + $0x2] sm:$0x1]
        %v5918 = vsel %vm644, %v5915, 0.0
        %5919 = vadd.xlane.f32.xlu0 %v5918
        %v5920 = vpop.xlane.xlu0 %5919
        %v5921 = vmul.f32 %v5920, %v1507
        %v5922 = vsub.f32 %v5915, %v5921
        %v5923 = vmul.f32 %v5922, %v5922
        %v5924 = vsel %vm644, %v5923, 0.0
        %5925 = vadd.xlane.f32.xlu0 %v5924
        %v5926 = vpop.xlane.xlu0 %5925
        %v5927 = vmul.f32 %v5926, %v1507
        %v5928 = vadd.f32 %v5927, 1e-05
        %v5929 = vrsqrt.pop %v5928
        %v5930 = vmul.f32 %v5922, %v5929
        %v5931 = vlaneseq
        %v5932 = vshrl.u32 %v5931, 7
        %v5933 = vsub.s32 0, %v5932
        %v5934 = vrot.slane %v5916, %v5933
        %v5935 = vmul.f32 %v5930, %v5934
        %v5936 = vlaneseq
        %v5937 = vshrl.u32 %v5936, 7
        %v5938 = vsub.s32 0, %v5937
        %v5939 = vrot.slane %v5917, %v5938
        %v5940 = vadd.f32 %v5935, %v5939
        %v5941 = vpack.c.bf16 %v5940, %v5940
        %5942 = vrot.lane.b32.xlu0 %v5057, 104
        %v5943 = vpop.permute.xlu0 %5942
        %5944 = vrot.lane.b32.xlu0 %v5058, 104
        %v5945 = vpop.permute.xlu0 %5944
        %5948 = vrot.lane.b32.xlu0 %v5032, 104
        %v5949 = vpop.permute.xlu0 %5948
        %v5952 = vsel %vm644, %v5941, 0
        %5954 = vmatprep.subr.bf16.mxu0 0
        %5955 = vmatpush1.bf16.msra.mxu0 0
        %5956 = vmatprep.subr.bf16.mxu0 0
        %5957 = vmatpush1.bf16.msra.mxu0 0
        %5958 = vmatprep.subr.bf16.mxu0 0
        %5959 = vmatpush1.bf16.msra.mxu0 0
        %5960 = vmatprep.subr.bf16.mxu0 0
        %5961 = vmatpush1.bf16.msra.mxu0 0
        %5962 = vmatprep.subr.bf16.mxu0 0
        %5963 = vmatpush1.bf16.msra.mxu0 0
        %5964 = vmatprep.subr.bf16.mxu0 0
        %5965 = vmatpush1.bf16.msra.mxu0 0
        %5966 = vmatprep.subr.bf16.mxu0 0
        %5967 = vmatpush1.bf16.msra.mxu0 %v5945
        %5968 = vmatprep.subr.bf16.mxu0 0
        %5969 = vmatpush1.bf16.msra.mxu0 %v5943
        %5970 = vmatprep.subr.bf16.mxu0 0
        %5971 = vmatpush2.bf16.msra.mxu0 0
        %5972 = vmatprep.subr.bf16.mxu0 0
        %5973 = vmatpush2.bf16.msra.mxu0 0
        %5974 = vmatprep.subr.bf16.mxu0 0
        %5975 = vmatpush2.bf16.msra.mxu0 0
        %5976 = vmatprep.subr.bf16.mxu0 0
        %5977 = vmatpush2.bf16.msra.mxu0 0
        %5978 = vmatprep.subr.bf16.mxu0 0
        %5979 = vmatpush2.bf16.msra.mxu0 0
        %5980 = vmatprep.subr.bf16.mxu0 0
        %5981 = vmatpush2.bf16.msra.mxu0 0
        %5982 = vmatprep.subr.bf16.mxu0 0
        %5983 = vmatpush2.bf16.msra.mxu0 0
        %5984 = vmatprep.subr.bf16.mxu0 0
        %5985 = vmatpush2.bf16.msra.mxu0 0
        %5986 = vmatprep.mubr.bf16.mxu0 0
        %5987 = vmatmul.mubr.bf16.gmra.mxu0 %v5952
        %v5988 = vpop.f32.mrf.mxu0
        %v5989 = vadd.f32 %v5949, %v5988
        %v5990 = vpop.f32.mrf.mxu0
        %v5991 = vpop.f32.mrf.mxu0
        %v5992 = vpop.f32.mrf.mxu0
        %5993 = vdwg.mxu0
        %5994 = vrot.lane.b32.xlu0 %v5112, 104
        %v5995 = vpop.permute.xlu0 %5994
        %5996 = vrot.lane.b32.xlu0 %v5113, 104
        %v5997 = vpop.permute.xlu0 %5996
        %6000 = vrot.lane.b32.xlu0 %v5036, 104
        %v6001 = vpop.permute.xlu0 %6000
        %6003 = vmatprep.subr.bf16.mxu0 0
        %6004 = vmatpush1.bf16.msra.mxu0 0
        %6005 = vmatprep.subr.bf16.mxu0 0
        %6006 = vmatpush1.bf16.msra.mxu0 0
        %6007 = vmatprep.subr.bf16.mxu0 0
        %6008 = vmatpush1.bf16.msra.mxu0 0
        %6009 = vmatprep.subr.bf16.mxu0 0
        %6010 = vmatpush1.bf16.msra.mxu0 0
        %6011 = vmatprep.subr.bf16.mxu0 0
        %6012 = vmatpush1.bf16.msra.mxu0 0
        %6013 = vmatprep.subr.bf16.mxu0 0
        %6014 = vmatpush1.bf16.msra.mxu0 0
        %6015 = vmatprep.subr.bf16.mxu0 0
        %6016 = vmatpush1.bf16.msra.mxu0 %v5997
        %6017 = vmatprep.subr.bf16.mxu0 0
        %6018 = vmatpush1.bf16.msra.mxu0 %v5995
        %6019 = vmatprep.subr.bf16.mxu0 0
        %6020 = vmatpush2.bf16.msra.mxu0 0
        %6021 = vmatprep.subr.bf16.mxu0 0
        %6022 = vmatpush2.bf16.msra.mxu0 0
        %6023 = vmatprep.subr.bf16.mxu0 0
        %6024 = vmatpush2.bf16.msra.mxu0 0
        %6025 = vmatprep.subr.bf16.mxu0 0
        %6026 = vmatpush2.bf16.msra.mxu0 0
        %6027 = vmatprep.subr.bf16.mxu0 0
        %6028 = vmatpush2.bf16.msra.mxu0 0
        %6029 = vmatprep.subr.bf16.mxu0 0
        %6030 = vmatpush2.bf16.msra.mxu0 0
        %6031 = vmatprep.subr.bf16.mxu0 0
        %6032 = vmatpush2.bf16.msra.mxu0 0
        %6033 = vmatprep.subr.bf16.mxu0 0
        %6034 = vmatpush2.bf16.msra.mxu0 0
        %6035 = vmatprep.mubr.bf16.mxu0 0
        %6036 = vmatmul.mubr.bf16.gmra.mxu0 %v5952
        %v6037 = vpop.f32.mrf.mxu0
        %v6038 = vadd.f32 %v6001, %v6037
        %v6039 = vpop.f32.mrf.mxu0
        %v6040 = vpop.f32.mrf.mxu0
        %v6041 = vpop.f32.mrf.mxu0
        %6042 = vdwg.mxu0
        %6043 = vrot.lane.b32.xlu0 %v5164, 104
        %v6044 = vpop.permute.xlu0 %6043
        %6045 = vrot.lane.b32.xlu0 %v5165, 104
        %v6046 = vpop.permute.xlu0 %6045
        %6049 = vrot.lane.b32.xlu0 %v5040, 104
        %v6050 = vpop.permute.xlu0 %6049
        %6052 = vmatprep.subr.bf16.mxu0 0
        %6053 = vmatpush1.bf16.msra.mxu0 0
        %6054 = vmatprep.subr.bf16.mxu0 0
        %6055 = vmatpush1.bf16.msra.mxu0 0
        %6056 = vmatprep.subr.bf16.mxu0 0
        %6057 = vmatpush1.bf16.msra.mxu0 0
        %6058 = vmatprep.subr.bf16.mxu0 0
        %6059 = vmatpush1.bf16.msra.mxu0 0
        %6060 = vmatprep.subr.bf16.mxu0 0
        %6061 = vmatpush1.bf16.msra.mxu0 0
        %6062 = vmatprep.subr.bf16.mxu0 0
        %6063 = vmatpush1.bf16.msra.mxu0 0
        %6064 = vmatprep.subr.bf16.mxu0 0
        %6065 = vmatpush1.bf16.msra.mxu0 %v6046
        %6066 = vmatprep.subr.bf16.mxu0 0
        %6067 = vmatpush1.bf16.msra.mxu0 %v6044
        %6068 = vmatprep.subr.bf16.mxu0 0
        %6069 = vmatpush2.bf16.msra.mxu0 0
        %6070 = vmatprep.subr.bf16.mxu0 0
        %6071 = vmatpush2.bf16.msra.mxu0 0
        %6072 = vmatprep.subr.bf16.mxu0 0
        %6073 = vmatpush2.bf16.msra.mxu0 0
        %6074 = vmatprep.subr.bf16.mxu0 0
        %6075 = vmatpush2.bf16.msra.mxu0 0
        %6076 = vmatprep.subr.bf16.mxu0 0
        %6077 = vmatpush2.bf16.msra.mxu0 0
        %6078 = vmatprep.subr.bf16.mxu0 0
        %6079 = vmatpush2.bf16.msra.mxu0 0
        %6080 = vmatprep.subr.bf16.mxu0 0
        %6081 = vmatpush2.bf16.msra.mxu0 0
        %6082 = vmatprep.subr.bf16.mxu0 0
        %6083 = vmatpush2.bf16.msra.mxu0 0
        %6084 = vmatprep.mubr.bf16.mxu0 0
        %6085 = vmatmul.mubr.bf16.gmra.mxu0 %v5952
        %v6086 = vpop.f32.mrf.mxu0
        %v6087 = vadd.f32 %v6050, %v6086
        %v6088 = vpop.f32.mrf.mxu0
        %v6089 = vpop.f32.mrf.mxu0
        %v6090 = vpop.f32.mrf.mxu0
        %6091 = vdwg.mxu0
        %6092 = vrot.lane.b32.xlu0 %v5216, 104
        %v6093 = vpop.permute.xlu0 %6092
        %6094 = vrot.lane.b32.xlu0 %v5217, 104
        %v6095 = vpop.permute.xlu0 %6094
        %6098 = vrot.lane.b32.xlu0 %v5044, 104
        %v6099 = vpop.permute.xlu0 %6098
        %6101 = vmatprep.subr.bf16.mxu0 0
        %6102 = vmatpush1.bf16.msra.mxu0 0
        %6103 = vmatprep.subr.bf16.mxu0 0
        %6104 = vmatpush1.bf16.msra.mxu0 0
        %6105 = vmatprep.subr.bf16.mxu0 0
        %6106 = vmatpush1.bf16.msra.mxu0 0
        %6107 = vmatprep.subr.bf16.mxu0 0
        %6108 = vmatpush1.bf16.msra.mxu0 0
        %6109 = vmatprep.subr.bf16.mxu0 0
        %6110 = vmatpush1.bf16.msra.mxu0 0
        %6111 = vmatprep.subr.bf16.mxu0 0
        %6112 = vmatpush1.bf16.msra.mxu0 0
        %6113 = vmatprep.subr.bf16.mxu0 0
        %6114 = vmatpush1.bf16.msra.mxu0 %v6095
        %6115 = vmatprep.subr.bf16.mxu0 0
        %6116 = vmatpush1.bf16.msra.mxu0 %v6093
        %6117 = vmatprep.subr.bf16.mxu0 0
        %6118 = vmatpush2.bf16.msra.mxu0 0
        %6119 = vmatprep.subr.bf16.mxu0 0
        %6120 = vmatpush2.bf16.msra.mxu0 0
        %6121 = vmatprep.subr.bf16.mxu0 0
        %6122 = vmatpush2.bf16.msra.mxu0 0
        %6123 = vmatprep.subr.bf16.mxu0 0
        %6124 = vmatpush2.bf16.msra.mxu0 0
        %6125 = vmatprep.subr.bf16.mxu0 0
        %6126 = vmatpush2.bf16.msra.mxu0 0
        %6127 = vmatprep.subr.bf16.mxu0 0
        %6128 = vmatpush2.bf16.msra.mxu0 0
        %6129 = vmatprep.subr.bf16.mxu0 0
        %6130 = vmatpush2.bf16.msra.mxu0 0
        %6131 = vmatprep.subr.bf16.mxu0 0
        %6132 = vmatpush2.bf16.msra.mxu0 0
        %6133 = vmatprep.mubr.bf16.mxu0 0
        %6134 = vmatmul.mubr.bf16.gmra.mxu0 %v5952
        %v6135 = vpop.f32.mrf.mxu0
        %v6136 = vadd.f32 %v6099, %v6135
        %v6137 = vpop.f32.mrf.mxu0
        %v6138 = vpop.f32.mrf.mxu0
        %v6139 = vpop.f32.mrf.mxu0
        %6140 = vdwg.mxu0
        %6141 = vrot.lane.b32.xlu0 %v5057, 96
        %v6142 = vpop.permute.xlu0 %6141
        %6143 = vrot.lane.b32.xlu0 %v5058, 96
        %v6144 = vpop.permute.xlu0 %6143
        %6147 = vrot.lane.b32.xlu0 %v5032, 96
        %v6148 = vpop.permute.xlu0 %6147
        %6150 = vmatprep.subr.bf16.mxu0 0
        %6151 = vmatpush1.bf16.msra.mxu0 0
        %6152 = vmatprep.subr.bf16.mxu0 0
        %6153 = vmatpush1.bf16.msra.mxu0 0
        %6154 = vmatprep.subr.bf16.mxu0 0
        %6155 = vmatpush1.bf16.msra.mxu0 0
        %6156 = vmatprep.subr.bf16.mxu0 0
        %6157 = vmatpush1.bf16.msra.mxu0 0
        %6158 = vmatprep.subr.bf16.mxu0 0
        %6159 = vmatpush1.bf16.msra.mxu0 0
        %6160 = vmatprep.subr.bf16.mxu0 0
        %6161 = vmatpush1.bf16.msra.mxu0 0
        %6162 = vmatprep.subr.bf16.mxu0 0
        %6163 = vmatpush1.bf16.msra.mxu0 %v6144
        %6164 = vmatprep.subr.bf16.mxu0 0
        %6165 = vmatpush1.bf16.msra.mxu0 %v6142
        %6166 = vmatprep.subr.bf16.mxu0 0
        %6167 = vmatpush2.bf16.msra.mxu0 0
        %6168 = vmatprep.subr.bf16.mxu0 0
        %6169 = vmatpush2.bf16.msra.mxu0 0
        %6170 = vmatprep.subr.bf16.mxu0 0
        %6171 = vmatpush2.bf16.msra.mxu0 0
        %6172 = vmatprep.subr.bf16.mxu0 0
        %6173 = vmatpush2.bf16.msra.mxu0 0
        %6174 = vmatprep.subr.bf16.mxu0 0
        %6175 = vmatpush2.bf16.msra.mxu0 0
        %6176 = vmatprep.subr.bf16.mxu0 0
        %6177 = vmatpush2.bf16.msra.mxu0 0
        %6178 = vmatprep.subr.bf16.mxu0 0
        %6179 = vmatpush2.bf16.msra.mxu0 0
        %6180 = vmatprep.subr.bf16.mxu0 0
        %6181 = vmatpush2.bf16.msra.mxu0 0
        %6182 = vmatprep.mubr.bf16.mxu0 0
        %6183 = vmatmul.mubr.bf16.gmra.mxu0 %v3965
        %v6184 = vpop.f32.mrf.mxu0
        %v6185 = vadd.f32 %v6148, %v6184
        %v6186 = vpop.f32.mrf.mxu0
        %v6187 = vpop.f32.mrf.mxu0
        %v6188 = vpop.f32.mrf.mxu0
        %6189 = vdwg.mxu0
        %6190 = vrot.lane.b32.xlu0 %v5112, 96
        %v6191 = vpop.permute.xlu0 %6190
        %6192 = vrot.lane.b32.xlu0 %v5113, 96
        %v6193 = vpop.permute.xlu0 %6192
        %6196 = vrot.lane.b32.xlu0 %v5036, 96
        %v6197 = vpop.permute.xlu0 %6196
        %6199 = vmatprep.subr.bf16.mxu0 0
        %6200 = vmatpush1.bf16.msra.mxu0 0
        %6201 = vmatprep.subr.bf16.mxu0 0
        %6202 = vmatpush1.bf16.msra.mxu0 0
        %6203 = vmatprep.subr.bf16.mxu0 0
        %6204 = vmatpush1.bf16.msra.mxu0 0
        %6205 = vmatprep.subr.bf16.mxu0 0
        %6206 = vmatpush1.bf16.msra.mxu0 0
        %6207 = vmatprep.subr.bf16.mxu0 0
        %6208 = vmatpush1.bf16.msra.mxu0 0
        %6209 = vmatprep.subr.bf16.mxu0 0
        %6210 = vmatpush1.bf16.msra.mxu0 0
        %6211 = vmatprep.subr.bf16.mxu0 0
        %6212 = vmatpush1.bf16.msra.mxu0 %v6193
        %6213 = vmatprep.subr.bf16.mxu0 0
        %6214 = vmatpush1.bf16.msra.mxu0 %v6191
        %6215 = vmatprep.subr.bf16.mxu0 0
        %6216 = vmatpush2.bf16.msra.mxu0 0
        %6217 = vmatprep.subr.bf16.mxu0 0
        %6218 = vmatpush2.bf16.msra.mxu0 0
        %6219 = vmatprep.subr.bf16.mxu0 0
        %6220 = vmatpush2.bf16.msra.mxu0 0
        %6221 = vmatprep.subr.bf16.mxu0 0
        %6222 = vmatpush2.bf16.msra.mxu0 0
        %6223 = vmatprep.subr.bf16.mxu0 0
        %6224 = vmatpush2.bf16.msra.mxu0 0
        %6225 = vmatprep.subr.bf16.mxu0 0
        %6226 = vmatpush2.bf16.msra.mxu0 0
        %6227 = vmatprep.subr.bf16.mxu0 0
        %6228 = vmatpush2.bf16.msra.mxu0 0
        %6229 = vmatprep.subr.bf16.mxu0 0
        %6230 = vmatpush2.bf16.msra.mxu0 0
        %6231 = vmatprep.mubr.bf16.mxu0 0
        %6232 = vmatmul.mubr.bf16.gmra.mxu0 %v3965
        %v6233 = vpop.f32.mrf.mxu0
        %v6234 = vadd.f32 %v6197, %v6233
        %v6235 = vpop.f32.mrf.mxu0
        %v6236 = vpop.f32.mrf.mxu0
        %v6237 = vpop.f32.mrf.mxu0
        %6238 = vdwg.mxu0
        %6239 = vrot.lane.b32.xlu0 %v5164, 96
        %v6240 = vpop.permute.xlu0 %6239
        %6241 = vrot.lane.b32.xlu0 %v5165, 96
        %v6242 = vpop.permute.xlu0 %6241
        %6245 = vrot.lane.b32.xlu0 %v5040, 96
        %v6246 = vpop.permute.xlu0 %6245
        %6248 = vmatprep.subr.bf16.mxu0 0
        %6249 = vmatpush1.bf16.msra.mxu0 0
        %6250 = vmatprep.subr.bf16.mxu0 0
        %6251 = vmatpush1.bf16.msra.mxu0 0
        %6252 = vmatprep.subr.bf16.mxu0 0
        %6253 = vmatpush1.bf16.msra.mxu0 0
        %6254 = vmatprep.subr.bf16.mxu0 0
        %6255 = vmatpush1.bf16.msra.mxu0 0
        %6256 = vmatprep.subr.bf16.mxu0 0
        %6257 = vmatpush1.bf16.msra.mxu0 0
        %6258 = vmatprep.subr.bf16.mxu0 0
        %6259 = vmatpush1.bf16.msra.mxu0 0
        %6260 = vmatprep.subr.bf16.mxu0 0
        %6261 = vmatpush1.bf16.msra.mxu0 %v6242
        %6262 = vmatprep.subr.bf16.mxu0 0
        %6263 = vmatpush1.bf16.msra.mxu0 %v6240
        %6264 = vmatprep.subr.bf16.mxu0 0
        %6265 = vmatpush2.bf16.msra.mxu0 0
        %6266 = vmatprep.subr.bf16.mxu0 0
        %6267 = vmatpush2.bf16.msra.mxu0 0
        %6268 = vmatprep.subr.bf16.mxu0 0
        %6269 = vmatpush2.bf16.msra.mxu0 0
        %6270 = vmatprep.subr.bf16.mxu0 0
        %6271 = vmatpush2.bf16.msra.mxu0 0
        %6272 = vmatprep.subr.bf16.mxu0 0
        %6273 = vmatpush2.bf16.msra.mxu0 0
        %6274 = vmatprep.subr.bf16.mxu0 0
        %6275 = vmatpush2.bf16.msra.mxu0 0
        %6276 = vmatprep.subr.bf16.mxu0 0
        %6277 = vmatpush2.bf16.msra.mxu0 0
        %6278 = vmatprep.subr.bf16.mxu0 0
        %6279 = vmatpush2.bf16.msra.mxu0 0
        %6280 = vmatprep.mubr.bf16.mxu0 0
        %6281 = vmatmul.mubr.bf16.gmra.mxu0 %v3965
        %v6282 = vpop.f32.mrf.mxu0
        %v6283 = vadd.f32 %v6246, %v6282
        %v6284 = vpop.f32.mrf.mxu0
        %v6285 = vpop.f32.mrf.mxu0
        %v6286 = vpop.f32.mrf.mxu0
        %6287 = vdwg.mxu0
        %6288 = vrot.lane.b32.xlu0 %v5216, 96
        %v6289 = vpop.permute.xlu0 %6288
        %6290 = vrot.lane.b32.xlu0 %v5217, 96
        %v6291 = vpop.permute.xlu0 %6290
        %6294 = vrot.lane.b32.xlu0 %v5044, 96
        %v6295 = vpop.permute.xlu0 %6294
        %6297 = vmatprep.subr.bf16.mxu0 0
        %6298 = vmatpush1.bf16.msra.mxu0 0
        %6299 = vmatprep.subr.bf16.mxu0 0
        %6300 = vmatpush1.bf16.msra.mxu0 0
        %6301 = vmatprep.subr.bf16.mxu0 0
        %6302 = vmatpush1.bf16.msra.mxu0 0
        %6303 = vmatprep.subr.bf16.mxu0 0
        %6304 = vmatpush1.bf16.msra.mxu0 0
        %6305 = vmatprep.subr.bf16.mxu0 0
        %6306 = vmatpush1.bf16.msra.mxu0 0
        %6307 = vmatprep.subr.bf16.mxu0 0
        %6308 = vmatpush1.bf16.msra.mxu0 0
        %6309 = vmatprep.subr.bf16.mxu0 0
        %6310 = vmatpush1.bf16.msra.mxu0 %v6291
        %6311 = vmatprep.subr.bf16.mxu0 0
        %6312 = vmatpush1.bf16.msra.mxu0 %v6289
        %6313 = vmatprep.subr.bf16.mxu0 0
        %6314 = vmatpush2.bf16.msra.mxu0 0
        %6315 = vmatprep.subr.bf16.mxu0 0
        %6316 = vmatpush2.bf16.msra.mxu0 0
        %6317 = vmatprep.subr.bf16.mxu0 0
        %6318 = vmatpush2.bf16.msra.mxu0 0
        %6319 = vmatprep.subr.bf16.mxu0 0
        %6320 = vmatpush2.bf16.msra.mxu0 0
        %6321 = vmatprep.subr.bf16.mxu0 0
        %6322 = vmatpush2.bf16.msra.mxu0 0
        %6323 = vmatprep.subr.bf16.mxu0 0
        %6324 = vmatpush2.bf16.msra.mxu0 0
        %6325 = vmatprep.subr.bf16.mxu0 0
        %6326 = vmatpush2.bf16.msra.mxu0 0
        %6327 = vmatprep.subr.bf16.mxu0 0
        %6328 = vmatpush2.bf16.msra.mxu0 0
        %6329 = vmatprep.mubr.bf16.mxu0 0
        %6330 = vmatmul.mubr.bf16.gmra.mxu0 %v3965
        %v6331 = vpop.f32.mrf.mxu0
        %v6332 = vadd.f32 %v6295, %v6331
        %v6333 = vpop.f32.mrf.mxu0
        %v6334 = vpop.f32.mrf.mxu0
        %v6335 = vpop.f32.mrf.mxu0
        %6336 = vdwg.mxu0
        %s6337 = scalar_lea.vmem %s13, 16
        %v6338 = vld [vmem:[%s6337] sm:$0xf]
        %v6339 = vld [vmem:[%s6337 + $0x4] sm:$0xf]
        %v6340 = vld [vmem:[%s6337 + $0x8] sm:$0xf]
        %v6341 = vld [vmem:[%s6337 + $0xc] sm:$0xf]
        %v6342 = vld [vmem:[%s5265 + $0x3] sm:$0x1]
        %v6343 = vpack.c.bf16 %v5989, %v5989
        %v6344 = vpack.c.bf16 %v6038, %v6038
        %v6345 = vpack.c.bf16 %v6087, %v6087
        %v6346 = vpack.c.bf16 %v6136, %v6136
        %v6347 = vpack.c.bf16 %v6185, %v6185
        %v6348 = vpack.c.bf16 %v6234, %v6234
        %v6349 = vpack.c.bf16 %v6283, %v6283
        %v6350 = vpack.c.bf16 %v6332, %v6332
        %v6352 = vsel %vm856, %v6343, 0
        %v6355 = vsel %vm856, %v6347, 0
        %6357 = vmatprep.subr.bf16.mxu0 0
        %6358 = vmatpush1.bf16.xpose.msra.mxu0 0
        %6359 = vmatprep.subr.bf16.mxu0 0
        %6360 = vmatpush1.bf16.xpose.msra.mxu0 0
        %6361 = vmatprep.subr.bf16.mxu0 0
        %6362 = vmatpush1.bf16.xpose.msra.mxu0 0
        %6363 = vmatprep.subr.bf16.mxu0 0
        %6364 = vmatpush1.bf16.xpose.msra.mxu0 0
        %6365 = vmatprep.subr.bf16.mxu0 0
        %6366 = vmatpush1.bf16.xpose.msra.mxu0 0
        %6367 = vmatprep.subr.bf16.mxu0 0
        %6368 = vmatpush1.bf16.xpose.msra.mxu0 0
        %6369 = vmatprep.subr.bf16.mxu0 0
        %6370 = vmatpush1.bf16.xpose.msra.mxu0 0
        %6371 = vmatprep.subr.bf16.mxu0 0
        %6372 = vmatpush1.bf16.xpose.msra.mxu0 %v6355
        %6373 = vmatprep.subr.bf16.mxu0 0
        %6374 = vmatpush2.bf16.xpose.msra.mxu0 0
        %6375 = vmatprep.subr.bf16.mxu0 0
        %6376 = vmatpush2.bf16.xpose.msra.mxu0 0
        %6377 = vmatprep.subr.bf16.mxu0 0
        %6378 = vmatpush2.bf16.xpose.msra.mxu0 0
        %6379 = vmatprep.subr.bf16.mxu0 0
        %6380 = vmatpush2.bf16.xpose.msra.mxu0 0
        %6381 = vmatprep.subr.bf16.mxu0 0
        %6382 = vmatpush2.bf16.xpose.msra.mxu0 0
        %6383 = vmatprep.subr.bf16.mxu0 0
        %6384 = vmatpush2.bf16.xpose.msra.mxu0 0
        %6385 = vmatprep.subr.bf16.mxu0 0
        %6386 = vmatpush2.bf16.xpose.msra.mxu0 0
        %6387 = vmatprep.subr.bf16.mxu0 0
        %6388 = vmatpush2.bf16.xpose.msra.mxu0 0
        %6389 = vmatprep.mubr.bf16.mxu0 0
        %6390 = vmatmul.mubr.bf16.gmra.mxu0 %v6352
        %v6391 = vpop.f32.mrf.mxu0
        %v6392 = vadd.f32 0.0, %v6391
        %v6393 = vpop.f32.mrf.mxu0
        %v6394 = vpop.f32.mrf.mxu0
        %v6395 = vpop.f32.mrf.mxu0
        %6396 = vdwg.mxu0
        %v6398 = vsel %vm856, %v6344, 0
        %v6401 = vsel %vm856, %v6348, 0
        %6403 = vmatprep.subr.bf16.mxu0 0
        %6404 = vmatpush1.bf16.xpose.msra.mxu0 0
        %6405 = vmatprep.subr.bf16.mxu0 0
        %6406 = vmatpush1.bf16.xpose.msra.mxu0 0
        %6407 = vmatprep.subr.bf16.mxu0 0
        %6408 = vmatpush1.bf16.xpose.msra.mxu0 0
        %6409 = vmatprep.subr.bf16.mxu0 0
        %6410 = vmatpush1.bf16.xpose.msra.mxu0 0
        %6411 = vmatprep.subr.bf16.mxu0 0
        %6412 = vmatpush1.bf16.xpose.msra.mxu0 0
        %6413 = vmatprep.subr.bf16.mxu0 0
        %6414 = vmatpush1.bf16.xpose.msra.mxu0 0
        %6415 = vmatprep.subr.bf16.mxu0 0
        %6416 = vmatpush1.bf16.xpose.msra.mxu0 0
        %6417 = vmatprep.subr.bf16.mxu0 0
        %6418 = vmatpush1.bf16.xpose.msra.mxu0 %v6401
        %6419 = vmatprep.subr.bf16.mxu0 0
        %6420 = vmatpush2.bf16.xpose.msra.mxu0 0
        %6421 = vmatprep.subr.bf16.mxu0 0
        %6422 = vmatpush2.bf16.xpose.msra.mxu0 0
        %6423 = vmatprep.subr.bf16.mxu0 0
        %6424 = vmatpush2.bf16.xpose.msra.mxu0 0
        %6425 = vmatprep.subr.bf16.mxu0 0
        %6426 = vmatpush2.bf16.xpose.msra.mxu0 0
        %6427 = vmatprep.subr.bf16.mxu0 0
        %6428 = vmatpush2.bf16.xpose.msra.mxu0 0
        %6429 = vmatprep.subr.bf16.mxu0 0
        %6430 = vmatpush2.bf16.xpose.msra.mxu0 0
        %6431 = vmatprep.subr.bf16.mxu0 0
        %6432 = vmatpush2.bf16.xpose.msra.mxu0 0
        %6433 = vmatprep.subr.bf16.mxu0 0
        %6434 = vmatpush2.bf16.xpose.msra.mxu0 0
        %6435 = vmatprep.mubr.bf16.mxu0 0
        %6436 = vmatmul.mubr.bf16.gmra.mxu0 %v6398
        %v6437 = vpop.f32.mrf.mxu0
        %v6438 = vadd.f32 0.0, %v6437
        %v6439 = vpop.f32.mrf.mxu0
        %v6440 = vpop.f32.mrf.mxu0
        %v6441 = vpop.f32.mrf.mxu0
        %6442 = vdwg.mxu0
        %v6444 = vsel %vm856, %v6345, 0
        %v6447 = vsel %vm856, %v6349, 0
        %6449 = vmatprep.subr.bf16.mxu0 0
        %6450 = vmatpush1.bf16.xpose.msra.mxu0 0
        %6451 = vmatprep.subr.bf16.mxu0 0
        %6452 = vmatpush1.bf16.xpose.msra.mxu0 0
        %6453 = vmatprep.subr.bf16.mxu0 0
        %6454 = vmatpush1.bf16.xpose.msra.mxu0 0
        %6455 = vmatprep.subr.bf16.mxu0 0
        %6456 = vmatpush1.bf16.xpose.msra.mxu0 0
        %6457 = vmatprep.subr.bf16.mxu0 0
        %6458 = vmatpush1.bf16.xpose.msra.mxu0 0
        %6459 = vmatprep.subr.bf16.mxu0 0
        %6460 = vmatpush1.bf16.xpose.msra.mxu0 0
        %6461 = vmatprep.subr.bf16.mxu0 0
        %6462 = vmatpush1.bf16.xpose.msra.mxu0 0
        %6463 = vmatprep.subr.bf16.mxu0 0
        %6464 = vmatpush1.bf16.xpose.msra.mxu0 %v6447
        %6465 = vmatprep.subr.bf16.mxu0 0
        %6466 = vmatpush2.bf16.xpose.msra.mxu0 0
        %6467 = vmatprep.subr.bf16.mxu0 0
        %6468 = vmatpush2.bf16.xpose.msra.mxu0 0
        %6469 = vmatprep.subr.bf16.mxu0 0
        %6470 = vmatpush2.bf16.xpose.msra.mxu0 0
        %6471 = vmatprep.subr.bf16.mxu0 0
        %6472 = vmatpush2.bf16.xpose.msra.mxu0 0
        %6473 = vmatprep.subr.bf16.mxu0 0
        %6474 = vmatpush2.bf16.xpose.msra.mxu0 0
        %6475 = vmatprep.subr.bf16.mxu0 0
        %6476 = vmatpush2.bf16.xpose.msra.mxu0 0
        %6477 = vmatprep.subr.bf16.mxu0 0
        %6478 = vmatpush2.bf16.xpose.msra.mxu0 0
        %6479 = vmatprep.subr.bf16.mxu0 0
        %6480 = vmatpush2.bf16.xpose.msra.mxu0 0
        %6481 = vmatprep.mubr.bf16.mxu0 0
        %6482 = vmatmul.mubr.bf16.gmra.mxu0 %v6444
        %v6483 = vpop.f32.mrf.mxu0
        %v6484 = vadd.f32 0.0, %v6483
        %v6485 = vpop.f32.mrf.mxu0
        %v6486 = vpop.f32.mrf.mxu0
        %v6487 = vpop.f32.mrf.mxu0
        %6488 = vdwg.mxu0
        %v6490 = vsel %vm856, %v6346, 0
        %v6493 = vsel %vm856, %v6350, 0
        %6495 = vmatprep.subr.bf16.mxu0 0
        %6496 = vmatpush1.bf16.xpose.msra.mxu0 0
        %6497 = vmatprep.subr.bf16.mxu0 0
        %6498 = vmatpush1.bf16.xpose.msra.mxu0 0
        %6499 = vmatprep.subr.bf16.mxu0 0
        %6500 = vmatpush1.bf16.xpose.msra.mxu0 0
        %6501 = vmatprep.subr.bf16.mxu0 0
        %6502 = vmatpush1.bf16.xpose.msra.mxu0 0
        %6503 = vmatprep.subr.bf16.mxu0 0
        %6504 = vmatpush1.bf16.xpose.msra.mxu0 0
        %6505 = vmatprep.subr.bf16.mxu0 0
        %6506 = vmatpush1.bf16.xpose.msra.mxu0 0
        %6507 = vmatprep.subr.bf16.mxu0 0
        %6508 = vmatpush1.bf16.xpose.msra.mxu0 0
        %6509 = vmatprep.subr.bf16.mxu0 0
        %6510 = vmatpush1.bf16.xpose.msra.mxu0 %v6493
        %6511 = vmatprep.subr.bf16.mxu0 0
        %6512 = vmatpush2.bf16.xpose.msra.mxu0 0
        %6513 = vmatprep.subr.bf16.mxu0 0
        %6514 = vmatpush2.bf16.xpose.msra.mxu0 0
        %6515 = vmatprep.subr.bf16.mxu0 0
        %6516 = vmatpush2.bf16.xpose.msra.mxu0 0
        %6517 = vmatprep.subr.bf16.mxu0 0
        %6518 = vmatpush2.bf16.xpose.msra.mxu0 0
        %6519 = vmatprep.subr.bf16.mxu0 0
        %6520 = vmatpush2.bf16.xpose.msra.mxu0 0
        %6521 = vmatprep.subr.bf16.mxu0 0
        %6522 = vmatpush2.bf16.xpose.msra.mxu0 0
        %6523 = vmatprep.subr.bf16.mxu0 0
        %6524 = vmatpush2.bf16.xpose.msra.mxu0 0
        %6525 = vmatprep.subr.bf16.mxu0 0
        %6526 = vmatpush2.bf16.xpose.msra.mxu0 0
        %6527 = vmatprep.mubr.bf16.mxu0 0
        %6528 = vmatmul.mubr.bf16.gmra.mxu0 %v6490
        %v6529 = vpop.f32.mrf.mxu0
        %v6530 = vadd.f32 0.0, %v6529
        %v6531 = vpop.f32.mrf.mxu0
        %v6532 = vpop.f32.mrf.mxu0
        %v6533 = vpop.f32.mrf.mxu0
        %6534 = vdwg.mxu0
        %v6535 = vmul.f32 %v6392, 0.35355338
        %v6536 = vmul.f32 %v6438, 0.35355338
        %v6537 = vmul.f32 %v6484, 0.35355338
        %v6538 = vmul.f32 %v6530, 0.35355338
        %v6539 = vsel %vm1055, %v6535, -1e+10
        %v6540 = vsel %vm1055, %v6536, -1e+10
        %v6541 = vsel %vm1055, %v6537, -1e+10
        %v6542 = vsel %vm1055, %v6538, -1e+10
        %v6543 = vsel %vm856, %v6539, -inf
        %6544 = vmax.xlane.f32.xlu0 %v6543
        %v6545 = vpop.xlane.xlu0 %6544
        %v6546 = vsel %vm856, %v6540, -inf
        %6547 = vmax.xlane.f32.xlu0 %v6546
        %v6548 = vpop.xlane.xlu0 %6547
        %v6549 = vsel %vm856, %v6541, -inf
        %6550 = vmax.xlane.f32.xlu0 %v6549
        %v6551 = vpop.xlane.xlu0 %6550
        %v6552 = vsel %vm856, %v6542, -inf
        %6553 = vmax.xlane.f32.xlu0 %v6552
        %v6554 = vpop.xlane.xlu0 %6553
        %v6555 = vsub.f32 %v6539, %v6545
        %v6556 = vsub.f32 %v6540, %v6548
        %v6557 = vsub.f32 %v6541, %v6551
        %v6558 = vsub.f32 %v6542, %v6554
        %v6559 = vmul.f32 %v6555, 1.442695
        %v6560 = vpow.pop %v6559
        %v6561 = vmul.f32 %v6556, 1.442695
        %v6562 = vpow.pop %v6561
        %v6563 = vmul.f32 %v6557, 1.442695
        %v6564 = vpow.pop %v6563
        %v6565 = vmul.f32 %v6558, 1.442695
        %v6566 = vpow.pop %v6565
        %v6567 = vsel %vm856, %v6560, 0.0
        %6568 = vadd.xlane.f32.xlu0 %v6567
        %v6569 = vpop.xlane.xlu0 %6568
        %v6570 = vsel %vm856, %v6562, 0.0
        %6571 = vadd.xlane.f32.xlu0 %v6570
        %v6572 = vpop.xlane.xlu0 %6571
        %v6573 = vsel %vm856, %v6564, 0.0
        %6574 = vadd.xlane.f32.xlu0 %v6573
        %v6575 = vpop.xlane.xlu0 %6574
        %v6576 = vsel %vm856, %v6566, 0.0
        %6577 = vadd.xlane.f32.xlu0 %v6576
        %v6578 = vpop.xlane.xlu0 %6577
        %v6579 = vrcp.pop %v6569
        %v6580 = vmul.f32 %v6560, %v6579
        %v6581 = vrcp.pop %v6572
        %v6582 = vmul.f32 %v6562, %v6581
        %v6583 = vrcp.pop %v6575
        %v6584 = vmul.f32 %v6564, %v6583
        %v6585 = vrcp.pop %v6578
        %v6586 = vmul.f32 %v6566, %v6585
        %v6587 = vpack.c.bf16 %v6580, %v6580
        %v6588 = vpack.c.bf16 %v6582, %v6582
        %v6589 = vpack.c.bf16 %v6584, %v6584
        %v6590 = vpack.c.bf16 %v6586, %v6586
        %6592 = vrot.lane.b32.xlu0 %v6347, 120
        %v6593 = vpop.permute.xlu0 %6592
        %v6595 = vsel %vm856, %v6587, 0
        %v6598 = vsel %vm1113, %v6593, 0
        %6600 = vmatprep.subr.bf16.mxu0 0
        %6601 = vmatpush1.bf16.msra.mxu0 0
        %6602 = vmatprep.subr.bf16.mxu0 0
        %6603 = vmatpush1.bf16.msra.mxu0 0
        %6604 = vmatprep.subr.bf16.mxu0 0
        %6605 = vmatpush1.bf16.msra.mxu0 0
        %6606 = vmatprep.subr.bf16.mxu0 0
        %6607 = vmatpush1.bf16.msra.mxu0 0
        %6608 = vmatprep.subr.bf16.mxu0 0
        %6609 = vmatpush1.bf16.msra.mxu0 0
        %6610 = vmatprep.subr.bf16.mxu0 0
        %6611 = vmatpush1.bf16.msra.mxu0 0
        %6612 = vmatprep.subr.bf16.mxu0 0
        %6613 = vmatpush1.bf16.msra.mxu0 0
        %6614 = vmatprep.subr.bf16.mxu0 0
        %6615 = vmatpush1.bf16.msra.mxu0 %v6598
        %6616 = vmatprep.subr.bf16.mxu0 0
        %6617 = vmatpush2.bf16.msra.mxu0 0
        %6618 = vmatprep.subr.bf16.mxu0 0
        %6619 = vmatpush2.bf16.msra.mxu0 0
        %6620 = vmatprep.subr.bf16.mxu0 0
        %6621 = vmatpush2.bf16.msra.mxu0 0
        %6622 = vmatprep.subr.bf16.mxu0 0
        %6623 = vmatpush2.bf16.msra.mxu0 0
        %6624 = vmatprep.subr.bf16.mxu0 0
        %6625 = vmatpush2.bf16.msra.mxu0 0
        %6626 = vmatprep.subr.bf16.mxu0 0
        %6627 = vmatpush2.bf16.msra.mxu0 0
        %6628 = vmatprep.subr.bf16.mxu0 0
        %6629 = vmatpush2.bf16.msra.mxu0 0
        %6630 = vmatprep.subr.bf16.mxu0 0
        %6631 = vmatpush2.bf16.msra.mxu0 0
        %6632 = vmatprep.mubr.bf16.mxu0 0
        %6633 = vmatmul.mubr.bf16.gmra.mxu0 %v6595
        %v6634 = vpop.f32.mrf.mxu0
        %v6635 = vadd.f32 0.0, %v6634
        %v6636 = vpop.f32.mrf.mxu0
        %v6637 = vpop.f32.mrf.mxu0
        %v6638 = vpop.f32.mrf.mxu0
        %6639 = vdwg.mxu0
        %6641 = vrot.lane.b32.xlu0 %v6348, 120
        %v6642 = vpop.permute.xlu0 %6641
        %v6644 = vsel %vm856, %v6588, 0
        %v6647 = vsel %vm1113, %v6642, 0
        %6649 = vmatprep.subr.bf16.mxu0 0
        %6650 = vmatpush1.bf16.msra.mxu0 0
        %6651 = vmatprep.subr.bf16.mxu0 0
        %6652 = vmatpush1.bf16.msra.mxu0 0
        %6653 = vmatprep.subr.bf16.mxu0 0
        %6654 = vmatpush1.bf16.msra.mxu0 0
        %6655 = vmatprep.subr.bf16.mxu0 0
        %6656 = vmatpush1.bf16.msra.mxu0 0
        %6657 = vmatprep.subr.bf16.mxu0 0
        %6658 = vmatpush1.bf16.msra.mxu0 0
        %6659 = vmatprep.subr.bf16.mxu0 0
        %6660 = vmatpush1.bf16.msra.mxu0 0
        %6661 = vmatprep.subr.bf16.mxu0 0
        %6662 = vmatpush1.bf16.msra.mxu0 0
        %6663 = vmatprep.subr.bf16.mxu0 0
        %6664 = vmatpush1.bf16.msra.mxu0 %v6647
        %6665 = vmatprep.subr.bf16.mxu0 0
        %6666 = vmatpush2.bf16.msra.mxu0 0
        %6667 = vmatprep.subr.bf16.mxu0 0
        %6668 = vmatpush2.bf16.msra.mxu0 0
        %6669 = vmatprep.subr.bf16.mxu0 0
        %6670 = vmatpush2.bf16.msra.mxu0 0
        %6671 = vmatprep.subr.bf16.mxu0 0
        %6672 = vmatpush2.bf16.msra.mxu0 0
        %6673 = vmatprep.subr.bf16.mxu0 0
        %6674 = vmatpush2.bf16.msra.mxu0 0
        %6675 = vmatprep.subr.bf16.mxu0 0
        %6676 = vmatpush2.bf16.msra.mxu0 0
        %6677 = vmatprep.subr.bf16.mxu0 0
        %6678 = vmatpush2.bf16.msra.mxu0 0
        %6679 = vmatprep.subr.bf16.mxu0 0
        %6680 = vmatpush2.bf16.msra.mxu0 0
        %6681 = vmatprep.mubr.bf16.mxu0 0
        %6682 = vmatmul.mubr.bf16.gmra.mxu0 %v6644
        %v6683 = vpop.f32.mrf.mxu0
        %v6684 = vadd.f32 0.0, %v6683
        %v6685 = vpop.f32.mrf.mxu0
        %v6686 = vpop.f32.mrf.mxu0
        %v6687 = vpop.f32.mrf.mxu0
        %6688 = vdwg.mxu0
        %6690 = vrot.lane.b32.xlu0 %v6349, 120
        %v6691 = vpop.permute.xlu0 %6690
        %v6693 = vsel %vm856, %v6589, 0
        %v6696 = vsel %vm1113, %v6691, 0
        %6698 = vmatprep.subr.bf16.mxu0 0
        %6699 = vmatpush1.bf16.msra.mxu0 0
        %6700 = vmatprep.subr.bf16.mxu0 0
        %6701 = vmatpush1.bf16.msra.mxu0 0
        %6702 = vmatprep.subr.bf16.mxu0 0
        %6703 = vmatpush1.bf16.msra.mxu0 0
        %6704 = vmatprep.subr.bf16.mxu0 0
        %6705 = vmatpush1.bf16.msra.mxu0 0
        %6706 = vmatprep.subr.bf16.mxu0 0
        %6707 = vmatpush1.bf16.msra.mxu0 0
        %6708 = vmatprep.subr.bf16.mxu0 0
        %6709 = vmatpush1.bf16.msra.mxu0 0
        %6710 = vmatprep.subr.bf16.mxu0 0
        %6711 = vmatpush1.bf16.msra.mxu0 0
        %6712 = vmatprep.subr.bf16.mxu0 0
        %6713 = vmatpush1.bf16.msra.mxu0 %v6696
        %6714 = vmatprep.subr.bf16.mxu0 0
        %6715 = vmatpush2.bf16.msra.mxu0 0
        %6716 = vmatprep.subr.bf16.mxu0 0
        %6717 = vmatpush2.bf16.msra.mxu0 0
        %6718 = vmatprep.subr.bf16.mxu0 0
        %6719 = vmatpush2.bf16.msra.mxu0 0
        %6720 = vmatprep.subr.bf16.mxu0 0
        %6721 = vmatpush2.bf16.msra.mxu0 0
        %6722 = vmatprep.subr.bf16.mxu0 0
        %6723 = vmatpush2.bf16.msra.mxu0 0
        %6724 = vmatprep.subr.bf16.mxu0 0
        %6725 = vmatpush2.bf16.msra.mxu0 0
        %6726 = vmatprep.subr.bf16.mxu0 0
        %6727 = vmatpush2.bf16.msra.mxu0 0
        %6728 = vmatprep.subr.bf16.mxu0 0
        %6729 = vmatpush2.bf16.msra.mxu0 0
        %6730 = vmatprep.mubr.bf16.mxu0 0
        %6731 = vmatmul.mubr.bf16.gmra.mxu0 %v6693
        %v6732 = vpop.f32.mrf.mxu0
        %v6733 = vadd.f32 0.0, %v6732
        %v6734 = vpop.f32.mrf.mxu0
        %v6735 = vpop.f32.mrf.mxu0
        %v6736 = vpop.f32.mrf.mxu0
        %6737 = vdwg.mxu0
        %6739 = vrot.lane.b32.xlu0 %v6350, 120
        %v6740 = vpop.permute.xlu0 %6739
        %v6742 = vsel %vm856, %v6590, 0
        %v6745 = vsel %vm1113, %v6740, 0
        %6747 = vmatprep.subr.bf16.mxu0 0
        %6748 = vmatpush1.bf16.msra.mxu0 0
        %6749 = vmatprep.subr.bf16.mxu0 0
        %6750 = vmatpush1.bf16.msra.mxu0 0
        %6751 = vmatprep.subr.bf16.mxu0 0
        %6752 = vmatpush1.bf16.msra.mxu0 0
        %6753 = vmatprep.subr.bf16.mxu0 0
        %6754 = vmatpush1.bf16.msra.mxu0 0
        %6755 = vmatprep.subr.bf16.mxu0 0
        %6756 = vmatpush1.bf16.msra.mxu0 0
        %6757 = vmatprep.subr.bf16.mxu0 0
        %6758 = vmatpush1.bf16.msra.mxu0 0
        %6759 = vmatprep.subr.bf16.mxu0 0
        %6760 = vmatpush1.bf16.msra.mxu0 0
        %6761 = vmatprep.subr.bf16.mxu0 0
        %6762 = vmatpush1.bf16.msra.mxu0 %v6745
        %6763 = vmatprep.subr.bf16.mxu0 0
        %6764 = vmatpush2.bf16.msra.mxu0 0
        %6765 = vmatprep.subr.bf16.mxu0 0
        %6766 = vmatpush2.bf16.msra.mxu0 0
        %6767 = vmatprep.subr.bf16.mxu0 0
        %6768 = vmatpush2.bf16.msra.mxu0 0
        %6769 = vmatprep.subr.bf16.mxu0 0
        %6770 = vmatpush2.bf16.msra.mxu0 0
        %6771 = vmatprep.subr.bf16.mxu0 0
        %6772 = vmatpush2.bf16.msra.mxu0 0
        %6773 = vmatprep.subr.bf16.mxu0 0
        %6774 = vmatpush2.bf16.msra.mxu0 0
        %6775 = vmatprep.subr.bf16.mxu0 0
        %6776 = vmatpush2.bf16.msra.mxu0 0
        %6777 = vmatprep.subr.bf16.mxu0 0
        %6778 = vmatpush2.bf16.msra.mxu0 0
        %6779 = vmatprep.mubr.bf16.mxu0 0
        %6780 = vmatmul.mubr.bf16.gmra.mxu0 %v6742
        %v6781 = vpop.f32.mrf.mxu0
        %v6782 = vadd.f32 0.0, %v6781
        %v6783 = vpop.f32.mrf.mxu0
        %v6784 = vpop.f32.mrf.mxu0
        %v6785 = vpop.f32.mrf.mxu0
        %6786 = vdwg.mxu0
        %v6787 = vpack.c.bf16 %v6635, %v6635
        %v6788 = vpack.c.bf16 %v6684, %v6684
        %v6789 = vpack.c.bf16 %v6733, %v6733
        %v6790 = vpack.c.bf16 %v6782, %v6782
        %v6792 = vsel %vm856, %v6787, 0
        %v6795 = vsel %vm1113, %v6338, 0
        %6797 = vmatprep.subr.bf16.mxu0 0
        %6798 = vmatpush1.bf16.msra.mxu0 0
        %6799 = vmatprep.subr.bf16.mxu0 0
        %6800 = vmatpush1.bf16.msra.mxu0 0
        %6801 = vmatprep.subr.bf16.mxu0 0
        %6802 = vmatpush1.bf16.msra.mxu0 0
        %6803 = vmatprep.subr.bf16.mxu0 0
        %6804 = vmatpush1.bf16.msra.mxu0 0
        %6805 = vmatprep.subr.bf16.mxu0 0
        %6806 = vmatpush1.bf16.msra.mxu0 0
        %6807 = vmatprep.subr.bf16.mxu0 0
        %6808 = vmatpush1.bf16.msra.mxu0 0
        %6809 = vmatprep.subr.bf16.mxu0 0
        %6810 = vmatpush1.bf16.msra.mxu0 0
        %6811 = vmatprep.subr.bf16.mxu0 0
        %6812 = vmatpush1.bf16.msra.mxu0 %v6795
        %6813 = vmatprep.subr.bf16.mxu0 0
        %6814 = vmatpush2.bf16.msra.mxu0 0
        %6815 = vmatprep.subr.bf16.mxu0 0
        %6816 = vmatpush2.bf16.msra.mxu0 0
        %6817 = vmatprep.subr.bf16.mxu0 0
        %6818 = vmatpush2.bf16.msra.mxu0 0
        %6819 = vmatprep.subr.bf16.mxu0 0
        %6820 = vmatpush2.bf16.msra.mxu0 0
        %6821 = vmatprep.subr.bf16.mxu0 0
        %6822 = vmatpush2.bf16.msra.mxu0 0
        %6823 = vmatprep.subr.bf16.mxu0 0
        %6824 = vmatpush2.bf16.msra.mxu0 0
        %6825 = vmatprep.subr.bf16.mxu0 0
        %6826 = vmatpush2.bf16.msra.mxu0 0
        %6827 = vmatprep.subr.bf16.mxu0 0
        %6828 = vmatpush2.bf16.msra.mxu0 0
        %6829 = vmatprep.mubr.bf16.mxu0 0
        %6830 = vmatmul.mubr.bf16.gmra.mxu0 %v6792
        %v6831 = vpop.f32.mrf.mxu0
        %v6832 = vadd.f32 0.0, %v6831
        %v6833 = vpop.f32.mrf.mxu0
        %v6834 = vpop.f32.mrf.mxu0
        %v6835 = vpop.f32.mrf.mxu0
        %6836 = vdwg.mxu0
        %v6838 = vsel %vm856, %v6788, 0
        %v6841 = vsel %vm1113, %v6339, 0
        %6843 = vmatprep.subr.bf16.mxu0 0
        %6844 = vmatpush1.bf16.msra.mxu0 0
        %6845 = vmatprep.subr.bf16.mxu0 0
        %6846 = vmatpush1.bf16.msra.mxu0 0
        %6847 = vmatprep.subr.bf16.mxu0 0
        %6848 = vmatpush1.bf16.msra.mxu0 0
        %6849 = vmatprep.subr.bf16.mxu0 0
        %6850 = vmatpush1.bf16.msra.mxu0 0
        %6851 = vmatprep.subr.bf16.mxu0 0
        %6852 = vmatpush1.bf16.msra.mxu0 0
        %6853 = vmatprep.subr.bf16.mxu0 0
        %6854 = vmatpush1.bf16.msra.mxu0 0
        %6855 = vmatprep.subr.bf16.mxu0 0
        %6856 = vmatpush1.bf16.msra.mxu0 0
        %6857 = vmatprep.subr.bf16.mxu0 0
        %6858 = vmatpush1.bf16.msra.mxu0 %v6841
        %6859 = vmatprep.subr.bf16.mxu0 0
        %6860 = vmatpush2.bf16.msra.mxu0 0
        %6861 = vmatprep.subr.bf16.mxu0 0
        %6862 = vmatpush2.bf16.msra.mxu0 0
        %6863 = vmatprep.subr.bf16.mxu0 0
        %6864 = vmatpush2.bf16.msra.mxu0 0
        %6865 = vmatprep.subr.bf16.mxu0 0
        %6866 = vmatpush2.bf16.msra.mxu0 0
        %6867 = vmatprep.subr.bf16.mxu0 0
        %6868 = vmatpush2.bf16.msra.mxu0 0
        %6869 = vmatprep.subr.bf16.mxu0 0
        %6870 = vmatpush2.bf16.msra.mxu0 0
        %6871 = vmatprep.subr.bf16.mxu0 0
        %6872 = vmatpush2.bf16.msra.mxu0 0
        %6873 = vmatprep.subr.bf16.mxu0 0
        %6874 = vmatpush2.bf16.msra.mxu0 0
        %6875 = vmatprep.mubr.bf16.mxu0 0
        %6876 = vmatmul.mubr.bf16.gmra.mxu0 %v6838
        %v6877 = vpop.f32.mrf.mxu0
        %v6878 = vadd.f32 0.0, %v6877
        %v6879 = vpop.f32.mrf.mxu0
        %v6880 = vpop.f32.mrf.mxu0
        %v6881 = vpop.f32.mrf.mxu0
        %6882 = vdwg.mxu0
        %v6884 = vsel %vm856, %v6789, 0
        %v6887 = vsel %vm1113, %v6340, 0
        %6889 = vmatprep.subr.bf16.mxu0 0
        %6890 = vmatpush1.bf16.msra.mxu0 0
        %6891 = vmatprep.subr.bf16.mxu0 0
        %6892 = vmatpush1.bf16.msra.mxu0 0
        %6893 = vmatprep.subr.bf16.mxu0 0
        %6894 = vmatpush1.bf16.msra.mxu0 0
        %6895 = vmatprep.subr.bf16.mxu0 0
        %6896 = vmatpush1.bf16.msra.mxu0 0
        %6897 = vmatprep.subr.bf16.mxu0 0
        %6898 = vmatpush1.bf16.msra.mxu0 0
        %6899 = vmatprep.subr.bf16.mxu0 0
        %6900 = vmatpush1.bf16.msra.mxu0 0
        %6901 = vmatprep.subr.bf16.mxu0 0
        %6902 = vmatpush1.bf16.msra.mxu0 0
        %6903 = vmatprep.subr.bf16.mxu0 0
        %6904 = vmatpush1.bf16.msra.mxu0 %v6887
        %6905 = vmatprep.subr.bf16.mxu0 0
        %6906 = vmatpush2.bf16.msra.mxu0 0
        %6907 = vmatprep.subr.bf16.mxu0 0
        %6908 = vmatpush2.bf16.msra.mxu0 0
        %6909 = vmatprep.subr.bf16.mxu0 0
        %6910 = vmatpush2.bf16.msra.mxu0 0
        %6911 = vmatprep.subr.bf16.mxu0 0
        %6912 = vmatpush2.bf16.msra.mxu0 0
        %6913 = vmatprep.subr.bf16.mxu0 0
        %6914 = vmatpush2.bf16.msra.mxu0 0
        %6915 = vmatprep.subr.bf16.mxu0 0
        %6916 = vmatpush2.bf16.msra.mxu0 0
        %6917 = vmatprep.subr.bf16.mxu0 0
        %6918 = vmatpush2.bf16.msra.mxu0 0
        %6919 = vmatprep.subr.bf16.mxu0 0
        %6920 = vmatpush2.bf16.msra.mxu0 0
        %6921 = vmatprep.mubr.bf16.mxu0 0
        %6922 = vmatmul.mubr.bf16.gmra.mxu0 %v6884
        %v6923 = vpop.f32.mrf.mxu0
        %v6924 = vadd.f32 0.0, %v6923
        %v6925 = vpop.f32.mrf.mxu0
        %v6926 = vpop.f32.mrf.mxu0
        %v6927 = vpop.f32.mrf.mxu0
        %6928 = vdwg.mxu0
        %v6930 = vsel %vm856, %v6790, 0
        %v6933 = vsel %vm1113, %v6341, 0
        %6935 = vmatprep.subr.bf16.mxu0 0
        %6936 = vmatpush1.bf16.msra.mxu0 0
        %6937 = vmatprep.subr.bf16.mxu0 0
        %6938 = vmatpush1.bf16.msra.mxu0 0
        %6939 = vmatprep.subr.bf16.mxu0 0
        %6940 = vmatpush1.bf16.msra.mxu0 0
        %6941 = vmatprep.subr.bf16.mxu0 0
        %6942 = vmatpush1.bf16.msra.mxu0 0
        %6943 = vmatprep.subr.bf16.mxu0 0
        %6944 = vmatpush1.bf16.msra.mxu0 0
        %6945 = vmatprep.subr.bf16.mxu0 0
        %6946 = vmatpush1.bf16.msra.mxu0 0
        %6947 = vmatprep.subr.bf16.mxu0 0
        %6948 = vmatpush1.bf16.msra.mxu0 0
        %6949 = vmatprep.subr.bf16.mxu0 0
        %6950 = vmatpush1.bf16.msra.mxu0 %v6933
        %6951 = vmatprep.subr.bf16.mxu0 0
        %6952 = vmatpush2.bf16.msra.mxu0 0
        %6953 = vmatprep.subr.bf16.mxu0 0
        %6954 = vmatpush2.bf16.msra.mxu0 0
        %6955 = vmatprep.subr.bf16.mxu0 0
        %6956 = vmatpush2.bf16.msra.mxu0 0
        %6957 = vmatprep.subr.bf16.mxu0 0
        %6958 = vmatpush2.bf16.msra.mxu0 0
        %6959 = vmatprep.subr.bf16.mxu0 0
        %6960 = vmatpush2.bf16.msra.mxu0 0
        %6961 = vmatprep.subr.bf16.mxu0 0
        %6962 = vmatpush2.bf16.msra.mxu0 0
        %6963 = vmatprep.subr.bf16.mxu0 0
        %6964 = vmatpush2.bf16.msra.mxu0 0
        %6965 = vmatprep.subr.bf16.mxu0 0
        %6966 = vmatpush2.bf16.msra.mxu0 0
        %6967 = vmatprep.mubr.bf16.mxu0 0
        %6968 = vmatmul.mubr.bf16.gmra.mxu0 %v6930
        %v6969 = vpop.f32.mrf.mxu0
        %v6970 = vadd.f32 0.0, %v6969
        %v6971 = vpop.f32.mrf.mxu0
        %v6972 = vpop.f32.mrf.mxu0
        %v6973 = vpop.f32.mrf.mxu0
        %6974 = vdwg.mxu0
        %v6975 = vsel %vm644, %v6832, 0.0
        %v6976 = vsel %vm644, %v6878, 0.0
        %v6977 = vadd.f32 %v6975, %v6976
        %v6978 = vsel %vm644, %v6924, 0.0
        %v6979 = vadd.f32 %v6977, %v6978
        %v6980 = vsel %vm644, %v6970, 0.0
        %v6981 = vadd.f32 %v6979, %v6980
        %v6982 = vlaneseq
        %v6983 = vshrl.u32 %v6982, 7
        %v6984 = vsub.s32 0, %v6983
        %v6985 = vrot.slane %v6342, %v6984
        %v6986 = vadd.f32 %v6981, %v6985
        %v6987 = vadd.f32 %v5940, %v6986
        %v6988 = vld [vmem:[%s5265 + $0x4] sm:$0x1]
        %v6989 = vld [vmem:[%s5265 + $0x5] sm:$0x1]
        %v6990 = vsel %vm644, %v6987, 0.0
        %6991 = vadd.xlane.f32.xlu0 %v6990
        %v6992 = vpop.xlane.xlu0 %6991
        %v6993 = vmul.f32 %v6992, %v1507
        %v6994 = vsub.f32 %v6987, %v6993
        %v6995 = vmul.f32 %v6994, %v6994
        %v6996 = vsel %vm644, %v6995, 0.0
        %6997 = vadd.xlane.f32.xlu0 %v6996
        %v6998 = vpop.xlane.xlu0 %6997
        %v6999 = vmul.f32 %v6998, %v1507
        %v7000 = vadd.f32 %v6999, 1e-05
        %v7001 = vrsqrt.pop %v7000
        %v7002 = vmul.f32 %v6994, %v7001
        %v7003 = vlaneseq
        %v7004 = vshrl.u32 %v7003, 7
        %v7005 = vsub.s32 0, %v7004
        %v7006 = vrot.slane %v6988, %v7005
        %v7007 = vmul.f32 %v7002, %v7006
        %v7008 = vlaneseq
        %v7009 = vshrl.u32 %v7008, 7
        %v7010 = vsub.s32 0, %v7009
        %v7011 = vrot.slane %v6989, %v7010
        %v7012 = vadd.f32 %v7007, %v7011
        %s7013 = scalar_lea.vmem %s14, 16
        %v7014 = vld [vmem:[%s7013] sm:$0xf]
        %v7015 = vld [vmem:[%s7013 + $0x4] sm:$0xf]
        %v7016 = vld [vmem:[%s7013 + $0x8] sm:$0xf]
        %v7017 = vld [vmem:[%s7013 + $0xc] sm:$0xf]
        %v7018 = vld [vmem:[%s5265 + $0x6] sm:$0x1]
        %s7019 = scalar_lea.vmem %s15, 32
        %v7020 = vld [vmem:[%s7019] sm:$0xf]
        %v7021 = vld [vmem:[%s7019 + $0x4] sm:$0xf]
        %v7022 = vld [vmem:[%s7019 + $0x8] sm:$0xf]
        %v7023 = vld [vmem:[%s7019 + $0xc] sm:$0xf]
        %v7024 = vld [vmem:[%s7019 + $0x10] sm:$0xf]
        %v7025 = vld [vmem:[%s7019 + $0x14] sm:$0xf]
        %v7026 = vld [vmem:[%s7019 + $0x18] sm:$0xf]
        %v7027 = vld [vmem:[%s7019 + $0x1c] sm:$0xf]
        %v7028 = vld [vmem:[%s5265 + $0x7] sm:$0x1]
        %v7029 = vpack.c.bf16 %v7012, %v7012
        %v7030 = vlaneseq
        %v7031 = vshrl.u32 %v7030, 7
        %v7032 = vsub.s32 0, %v7031
        %v7033 = vrot.slane %v7018, %v7032
        %v7038 = vunpack.c.l.b16 %v7014
        %v7039 = vunpack.c.l.b16 %v7015
        %v7040 = vunpack.c.l.b16 %v7016
        %v7041 = vunpack.c.l.b16 %v7017
        %v7042 = vpack.c.b16 %v7039, %v7038
        %v7043 = vpack.c.b16 %v7041, %v7040
        %v7047 = vsel %vm644, %v7029, 0
        %7049 = vmatprep.subr.bf16.mxu0 0
        %7050 = vmatpush1.bf16.msra.mxu0 0
        %7051 = vmatprep.subr.bf16.mxu0 0
        %7052 = vmatpush1.bf16.msra.mxu0 0
        %7053 = vmatprep.subr.bf16.mxu0 0
        %7054 = vmatpush1.bf16.msra.mxu0 0
        %7055 = vmatprep.subr.bf16.mxu0 0
        %7056 = vmatpush1.bf16.msra.mxu0 0
        %7057 = vmatprep.subr.bf16.mxu0 0
        %7058 = vmatpush1.bf16.msra.mxu0 0
        %7059 = vmatprep.subr.bf16.mxu0 0
        %7060 = vmatpush1.bf16.msra.mxu0 0
        %7061 = vmatprep.subr.bf16.mxu0 0
        %7062 = vmatpush1.bf16.msra.mxu0 %v7043
        %7063 = vmatprep.subr.bf16.mxu0 0
        %7064 = vmatpush1.bf16.msra.mxu0 %v7042
        %7065 = vmatprep.subr.bf16.mxu0 0
        %7066 = vmatpush2.bf16.msra.mxu0 0
        %7067 = vmatprep.subr.bf16.mxu0 0
        %7068 = vmatpush2.bf16.msra.mxu0 0
        %7069 = vmatprep.subr.bf16.mxu0 0
        %7070 = vmatpush2.bf16.msra.mxu0 0
        %7071 = vmatprep.subr.bf16.mxu0 0
        %7072 = vmatpush2.bf16.msra.mxu0 0
        %7073 = vmatprep.subr.bf16.mxu0 0
        %7074 = vmatpush2.bf16.msra.mxu0 0
        %7075 = vmatprep.subr.bf16.mxu0 0
        %7076 = vmatpush2.bf16.msra.mxu0 0
        %7077 = vmatprep.subr.bf16.mxu0 0
        %7078 = vmatpush2.bf16.msra.mxu0 0
        %7079 = vmatprep.subr.bf16.mxu0 0
        %7080 = vmatpush2.bf16.msra.mxu0 0
        %7081 = vmatprep.mubr.bf16.mxu0 0
        %7082 = vmatmul.mubr.bf16.gmra.mxu0 %v7047
        %v7083 = vpop.f32.mrf.mxu0
        %v7084 = vadd.f32 %v7033, %v7083
        %v7085 = vpop.f32.mrf.mxu0
        %v7086 = vpop.f32.mrf.mxu0
        %v7087 = vpop.f32.mrf.mxu0
        %7088 = vdwg.mxu0
        %v7089 = vmax.f32 %v7084, 0.0
        %v7090 = vpack.c.bf16 %v7089, %v7089
        %v7091 = vlaneseq
        %v7092 = vshrl.u32 %v7091, 7
        %v7093 = vsub.s32 0, %v7092
        %v7094 = vrot.slane %v7028, %v7093
        %v7103 = vunpack.c.l.b16 %v7020
        %v7104 = vunpack.c.l.b16 %v7021
        %v7105 = vunpack.c.l.b16 %v7022
        %v7106 = vunpack.c.l.b16 %v7023
        %v7107 = vunpack.c.l.b16 %v7024
        %v7108 = vunpack.c.l.b16 %v7025
        %v7109 = vunpack.c.l.b16 %v7026
        %v7110 = vunpack.c.l.b16 %v7027
        %v7111 = vpack.c.b16 %v7104, %v7103
        %v7112 = vpack.c.b16 %v7106, %v7105
        %v7113 = vpack.c.b16 %v7108, %v7107
        %v7114 = vpack.c.b16 %v7110, %v7109
        %v7120 = vsel %vm1632, %v7090, 0
        %7122 = vmatprep.subr.bf16.mxu0 0
        %7123 = vmatpush1.bf16.msra.mxu0 0
        %7124 = vmatprep.subr.bf16.mxu0 0
        %7125 = vmatpush1.bf16.msra.mxu0 0
        %7126 = vmatprep.subr.bf16.mxu0 0
        %7127 = vmatpush1.bf16.msra.mxu0 0
        %7128 = vmatprep.subr.bf16.mxu0 0
        %7129 = vmatpush1.bf16.msra.mxu0 0
        %7130 = vmatprep.subr.bf16.mxu0 0
        %7131 = vmatpush1.bf16.msra.mxu0 %v7114
        %7132 = vmatprep.subr.bf16.mxu0 0
        %7133 = vmatpush1.bf16.msra.mxu0 %v7113
        %7134 = vmatprep.subr.bf16.mxu0 0
        %7135 = vmatpush1.bf16.msra.mxu0 %v7112
        %7136 = vmatprep.subr.bf16.mxu0 0
        %7137 = vmatpush1.bf16.msra.mxu0 %v7111
        %7138 = vmatprep.subr.bf16.mxu0 0
        %7139 = vmatpush2.bf16.msra.mxu0 0
        %7140 = vmatprep.subr.bf16.mxu0 0
        %7141 = vmatpush2.bf16.msra.mxu0 0
        %7142 = vmatprep.subr.bf16.mxu0 0
        %7143 = vmatpush2.bf16.msra.mxu0 0
        %7144 = vmatprep.subr.bf16.mxu0 0
        %7145 = vmatpush2.bf16.msra.mxu0 0
        %7146 = vmatprep.subr.bf16.mxu0 0
        %7147 = vmatpush2.bf16.msra.mxu0 0
        %7148 = vmatprep.subr.bf16.mxu0 0
        %7149 = vmatpush2.bf16.msra.mxu0 0
        %7150 = vmatprep.subr.bf16.mxu0 0
        %7151 = vmatpush2.bf16.msra.mxu0 0
        %7152 = vmatprep.subr.bf16.mxu0 0
        %7153 = vmatpush2.bf16.msra.mxu0 0
        %7154 = vmatprep.mubr.bf16.mxu0 0
        %7155 = vmatmul.mubr.bf16.gmra.mxu0 %v7120
        %v7156 = vpop.f32.mrf.mxu0
        %v7157 = vadd.f32 %v7094, %v7156
        %v7158 = vpop.f32.mrf.mxu0
        %v7159 = vpop.f32.mrf.mxu0
        %v7160 = vpop.f32.mrf.mxu0
        %7161 = vdwg.mxu0
        %v7162 = vadd.f32 %v7012, %v7157
        %v7163 = vld [vmem:[%s5265 + $0x8] sm:$0x1]
        %v7164 = vld [vmem:[%s5265 + $0x9] sm:$0x1]
        %v7165 = vsel %vm644, %v7162, 0.0
        %7166 = vadd.xlane.f32.xlu0 %v7165
        %v7167 = vpop.xlane.xlu0 %7166
        %v7168 = vmul.f32 %v7167, %v1507
        %v7169 = vsub.f32 %v7162, %v7168
        %v7170 = vmul.f32 %v7169, %v7169
        %v7171 = vsel %vm644, %v7170, 0.0
        %7172 = vadd.xlane.f32.xlu0 %v7171
        %v7173 = vpop.xlane.xlu0 %7172
        %v7174 = vmul.f32 %v7173, %v1507
        %v7175 = vadd.f32 %v7174, 1e-05
        %v7176 = vrsqrt.pop %v7175
        %v7177 = vmul.f32 %v7169, %v7176
        %v7178 = vlaneseq
        %v7179 = vshrl.u32 %v7178, 7
        %v7180 = vsub.s32 0, %v7179
        %v7181 = vrot.slane %v7163, %v7180
        %v7182 = vmul.f32 %v7177, %v7181
        %v7183 = vlaneseq
        %v7184 = vshrl.u32 %v7183, 7
        %v7185 = vsub.s32 0, %v7184
        %v7186 = vrot.slane %v7164, %v7185
        %v7187 = vadd.f32 %v7182, %v7186
        %v7188 = vpack.c.bf16 %v7187, %v7187
        %v7189 = vld [vmem:[%s17] sm:$0xf]
        %v7190 = vld [vmem:[%s17 + $0x4] sm:$0xf]
        %v7191 = vld [vmem:[%s17 + $0x8] sm:$0xf]
        %v7192 = vld [vmem:[%s17 + $0xc] sm:$0xf]
        %v7193 = vld [vmem:[%s18] sm:$0x1]
        %v7195 = vlaneseq
        %v7196 = vshrl.u32 %v7195, 7
        %v7197 = vsub.s32 0, %v7196
        %v7198 = vrot.slane %v7193, %v7197
        %v7204 = vunpack.c.l.b16 %v7189
        %v7205 = vunpack.c.l.b16 %v7190
        %v7206 = vunpack.c.l.b16 %v7191
        %v7207 = vunpack.c.l.b16 %v7192
        %v7208 = vpack.c.b16 %v7205, %v7204
        %v7209 = vpack.c.b16 %v7207, %v7206
        %v7213 = vsel %vm644, %v7188, 0
        %7215 = vmatprep.subr.bf16.mxu0 0
        %7216 = vmatpush1.bf16.msra.mxu0 0
        %7217 = vmatprep.subr.bf16.mxu0 0
        %7218 = vmatpush1.bf16.msra.mxu0 0
        %7219 = vmatprep.subr.bf16.mxu0 0
        %7220 = vmatpush1.bf16.msra.mxu0 0
        %7221 = vmatprep.subr.bf16.mxu0 0
        %7222 = vmatpush1.bf16.msra.mxu0 0
        %7223 = vmatprep.subr.bf16.mxu0 0
        %7224 = vmatpush1.bf16.msra.mxu0 0
        %7225 = vmatprep.subr.bf16.mxu0 0
        %7226 = vmatpush1.bf16.msra.mxu0 0
        %7227 = vmatprep.subr.bf16.mxu0 0
        %7228 = vmatpush1.bf16.msra.mxu0 %v7209
        %7229 = vmatprep.subr.bf16.mxu0 0
        %7230 = vmatpush1.bf16.msra.mxu0 %v7208
        %7231 = vmatprep.subr.bf16.mxu0 0
        %7232 = vmatpush2.bf16.msra.mxu0 0
        %7233 = vmatprep.subr.bf16.mxu0 0
        %7234 = vmatpush2.bf16.msra.mxu0 0
        %7235 = vmatprep.subr.bf16.mxu0 0
        %7236 = vmatpush2.bf16.msra.mxu0 0
        %7237 = vmatprep.subr.bf16.mxu0 0
        %7238 = vmatpush2.bf16.msra.mxu0 0
        %7239 = vmatprep.subr.bf16.mxu0 0
        %7240 = vmatpush2.bf16.msra.mxu0 0
        %7241 = vmatprep.subr.bf16.mxu0 0
        %7242 = vmatpush2.bf16.msra.mxu0 0
        %7243 = vmatprep.subr.bf16.mxu0 0
        %7244 = vmatpush2.bf16.msra.mxu0 0
        %7245 = vmatprep.subr.bf16.mxu0 0
        %7246 = vmatpush2.bf16.msra.mxu0 0
        %7247 = vmatprep.mubr.bf16.mxu0 0
        %7248 = vmatmul.mubr.bf16.gmra.mxu0 %v7213
        %v7249 = vpop.f32.mrf.mxu0
        %v7250 = vadd.f32 %v7198, %v7249
        %v7251 = vpop.f32.mrf.mxu0
        %v7252 = vpop.f32.mrf.mxu0
        %v7253 = vpop.f32.mrf.mxu0
        %7254 = vdwg.mxu0
        %7255 = vst [vmem:[%s564] sm:$0xff] %v7250
        %s7256 = sand.u32 %s418, 1
        %s7257 = scalar_lea.sflag [#allocation6], %s7256
        %s7258 = sand.u32 %s418, 1
        %s7259 = smul.addr %s7258, 8
        %s7260 = scalar_lea.vmem [#allocation5], %s7259
        // Predicated region
        $region89: #{_lambda_.1} parent=87 // pred_check
          %p7261 = pneg %p428
        $region90: #{_lambda_.1} parent=87 // pred_check_branch
          %7263 = sbr.rel (%p7261) target = $region92
        $region91: #{_lambda_.1} parent=87 // pred_region
          %s7265 = ssub.s32 128, 128
          %7266 = vsyncadd %s7257, %s7265
          %s7267 = smul.addr %s43, 128
          %s7268 = scalar_lea.hbm %s19, %s7267
          %s7270 = sshll.u32 %s7260, 4
          %s7271 = int_to_ptr.vmem [resolvable:$true] %s7270
          %7273 = dma.vmem_to_hbm [thread:$0]  %s7271, 128, %s7268, %s7257
        $region92: #{_lambda_.1} parent=87 // pred_fallthru
          _
      $region88: #{_lambda_.1} parent=5 // pred_fallthru
        _
      %p7274 = scmp.le.s32.totalorder 2, %s38
      // Predicated region
      $region93: #{_lambda_.1} parent=5 // pred_check
        %p7275 = pneg %p7274
      $region94: #{_lambda_.1} parent=5 // pred_check_branch
        %7277 = sbr.rel (%p7275) target = $region96
      $region95: #{_lambda_.1} parent=5 // pred_region
        %s7278 = ssub.s32 %s38, 2
        // Predicated region
        $region97: #{_lambda_.1} parent=95 // pred_check
          %p7279 = pneg %p434
        $region98: #{_lambda_.1} parent=95 // pred_check_branch
          %7281 = sbr.rel (%p7279) target = $region100
        $region99: #{_lambda_.1} parent=95 // pred_region
          %s7282 = sand.u32 %s419, 1
          %s7283 = scalar_lea.sflag [#allocation6], %s7282
          %s7284 = sand.u32 %s419, 1
          %s7285 = smul.addr %s7284, 8
          %s7286 = scalar_lea.vmem [#allocation5], %s7285
          %7287 = dma.done %s7283, 128
        $region100: #{_lambda_.1} parent=95 // pred_fallthru
          _
      $region96: #{_lambda_.1} parent=5 // pred_fallthru
        _
    $region6: #{_lambda_.1} parent=1 // loop_footer
      %s42 = sadd.s32 1, %s38
    $region7: #{_lambda_.1} parent=1 // loop_footer_branch
      %37 = sbr.rel target = $region3
    $region8: #{_lambda_.1} parent=1 // loop_exit
      _
    %7288 = vsyncpa [#allocation6], 1
    %s7289 = scalar_lea.sflag [#allocation6], 1
    %7290 = vsyncpa %s7289, 1

</llo_original>
